<compile_context>
chip_gen: v6e
topology: v6e:2x2x1
jax: 0.10.0
libtpu: 0.0.40
codegen_flags: <defaults>
</compile_context>

<pallas_src>
import functools

import jax
import jax.numpy as jnp
from jax import lax
from jax.experimental import pallas as pl
from jax.experimental.pallas import tpu as pltpu


# -----------------------------------------------------------------------------
# Kernel
# -----------------------------------------------------------------------------
def _resnet_block_kernel(*refs, W, HW, PAD, groups, eps, pack1, res_identity):
    if pack1:
        (x1_ref, xres_ref, temb_ref, gmat_ref, w1_ref, b1_ref, g1_ref, be1_ref,
         wmlp_ref, bmlp_ref, w2_ref, b2_ref, g2_ref, be2_ref,
         wres_ref, bres_ref, out_ref, hpad_ref) = refs
    else:
        (xpad_ref, temb_ref, gmat_ref, w1_ref, b1_ref, g1_ref, be1_ref,
         wmlp_ref, bmlp_ref, w2_ref, b2_ref, g2_ref, be2_ref,
         wres_ref, bres_ref, out_ref, hpad_ref) = refs

    f32 = jnp.float32
    cout = out_ref.shape[-1]

    # dx = +/-1 column masks for the shifted-slice convs.  Out-of-range *rows* read
    # the PAD zero rows for free, so only these two masks are needed.  Column index
    # from an iota via float math (exact for H*W << 2^24); vector integer remainder
    # lowering is avoided on purpose.
    idx = lax.broadcasted_iota(jnp.int32, (HW, 1), 0).astype(f32)
    col = idx - float(W) * jnp.floor((idx + 0.5) * (1.0 / float(W)))
    not_left = col > 0.5                    # w - 1 >= 0
    not_right = col < float(W) - 1.5        # w + 1 <= W - 1

    def mish(v):
        # x * tanh(softplus(x)) == x * (e^2x + 2 e^x) / (e^2x + 2 e^x + 2):
        # one exp + one approx reciprocal instead of exp + log + tanh.
        e = jnp.exp(jnp.minimum(v, 20.0))
        num = e * (e + 2.0)
        return v * num * pl.reciprocal(num + 2.0, approx=True)

    def group_norm(v, gamma_ref, beta_ref):
        c = v.shape[-1]
        inv_n = 1.0 / float(HW * (c // groups))
        s = jnp.sum(v, axis=0, keepdims=True)          # (1, C) per-channel sums
        ss = jnp.sum(v * v, axis=0, keepdims=True)     # (1, C) per-channel sq-sums
        gs = jnp.dot(s, gmat_ref[...], preferred_element_type=f32)    # group sums
        gss = jnp.dot(ss, gmat_ref[...], preferred_element_type=f32)
        mean = gs * inv_n
        var = jnp.maximum(gss * inv_n - mean * mean, 0.0)
        # Folded affine: one mul + one add over the (HW, C) tensor.
        scale = lax.rsqrt(var + eps) * gamma_ref[...]
        shift = beta_ref[...] - mean * scale
        return v * scale + shift

    def conv3x3(tap, w_ref, b_ref, c_in):
        # 9 shifted (HW, c_in) @ (c_in, Cout) MXU matmuls; mask broadcasts hoisted.
        mL = jnp.broadcast_to(not_left, (HW, c_in))
        mR = jnp.broadcast_to(not_right, (HW, c_in))
        acc = None
        t = 0
        for dy in (-1, 0, 1):
            for dx in (-1, 0, 1):
                s = tap(dy * W + dx)
                if dx == -1:
                    s = jnp.where(mL, s, 0.0)
                elif dx == 1:
                    s = jnp.where(mR, s, 0.0)
                p = jnp.dot(s, w_ref[t], preferred_element_type=f32)
                acc = p if acc is None else acc + p
                t += 1
        return acc + b_ref[...]

    # --- block1: Conv3x3 -> GroupNorm -> Mish ---------------------------------
    if pack1:
        # Small-Cin path: im2col'd input (HW, 9*Cin) -> single full-K matmul,
        # no partial-product adds and no masks for conv1.
        h = jnp.dot(x1_ref[...], w1_ref[...], preferred_element_type=f32) + b1_ref[...]
        xres = xres_ref[...]
    else:
        def x_tap(d):
            return xpad_ref[PAD + d:PAD + d + HW, :]
        h = conv3x3(x_tap, w1_ref, b1_ref, xpad_ref.shape[-1])
        xres = xpad_ref[PAD:PAD + HW, :]
    h = mish(group_norm(h, g1_ref, be1_ref))

    # --- time MLP: Mish -> Linear, broadcast over all pixels ------------------
    t_proj = jnp.dot(mish(temb_ref[...]), wmlp_ref[...],
                     preferred_element_type=f32) + bmlp_ref[...]
    h = h + t_proj                                      # (HW, Cout) + (1, Cout)

    # --- block2: stage h in padded VMEM scratch, then Conv3x3 -> GN -> Mish ---
    # Pad rows are re-zeroed every step (parallel batch axis => per-core scratch,
    # program_id 0 may never run on a given core); cost is 2*(PAD, Cout) stores.
    hpad_ref[0:PAD, :] = jnp.zeros((PAD, cout), f32)
    hpad_ref[PAD + HW:PAD + HW + PAD, :] = jnp.zeros((PAD, cout), f32)
    hpad_ref[PAD:PAD + HW, :] = h

    def h_tap(d):
        return hpad_ref[PAD + d:PAD + d + HW, :]

    h2 = conv3x3(h_tap, w2_ref, b2_ref, cout)
    h2 = mish(group_norm(h2, g2_ref, be2_ref))

    # --- residual: 1x1 conv, or plain add when res_conv is nn.Identity --------
    if res_identity:
        res = xres
    else:
        res = jnp.dot(xres, wres_ref[...], preferred_element_type=f32) + bres_ref[...]
    out_ref[...] = (h2 + res).astype(out_ref.dtype)


# -----------------------------------------------------------------------------
# Wrapper
# -----------------------------------------------------------------------------
def resnet_block_pallas(x, time_emb, params, *, groups=8, eps=1e-5):
    """x: (B, Cin, H, W) NCHW; time_emb: (B, T).  Returns (B, Cout, H, W) float32."""
    B, Cin, H, W = x.shape
    T = time_emb.shape[1]
    Cout = params["w1"].shape[0]
    assert Cout % groups == 0, "dim_out must be divisible by groups"
    HW = H * W
    PAD = ((W + 1 + 7) // 8) * 8              # >= W+1 and sublane(8)-aligned
    HWp = HW + 2 * PAD
    pack1 = (9 * Cin) <= 256                  # pack conv1 taps along K for small Cin
    res_identity = params.get("wres") is None

    f32 = jnp.float32
    x = x.astype(f32)
    temb = time_emb.astype(f32).reshape(B, 1, T)

    # ---- layout plumbing (pure data movement, no FLOPs hoisted) ---------------
    x_nhwc = jnp.transpose(x, (0, 2, 3, 1))              # (B, H, W, Cin)
    x_rows = x_nhwc.reshape(B, HW, Cin)                  # flattened pixels x channels

    gid = jnp.arange(Cout) // (Cout // groups)
    gmat = (gid[:, None] == gid[None, :]).astype(f32)    # (Cout, Cout) group aggregation

    def taps(w):                                         # (Co,Ci,3,3) -> (9, Ci, Co)
        co, ci = w.shape[0], w.shape[1]
        return jnp.transpose(w, (2, 3, 1, 0)).reshape(9, ci, co).astype(f32)

    row = lambda v: v.reshape(1, -1).astype(f32)
    b1, g1, be1 = row(params["b1"]), row(params["g1"]), row(params["be1"])
    b2, g2, be2 = row(params["b2"]), row(params["g2"]), row(params["be2"])
    w2t = taps(params["w2"])
    wmlp = jnp.transpose(params["wmlp"]).astype(f32)     # (T, Cout)
    bmlp = row(params["bmlp"])
    if res_identity:
        wres, bres = jnp.zeros((1, 1), f32), jnp.zeros((1, 1), f32)   # unused dummies
    else:
        wres = jnp.transpose(params["wres"][:, :, 0, 0]).astype(f32)  # (Cin, Cout)
        bres = row(params["bres"])

    def cspec(shape):
        return pl.BlockSpec(shape, lambda b, _n=len(shape): (0,) * _n)

    if pack1:
        # im2col for conv1 only: 9 shifted copies of x lane-concatenated (layout only).
        xpp = jnp.pad(x_nhwc, ((0, 0), (1, 1), (1, 1), (0, 0)))
        cols = [xpp[:, dy:dy + H, dx:dx + W, :] for dy in range(3) for dx in range(3)]
        x9 = jnp.concatenate(cols, axis=-1).reshape(B, HW, 9 * Cin)
        w1 = jnp.transpose(params["w1"], (2, 3, 1, 0)).reshape(9 * Cin, Cout).astype(f32)
        x_ops = [x9, x_rows]
        x_specs = [pl.BlockSpec((None, HW, 9 * Cin), lambda b: (b, 0, 0)),
                   pl.BlockSpec((None, HW, Cin), lambda b: (b, 0, 0))]
    else:
        x_pad = jnp.pad(x_rows, ((0, 0), (PAD, PAD), (0, 0)))
        w1 = taps(params["w1"])
        x_ops = [x_pad]
        x_specs = [pl.BlockSpec((None, HWp, Cin), lambda b: (b, 0, 0))]

    operands = x_ops + [temb, gmat, w1, b1, g1, be1, wmlp, bmlp,
                        w2t, b2, g2, be2, wres, bres]
    in_specs = x_specs + [
        pl.BlockSpec((None, 1, T), lambda b: (b, 0, 0)),   # this image's embedding only
        cspec(gmat.shape), cspec(w1.shape),
        cspec(b1.shape), cspec(g1.shape), cspec(be1.shape),
        cspec(wmlp.shape), cspec(bmlp.shape),
        cspec(w2t.shape), cspec(b2.shape), cspec(g2.shape), cspec(be2.shape),
        cspec(wres.shape), cspec(bres.shape),
    ]

    # VMEM budget from the actual per-program footprint (inputs/outputs double
    # buffered + padded scratch + live (HW,Cout) temporaries + constants x2).
    per_img_in = (HW * 9 * Cin + HW * Cin) if pack1 else (HWp * Cin)
    const_elems = (w1.size + w2t.size + gmat.size + wmlp.size + wres.size
                   + bres.size + 6 * Cout + T)
    est = 4 * (2 * per_img_in + 2 * HW * Cout + HWp * Cout
               + 8 * HW * Cout + 2 * const_elems)
    vmem_limit = int(min(max(2 * est, 32 * 1024 * 1024), 100 * 1024 * 1024))

    kernel = functools.partial(
        _resnet_block_kernel, W=W, HW=HW, PAD=PAD, groups=groups, eps=eps,
        pack1=pack1, res_identity=res_identity)

    out_rows = pl.pallas_call(
        kernel,
        out_shape=jax.ShapeDtypeStruct((B, HW, Cout), f32),
        grid=(B,),
        in_specs=in_specs,
        out_specs=pl.BlockSpec((None, HW, Cout), lambda b: (b, 0, 0)),
        scratch_shapes=[pltpu.VMEM((HWp, Cout), f32)],
        compiler_params=pltpu.CompilerParams(
            dimension_semantics=("parallel",),        # batch split across TCs (v7x)
            vmem_limit_bytes=vmem_limit),
    )(*operands)

    # pixel rows -> NCHW
    return jnp.transpose(out_rows.reshape(B, H, W, Cout), (0, 3, 1, 2))


# -----------------------------------------------------------------------------
# Pure-JAX reference (mirrors the PyTorch module exactly)
# -----------------------------------------------------------------------------
def _mish_ref(v):
    return v * jnp.tanh(jax.nn.softplus(v))


def _group_norm_ref(x, groups, gamma, beta, eps=1e-5):
    B, C, H, W = x.shape
    xg = x.reshape(B, groups, -1)
    mean = jnp.mean(xg, axis=2, keepdims=True)
    var = jnp.var(xg, axis=2, keepdims=True)
    xg = (xg - mean) * lax.rsqrt(var + eps)
    return xg.reshape(B, C, H, W) * gamma.reshape(1, C, 1, 1) + beta.reshape(1, C, 1, 1)


def _conv2d_ref(x, w, b, padding):
    out = lax.conv_general_dilated(
        x, w, window_strides=(1, 1), padding=padding,
        dimension_numbers=("NCHW", "OIHW", "NCHW"),
        precision=lax.Precision.HIGHEST)
    return out + b.reshape(1, -1, 1, 1)


def resnet_block_reference(x, time_emb, params, *, groups=8):
    h = _conv2d_ref(x, params["w1"], params["b1"], ((1, 1), (1, 1)))
    h = _mish_ref(_group_norm_ref(h, groups, params["g1"], params["be1"]))
    t = jnp.dot(_mish_ref(time_emb), params["wmlp"].T,
                precision=lax.Precision.HIGHEST) + params["bmlp"]
    h = h + t[:, :, None, None]
    h = _conv2d_ref(h, params["w2"], params["b2"], ((1, 1), (1, 1)))
    h = _mish_ref(_group_norm_ref(h, groups, params["g2"], params["be2"]))
    if params.get("wres") is not None:
        res = _conv2d_ref(x, params["wres"], params["bres"], ((0, 0), (0, 0)))
    else:
        res = x
    return h + res


if __name__ == "__main__":
    def run_case(key, B, DIM, DIM_OUT, H, W, T, GROUPS, with_res):
        ks = jax.random.split(key, 14)
        nrm = lambda k, shape, s=0.1: s * jax.random.normal(k, shape, dtype=jnp.float32)
        params = {
            "w1": nrm(ks[0], (DIM_OUT, DIM, 3, 3)),
            "b1": nrm(ks[1], (DIM_OUT,)),
            "g1": 1.0 + nrm(ks[2], (DIM_OUT,)),
            "be1": nrm(ks[3], (DIM_OUT,)),
            "wmlp": nrm(ks[4], (DIM_OUT, T)),
            "bmlp": nrm(ks[5], (DIM_OUT,)),
            "w2": nrm(ks[6], (DIM_OUT, DIM_OUT, 3, 3)),
            "b2": nrm(ks[7], (DIM_OUT,)),
            "g2": 1.0 + nrm(ks[8], (DIM_OUT,)),
            "be2": nrm(ks[9], (DIM_OUT,)),
        }
        if with_res:
            params["wres"] = nrm(ks[10], (DIM_OUT, DIM, 1, 1))
            params["bres"] = nrm(ks[11], (DIM_OUT,))
        x = jax.random.normal(ks[12], (B, DIM, H, W), dtype=jnp.float32)
        temb = jax.random.normal(ks[13], (B, T), dtype=jnp.float32)

        out = jax.block_until_ready(resnet_block_pallas(x, temb, params, groups=GROUPS))
        ref = resnet_block_reference(x, temb, params, groups=GROUPS)
        assert out.shape == (B, DIM_OUT, H, W), out.shape
        err = float(jnp.max(jnp.abs(out - ref)))
        assert err < 2e-2, f"max abs err = {err}"
        return err

    key = jax.random.PRNGKey(0)
    k1, k2 = jax.random.split(key)
    # Case 1: small Cin -> packed conv1 (single K=9*Cin matmul), real 1x1 residual conv.
    run_case(k1, B=2, DIM=4, DIM_OUT=16, H=16, W=16, T=32, GROUPS=8, with_res=True)
    # Case 2: dim == dim_out (identity residual), generic 9-tap conv1 path.
    run_case(k2, B=2, DIM=32, DIM_OUT=32, H=8, W=8, T=16, GROUPS=8, with_res=False)
    print("KERNEL_OK")
</pallas_src>

<mosaic_0001>
module attributes {stable_mosaic.version = 11 : i64} {
  func.func @_resnet_block_kernel(%arg0: i32, %arg1: memref<1x256x36xf32, #tpu.memory_space<vmem>>, %arg2: memref<1x256x4xf32, #tpu.memory_space<vmem>>, %arg3: memref<1x1x32xf32, #tpu.memory_space<vmem>>, %arg4: memref<16x16xf32, #tpu.memory_space<vmem>>, %arg5: memref<36x16xf32, #tpu.memory_space<vmem>>, %arg6: memref<1x16xf32, #tpu.memory_space<vmem>>, %arg7: memref<1x16xf32, #tpu.memory_space<vmem>>, %arg8: memref<1x16xf32, #tpu.memory_space<vmem>>, %arg9: memref<32x16xf32, #tpu.memory_space<vmem>>, %arg10: memref<1x16xf32, #tpu.memory_space<vmem>>, %arg11: memref<9x16x16xf32, #tpu.memory_space<vmem>>, %arg12: memref<1x16xf32, #tpu.memory_space<vmem>>, %arg13: memref<1x16xf32, #tpu.memory_space<vmem>>, %arg14: memref<1x16xf32, #tpu.memory_space<vmem>>, %arg15: memref<4x16xf32, #tpu.memory_space<vmem>>, %arg16: memref<1x16xf32, #tpu.memory_space<vmem>>, %arg17: memref<1x256x16xf32, #tpu.memory_space<vmem>>, %arg18: memref<304x16xf32, #tpu.memory_space<vmem>>) attributes {dimension_semantics = [#tpu.dimension_semantics<parallel>], iteration_bounds = array<i64: 2>, scalar_prefetch = 0 : i64, scratch_operands = 1 : i64, tpu.core_type = #tpu.core_type<tc>, window_params = [{transform_indices = @transform_0, window_bounds = array<i64: 1, 256, 36>}, {transform_indices = @transform_1, window_bounds = array<i64: 1, 256, 4>}, {transform_indices = @transform_2, window_bounds = array<i64: 1, 1, 32>}, {pipeline_mode = #tpu.pipeline_mode<synchronous>, transform_indices = @transform_3, window_bounds = array<i64: 16, 16>}, {pipeline_mode = #tpu.pipeline_mode<synchronous>, transform_indices = @transform_4, window_bounds = array<i64: 36, 16>}, {pipeline_mode = #tpu.pipeline_mode<synchronous>, transform_indices = @transform_5, window_bounds = array<i64: 1, 16>}, {pipeline_mode = #tpu.pipeline_mode<synchronous>, transform_indices = @transform_6, window_bounds = array<i64: 1, 16>}, {pipeline_mode = #tpu.pipeline_mode<synchronous>, transform_indices = @transform_7, window_bounds = array<i64: 1, 16>}, {pipeline_mode = #tpu.pipeline_mode<synchronous>, transform_indices = @transform_8, window_bounds = array<i64: 32, 16>}, {pipeline_mode = #tpu.pipeline_mode<synchronous>, transform_indices = @transform_9, window_bounds = array<i64: 1, 16>}, {pipeline_mode = #tpu.pipeline_mode<synchronous>, transform_indices = @transform_10, window_bounds = array<i64: 9, 16, 16>}, {pipeline_mode = #tpu.pipeline_mode<synchronous>, transform_indices = @transform_11, window_bounds = array<i64: 1, 16>}, {pipeline_mode = #tpu.pipeline_mode<synchronous>, transform_indices = @transform_12, window_bounds = array<i64: 1, 16>}, {pipeline_mode = #tpu.pipeline_mode<synchronous>, transform_indices = @transform_13, window_bounds = array<i64: 1, 16>}, {pipeline_mode = #tpu.pipeline_mode<synchronous>, transform_indices = @transform_14, window_bounds = array<i64: 4, 16>}, {pipeline_mode = #tpu.pipeline_mode<synchronous>, transform_indices = @transform_15, window_bounds = array<i64: 1, 16>}, {transform_indices = @transform_16, window_bounds = array<i64: 1, 256, 16>}]} {
    %0 = tpu.iota {dimensions = array<i32: 0>} : vector<256x1xi32>
    %1 = arith.sitofp %0 : vector<256x1xi32> to vector<256x1xf32>
    %cst = arith.constant 5.000000e-01 : f32
    %2 = vector.broadcast %cst : f32 to vector<256x1xf32>
    %3 = arith.addf %1, %2 : vector<256x1xf32>
    %cst_0 = arith.constant 6.250000e-02 : f32
    %4 = vector.broadcast %cst_0 : f32 to vector<256x1xf32>
    %5 = arith.mulf %3, %4 : vector<256x1xf32>
    %6 = math.floor %5 : vector<256x1xf32>
    %cst_1 = arith.constant 1.600000e+01 : f32
    %7 = vector.broadcast %cst_1 : f32 to vector<256x1xf32>
    %8 = arith.mulf %7, %6 : vector<256x1xf32>
    %9 = arith.subf %1, %8 : vector<256x1xf32>
    %cst_2 = arith.constant 5.000000e-01 : f32
    %10 = vector.broadcast %cst_2 : f32 to vector<256x1xf32>
    %11 = arith.cmpf ogt, %9, %10 : vector<256x1xf32>
    %cst_3 = arith.constant 1.450000e+01 : f32
    %12 = vector.broadcast %cst_3 : f32 to vector<256x1xf32>
    %13 = arith.cmpf olt, %9, %12 : vector<256x1xf32>
    %c0 = arith.constant 0 : index
    %c0_4 = arith.constant 0 : index
    %c0_5 = arith.constant 0 : index
    %14 = vector.load %arg1[%c0, %c0_4, %c0_5] : memref<1x256x36xf32, #tpu.memory_space<vmem>>, vector<1x256x36xf32>
    %15 = vector.shape_cast %14 : vector<1x256x36xf32> to vector<256x36xf32>
    %c0_6 = arith.constant 0 : index
    %c0_7 = arith.constant 0 : index
    %16 = vector.load %arg5[%c0_6, %c0_7] : memref<36x16xf32, #tpu.memory_space<vmem>>, vector<36x16xf32>
    %cst_8 = arith.constant dense<0.000000e+00> : vector<256x16xf32>
    %17 = tpu.matmul %15, %16, %cst_8 {dimension_numbers = #tpu.dot_dimension_numbers<[1], [0], [0], [1], [0, 0, 1, 1], [], []>} : vector<256x36xf32>, vector<36x16xf32>, vector<256x16xf32> -> vector<256x16xf32>
    %c0_9 = arith.constant 0 : index
    %c0_10 = arith.constant 0 : index
    %18 = vector.load %arg6[%c0_9, %c0_10] : memref<1x16xf32, #tpu.memory_space<vmem>>, vector<1x16xf32>
    %19 = vector.broadcast %18 : vector<1x16xf32> to vector<256x16xf32>
    %20 = arith.addf %17, %19 : vector<256x16xf32>
    %c0_11 = arith.constant 0 : index
    %c0_12 = arith.constant 0 : index
    %c0_13 = arith.constant 0 : index
    %21 = vector.load %arg2[%c0_11, %c0_12, %c0_13] : memref<1x256x4xf32, #tpu.memory_space<vmem>>, vector<1x256x4xf32>
    %22 = vector.shape_cast %21 : vector<1x256x4xf32> to vector<256x4xf32>
    %cst_14 = arith.constant dense<0.000000e+00> : vector<16xf32>
    %23 = vector.multi_reduction <add>, %20, %cst_14 [0] : vector<256x16xf32> to vector<16xf32>
    %24 = vector.shape_cast %23 : vector<16xf32> to vector<1x16xf32>
    %25 = arith.mulf %20, %20 : vector<256x16xf32>
    %cst_15 = arith.constant dense<0.000000e+00> : vector<16xf32>
    %26 = vector.multi_reduction <add>, %25, %cst_15 [0] : vector<256x16xf32> to vector<16xf32>
    %27 = vector.shape_cast %26 : vector<16xf32> to vector<1x16xf32>
    %c0_16 = arith.constant 0 : index
    %c0_17 = arith.constant 0 : index
    %28 = vector.load %arg4[%c0_16, %c0_17] : memref<16x16xf32, #tpu.memory_space<vmem>>, vector<16x16xf32>
    %cst_18 = arith.constant dense<0.000000e+00> : vector<1x16xf32>
    %29 = tpu.matmul %24, %28, %cst_18 {dimension_numbers = #tpu.dot_dimension_numbers<[1], [0], [0], [1], [0, 0, 1, 1], [], []>} : vector<1x16xf32>, vector<16x16xf32>, vector<1x16xf32> -> vector<1x16xf32>
    %c0_19 = arith.constant 0 : index
    %c0_20 = arith.constant 0 : index
    %30 = vector.load %arg4[%c0_19, %c0_20] : memref<16x16xf32, #tpu.memory_space<vmem>>, vector<16x16xf32>
    %cst_21 = arith.constant dense<0.000000e+00> : vector<1x16xf32>
    %31 = tpu.matmul %27, %30, %cst_21 {dimension_numbers = #tpu.dot_dimension_numbers<[1], [0], [0], [1], [0, 0, 1, 1], [], []>} : vector<1x16xf32>, vector<16x16xf32>, vector<1x16xf32> -> vector<1x16xf32>
    %cst_22 = arith.constant 0.001953125 : f32
    %32 = vector.broadcast %cst_22 : f32 to vector<1x16xf32>
    %33 = arith.mulf %29, %32 : vector<1x16xf32>
    %cst_23 = arith.constant 0.001953125 : f32
    %34 = vector.broadcast %cst_23 : f32 to vector<1x16xf32>
    %35 = arith.mulf %31, %34 : vector<1x16xf32>
    %36 = arith.mulf %33, %33 : vector<1x16xf32>
    %37 = arith.subf %35, %36 : vector<1x16xf32>
    %cst_24 = arith.constant 0.000000e+00 : f32
    %38 = vector.broadcast %cst_24 : f32 to vector<1x16xf32>
    %39 = arith.maximumf %37, %38 : vector<1x16xf32>
    %cst_25 = arith.constant 9.99999974E-6 : f32
    %40 = vector.broadcast %cst_25 : f32 to vector<1x16xf32>
    %41 = arith.addf %39, %40 : vector<1x16xf32>
    %42 = math.rsqrt %41 : vector<1x16xf32>
    %c0_26 = arith.constant 0 : index
    %c0_27 = arith.constant 0 : index
    %43 = vector.load %arg7[%c0_26, %c0_27] : memref<1x16xf32, #tpu.memory_space<vmem>>, vector<1x16xf32>
    %44 = arith.mulf %42, %43 : vector<1x16xf32>
    %c0_28 = arith.constant 0 : index
    %c0_29 = arith.constant 0 : index
    %45 = vector.load %arg8[%c0_28, %c0_29] : memref<1x16xf32, #tpu.memory_space<vmem>>, vector<1x16xf32>
    %46 = arith.mulf %33, %44 : vector<1x16xf32>
    %47 = arith.subf %45, %46 : vector<1x16xf32>
    %48 = vector.broadcast %44 : vector<1x16xf32> to vector<256x16xf32>
    %49 = arith.mulf %20, %48 : vector<256x16xf32>
    %50 = vector.broadcast %47 : vector<1x16xf32> to vector<256x16xf32>
    %51 = arith.addf %49, %50 : vector<256x16xf32>
    %cst_30 = arith.constant 2.000000e+01 : f32
    %52 = vector.broadcast %cst_30 : f32 to vector<256x16xf32>
    %53 = arith.minimumf %51, %52 : vector<256x16xf32>
    %54 = math.exp %53 : vector<256x16xf32>
    %cst_31 = arith.constant 2.000000e+00 : f32
    %55 = vector.broadcast %cst_31 : f32 to vector<256x16xf32>
    %56 = arith.addf %54, %55 : vector<256x16xf32>
    %57 = arith.mulf %54, %56 : vector<256x16xf32>
    %58 = arith.mulf %51, %57 : vector<256x16xf32>
    %cst_32 = arith.constant 2.000000e+00 : f32
    %59 = vector.broadcast %cst_32 : f32 to vector<256x16xf32>
    %60 = arith.addf %57, %59 : vector<256x16xf32>
    %61 = tpu.reciprocal %60 {approx = true} : vector<256x16xf32> -> vector<256x16xf32>
    %62 = arith.mulf %58, %61 : vector<256x16xf32>
    %c0_33 = arith.constant 0 : index
    %c0_34 = arith.constant 0 : index
    %c0_35 = arith.constant 0 : index
    %63 = vector.load %arg3[%c0_33, %c0_34, %c0_35] : memref<1x1x32xf32, #tpu.memory_space<vmem>>, vector<1x1x32xf32>
    %64 = vector.shape_cast %63 : vector<1x1x32xf32> to vector<1x32xf32>
    %cst_36 = arith.constant 2.000000e+01 : f32
    %65 = vector.broadcast %cst_36 : f32 to vector<1x32xf32>
    %66 = arith.minimumf %64, %65 : vector<1x32xf32>
    %67 = math.exp %66 : vector<1x32xf32>
    %cst_37 = arith.constant 2.000000e+00 : f32
    %68 = vector.broadcast %cst_37 : f32 to vector<1x32xf32>
    %69 = arith.addf %67, %68 : vector<1x32xf32>
    %70 = arith.mulf %67, %69 : vector<1x32xf32>
    %71 = arith.mulf %64, %70 : vector<1x32xf32>
    %cst_38 = arith.constant 2.000000e+00 : f32
    %72 = vector.broadcast %cst_38 : f32 to vector<1x32xf32>
    %73 = arith.addf %70, %72 : vector<1x32xf32>
    %74 = tpu.reciprocal %73 {approx = true} : vector<1x32xf32> -> vector<1x32xf32>
    %75 = arith.mulf %71, %74 : vector<1x32xf32>
    %c0_39 = arith.constant 0 : index
    %c0_40 = arith.constant 0 : index
    %76 = vector.load %arg9[%c0_39, %c0_40] : memref<32x16xf32, #tpu.memory_space<vmem>>, vector<32x16xf32>
    %cst_41 = arith.constant dense<0.000000e+00> : vector<1x16xf32>
    %77 = tpu.matmul %75, %76, %cst_41 {dimension_numbers = #tpu.dot_dimension_numbers<[1], [0], [0], [1], [0, 0, 1, 1], [], []>} : vector<1x32xf32>, vector<32x16xf32>, vector<1x16xf32> -> vector<1x16xf32>
    %c0_42 = arith.constant 0 : index
    %c0_43 = arith.constant 0 : index
    %78 = vector.load %arg10[%c0_42, %c0_43] : memref<1x16xf32, #tpu.memory_space<vmem>>, vector<1x16xf32>
    %79 = arith.addf %77, %78 : vector<1x16xf32>
    %80 = vector.broadcast %79 : vector<1x16xf32> to vector<256x16xf32>
    %81 = arith.addf %62, %80 : vector<256x16xf32>
    %cst_44 = arith.constant 0.000000e+00 : f32
    %82 = vector.broadcast %cst_44 : f32 to vector<24x16xf32>
    %c0_45 = arith.constant 0 : index
    %c0_46 = arith.constant 0 : index
    %83 = vector.load %arg18[%c0_45, %c0_46] : memref<304x16xf32, #tpu.memory_space<vmem>>, vector<24x16xf32>
    tpu.vector_store %arg18[%c0_45, %c0_46], %82 {strides = array<i32>} : memref<304x16xf32, #tpu.memory_space<vmem>>, vector<24x16xf32>,
    %cst_47 = arith.constant 0.000000e+00 : f32
    %84 = vector.broadcast %cst_47 : f32 to vector<24x16xf32>
    %c280 = arith.constant 280 : index
    %c0_48 = arith.constant 0 : index
    %85 = vector.load %arg18[%c280, %c0_48] : memref<304x16xf32, #tpu.memory_space<vmem>>, vector<24x16xf32>
    tpu.vector_store %arg18[%c280, %c0_48], %84 {strides = array<i32>} : memref<304x16xf32, #tpu.memory_space<vmem>>, vector<24x16xf32>,
    %c24 = arith.constant 24 : index
    %c0_49 = arith.constant 0 : index
    %86 = vector.load %arg18[%c24, %c0_49] : memref<304x16xf32, #tpu.memory_space<vmem>>, vector<256x16xf32>
    tpu.vector_store %arg18[%c24, %c0_49], %81 {strides = array<i32>} : memref<304x16xf32, #tpu.memory_space<vmem>>, vector<256x16xf32>,
    %87 = vector.shape_cast %11 : vector<256x1xi1> to vector<256x1xi1>
    %88 = vector.broadcast %87 : vector<256x1xi1> to vector<256x16xi1>
    %89 = vector.shape_cast %13 : vector<256x1xi1> to vector<256x1xi1>
    %90 = vector.broadcast %89 : vector<256x1xi1> to vector<256x16xi1>
    %c7 = arith.constant 7 : index
    %c0_50 = arith.constant 0 : index
    %91 = vector.load %arg18[%c7, %c0_50] : memref<304x16xf32, #tpu.memory_space<vmem>>, vector<256x16xf32>
    %cst_51 = arith.constant 0.000000e+00 : f32
    %92 = vector.broadcast %cst_51 : f32 to vector<256x16xf32>
    %93 = arith.select %88, %91, %92 : vector<256x16xi1>, vector<256x16xf32>
    %c0_52 = arith.constant 0 : index
    %c0_53 = arith.constant 0 : index
    %c0_54 = arith.constant 0 : index
    %94 = vector.load %arg11[%c0_52, %c0_53, %c0_54] : memref<9x16x16xf32, #tpu.memory_space<vmem>>, vector<1x16x16xf32>
    %95 = vector.shape_cast %94 : vector<1x16x16xf32> to vector<16x16xf32>
    %cst_55 = arith.constant dense<0.000000e+00> : vector<256x16xf32>
    %96 = tpu.matmul %93, %95, %cst_55 {dimension_numbers = #tpu.dot_dimension_numbers<[1], [0], [0], [1], [0, 0, 1, 1], [], []>} : vector<256x16xf32>, vector<16x16xf32>, vector<256x16xf32> -> vector<256x16xf32>
    %c8 = arith.constant 8 : index
    %c0_56 = arith.constant 0 : index
    %97 = vector.load %arg18[%c8, %c0_56] : memref<304x16xf32, #tpu.memory_space<vmem>>, vector<256x16xf32>
    %c1 = arith.constant 1 : index
    %c0_57 = arith.constant 0 : index
    %c0_58 = arith.constant 0 : index
    %98 = vector.load %arg11[%c1, %c0_57, %c0_58] : memref<9x16x16xf32, #tpu.memory_space<vmem>>, vector<1x16x16xf32>
    %99 = vector.shape_cast %98 : vector<1x16x16xf32> to vector<16x16xf32>
    %cst_59 = arith.constant dense<0.000000e+00> : vector<256x16xf32>
    %100 = tpu.matmul %97, %99, %cst_59 {dimension_numbers = #tpu.dot_dimension_numbers<[1], [0], [0], [1], [0, 0, 1, 1], [], []>} : vector<256x16xf32>, vector<16x16xf32>, vector<256x16xf32> -> vector<256x16xf32>
    %101 = arith.addf %96, %100 : vector<256x16xf32>
    %c9 = arith.constant 9 : index
    %c0_60 = arith.constant 0 : index
    %102 = vector.load %arg18[%c9, %c0_60] : memref<304x16xf32, #tpu.memory_space<vmem>>, vector<256x16xf32>
    %cst_61 = arith.constant 0.000000e+00 : f32
    %103 = vector.broadcast %cst_61 : f32 to vector<256x16xf32>
    %104 = arith.select %90, %102, %103 : vector<256x16xi1>, vector<256x16xf32>
    %c2 = arith.constant 2 : index
    %c0_62 = arith.constant 0 : index
    %c0_63 = arith.constant 0 : index
    %105 = vector.load %arg11[%c2, %c0_62, %c0_63] : memref<9x16x16xf32, #tpu.memory_space<vmem>>, vector<1x16x16xf32>
    %106 = vector.shape_cast %105 : vector<1x16x16xf32> to vector<16x16xf32>
    %cst_64 = arith.constant dense<0.000000e+00> : vector<256x16xf32>
    %107 = tpu.matmul %104, %106, %cst_64 {dimension_numbers = #tpu.dot_dimension_numbers<[1], [0], [0], [1], [0, 0, 1, 1], [], []>} : vector<256x16xf32>, vector<16x16xf32>, vector<256x16xf32> -> vector<256x16xf32>
    %108 = arith.addf %101, %107 : vector<256x16xf32>
    %c23 = arith.constant 23 : index
    %c0_65 = arith.constant 0 : index
    %109 = vector.load %arg18[%c23, %c0_65] : memref<304x16xf32, #tpu.memory_space<vmem>>, vector<256x16xf32>
    %cst_66 = arith.constant 0.000000e+00 : f32
    %110 = vector.broadcast %cst_66 : f32 to vector<256x16xf32>
    %111 = arith.select %88, %109, %110 : vector<256x16xi1>, vector<256x16xf32>
    %c3 = arith.constant 3 : index
    %c0_67 = arith.constant 0 : index
    %c0_68 = arith.constant 0 : index
    %112 = vector.load %arg11[%c3, %c0_67, %c0_68] : memref<9x16x16xf32, #tpu.memory_space<vmem>>, vector<1x16x16xf32>
    %113 = vector.shape_cast %112 : vector<1x16x16xf32> to vector<16x16xf32>
    %cst_69 = arith.constant dense<0.000000e+00> : vector<256x16xf32>
    %114 = tpu.matmul %111, %113, %cst_69 {dimension_numbers = #tpu.dot_dimension_numbers<[1], [0], [0], [1], [0, 0, 1, 1], [], []>} : vector<256x16xf32>, vector<16x16xf32>, vector<256x16xf32> -> vector<256x16xf32>
    %115 = arith.addf %108, %114 : vector<256x16xf32>
    %c24_70 = arith.constant 24 : index
    %c0_71 = arith.constant 0 : index
    %116 = vector.load %arg18[%c24_70, %c0_71] : memref<304x16xf32, #tpu.memory_space<vmem>>, vector<256x16xf32>
    %c4 = arith.constant 4 : index
    %c0_72 = arith.constant 0 : index
    %c0_73 = arith.constant 0 : index
    %117 = vector.load %arg11[%c4, %c0_72, %c0_73] : memref<9x16x16xf32, #tpu.memory_space<vmem>>, vector<1x16x16xf32>
    %118 = vector.shape_cast %117 : vector<1x16x16xf32> to vector<16x16xf32>
    %cst_74 = arith.constant dense<0.000000e+00> : vector<256x16xf32>
    %119 = tpu.matmul %116, %118, %cst_74 {dimension_numbers = #tpu.dot_dimension_numbers<[1], [0], [0], [1], [0, 0, 1, 1], [], []>} : vector<256x16xf32>, vector<16x16xf32>, vector<256x16xf32> -> vector<256x16xf32>
    %120 = arith.addf %115, %119 : vector<256x16xf32>
    %c25 = arith.constant 25 : index
    %c0_75 = arith.constant 0 : index
    %121 = vector.load %arg18[%c25, %c0_75] : memref<304x16xf32, #tpu.memory_space<vmem>>, vector<256x16xf32>
    %cst_76 = arith.constant 0.000000e+00 : f32
    %122 = vector.broadcast %cst_76 : f32 to vector<256x16xf32>
    %123 = arith.select %90, %121, %122 : vector<256x16xi1>, vector<256x16xf32>
    %c5 = arith.constant 5 : index
    %c0_77 = arith.constant 0 : index
    %c0_78 = arith.constant 0 : index
    %124 = vector.load %arg11[%c5, %c0_77, %c0_78] : memref<9x16x16xf32, #tpu.memory_space<vmem>>, vector<1x16x16xf32>
    %125 = vector.shape_cast %124 : vector<1x16x16xf32> to vector<16x16xf32>
    %cst_79 = arith.constant dense<0.000000e+00> : vector<256x16xf32>
    %126 = tpu.matmul %123, %125, %cst_79 {dimension_numbers = #tpu.dot_dimension_numbers<[1], [0], [0], [1], [0, 0, 1, 1], [], []>} : vector<256x16xf32>, vector<16x16xf32>, vector<256x16xf32> -> vector<256x16xf32>
    %127 = arith.addf %120, %126 : vector<256x16xf32>
    %c39 = arith.constant 39 : index
    %c0_80 = arith.constant 0 : index
    %128 = vector.load %arg18[%c39, %c0_80] : memref<304x16xf32, #tpu.memory_space<vmem>>, vector<256x16xf32>
    %cst_81 = arith.constant 0.000000e+00 : f32
    %129 = vector.broadcast %cst_81 : f32 to vector<256x16xf32>
    %130 = arith.select %88, %128, %129 : vector<256x16xi1>, vector<256x16xf32>
    %c6 = arith.constant 6 : index
    %c0_82 = arith.constant 0 : index
    %c0_83 = arith.constant 0 : index
    %131 = vector.load %arg11[%c6, %c0_82, %c0_83] : memref<9x16x16xf32, #tpu.memory_space<vmem>>, vector<1x16x16xf32>
    %132 = vector.shape_cast %131 : vector<1x16x16xf32> to vector<16x16xf32>
    %cst_84 = arith.constant dense<0.000000e+00> : vector<256x16xf32>
    %133 = tpu.matmul %130, %132, %cst_84 {dimension_numbers = #tpu.dot_dimension_numbers<[1], [0], [0], [1], [0, 0, 1, 1], [], []>} : vector<256x16xf32>, vector<16x16xf32>, vector<256x16xf32> -> vector<256x16xf32>
    %134 = arith.addf %127, %133 : vector<256x16xf32>
    %c40 = arith.constant 40 : index
    %c0_85 = arith.constant 0 : index
    %135 = vector.load %arg18[%c40, %c0_85] : memref<304x16xf32, #tpu.memory_space<vmem>>, vector<256x16xf32>
    %c7_86 = arith.constant 7 : index
    %c0_87 = arith.constant 0 : index
    %c0_88 = arith.constant 0 : index
    %136 = vector.load %arg11[%c7_86, %c0_87, %c0_88] : memref<9x16x16xf32, #tpu.memory_space<vmem>>, vector<1x16x16xf32>
    %137 = vector.shape_cast %136 : vector<1x16x16xf32> to vector<16x16xf32>
    %cst_89 = arith.constant dense<0.000000e+00> : vector<256x16xf32>
    %138 = tpu.matmul %135, %137, %cst_89 {dimension_numbers = #tpu.dot_dimension_numbers<[1], [0], [0], [1], [0, 0, 1, 1], [], []>} : vector<256x16xf32>, vector<16x16xf32>, vector<256x16xf32> -> vector<256x16xf32>
    %139 = arith.addf %134, %138 : vector<256x16xf32>
    %c41 = arith.constant 41 : index
    %c0_90 = arith.constant 0 : index
    %140 = vector.load %arg18[%c41, %c0_90] : memref<304x16xf32, #tpu.memory_space<vmem>>, vector<256x16xf32>
    %cst_91 = arith.constant 0.000000e+00 : f32
    %141 = vector.broadcast %cst_91 : f32 to vector<256x16xf32>
    %142 = arith.select %90, %140, %141 : vector<256x16xi1>, vector<256x16xf32>
    %c8_92 = arith.constant 8 : index
    %c0_93 = arith.constant 0 : index
    %c0_94 = arith.constant 0 : index
    %143 = vector.load %arg11[%c8_92, %c0_93, %c0_94] : memref<9x16x16xf32, #tpu.memory_space<vmem>>, vector<1x16x16xf32>
    %144 = vector.shape_cast %143 : vector<1x16x16xf32> to vector<16x16xf32>
    %cst_95 = arith.constant dense<0.000000e+00> : vector<256x16xf32>
    %145 = tpu.matmul %142, %144, %cst_95 {dimension_numbers = #tpu.dot_dimension_numbers<[1], [0], [0], [1], [0, 0, 1, 1], [], []>} : vector<256x16xf32>, vector<16x16xf32>, vector<256x16xf32> -> vector<256x16xf32>
    %146 = arith.addf %139, %145 : vector<256x16xf32>
    %c0_96 = arith.constant 0 : index
    %c0_97 = arith.constant 0 : index
    %147 = vector.load %arg12[%c0_96, %c0_97] : memref<1x16xf32, #tpu.memory_space<vmem>>, vector<1x16xf32>
    %148 = vector.broadcast %147 : vector<1x16xf32> to vector<256x16xf32>
    %149 = arith.addf %146, %148 : vector<256x16xf32>
    %cst_98 = arith.constant dense<0.000000e+00> : vector<16xf32>
    %150 = vector.multi_reduction <add>, %149, %cst_98 [0] : vector<256x16xf32> to vector<16xf32>
    %151 = vector.shape_cast %150 : vector<16xf32> to vector<1x16xf32>
    %152 = arith.mulf %149, %149 : vector<256x16xf32>
    %cst_99 = arith.constant dense<0.000000e+00> : vector<16xf32>
    %153 = vector.multi_reduction <add>, %152, %cst_99 [0] : vector<256x16xf32> to vector<16xf32>
    %154 = vector.shape_cast %153 : vector<16xf32> to vector<1x16xf32>
    %c0_100 = arith.constant 0 : index
    %c0_101 = arith.constant 0 : index
    %155 = vector.load %arg4[%c0_100, %c0_101] : memref<16x16xf32, #tpu.memory_space<vmem>>, vector<16x16xf32>
    %cst_102 = arith.constant dense<0.000000e+00> : vector<1x16xf32>
    %156 = tpu.matmul %151, %155, %cst_102 {dimension_numbers = #tpu.dot_dimension_numbers<[1], [0], [0], [1], [0, 0, 1, 1], [], []>} : vector<1x16xf32>, vector<16x16xf32>, vector<1x16xf32> -> vector<1x16xf32>
    %c0_103 = arith.constant 0 : index
    %c0_104 = arith.constant 0 : index
    %157 = vector.load %arg4[%c0_103, %c0_104] : memref<16x16xf32, #tpu.memory_space<vmem>>, vector<16x16xf32>
    %cst_105 = arith.constant dense<0.000000e+00> : vector<1x16xf32>
    %158 = tpu.matmul %154, %157, %cst_105 {dimension_numbers = #tpu.dot_dimension_numbers<[1], [0], [0], [1], [0, 0, 1, 1], [], []>} : vector<1x16xf32>, vector<16x16xf32>, vector<1x16xf32> -> vector<1x16xf32>
    %cst_106 = arith.constant 0.001953125 : f32
    %159 = vector.broadcast %cst_106 : f32 to vector<1x16xf32>
    %160 = arith.mulf %156, %159 : vector<1x16xf32>
    %cst_107 = arith.constant 0.001953125 : f32
    %161 = vector.broadcast %cst_107 : f32 to vector<1x16xf32>
    %162 = arith.mulf %158, %161 : vector<1x16xf32>
    %163 = arith.mulf %160, %160 : vector<1x16xf32>
    %164 = arith.subf %162, %163 : vector<1x16xf32>
    %cst_108 = arith.constant 0.000000e+00 : f32
    %165 = vector.broadcast %cst_108 : f32 to vector<1x16xf32>
    %166 = arith.maximumf %164, %165 : vector<1x16xf32>
    %cst_109 = arith.constant 9.99999974E-6 : f32
    %167 = vector.broadcast %cst_109 : f32 to vector<1x16xf32>
    %168 = arith.addf %166, %167 : vector<1x16xf32>
    %169 = math.rsqrt %168 : vector<1x16xf32>
    %c0_110 = arith.constant 0 : index
    %c0_111 = arith.constant 0 : index
    %170 = vector.load %arg13[%c0_110, %c0_111] : memref<1x16xf32, #tpu.memory_space<vmem>>, vector<1x16xf32>
    %171 = arith.mulf %169, %170 : vector<1x16xf32>
    %c0_112 = arith.constant 0 : index
    %c0_113 = arith.constant 0 : index
    %172 = vector.load %arg14[%c0_112, %c0_113] : memref<1x16xf32, #tpu.memory_space<vmem>>, vector<1x16xf32>
    %173 = arith.mulf %160, %171 : vector<1x16xf32>
    %174 = arith.subf %172, %173 : vector<1x16xf32>
    %175 = vector.broadcast %171 : vector<1x16xf32> to vector<256x16xf32>
    %176 = arith.mulf %149, %175 : vector<256x16xf32>
    %177 = vector.broadcast %174 : vector<1x16xf32> to vector<256x16xf32>
    %178 = arith.addf %176, %177 : vector<256x16xf32>
    %cst_114 = arith.constant 2.000000e+01 : f32
    %179 = vector.broadcast %cst_114 : f32 to vector<256x16xf32>
    %180 = arith.minimumf %178, %179 : vector<256x16xf32>
    %181 = math.exp %180 : vector<256x16xf32>
    %cst_115 = arith.constant 2.000000e+00 : f32
    %182 = vector.broadcast %cst_115 : f32 to vector<256x16xf32>
    %183 = arith.addf %181, %182 : vector<256x16xf32>
    %184 = arith.mulf %181, %183 : vector<256x16xf32>
    %185 = arith.mulf %178, %184 : vector<256x16xf32>
    %cst_116 = arith.constant 2.000000e+00 : f32
    %186 = vector.broadcast %cst_116 : f32 to vector<256x16xf32>
    %187 = arith.addf %184, %186 : vector<256x16xf32>
    %188 = tpu.reciprocal %187 {approx = true} : vector<256x16xf32> -> vector<256x16xf32>
    %189 = arith.mulf %185, %188 : vector<256x16xf32>
    %c0_117 = arith.constant 0 : index
    %c0_118 = arith.constant 0 : index
    %190 = vector.load %arg15[%c0_117, %c0_118] : memref<4x16xf32, #tpu.memory_space<vmem>>, vector<4x16xf32>
    %cst_119 = arith.constant dense<0.000000e+00> : vector<256x16xf32>
    %191 = tpu.matmul %22, %190, %cst_119 {dimension_numbers = #tpu.dot_dimension_numbers<[1], [0], [0], [1], [0, 0, 1, 1], [], []>} : vector<256x4xf32>, vector<4x16xf32>, vector<256x16xf32> -> vector<256x16xf32>
    %c0_120 = arith.constant 0 : index
    %c0_121 = arith.constant 0 : index
    %192 = vector.load %arg16[%c0_120, %c0_121] : memref<1x16xf32, #tpu.memory_space<vmem>>, vector<1x16xf32>
    %193 = vector.broadcast %192 : vector<1x16xf32> to vector<256x16xf32>
    %194 = arith.addf %191, %193 : vector<256x16xf32>
    %195 = arith.addf %189, %194 : vector<256x16xf32>
    %c0_122 = arith.constant 0 : index
    %c0_123 = arith.constant 0 : index
    %c0_124 = arith.constant 0 : index
    %196 = vector.load %arg17[%c0_122, %c0_123, %c0_124] : memref<1x256x16xf32, #tpu.memory_space<vmem>>, vector<1x256x16xf32>
    %197 = vector.shape_cast %196 : vector<1x256x16xf32> to vector<256x16xf32>
    %198 = vector.shape_cast %195 : vector<256x16xf32> to vector<1x256x16xf32>
    tpu.vector_store %arg17[%c0_122, %c0_123, %c0_124], %198 {strides = array<i32>} : memref<1x256x16xf32, #tpu.memory_space<vmem>>, vector<1x256x16xf32>,
    return
  }
  func.func @transform_0(%arg0: i32) -> (i32, i32, i32) {
    %c0_i32 = arith.constant 0 : i32
    %c0_i32_0 = arith.constant 0 : i32
    %c0_i32_1 = arith.constant 0 : i32
    return %arg0, %c0_i32, %c0_i32_0 : i32, i32, i32
  }
  func.func @transform_1(%arg0: i32) -> (i32, i32, i32) {
    %c0_i32 = arith.constant 0 : i32
    %c0_i32_0 = arith.constant 0 : i32
    %c0_i32_1 = arith.constant 0 : i32
    return %arg0, %c0_i32, %c0_i32_0 : i32, i32, i32
  }
  func.func @transform_2(%arg0: i32) -> (i32, i32, i32) {
    %c0_i32 = arith.constant 0 : i32
    %c0_i32_0 = arith.constant 0 : i32
    %c0_i32_1 = arith.constant 0 : i32
    return %arg0, %c0_i32, %c0_i32_0 : i32, i32, i32
  }
  func.func @transform_3(%arg0: i32) -> (i32, i32) {
    %c0_i32 = arith.constant 0 : i32
    %c0_i32_0 = arith.constant 0 : i32
    %c0_i32_1 = arith.constant 0 : i32
    return %c0_i32, %c0_i32_0 : i32, i32
  }
  func.func @transform_4(%arg0: i32) -> (i32, i32) {
    %c0_i32 = arith.constant 0 : i32
    %c0_i32_0 = arith.constant 0 : i32
    %c0_i32_1 = arith.constant 0 : i32
    return %c0_i32, %c0_i32_0 : i32, i32
  }
  func.func @transform_5(%arg0: i32) -> (i32, i32) {
    %c0_i32 = arith.constant 0 : i32
    %c0_i32_0 = arith.constant 0 : i32
    %c0_i32_1 = arith.constant 0 : i32
    return %c0_i32, %c0_i32_0 : i32, i32
  }
  func.func @transform_6(%arg0: i32) -> (i32, i32) {
    %c0_i32 = arith.constant 0 : i32
    %c0_i32_0 = arith.constant 0 : i32
    %c0_i32_1 = arith.constant 0 : i32
    return %c0_i32, %c0_i32_0 : i32, i32
  }
  func.func @transform_7(%arg0: i32) -> (i32, i32) {
    %c0_i32 = arith.constant 0 : i32
    %c0_i32_0 = arith.constant 0 : i32
    %c0_i32_1 = arith.constant 0 : i32
    return %c0_i32, %c0_i32_0 : i32, i32
  }
  func.func @transform_8(%arg0: i32) -> (i32, i32) {
    %c0_i32 = arith.constant 0 : i32
    %c0_i32_0 = arith.constant 0 : i32
    %c0_i32_1 = arith.constant 0 : i32
    return %c0_i32, %c0_i32_0 : i32, i32
  }
  func.func @transform_9(%arg0: i32) -> (i32, i32) {
    %c0_i32 = arith.constant 0 : i32
    %c0_i32_0 = arith.constant 0 : i32
    %c0_i32_1 = arith.constant 0 : i32
    return %c0_i32, %c0_i32_0 : i32, i32
  }
  func.func @transform_10(%arg0: i32) -> (i32, i32, i32) {
    %c0_i32 = arith.constant 0 : i32
    %c0_i32_0 = arith.constant 0 : i32
    %c0_i32_1 = arith.constant 0 : i32
    %c0_i32_2 = arith.constant 0 : i32
    return %c0_i32, %c0_i32_0, %c0_i32_1 : i32, i32, i32
  }
  func.func @transform_11(%arg0: i32) -> (i32, i32) {
    %c0_i32 = arith.constant 0 : i32
    %c0_i32_0 = arith.constant 0 : i32
    %c0_i32_1 = arith.constant 0 : i32
    return %c0_i32, %c0_i32_0 : i32, i32
  }
  func.func @transform_12(%arg0: i32) -> (i32, i32) {
    %c0_i32 = arith.constant 0 : i32
    %c0_i32_0 = arith.constant 0 : i32
    %c0_i32_1 = arith.constant 0 : i32
    return %c0_i32, %c0_i32_0 : i32, i32
  }
  func.func @transform_13(%arg0: i32) -> (i32, i32) {
    %c0_i32 = arith.constant 0 : i32
    %c0_i32_0 = arith.constant 0 : i32
    %c0_i32_1 = arith.constant 0 : i32
    return %c0_i32, %c0_i32_0 : i32, i32
  }
  func.func @transform_14(%arg0: i32) -> (i32, i32) {
    %c0_i32 = arith.constant 0 : i32
    %c0_i32_0 = arith.constant 0 : i32
    %c0_i32_1 = arith.constant 0 : i32
    return %c0_i32, %c0_i32_0 : i32, i32
  }
  func.func @transform_15(%arg0: i32) -> (i32, i32) {
    %c0_i32 = arith.constant 0 : i32
    %c0_i32_0 = arith.constant 0 : i32
    %c0_i32_1 = arith.constant 0 : i32
    return %c0_i32, %c0_i32_0 : i32, i32
  }
  func.func @transform_16(%arg0: i32) -> (i32, i32, i32) {
    %c0_i32 = arith.constant 0 : i32
    %c0_i32_0 = arith.constant 0 : i32
    %c0_i32_1 = arith.constant 0 : i32
    return %arg0, %c0_i32, %c0_i32_0 : i32, i32, i32
  }
}

</mosaic_0001>

<llo_original>
// kernel: tpu_custom_call.1
$region0: #{tpu_custom_call.1}
  #allocation0 [shape = 'u32[]', space=smem, size = 0x4, offset = 0x4, fixed_abs, tag = 'smem constant byte address 0x4 - core index']
  #allocation1 [shape = 'u32[144,128]{1,0:T(1,128)}', space=vmem, size = 0x12000, scoped, tag = 'internal scratch']
  #allocation2 [shape = 'f32[304,16]{1,0:T(8,128)}', space=vmem, size = 0x26000, scoped, tag = 'scratch operand']
  %s0 = inlined_call_operand.vmem [shape: f32[2,256,36], index: 0, kind: input, shape index: {}]
  %s1 = inlined_call_operand.vmem [shape: f32[2,256,4], index: 1, kind: input, shape index: {}]
  %s2 = inlined_call_operand.vmem [shape: f32[2,1,32], index: 2, kind: input, shape index: {}]
  %s3 = inlined_call_operand.vmem [shape: f32[16,16], index: 3, kind: input, shape index: {}]
  %s4 = inlined_call_operand.vmem [shape: f32[36,16], index: 4, kind: input, shape index: {}]
  %s5 = inlined_call_operand.vmem [shape: f32[1,16], index: 5, kind: input, shape index: {}]
  %s6 = inlined_call_operand.vmem [shape: f32[1,16], index: 6, kind: input, shape index: {}]
  %s7 = inlined_call_operand.vmem [shape: f32[1,16], index: 7, kind: input, shape index: {}]
  %s8 = inlined_call_operand.vmem [shape: f32[32,16], index: 8, kind: input, shape index: {}]
  %s9 = inlined_call_operand.vmem [shape: f32[1,16], index: 9, kind: input, shape index: {}]
  %s10 = inlined_call_operand.vmem [shape: f32[9,16,16], index: 10, kind: input, shape index: {}]
  %s11 = inlined_call_operand.vmem [shape: f32[1,16], index: 11, kind: input, shape index: {}]
  %s12 = inlined_call_operand.vmem [shape: f32[1,16], index: 12, kind: input, shape index: {}]
  %s13 = inlined_call_operand.vmem [shape: f32[1,16], index: 13, kind: input, shape index: {}]
  %s14 = inlined_call_operand.vmem [shape: f32[4,16], index: 14, kind: input, shape index: {}]
  %s15 = inlined_call_operand.vmem [shape: f32[1,16], index: 15, kind: input, shape index: {}]
  %s16 = inlined_call_operand.vmem [shape: f32[2,256,16], index: 16, kind: output, shape index: {}]
  %s17 = sld [smem:[#allocation0]]
  $region97: #{tpu_custom_call.1} parent=0
    _
  %s19 = ssub.s32 1, %s17
  %s20 = scalar_select 0, %s19, %s17
  loop: start=0, step=1, limit=4
  $region2: #{tpu_custom_call.1} parent=0 // loop_pre_header
    _
  $region3: #{tpu_custom_call.1} parent=0 // loop_header
    %s22 = sphi 0, %s26
    %p23 = scmp.ge.s32.totalorder %s22, 4
    %s32 = sphi 0, %s34
    %s35 = sphi 0, %s32
    %s36 = sphi 0, %s35
    %s52 = sphi 0, %s36
    %s58 = sphi 0, %s60
    %s61 = sphi 0, %s58
    %s62 = sphi 0, %s61
    %s78 = sphi 0, %s62
    %s84 = sphi 0, %s86
    %s87 = sphi 0, %s84
    %s88 = sphi 0, %s87
    %s104 = sphi 0, %s88
    %s108 = sphi 0, %s108
    %s110 = sphi 0, %s108
    %s111 = sphi 0, %s110
    %s125 = sphi 0, %s111
    %s129 = sphi 0, %s129
    %s131 = sphi 0, %s129
    %s132 = sphi 0, %s131
    %s146 = sphi 0, %s132
    %s150 = sphi 0, %s150
    %s152 = sphi 0, %s150
    %s153 = sphi 0, %s152
    %s167 = sphi 0, %s153
    %s171 = sphi 0, %s171
    %s173 = sphi 0, %s171
    %s174 = sphi 0, %s173
    %s188 = sphi 0, %s174
    %s192 = sphi 0, %s192
    %s194 = sphi 0, %s192
    %s195 = sphi 0, %s194
    %s209 = sphi 0, %s195
    %s213 = sphi 0, %s213
    %s215 = sphi 0, %s213
    %s216 = sphi 0, %s215
    %s230 = sphi 0, %s216
    %s234 = sphi 0, %s234
    %s236 = sphi 0, %s234
    %s237 = sphi 0, %s236
    %s251 = sphi 0, %s237
    %s255 = sphi 0, %s255
    %s257 = sphi 0, %s255
    %s258 = sphi 0, %s257
    %s272 = sphi 0, %s258
    %s276 = sphi 0, %s276
    %s278 = sphi 0, %s276
    %s279 = sphi 0, %s278
    %s293 = sphi 0, %s279
    %s297 = sphi 0, %s297
    %s299 = sphi 0, %s297
    %s300 = sphi 0, %s299
    %s314 = sphi 0, %s300
    %s318 = sphi 0, %s318
    %s320 = sphi 0, %s318
    %s321 = sphi 0, %s320
    %s335 = sphi 0, %s321
    %s339 = sphi 0, %s339
    %s341 = sphi 0, %s339
    %s342 = sphi 0, %s341
    %s356 = sphi 0, %s342
    %s360 = sphi 0, %s360
    %s362 = sphi 0, %s360
    %s363 = sphi 0, %s362
    %s377 = sphi 0, %s363
    %s383 = sphi 0, %s385
    %s386 = sphi 0, %s383
    %s387 = sphi 0, %s386
    %s403 = sphi 0, %s387
  $region4: #{tpu_custom_call.1} parent=0 // loop_header_branch
    %25 = sbr.rel (%p23) target = $region8
  $region5: #{tpu_custom_call.1} parent=0 // loop_body
    %s27 = ssub.s32 %s22, 1
    %s28 = ssub.s32 %s22, 2
    %s29 = sadd.s32 %s22, 1
    %s30 = ssub.s32 %s22, %s29
    %p31 = scmp.eq.s32.totalorder %s30, 0
    %s33 = sadd.s32 %s32, 1
    %s34 = scalar_select %p31, %s32, %s33
    %p37 = pneg %p31
    %p38 = scmp.eq.s32.totalorder %s22, 1
    %p39 = por %p37, %p38
    %p40 = scmp.ne.s32.totalorder %s32, %s35
    %p41 = scmp.eq.s32.totalorder %s22, 0
    %p42 = por %p40, %p41
    %p43 = scmp.ne.s32.totalorder %s32, %s35
    %p44 = scmp.eq.s32.totalorder %s27, 1
    %p45 = por %p43, %p44
    %p46 = scmp.ne.s32.totalorder %s35, %s36
    %p47 = scmp.eq.s32.totalorder %s27, 0
    %p48 = por %p46, %p47
    %p49 = scmp.ne.s32.totalorder %s35, %s36
    %p50 = scmp.eq.s32.totalorder %s28, 1
    %p51 = por %p49, %p50
    %p53 = scmp.ne.s32.totalorder %s36, %s52
    %p54 = scmp.eq.s32.totalorder %s28, 0
    %p55 = por %p53, %p54
    %s56 = ssub.s32 %s22, %s29
    %p57 = scmp.eq.s32.totalorder %s56, 0
    %s59 = sadd.s32 %s58, 1
    %s60 = scalar_select %p57, %s58, %s59
    %p63 = pneg %p57
    %p64 = scmp.eq.s32.totalorder %s22, 1
    %p65 = por %p63, %p64
    %p66 = scmp.ne.s32.totalorder %s58, %s61
    %p67 = scmp.eq.s32.totalorder %s22, 0
    %p68 = por %p66, %p67
    %p69 = scmp.ne.s32.totalorder %s58, %s61
    %p70 = scmp.eq.s32.totalorder %s27, 1
    %p71 = por %p69, %p70
    %p72 = scmp.ne.s32.totalorder %s61, %s62
    %p73 = scmp.eq.s32.totalorder %s27, 0
    %p74 = por %p72, %p73
    %p75 = scmp.ne.s32.totalorder %s61, %s62
    %p76 = scmp.eq.s32.totalorder %s28, 1
    %p77 = por %p75, %p76
    %p79 = scmp.ne.s32.totalorder %s62, %s78
    %p80 = scmp.eq.s32.totalorder %s28, 0
    %p81 = por %p79, %p80
    %s82 = ssub.s32 %s22, %s29
    %p83 = scmp.eq.s32.totalorder %s82, 0
    %s85 = sadd.s32 %s84, 1
    %s86 = scalar_select %p83, %s84, %s85
    %p89 = pneg %p83
    %p90 = scmp.eq.s32.totalorder %s22, 1
    %p91 = por %p89, %p90
    %p92 = scmp.ne.s32.totalorder %s84, %s87
    %p93 = scmp.eq.s32.totalorder %s22, 0
    %p94 = por %p92, %p93
    %p95 = scmp.ne.s32.totalorder %s84, %s87
    %p96 = scmp.eq.s32.totalorder %s27, 1
    %p97 = por %p95, %p96
    %p98 = scmp.ne.s32.totalorder %s87, %s88
    %p99 = scmp.eq.s32.totalorder %s27, 0
    %p100 = por %p98, %p99
    %p101 = scmp.ne.s32.totalorder %s87, %s88
    %p102 = scmp.eq.s32.totalorder %s28, 1
    %p103 = por %p101, %p102
    %p105 = scmp.ne.s32.totalorder %s88, %s104
    %p106 = scmp.eq.s32.totalorder %s28, 0
    %p107 = por %p105, %p106
    %s109 = sadd.s32 %s108, 1
    %p112 = scmp.eq.s32.totalorder %s22, 1
    %p113 = scmp.ne.s32.totalorder %s108, %s110
    %p114 = scmp.eq.s32.totalorder %s22, 0
    %p115 = por %p113, %p114
    %p116 = scmp.ne.s32.totalorder %s108, %s110
    %p117 = scmp.eq.s32.totalorder %s27, 1
    %p118 = por %p116, %p117
    %p119 = scmp.ne.s32.totalorder %s110, %s111
    %p120 = scmp.eq.s32.totalorder %s27, 0
    %p121 = por %p119, %p120
    %p122 = scmp.ne.s32.totalorder %s110, %s111
    %p123 = scmp.eq.s32.totalorder %s28, 1
    %p124 = por %p122, %p123
    %p126 = scmp.ne.s32.totalorder %s111, %s125
    %p127 = scmp.eq.s32.totalorder %s28, 0
    %p128 = por %p126, %p127
    %s130 = sadd.s32 %s129, 1
    %p133 = scmp.eq.s32.totalorder %s22, 1
    %p134 = scmp.ne.s32.totalorder %s129, %s131
    %p135 = scmp.eq.s32.totalorder %s22, 0
    %p136 = por %p134, %p135
    %p137 = scmp.ne.s32.totalorder %s129, %s131
    %p138 = scmp.eq.s32.totalorder %s27, 1
    %p139 = por %p137, %p138
    %p140 = scmp.ne.s32.totalorder %s131, %s132
    %p141 = scmp.eq.s32.totalorder %s27, 0
    %p142 = por %p140, %p141
    %p143 = scmp.ne.s32.totalorder %s131, %s132
    %p144 = scmp.eq.s32.totalorder %s28, 1
    %p145 = por %p143, %p144
    %p147 = scmp.ne.s32.totalorder %s132, %s146
    %p148 = scmp.eq.s32.totalorder %s28, 0
    %p149 = por %p147, %p148
    %s151 = sadd.s32 %s150, 1
    %p154 = scmp.eq.s32.totalorder %s22, 1
    %p155 = scmp.ne.s32.totalorder %s150, %s152
    %p156 = scmp.eq.s32.totalorder %s22, 0
    %p157 = por %p155, %p156
    %p158 = scmp.ne.s32.totalorder %s150, %s152
    %p159 = scmp.eq.s32.totalorder %s27, 1
    %p160 = por %p158, %p159
    %p161 = scmp.ne.s32.totalorder %s152, %s153
    %p162 = scmp.eq.s32.totalorder %s27, 0
    %p163 = por %p161, %p162
    %p164 = scmp.ne.s32.totalorder %s152, %s153
    %p165 = scmp.eq.s32.totalorder %s28, 1
    %p166 = por %p164, %p165
    %p168 = scmp.ne.s32.totalorder %s153, %s167
    %p169 = scmp.eq.s32.totalorder %s28, 0
    %p170 = por %p168, %p169
    %s172 = sadd.s32 %s171, 1
    %p175 = scmp.eq.s32.totalorder %s22, 1
    %p176 = scmp.ne.s32.totalorder %s171, %s173
    %p177 = scmp.eq.s32.totalorder %s22, 0
    %p178 = por %p176, %p177
    %p179 = scmp.ne.s32.totalorder %s171, %s173
    %p180 = scmp.eq.s32.totalorder %s27, 1
    %p181 = por %p179, %p180
    %p182 = scmp.ne.s32.totalorder %s173, %s174
    %p183 = scmp.eq.s32.totalorder %s27, 0
    %p184 = por %p182, %p183
    %p185 = scmp.ne.s32.totalorder %s173, %s174
    %p186 = scmp.eq.s32.totalorder %s28, 1
    %p187 = por %p185, %p186
    %p189 = scmp.ne.s32.totalorder %s174, %s188
    %p190 = scmp.eq.s32.totalorder %s28, 0
    %p191 = por %p189, %p190
    %s193 = sadd.s32 %s192, 1
    %p196 = scmp.eq.s32.totalorder %s22, 1
    %p197 = scmp.ne.s32.totalorder %s192, %s194
    %p198 = scmp.eq.s32.totalorder %s22, 0
    %p199 = por %p197, %p198
    %p200 = scmp.ne.s32.totalorder %s192, %s194
    %p201 = scmp.eq.s32.totalorder %s27, 1
    %p202 = por %p200, %p201
    %p203 = scmp.ne.s32.totalorder %s194, %s195
    %p204 = scmp.eq.s32.totalorder %s27, 0
    %p205 = por %p203, %p204
    %p206 = scmp.ne.s32.totalorder %s194, %s195
    %p207 = scmp.eq.s32.totalorder %s28, 1
    %p208 = por %p206, %p207
    %p210 = scmp.ne.s32.totalorder %s195, %s209
    %p211 = scmp.eq.s32.totalorder %s28, 0
    %p212 = por %p210, %p211
    %s214 = sadd.s32 %s213, 1
    %p217 = scmp.eq.s32.totalorder %s22, 1
    %p218 = scmp.ne.s32.totalorder %s213, %s215
    %p219 = scmp.eq.s32.totalorder %s22, 0
    %p220 = por %p218, %p219
    %p221 = scmp.ne.s32.totalorder %s213, %s215
    %p222 = scmp.eq.s32.totalorder %s27, 1
    %p223 = por %p221, %p222
    %p224 = scmp.ne.s32.totalorder %s215, %s216
    %p225 = scmp.eq.s32.totalorder %s27, 0
    %p226 = por %p224, %p225
    %p227 = scmp.ne.s32.totalorder %s215, %s216
    %p228 = scmp.eq.s32.totalorder %s28, 1
    %p229 = por %p227, %p228
    %p231 = scmp.ne.s32.totalorder %s216, %s230
    %p232 = scmp.eq.s32.totalorder %s28, 0
    %p233 = por %p231, %p232
    %s235 = sadd.s32 %s234, 1
    %p238 = scmp.eq.s32.totalorder %s22, 1
    %p239 = scmp.ne.s32.totalorder %s234, %s236
    %p240 = scmp.eq.s32.totalorder %s22, 0
    %p241 = por %p239, %p240
    %p242 = scmp.ne.s32.totalorder %s234, %s236
    %p243 = scmp.eq.s32.totalorder %s27, 1
    %p244 = por %p242, %p243
    %p245 = scmp.ne.s32.totalorder %s236, %s237
    %p246 = scmp.eq.s32.totalorder %s27, 0
    %p247 = por %p245, %p246
    %p248 = scmp.ne.s32.totalorder %s236, %s237
    %p249 = scmp.eq.s32.totalorder %s28, 1
    %p250 = por %p248, %p249
    %p252 = scmp.ne.s32.totalorder %s237, %s251
    %p253 = scmp.eq.s32.totalorder %s28, 0
    %p254 = por %p252, %p253
    %s256 = sadd.s32 %s255, 1
    %p259 = scmp.eq.s32.totalorder %s22, 1
    %p260 = scmp.ne.s32.totalorder %s255, %s257
    %p261 = scmp.eq.s32.totalorder %s22, 0
    %p262 = por %p260, %p261
    %p263 = scmp.ne.s32.totalorder %s255, %s257
    %p264 = scmp.eq.s32.totalorder %s27, 1
    %p265 = por %p263, %p264
    %p266 = scmp.ne.s32.totalorder %s257, %s258
    %p267 = scmp.eq.s32.totalorder %s27, 0
    %p268 = por %p266, %p267
    %p269 = scmp.ne.s32.totalorder %s257, %s258
    %p270 = scmp.eq.s32.totalorder %s28, 1
    %p271 = por %p269, %p270
    %p273 = scmp.ne.s32.totalorder %s258, %s272
    %p274 = scmp.eq.s32.totalorder %s28, 0
    %p275 = por %p273, %p274
    %s277 = sadd.s32 %s276, 1
    %p280 = scmp.eq.s32.totalorder %s22, 1
    %p281 = scmp.ne.s32.totalorder %s276, %s278
    %p282 = scmp.eq.s32.totalorder %s22, 0
    %p283 = por %p281, %p282
    %p284 = scmp.ne.s32.totalorder %s276, %s278
    %p285 = scmp.eq.s32.totalorder %s27, 1
    %p286 = por %p284, %p285
    %p287 = scmp.ne.s32.totalorder %s278, %s279
    %p288 = scmp.eq.s32.totalorder %s27, 0
    %p289 = por %p287, %p288
    %p290 = scmp.ne.s32.totalorder %s278, %s279
    %p291 = scmp.eq.s32.totalorder %s28, 1
    %p292 = por %p290, %p291
    %p294 = scmp.ne.s32.totalorder %s279, %s293
    %p295 = scmp.eq.s32.totalorder %s28, 0
    %p296 = por %p294, %p295
    %s298 = sadd.s32 %s297, 1
    %p301 = scmp.eq.s32.totalorder %s22, 1
    %p302 = scmp.ne.s32.totalorder %s297, %s299
    %p303 = scmp.eq.s32.totalorder %s22, 0
    %p304 = por %p302, %p303
    %p305 = scmp.ne.s32.totalorder %s297, %s299
    %p306 = scmp.eq.s32.totalorder %s27, 1
    %p307 = por %p305, %p306
    %p308 = scmp.ne.s32.totalorder %s299, %s300
    %p309 = scmp.eq.s32.totalorder %s27, 0
    %p310 = por %p308, %p309
    %p311 = scmp.ne.s32.totalorder %s299, %s300
    %p312 = scmp.eq.s32.totalorder %s28, 1
    %p313 = por %p311, %p312
    %p315 = scmp.ne.s32.totalorder %s300, %s314
    %p316 = scmp.eq.s32.totalorder %s28, 0
    %p317 = por %p315, %p316
    %s319 = sadd.s32 %s318, 1
    %p322 = scmp.eq.s32.totalorder %s22, 1
    %p323 = scmp.ne.s32.totalorder %s318, %s320
    %p324 = scmp.eq.s32.totalorder %s22, 0
    %p325 = por %p323, %p324
    %p326 = scmp.ne.s32.totalorder %s318, %s320
    %p327 = scmp.eq.s32.totalorder %s27, 1
    %p328 = por %p326, %p327
    %p329 = scmp.ne.s32.totalorder %s320, %s321
    %p330 = scmp.eq.s32.totalorder %s27, 0
    %p331 = por %p329, %p330
    %p332 = scmp.ne.s32.totalorder %s320, %s321
    %p333 = scmp.eq.s32.totalorder %s28, 1
    %p334 = por %p332, %p333
    %p336 = scmp.ne.s32.totalorder %s321, %s335
    %p337 = scmp.eq.s32.totalorder %s28, 0
    %p338 = por %p336, %p337
    %s340 = sadd.s32 %s339, 1
    %p343 = scmp.eq.s32.totalorder %s22, 1
    %p344 = scmp.ne.s32.totalorder %s339, %s341
    %p345 = scmp.eq.s32.totalorder %s22, 0
    %p346 = por %p344, %p345
    %p347 = scmp.ne.s32.totalorder %s339, %s341
    %p348 = scmp.eq.s32.totalorder %s27, 1
    %p349 = por %p347, %p348
    %p350 = scmp.ne.s32.totalorder %s341, %s342
    %p351 = scmp.eq.s32.totalorder %s27, 0
    %p352 = por %p350, %p351
    %p353 = scmp.ne.s32.totalorder %s341, %s342
    %p354 = scmp.eq.s32.totalorder %s28, 1
    %p355 = por %p353, %p354
    %p357 = scmp.ne.s32.totalorder %s342, %s356
    %p358 = scmp.eq.s32.totalorder %s28, 0
    %p359 = por %p357, %p358
    %s361 = sadd.s32 %s360, 1
    %p364 = scmp.eq.s32.totalorder %s22, 1
    %p365 = scmp.ne.s32.totalorder %s360, %s362
    %p366 = scmp.eq.s32.totalorder %s22, 0
    %p367 = por %p365, %p366
    %p368 = scmp.ne.s32.totalorder %s360, %s362
    %p369 = scmp.eq.s32.totalorder %s27, 1
    %p370 = por %p368, %p369
    %p371 = scmp.ne.s32.totalorder %s362, %s363
    %p372 = scmp.eq.s32.totalorder %s27, 0
    %p373 = por %p371, %p372
    %p374 = scmp.ne.s32.totalorder %s362, %s363
    %p375 = scmp.eq.s32.totalorder %s28, 1
    %p376 = por %p374, %p375
    %p378 = scmp.ne.s32.totalorder %s363, %s377
    %p379 = scmp.eq.s32.totalorder %s28, 0
    %p380 = por %p378, %p379
    %s381 = ssub.s32 %s22, %s29
    %p382 = scmp.eq.s32.totalorder %s381, 0
    %s384 = sadd.s32 %s383, 1
    %s385 = scalar_select %p382, %s383, %s384
    %p388 = pneg %p382
    %p389 = scmp.eq.s32.totalorder %s22, 1
    %p390 = por %p388, %p389
    %p391 = scmp.ne.s32.totalorder %s383, %s386
    %p392 = scmp.eq.s32.totalorder %s22, 0
    %p393 = por %p391, %p392
    %p394 = scmp.ne.s32.totalorder %s383, %s386
    %p395 = scmp.eq.s32.totalorder %s27, 1
    %p396 = por %p394, %p395
    %p397 = scmp.ne.s32.totalorder %s386, %s387
    %p398 = scmp.eq.s32.totalorder %s27, 0
    %p399 = por %p397, %p398
    %p400 = scmp.ne.s32.totalorder %s386, %s387
    %p401 = scmp.eq.s32.totalorder %s28, 1
    %p402 = por %p400, %p401
    %p404 = scmp.ne.s32.totalorder %s387, %s403
    %p405 = scmp.eq.s32.totalorder %s28, 0
    %p406 = por %p404, %p405
    %p407 = scmp.le.s32.totalorder 1, %s22
    %p408 = scmp.lt.s32.totalorder %s22, 3
    %p409 = pnand %p407, %p408
    %p410 = pneg %p409
    // Predicated region
    $region9: #{tpu_custom_call.1} parent=5 // pred_check
      _
    $region10: #{tpu_custom_call.1} parent=5 // pred_check_branch
      %412 = sbr.rel (%p409) target = $region12
    $region11: #{tpu_custom_call.1} parent=5 // pred_region
      %s413 = ssub.s32 %s22, 1
      // Predicated region
      $region13: #{tpu_custom_call.1} parent=11 // pred_check
        %p414 = pneg %p121
      $region14: #{tpu_custom_call.1} parent=11 // pred_check_branch
        %416 = sbr.rel (%p414) target = $region16
      $region15: #{tpu_custom_call.1} parent=11 // pred_region
        _
      $region16: #{tpu_custom_call.1} parent=11 // pred_fallthru
        _
      // Predicated region
      $region17: #{tpu_custom_call.1} parent=11 // pred_check
        %p417 = pneg %p142
      $region18: #{tpu_custom_call.1} parent=11 // pred_check_branch
        %419 = sbr.rel (%p417) target = $region20
      $region19: #{tpu_custom_call.1} parent=11 // pred_region
        _
      $region20: #{tpu_custom_call.1} parent=11 // pred_fallthru
        _
      // Predicated region
      $region21: #{tpu_custom_call.1} parent=11 // pred_check
        %p420 = pneg %p163
      $region22: #{tpu_custom_call.1} parent=11 // pred_check_branch
        %422 = sbr.rel (%p420) target = $region24
      $region23: #{tpu_custom_call.1} parent=11 // pred_region
        _
      $region24: #{tpu_custom_call.1} parent=11 // pred_fallthru
        _
      // Predicated region
      $region25: #{tpu_custom_call.1} parent=11 // pred_check
        %p423 = pneg %p184
      $region26: #{tpu_custom_call.1} parent=11 // pred_check_branch
        %425 = sbr.rel (%p423) target = $region28
      $region27: #{tpu_custom_call.1} parent=11 // pred_region
        _
      $region28: #{tpu_custom_call.1} parent=11 // pred_fallthru
        _
      // Predicated region
      $region29: #{tpu_custom_call.1} parent=11 // pred_check
        %p426 = pneg %p205
      $region30: #{tpu_custom_call.1} parent=11 // pred_check_branch
        %428 = sbr.rel (%p426) target = $region32
      $region31: #{tpu_custom_call.1} parent=11 // pred_region
        _
      $region32: #{tpu_custom_call.1} parent=11 // pred_fallthru
        _
      // Predicated region
      $region33: #{tpu_custom_call.1} parent=11 // pred_check
        %p429 = pneg %p226
      $region34: #{tpu_custom_call.1} parent=11 // pred_check_branch
        %431 = sbr.rel (%p429) target = $region36
      $region35: #{tpu_custom_call.1} parent=11 // pred_region
        _
      $region36: #{tpu_custom_call.1} parent=11 // pred_fallthru
        _
      // Predicated region
      $region37: #{tpu_custom_call.1} parent=11 // pred_check
        %p432 = pneg %p247
      $region38: #{tpu_custom_call.1} parent=11 // pred_check_branch
        %434 = sbr.rel (%p432) target = $region40
      $region39: #{tpu_custom_call.1} parent=11 // pred_region
        _
      $region40: #{tpu_custom_call.1} parent=11 // pred_fallthru
        _
      // Predicated region
      $region41: #{tpu_custom_call.1} parent=11 // pred_check
        %p435 = pneg %p268
      $region42: #{tpu_custom_call.1} parent=11 // pred_check_branch
        %437 = sbr.rel (%p435) target = $region44
      $region43: #{tpu_custom_call.1} parent=11 // pred_region
        _
      $region44: #{tpu_custom_call.1} parent=11 // pred_fallthru
        _
      // Predicated region
      $region45: #{tpu_custom_call.1} parent=11 // pred_check
        %p438 = pneg %p289
      $region46: #{tpu_custom_call.1} parent=11 // pred_check_branch
        %440 = sbr.rel (%p438) target = $region48
      $region47: #{tpu_custom_call.1} parent=11 // pred_region
        _
      $region48: #{tpu_custom_call.1} parent=11 // pred_fallthru
        _
      // Predicated region
      $region49: #{tpu_custom_call.1} parent=11 // pred_check
        %p441 = pneg %p310
      $region50: #{tpu_custom_call.1} parent=11 // pred_check_branch
        %443 = sbr.rel (%p441) target = $region52
      $region51: #{tpu_custom_call.1} parent=11 // pred_region
        _
      $region52: #{tpu_custom_call.1} parent=11 // pred_fallthru
        _
      // Predicated region
      $region53: #{tpu_custom_call.1} parent=11 // pred_check
        %p444 = pneg %p331
      $region54: #{tpu_custom_call.1} parent=11 // pred_check_branch
        %446 = sbr.rel (%p444) target = $region56
      $region55: #{tpu_custom_call.1} parent=11 // pred_region
        _
      $region56: #{tpu_custom_call.1} parent=11 // pred_fallthru
        _
      // Predicated region
      $region57: #{tpu_custom_call.1} parent=11 // pred_check
        %p447 = pneg %p352
      $region58: #{tpu_custom_call.1} parent=11 // pred_check_branch
        %449 = sbr.rel (%p447) target = $region60
      $region59: #{tpu_custom_call.1} parent=11 // pred_region
        _
      $region60: #{tpu_custom_call.1} parent=11 // pred_fallthru
        _
      // Predicated region
      $region61: #{tpu_custom_call.1} parent=11 // pred_check
        %p450 = pneg %p373
      $region62: #{tpu_custom_call.1} parent=11 // pred_check_branch
        %452 = sbr.rel (%p450) target = $region64
      $region63: #{tpu_custom_call.1} parent=11 // pred_region
        _
      $region64: #{tpu_custom_call.1} parent=11 // pred_fallthru
        _
    $region12: #{tpu_custom_call.1} parent=5 // pred_fallthru
      _
    %p453 = scmp.lt.s32.totalorder %s22, 2
    // Predicated region
    $region65: #{tpu_custom_call.1} parent=5 // pred_check
      %p454 = pneg %p453
    $region66: #{tpu_custom_call.1} parent=5 // pred_check_branch
      %456 = sbr.rel (%p454) target = $region68
    $region67: #{tpu_custom_call.1} parent=5 // pred_region
      // Predicated region
      $region69: #{tpu_custom_call.1} parent=67 // pred_check
        %p457 = pneg %p42
      $region70: #{tpu_custom_call.1} parent=67 // pred_check_branch
        %459 = sbr.rel (%p457) target = $region72
      $region71: #{tpu_custom_call.1} parent=67 // pred_region
        %p460 = scmp.lt.s32.totalorder %s22, 1
        %s461 = scalar_select %p460, %s22, 1
        %s462 = smul.addr %s461, 32
        %s463 = smul.addr %s462, 8
        %s464 = scalar_lea.vmem %s0, %s463
      $region72: #{tpu_custom_call.1} parent=67 // pred_fallthru
        _
      // Predicated region
      $region73: #{tpu_custom_call.1} parent=67 // pred_check
        %p465 = pneg %p68
      $region74: #{tpu_custom_call.1} parent=67 // pred_check_branch
        %467 = sbr.rel (%p465) target = $region76
      $region75: #{tpu_custom_call.1} parent=67 // pred_region
        %p468 = scmp.lt.s32.totalorder %s22, 1
        %s469 = scalar_select %p468, %s22, 1
        %s470 = smul.addr %s469, 32
        %s471 = smul.addr %s470, 8
        %s472 = scalar_lea.vmem %s1, %s471
      $region76: #{tpu_custom_call.1} parent=67 // pred_fallthru
        _
      // Predicated region
      $region77: #{tpu_custom_call.1} parent=67 // pred_check
        %p473 = pneg %p94
      $region78: #{tpu_custom_call.1} parent=67 // pred_check_branch
        %475 = sbr.rel (%p473) target = $region80
      $region79: #{tpu_custom_call.1} parent=67 // pred_region
        %p476 = scmp.lt.s32.totalorder %s22, 1
        %s477 = scalar_select %p476, %s22, 1
        %s478 = scalar_lea.vmem %s2, %s477
      $region80: #{tpu_custom_call.1} parent=67 // pred_fallthru
        _
    $region68: #{tpu_custom_call.1} parent=5 // pred_fallthru
      _
    %p479 = scmp.le.s32.totalorder 1, %s22
    %p480 = scmp.lt.s32.totalorder %s22, 3
    %p481 = pnand %p479, %p480
    %p482 = pneg %p481
    // Predicated region
    $region81: #{tpu_custom_call.1} parent=5 // pred_check
      _
    $region82: #{tpu_custom_call.1} parent=5 // pred_check_branch
      %484 = sbr.rel (%p481) target = $region84
    $region83: #{tpu_custom_call.1} parent=5 // pred_region
      %s485 = ssub.s32 %s22, 1
      %p486 = scmp.lt.s32.totalorder %s27, 1
      %s487 = scalar_select %p486, %s27, 1
      %s488 = smul.addr %s487, 32
      %s489 = smul.addr %s488, 8
      %s490 = scalar_lea.vmem %s0, %s489
      %p491 = pneg %p48
      %p492 = pneg %p45
      %p493 = scmp.lt.s32.totalorder %s27, 1
      %s494 = scalar_select %p493, %s27, 1
      %s495 = smul.addr %s494, 32
      %s496 = smul.addr %s495, 8
      %s497 = scalar_lea.vmem %s1, %s496
      %p498 = pneg %p74
      %p499 = pneg %p71
      %p500 = scmp.lt.s32.totalorder %s27, 1
      %s501 = scalar_select %p500, %s27, 1
      %s502 = scalar_lea.vmem %s2, %s501
      %p503 = pneg %p100
      %p504 = pneg %p97
      %p505 = pneg %p121
      %p506 = pneg %p118
      %p507 = pneg %p142
      %p508 = pneg %p139
      %p509 = pneg %p163
      %p510 = pneg %p160
      %p511 = pneg %p184
      %p512 = pneg %p181
      %p513 = pneg %p205
      %p514 = pneg %p202
      %p515 = pneg %p226
      %p516 = pneg %p223
      %p517 = pneg %p247
      %p518 = pneg %p244
      %p519 = pneg %p268
      %p520 = pneg %p265
      %p521 = pneg %p289
      %p522 = pneg %p286
      %p523 = pneg %p310
      %p524 = pneg %p307
      %p525 = pneg %p331
      %p526 = pneg %p328
      %p527 = pneg %p352
      %p528 = pneg %p349
      %p529 = pneg %p373
      %p530 = pneg %p370
      %p531 = pneg %p399
      %p532 = pneg %p396
      %p533 = scmp.lt.s32.totalorder %s27, 1
      %s534 = scalar_select %p533, %s27, 1
      %s535 = smul.addr %s534, 32
      %s536 = smul.addr %s535, 8
      %s537 = scalar_lea.vmem %s16, %s536
      %p538 = scmp.lt.s32.totalorder %s27, 1
      %s539 = scalar_select %p538, %s27, 1
      %s540 = smul.addr %s539, 32
      %s541 = smul.addr %s540, 8
      %s542 = scalar_lea.vmem %s0, %s541
      %p543 = scmp.lt.s32.totalorder %s27, 1
      %s544 = scalar_select %p543, %s27, 1
      %s545 = smul.addr %s544, 32
      %s546 = smul.addr %s545, 8
      %s547 = scalar_lea.vmem %s1, %s546
      %p548 = scmp.lt.s32.totalorder %s27, 1
      %s549 = scalar_select %p548, %s27, 1
      %s550 = scalar_lea.vmem %s2, %s549
      %p551 = scmp.lt.s32.totalorder %s27, 1
      %s552 = scalar_select %p551, %s27, 1
      %s553 = smul.addr %s552, 32
      %s554 = smul.addr %s553, 8
      %s555 = scalar_lea.vmem %s16, %s554
      %v556 = vlaneseq
      %v557 = vshrl.u32 %v556, 7
      %v558 = vadd.s32 %v557, 8
      %v559 = vadd.s32 %v557, 16
      %v560 = vadd.s32 %v557, 24
      %v561 = vadd.s32 %v557, 32
      %v562 = vadd.s32 %v557, 40
      %v563 = vadd.s32 %v557, 48
      %v564 = vadd.s32 %v557, 56
      %v565 = vadd.s32 %v557, 64
      %v566 = vadd.s32 %v557, 72
      %v567 = vadd.s32 %v557, 80
      %v568 = vadd.s32 %v557, 88
      %v569 = vadd.s32 %v557, 96
      %v570 = vadd.s32 %v557, 104
      %v571 = vadd.s32 %v557, 112
      %v572 = vadd.s32 %v557, 120
      %v573 = vadd.s32 %v557, 128
      %v574 = vadd.s32 %v557, 136
      %v575 = vadd.s32 %v557, 144
      %v576 = vadd.s32 %v557, 152
      %v577 = vadd.s32 %v557, 160
      %v578 = vadd.s32 %v557, 168
      %v579 = vadd.s32 %v557, 176
      %v580 = vadd.s32 %v557, 184
      %v581 = vadd.s32 %v557, 192
      %v582 = vadd.s32 %v557, 200
      %v583 = vadd.s32 %v557, 208
      %v584 = vadd.s32 %v557, 216
      %v585 = vadd.s32 %v557, 224
      %v586 = vadd.s32 %v557, 232
      %v587 = vadd.s32 %v557, 240
      %v588 = vadd.s32 %v557, 248
      %v589 = vcvt.s32.f32 %v557
      %v590 = vcvt.s32.f32 %v558
      %v591 = vcvt.s32.f32 %v559
      %v592 = vcvt.s32.f32 %v560
      %v593 = vcvt.s32.f32 %v561
      %v594 = vcvt.s32.f32 %v562
      %v595 = vcvt.s32.f32 %v563
      %v596 = vcvt.s32.f32 %v564
      %v597 = vcvt.s32.f32 %v565
      %v598 = vcvt.s32.f32 %v566
      %v599 = vcvt.s32.f32 %v567
      %v600 = vcvt.s32.f32 %v568
      %v601 = vcvt.s32.f32 %v569
      %v602 = vcvt.s32.f32 %v570
      %v603 = vcvt.s32.f32 %v571
      %v604 = vcvt.s32.f32 %v572
      %v605 = vcvt.s32.f32 %v573
      %v606 = vcvt.s32.f32 %v574
      %v607 = vcvt.s32.f32 %v575
      %v608 = vcvt.s32.f32 %v576
      %v609 = vcvt.s32.f32 %v577
      %v610 = vcvt.s32.f32 %v578
      %v611 = vcvt.s32.f32 %v579
      %v612 = vcvt.s32.f32 %v580
      %v613 = vcvt.s32.f32 %v581
      %v614 = vcvt.s32.f32 %v582
      %v615 = vcvt.s32.f32 %v583
      %v616 = vcvt.s32.f32 %v584
      %v617 = vcvt.s32.f32 %v585
      %v618 = vcvt.s32.f32 %v586
      %v619 = vcvt.s32.f32 %v587
      %v620 = vcvt.s32.f32 %v588
      %v621 = vadd.f32 %v589, 0.5
      %v622 = vadd.f32 %v590, 0.5
      %v623 = vadd.f32 %v591, 0.5
      %v624 = vadd.f32 %v592, 0.5
      %v625 = vadd.f32 %v593, 0.5
      %v626 = vadd.f32 %v594, 0.5
      %v627 = vadd.f32 %v595, 0.5
      %v628 = vadd.f32 %v596, 0.5
      %v629 = vadd.f32 %v597, 0.5
      %v630 = vadd.f32 %v598, 0.5
      %v631 = vadd.f32 %v599, 0.5
      %v632 = vadd.f32 %v600, 0.5
      %v633 = vadd.f32 %v601, 0.5
      %v634 = vadd.f32 %v602, 0.5
      %v635 = vadd.f32 %v603, 0.5
      %v636 = vadd.f32 %v604, 0.5
      %v637 = vadd.f32 %v605, 0.5
      %v638 = vadd.f32 %v606, 0.5
      %v639 = vadd.f32 %v607, 0.5
      %v640 = vadd.f32 %v608, 0.5
      %v641 = vadd.f32 %v609, 0.5
      %v642 = vadd.f32 %v610, 0.5
      %v643 = vadd.f32 %v611, 0.5
      %v644 = vadd.f32 %v612, 0.5
      %v645 = vadd.f32 %v613, 0.5
      %v646 = vadd.f32 %v614, 0.5
      %v647 = vadd.f32 %v615, 0.5
      %v648 = vadd.f32 %v616, 0.5
      %v649 = vadd.f32 %v617, 0.5
      %v650 = vadd.f32 %v618, 0.5
      %v651 = vadd.f32 %v619, 0.5
      %v652 = vadd.f32 %v620, 0.5
      %v653 = vmul.f32 %v621, 0.0625
      %v654 = vmul.f32 %v622, 0.0625
      %v655 = vmul.f32 %v623, 0.0625
      %v656 = vmul.f32 %v624, 0.0625
      %v657 = vmul.f32 %v625, 0.0625
      %v658 = vmul.f32 %v626, 0.0625
      %v659 = vmul.f32 %v627, 0.0625
      %v660 = vmul.f32 %v628, 0.0625
      %v661 = vmul.f32 %v629, 0.0625
      %v662 = vmul.f32 %v630, 0.0625
      %v663 = vmul.f32 %v631, 0.0625
      %v664 = vmul.f32 %v632, 0.0625
      %v665 = vmul.f32 %v633, 0.0625
      %v666 = vmul.f32 %v634, 0.0625
      %v667 = vmul.f32 %v635, 0.0625
      %v668 = vmul.f32 %v636, 0.0625
      %v669 = vmul.f32 %v637, 0.0625
      %v670 = vmul.f32 %v638, 0.0625
      %v671 = vmul.f32 %v639, 0.0625
      %v672 = vmul.f32 %v640, 0.0625
      %v673 = vmul.f32 %v641, 0.0625
      %v674 = vmul.f32 %v642, 0.0625
      %v675 = vmul.f32 %v643, 0.0625
      %v676 = vmul.f32 %v644, 0.0625
      %v677 = vmul.f32 %v645, 0.0625
      %v678 = vmul.f32 %v646, 0.0625
      %v679 = vmul.f32 %v647, 0.0625
      %v680 = vmul.f32 %v648, 0.0625
      %v681 = vmul.f32 %v649, 0.0625
      %v682 = vmul.f32 %v650, 0.0625
      %v683 = vmul.f32 %v651, 0.0625
      %v684 = vmul.f32 %v652, 0.0625
      %v685 = vfloor.f32 %v653
      %v686 = vfloor.f32 %v654
      %v687 = vfloor.f32 %v655
      %v688 = vfloor.f32 %v656
      %v689 = vfloor.f32 %v657
      %v690 = vfloor.f32 %v658
      %v691 = vfloor.f32 %v659
      %v692 = vfloor.f32 %v660
      %v693 = vfloor.f32 %v661
      %v694 = vfloor.f32 %v662
      %v695 = vfloor.f32 %v663
      %v696 = vfloor.f32 %v664
      %v697 = vfloor.f32 %v665
      %v698 = vfloor.f32 %v666
      %v699 = vfloor.f32 %v667
      %v700 = vfloor.f32 %v668
      %v701 = vfloor.f32 %v669
      %v702 = vfloor.f32 %v670
      %v703 = vfloor.f32 %v671
      %v704 = vfloor.f32 %v672
      %v705 = vfloor.f32 %v673
      %v706 = vfloor.f32 %v674
      %v707 = vfloor.f32 %v675
      %v708 = vfloor.f32 %v676
      %v709 = vfloor.f32 %v677
      %v710 = vfloor.f32 %v678
      %v711 = vfloor.f32 %v679
      %v712 = vfloor.f32 %v680
      %v713 = vfloor.f32 %v681
      %v714 = vfloor.f32 %v682
      %v715 = vfloor.f32 %v683
      %v716 = vfloor.f32 %v684
      %v717 = vmul.f32 %v685, 16.0
      %v718 = vmul.f32 %v686, 16.0
      %v719 = vmul.f32 %v687, 16.0
      %v720 = vmul.f32 %v688, 16.0
      %v721 = vmul.f32 %v689, 16.0
      %v722 = vmul.f32 %v690, 16.0
      %v723 = vmul.f32 %v691, 16.0
      %v724 = vmul.f32 %v692, 16.0
      %v725 = vmul.f32 %v693, 16.0
      %v726 = vmul.f32 %v694, 16.0
      %v727 = vmul.f32 %v695, 16.0
      %v728 = vmul.f32 %v696, 16.0
      %v729 = vmul.f32 %v697, 16.0
      %v730 = vmul.f32 %v698, 16.0
      %v731 = vmul.f32 %v699, 16.0
      %v732 = vmul.f32 %v700, 16.0
      %v733 = vmul.f32 %v701, 16.0
      %v734 = vmul.f32 %v702, 16.0
      %v735 = vmul.f32 %v703, 16.0
      %v736 = vmul.f32 %v704, 16.0
      %v737 = vmul.f32 %v705, 16.0
      %v738 = vmul.f32 %v706, 16.0
      %v739 = vmul.f32 %v707, 16.0
      %v740 = vmul.f32 %v708, 16.0
      %v741 = vmul.f32 %v709, 16.0
      %v742 = vmul.f32 %v710, 16.0
      %v743 = vmul.f32 %v711, 16.0
      %v744 = vmul.f32 %v712, 16.0
      %v745 = vmul.f32 %v713, 16.0
      %v746 = vmul.f32 %v714, 16.0
      %v747 = vmul.f32 %v715, 16.0
      %v748 = vmul.f32 %v716, 16.0
      %v749 = vsub.f32 %v589, %v717
      %v750 = vsub.f32 %v590, %v718
      %v751 = vsub.f32 %v591, %v719
      %v752 = vsub.f32 %v592, %v720
      %v753 = vsub.f32 %v593, %v721
      %v754 = vsub.f32 %v594, %v722
      %v755 = vsub.f32 %v595, %v723
      %v756 = vsub.f32 %v596, %v724
      %v757 = vsub.f32 %v597, %v725
      %v758 = vsub.f32 %v598, %v726
      %v759 = vsub.f32 %v599, %v727
      %v760 = vsub.f32 %v600, %v728
      %v761 = vsub.f32 %v601, %v729
      %v762 = vsub.f32 %v602, %v730
      %v763 = vsub.f32 %v603, %v731
      %v764 = vsub.f32 %v604, %v732
      %v765 = vsub.f32 %v605, %v733
      %v766 = vsub.f32 %v606, %v734
      %v767 = vsub.f32 %v607, %v735
      %v768 = vsub.f32 %v608, %v736
      %v769 = vsub.f32 %v609, %v737
      %v770 = vsub.f32 %v610, %v738
      %v771 = vsub.f32 %v611, %v739
      %v772 = vsub.f32 %v612, %v740
      %v773 = vsub.f32 %v613, %v741
      %v774 = vsub.f32 %v614, %v742
      %v775 = vsub.f32 %v615, %v743
      %v776 = vsub.f32 %v616, %v744
      %v777 = vsub.f32 %v617, %v745
      %v778 = vsub.f32 %v618, %v746
      %v779 = vsub.f32 %v619, %v747
      %v780 = vsub.f32 %v620, %v748
      %vm781 = vcmp.gt.f32.partialorder %v749, 0.5
      %vm782 = vcmp.gt.f32.partialorder %v750, 0.5
      %vm783 = vcmp.gt.f32.partialorder %v751, 0.5
      %vm784 = vcmp.gt.f32.partialorder %v752, 0.5
      %vm785 = vcmp.gt.f32.partialorder %v753, 0.5
      %vm786 = vcmp.gt.f32.partialorder %v754, 0.5
      %vm787 = vcmp.gt.f32.partialorder %v755, 0.5
      %vm788 = vcmp.gt.f32.partialorder %v756, 0.5
      %vm789 = vcmp.gt.f32.partialorder %v757, 0.5
      %vm790 = vcmp.gt.f32.partialorder %v758, 0.5
      %vm791 = vcmp.gt.f32.partialorder %v759, 0.5
      %vm792 = vcmp.gt.f32.partialorder %v760, 0.5
      %vm793 = vcmp.gt.f32.partialorder %v761, 0.5
      %vm794 = vcmp.gt.f32.partialorder %v762, 0.5
      %vm795 = vcmp.gt.f32.partialorder %v763, 0.5
      %vm796 = vcmp.gt.f32.partialorder %v764, 0.5
      %vm797 = vcmp.gt.f32.partialorder %v765, 0.5
      %vm798 = vcmp.gt.f32.partialorder %v766, 0.5
      %vm799 = vcmp.gt.f32.partialorder %v767, 0.5
      %vm800 = vcmp.gt.f32.partialorder %v768, 0.5
      %vm801 = vcmp.gt.f32.partialorder %v769, 0.5
      %vm802 = vcmp.gt.f32.partialorder %v770, 0.5
      %vm803 = vcmp.gt.f32.partialorder %v771, 0.5
      %vm804 = vcmp.gt.f32.partialorder %v772, 0.5
      %vm805 = vcmp.gt.f32.partialorder %v773, 0.5
      %vm806 = vcmp.gt.f32.partialorder %v774, 0.5
      %vm807 = vcmp.gt.f32.partialorder %v775, 0.5
      %vm808 = vcmp.gt.f32.partialorder %v776, 0.5
      %vm809 = vcmp.gt.f32.partialorder %v777, 0.5
      %vm810 = vcmp.gt.f32.partialorder %v778, 0.5
      %vm811 = vcmp.gt.f32.partialorder %v779, 0.5
      %vm812 = vcmp.gt.f32.partialorder %v780, 0.5
      %vm813 = vcmp.lt.f32.partialorder %v749, 14.5
      %vm814 = vcmp.lt.f32.partialorder %v750, 14.5
      %vm815 = vcmp.lt.f32.partialorder %v751, 14.5
      %vm816 = vcmp.lt.f32.partialorder %v752, 14.5
      %vm817 = vcmp.lt.f32.partialorder %v753, 14.5
      %vm818 = vcmp.lt.f32.partialorder %v754, 14.5
      %vm819 = vcmp.lt.f32.partialorder %v755, 14.5
      %vm820 = vcmp.lt.f32.partialorder %v756, 14.5
      %vm821 = vcmp.lt.f32.partialorder %v757, 14.5
      %vm822 = vcmp.lt.f32.partialorder %v758, 14.5
      %vm823 = vcmp.lt.f32.partialorder %v759, 14.5
      %vm824 = vcmp.lt.f32.partialorder %v760, 14.5
      %vm825 = vcmp.lt.f32.partialorder %v761, 14.5
      %vm826 = vcmp.lt.f32.partialorder %v762, 14.5
      %vm827 = vcmp.lt.f32.partialorder %v763, 14.5
      %vm828 = vcmp.lt.f32.partialorder %v764, 14.5
      %vm829 = vcmp.lt.f32.partialorder %v765, 14.5
      %vm830 = vcmp.lt.f32.partialorder %v766, 14.5
      %vm831 = vcmp.lt.f32.partialorder %v767, 14.5
      %vm832 = vcmp.lt.f32.partialorder %v768, 14.5
      %vm833 = vcmp.lt.f32.partialorder %v769, 14.5
      %vm834 = vcmp.lt.f32.partialorder %v770, 14.5
      %vm835 = vcmp.lt.f32.partialorder %v771, 14.5
      %vm836 = vcmp.lt.f32.partialorder %v772, 14.5
      %vm837 = vcmp.lt.f32.partialorder %v773, 14.5
      %vm838 = vcmp.lt.f32.partialorder %v774, 14.5
      %vm839 = vcmp.lt.f32.partialorder %v775, 14.5
      %vm840 = vcmp.lt.f32.partialorder %v776, 14.5
      %vm841 = vcmp.lt.f32.partialorder %v777, 14.5
      %vm842 = vcmp.lt.f32.partialorder %v778, 14.5
      %vm843 = vcmp.lt.f32.partialorder %v779, 14.5
      %vm844 = vcmp.lt.f32.partialorder %v780, 14.5
      %v845 = vld [vmem:[%s542] sm:$0xff]
      %v846 = vld [vmem:[%s542 + $0x8] sm:$0xff]
      %v847 = vld [vmem:[%s542 + $0x10] sm:$0xff]
      %v848 = vld [vmem:[%s542 + $0x18] sm:$0xff]
      %v849 = vld [vmem:[%s542 + $0x20] sm:$0xff]
      %v850 = vld [vmem:[%s542 + $0x28] sm:$0xff]
      %v851 = vld [vmem:[%s542 + $0x30] sm:$0xff]
      %v852 = vld [vmem:[%s542 + $0x38] sm:$0xff]
      %v853 = vld [vmem:[%s542 + $0x40] sm:$0xff]
      %v854 = vld [vmem:[%s542 + $0x48] sm:$0xff]
      %v855 = vld [vmem:[%s542 + $0x50] sm:$0xff]
      %v856 = vld [vmem:[%s542 + $0x58] sm:$0xff]
      %v857 = vld [vmem:[%s542 + $0x60] sm:$0xff]
      %v858 = vld [vmem:[%s542 + $0x68] sm:$0xff]
      %v859 = vld [vmem:[%s542 + $0x70] sm:$0xff]
      %v860 = vld [vmem:[%s542 + $0x78] sm:$0xff]
      %v861 = vld [vmem:[%s542 + $0x80] sm:$0xff]
      %v862 = vld [vmem:[%s542 + $0x88] sm:$0xff]
      %v863 = vld [vmem:[%s542 + $0x90] sm:$0xff]
      %v864 = vld [vmem:[%s542 + $0x98] sm:$0xff]
      %v865 = vld [vmem:[%s542 + $0xa0] sm:$0xff]
      %v866 = vld [vmem:[%s542 + $0xa8] sm:$0xff]
      %v867 = vld [vmem:[%s542 + $0xb0] sm:$0xff]
      %v868 = vld [vmem:[%s542 + $0xb8] sm:$0xff]
      %v869 = vld [vmem:[%s542 + $0xc0] sm:$0xff]
      %v870 = vld [vmem:[%s542 + $0xc8] sm:$0xff]
      %v871 = vld [vmem:[%s542 + $0xd0] sm:$0xff]
      %v872 = vld [vmem:[%s542 + $0xd8] sm:$0xff]
      %v873 = vld [vmem:[%s542 + $0xe0] sm:$0xff]
      %v874 = vld [vmem:[%s542 + $0xe8] sm:$0xff]
      %v875 = vld [vmem:[%s542 + $0xf0] sm:$0xff]
      %v876 = vld [vmem:[%s542 + $0xf8] sm:$0xff]
      %v877 = vld [vmem:[%s4] sm:$0xff]
      %v878 = vld [vmem:[%s4 + $0x8] sm:$0xff]
      %v879 = vld [vmem:[%s4 + $0x10] sm:$0xff]
      %v880 = vld [vmem:[%s4 + $0x18] sm:$0xff]
      %v881 = vld [vmem:[%s4 + $0x20] sm:$0xf]
      %v882 = vld [vmem:[%s5] sm:$0x1]
      %v884 = vlaneseq
      %v885 = vshrl.u32 %v884, 7
      %v886 = vsub.s32 0, %v885
      %v887 = vrot.slane %v882, %v886
      %vm889 = vcmask 293888
      %v891 = vsel %vm889, %v845, 0
      %v894 = vsel %vm889, %v846, 0
      %v897 = vsel %vm889, %v847, 0
      %v900 = vsel %vm889, %v848, 0
      %v903 = vsel %vm889, %v849, 0
      %v906 = vsel %vm889, %v850, 0
      %v909 = vsel %vm889, %v851, 0
      %v912 = vsel %vm889, %v852, 0
      %v915 = vsel %vm889, %v853, 0
      %v918 = vsel %vm889, %v854, 0
      %v921 = vsel %vm889, %v855, 0
      %v924 = vsel %vm889, %v856, 0
      %v927 = vsel %vm889, %v857, 0
      %v930 = vsel %vm889, %v858, 0
      %v933 = vsel %vm889, %v859, 0
      %v936 = vsel %vm889, %v860, 0
      %v939 = vsel %vm889, %v861, 0
      %v942 = vsel %vm889, %v862, 0
      %v945 = vsel %vm889, %v863, 0
      %v948 = vsel %vm889, %v864, 0
      %v951 = vsel %vm889, %v865, 0
      %v954 = vsel %vm889, %v866, 0
      %v957 = vsel %vm889, %v867, 0
      %v960 = vsel %vm889, %v868, 0
      %v963 = vsel %vm889, %v869, 0
      %v966 = vsel %vm889, %v870, 0
      %v969 = vsel %vm889, %v871, 0
      %v972 = vsel %vm889, %v872, 0
      %v975 = vsel %vm889, %v873, 0
      %v978 = vsel %vm889, %v874, 0
      %v981 = vsel %vm889, %v875, 0
      %v984 = vsel %vm889, %v876, 0
      %vm986 = vcmask 1043456
      %v988 = vsel %vm986, %v881, 0
      %990 = vmatprep.subr.mxu0 0.0
      %991 = vmatpush1.msra.mxu0 0.0
      %992 = vmatprep.subr.mxu0 0.0
      %993 = vmatpush1.msra.mxu0 0.0
      %994 = vmatprep.subr.mxu0 0.0
      %995 = vmatpush1.msra.mxu0 0.0
      %996 = vmatprep.subr.mxu0 0.0
      %997 = vmatpush1.msra.mxu0 0.0
      %998 = vmatprep.subr.mxu0 0.0
      %999 = vmatpush1.msra.mxu0 0.0
      %1000 = vmatprep.subr.mxu0 0.0
      %1001 = vmatpush1.msra.mxu0 0.0
      %1002 = vmatprep.subr.mxu0 0.0
      %1003 = vmatpush1.msra.mxu0 0.0
      %1004 = vmatprep.subr.mxu0 0.0
      %1005 = vmatpush1.msra.mxu0 0.0
      %1006 = vmatprep.subr.mxu0 0.0
      %1007 = vmatpush1.msra.mxu0 0.0
      %1008 = vmatprep.subr.mxu0 0.0
      %1009 = vmatpush1.msra.mxu0 0.0
      %1010 = vmatprep.subr.mxu0 0.0
      %1011 = vmatpush1.msra.mxu0 0.0
      %1012 = vmatprep.subr.mxu0 0.0
      %1013 = vmatpush1.msra.mxu0 %v988
      %1014 = vmatprep.subr.mxu0 0.0
      %1015 = vmatpush1.msra.mxu0 %v880
      %1016 = vmatprep.subr.mxu0 0.0
      %1017 = vmatpush1.msra.mxu0 %v879
      %1018 = vmatprep.subr.mxu0 0.0
      %1019 = vmatpush1.msra.mxu0 %v878
      %1020 = vmatprep.subr.mxu0 0.0
      %1021 = vmatpush1.msra.mxu0 %v877
      %1022 = vmatprep.subr.mxu0 0.0
      %1023 = vmatpush2.msra.mxu0 0.0
      %1024 = vmatprep.subr.mxu0 0.0
      %1025 = vmatpush2.msra.mxu0 0.0
      %1026 = vmatprep.subr.mxu0 0.0
      %1027 = vmatpush2.msra.mxu0 0.0
      %1028 = vmatprep.subr.mxu0 0.0
      %1029 = vmatpush2.msra.mxu0 0.0
      %1030 = vmatprep.subr.mxu0 0.0
      %1031 = vmatpush2.msra.mxu0 0.0
      %1032 = vmatprep.subr.mxu0 0.0
      %1033 = vmatpush2.msra.mxu0 0.0
      %1034 = vmatprep.subr.mxu0 0.0
      %1035 = vmatpush2.msra.mxu0 0.0
      %1036 = vmatprep.subr.mxu0 0.0
      %1037 = vmatpush2.msra.mxu0 0.0
      %1038 = vmatprep.subr.mxu0 0.0
      %1039 = vmatpush2.msra.mxu0 0.0
      %1040 = vmatprep.subr.mxu0 0.0
      %1041 = vmatpush2.msra.mxu0 0.0
      %1042 = vmatprep.subr.mxu0 0.0
      %1043 = vmatpush2.msra.mxu0 0.0
      %1044 = vmatprep.subr.mxu0 0.0
      %1045 = vmatpush2.msra.mxu0 0.0
      %1046 = vmatprep.subr.mxu0 0.0
      %1047 = vmatpush2.msra.mxu0 0.0
      %1048 = vmatprep.subr.mxu0 0.0
      %1049 = vmatpush2.msra.mxu0 0.0
      %1050 = vmatprep.subr.mxu0 0.0
      %1051 = vmatpush2.msra.mxu0 0.0
      %1052 = vmatprep.subr.mxu0 0.0
      %1053 = vmatpush2.msra.mxu0 0.0
      %1054 = vmatprep.mubr.f32.mxu0 0.0
      %1055 = vmatmul.mubr.f32.gmra.mxu0 %v891
      %v1056 = vpop.f32.mrf.mxu0
      %v1057 = vadd.f32 %v887, %v1056
      %v1058 = vpop.f32.mrf.mxu0
      %1059 = vmatprep.mubr.f32.mxu0 0.0
      %1060 = vmatmul.mubr.f32.gmra.mxu0 %v894
      %v1061 = vpop.f32.mrf.mxu0
      %v1062 = vadd.f32 %v887, %v1061
      %v1063 = vpop.f32.mrf.mxu0
      %1064 = vmatprep.mubr.f32.mxu0 0.0
      %1065 = vmatmul.mubr.f32.gmra.mxu0 %v897
      %v1066 = vpop.f32.mrf.mxu0
      %v1067 = vadd.f32 %v887, %v1066
      %v1068 = vpop.f32.mrf.mxu0
      %1069 = vmatprep.mubr.f32.mxu0 0.0
      %1070 = vmatmul.mubr.f32.gmra.mxu0 %v900
      %v1071 = vpop.f32.mrf.mxu0
      %v1072 = vadd.f32 %v887, %v1071
      %v1073 = vpop.f32.mrf.mxu0
      %1074 = vmatprep.mubr.f32.mxu0 0.0
      %1075 = vmatmul.mubr.f32.gmra.mxu0 %v903
      %v1076 = vpop.f32.mrf.mxu0
      %v1077 = vadd.f32 %v887, %v1076
      %v1078 = vpop.f32.mrf.mxu0
      %1079 = vmatprep.mubr.f32.mxu0 0.0
      %1080 = vmatmul.mubr.f32.gmra.mxu0 %v906
      %v1081 = vpop.f32.mrf.mxu0
      %v1082 = vadd.f32 %v887, %v1081
      %v1083 = vpop.f32.mrf.mxu0
      %1084 = vmatprep.mubr.f32.mxu0 0.0
      %1085 = vmatmul.mubr.f32.gmra.mxu0 %v909
      %v1086 = vpop.f32.mrf.mxu0
      %v1087 = vadd.f32 %v887, %v1086
      %v1088 = vpop.f32.mrf.mxu0
      %1089 = vmatprep.mubr.f32.mxu0 0.0
      %1090 = vmatmul.mubr.f32.gmra.mxu0 %v912
      %v1091 = vpop.f32.mrf.mxu0
      %v1092 = vadd.f32 %v887, %v1091
      %v1093 = vpop.f32.mrf.mxu0
      %1094 = vmatprep.mubr.f32.mxu0 0.0
      %1095 = vmatmul.mubr.f32.gmra.mxu0 %v915
      %v1096 = vpop.f32.mrf.mxu0
      %v1097 = vadd.f32 %v887, %v1096
      %v1098 = vpop.f32.mrf.mxu0
      %1099 = vmatprep.mubr.f32.mxu0 0.0
      %1100 = vmatmul.mubr.f32.gmra.mxu0 %v918
      %v1101 = vpop.f32.mrf.mxu0
      %v1102 = vadd.f32 %v887, %v1101
      %v1103 = vpop.f32.mrf.mxu0
      %1104 = vmatprep.mubr.f32.mxu0 0.0
      %1105 = vmatmul.mubr.f32.gmra.mxu0 %v921
      %v1106 = vpop.f32.mrf.mxu0
      %v1107 = vadd.f32 %v887, %v1106
      %v1108 = vpop.f32.mrf.mxu0
      %1109 = vmatprep.mubr.f32.mxu0 0.0
      %1110 = vmatmul.mubr.f32.gmra.mxu0 %v924
      %v1111 = vpop.f32.mrf.mxu0
      %v1112 = vadd.f32 %v887, %v1111
      %v1113 = vpop.f32.mrf.mxu0
      %1114 = vmatprep.mubr.f32.mxu0 0.0
      %1115 = vmatmul.mubr.f32.gmra.mxu0 %v927
      %v1116 = vpop.f32.mrf.mxu0
      %v1117 = vadd.f32 %v887, %v1116
      %v1118 = vpop.f32.mrf.mxu0
      %1119 = vmatprep.mubr.f32.mxu0 0.0
      %1120 = vmatmul.mubr.f32.gmra.mxu0 %v930
      %v1121 = vpop.f32.mrf.mxu0
      %v1122 = vadd.f32 %v887, %v1121
      %v1123 = vpop.f32.mrf.mxu0
      %1124 = vmatprep.mubr.f32.mxu0 0.0
      %1125 = vmatmul.mubr.f32.gmra.mxu0 %v933
      %v1126 = vpop.f32.mrf.mxu0
      %v1127 = vadd.f32 %v887, %v1126
      %v1128 = vpop.f32.mrf.mxu0
      %1129 = vmatprep.mubr.f32.mxu0 0.0
      %1130 = vmatmul.mubr.f32.gmra.mxu0 %v936
      %v1131 = vpop.f32.mrf.mxu0
      %v1132 = vadd.f32 %v887, %v1131
      %v1133 = vpop.f32.mrf.mxu0
      %1134 = vmatprep.mubr.f32.mxu0 0.0
      %1135 = vmatmul.mubr.f32.gmra.mxu0 %v939
      %v1136 = vpop.f32.mrf.mxu0
      %v1137 = vadd.f32 %v887, %v1136
      %v1138 = vpop.f32.mrf.mxu0
      %1139 = vmatprep.mubr.f32.mxu0 0.0
      %1140 = vmatmul.mubr.f32.gmra.mxu0 %v942
      %v1141 = vpop.f32.mrf.mxu0
      %v1142 = vadd.f32 %v887, %v1141
      %v1143 = vpop.f32.mrf.mxu0
      %1144 = vmatprep.mubr.f32.mxu0 0.0
      %1145 = vmatmul.mubr.f32.gmra.mxu0 %v945
      %v1146 = vpop.f32.mrf.mxu0
      %v1147 = vadd.f32 %v887, %v1146
      %v1148 = vpop.f32.mrf.mxu0
      %1149 = vmatprep.mubr.f32.mxu0 0.0
      %1150 = vmatmul.mubr.f32.gmra.mxu0 %v948
      %v1151 = vpop.f32.mrf.mxu0
      %v1152 = vadd.f32 %v887, %v1151
      %v1153 = vpop.f32.mrf.mxu0
      %1154 = vmatprep.mubr.f32.mxu0 0.0
      %1155 = vmatmul.mubr.f32.gmra.mxu0 %v951
      %v1156 = vpop.f32.mrf.mxu0
      %v1157 = vadd.f32 %v887, %v1156
      %v1158 = vpop.f32.mrf.mxu0
      %1159 = vmatprep.mubr.f32.mxu0 0.0
      %1160 = vmatmul.mubr.f32.gmra.mxu0 %v954
      %v1161 = vpop.f32.mrf.mxu0
      %v1162 = vadd.f32 %v887, %v1161
      %v1163 = vpop.f32.mrf.mxu0
      %1164 = vmatprep.mubr.f32.mxu0 0.0
      %1165 = vmatmul.mubr.f32.gmra.mxu0 %v957
      %v1166 = vpop.f32.mrf.mxu0
      %v1167 = vadd.f32 %v887, %v1166
      %v1168 = vpop.f32.mrf.mxu0
      %1169 = vmatprep.mubr.f32.mxu0 0.0
      %1170 = vmatmul.mubr.f32.gmra.mxu0 %v960
      %v1171 = vpop.f32.mrf.mxu0
      %v1172 = vadd.f32 %v887, %v1171
      %v1173 = vpop.f32.mrf.mxu0
      %1174 = vmatprep.mubr.f32.mxu0 0.0
      %1175 = vmatmul.mubr.f32.gmra.mxu0 %v963
      %v1176 = vpop.f32.mrf.mxu0
      %v1177 = vadd.f32 %v887, %v1176
      %v1178 = vpop.f32.mrf.mxu0
      %1179 = vmatprep.mubr.f32.mxu0 0.0
      %1180 = vmatmul.mubr.f32.gmra.mxu0 %v966
      %v1181 = vpop.f32.mrf.mxu0
      %v1182 = vadd.f32 %v887, %v1181
      %v1183 = vpop.f32.mrf.mxu0
      %1184 = vmatprep.mubr.f32.mxu0 0.0
      %1185 = vmatmul.mubr.f32.gmra.mxu0 %v969
      %v1186 = vpop.f32.mrf.mxu0
      %v1187 = vadd.f32 %v887, %v1186
      %v1188 = vpop.f32.mrf.mxu0
      %1189 = vmatprep.mubr.f32.mxu0 0.0
      %1190 = vmatmul.mubr.f32.gmra.mxu0 %v972
      %v1191 = vpop.f32.mrf.mxu0
      %v1192 = vadd.f32 %v887, %v1191
      %v1193 = vpop.f32.mrf.mxu0
      %1194 = vmatprep.mubr.f32.mxu0 0.0
      %1195 = vmatmul.mubr.f32.gmra.mxu0 %v975
      %v1196 = vpop.f32.mrf.mxu0
      %v1197 = vadd.f32 %v887, %v1196
      %v1198 = vpop.f32.mrf.mxu0
      %1199 = vmatprep.mubr.f32.mxu0 0.0
      %1200 = vmatmul.mubr.f32.gmra.mxu0 %v978
      %v1201 = vpop.f32.mrf.mxu0
      %v1202 = vadd.f32 %v887, %v1201
      %v1203 = vpop.f32.mrf.mxu0
      %1204 = vmatprep.mubr.f32.mxu0 0.0
      %1205 = vmatmul.mubr.f32.gmra.mxu0 %v981
      %v1206 = vpop.f32.mrf.mxu0
      %v1207 = vadd.f32 %v887, %v1206
      %v1208 = vpop.f32.mrf.mxu0
      %1209 = vmatprep.mubr.f32.mxu0 0.0
      %1210 = vmatmul.mubr.f32.gmra.mxu0 %v984
      %v1211 = vpop.f32.mrf.mxu0
      %v1212 = vadd.f32 %v887, %v1211
      %v1213 = vpop.f32.mrf.mxu0
      %1214 = vdwg.mxu0
      %v1215 = vld [vmem:[%s547] sm:$0xff]
      %v1216 = vld [vmem:[%s547 + $0x8] sm:$0xff]
      %v1217 = vld [vmem:[%s547 + $0x10] sm:$0xff]
      %v1218 = vld [vmem:[%s547 + $0x18] sm:$0xff]
      %v1219 = vld [vmem:[%s547 + $0x20] sm:$0xff]
      %v1220 = vld [vmem:[%s547 + $0x28] sm:$0xff]
      %v1221 = vld [vmem:[%s547 + $0x30] sm:$0xff]
      %v1222 = vld [vmem:[%s547 + $0x38] sm:$0xff]
      %v1223 = vld [vmem:[%s547 + $0x40] sm:$0xff]
      %v1224 = vld [vmem:[%s547 + $0x48] sm:$0xff]
      %v1225 = vld [vmem:[%s547 + $0x50] sm:$0xff]
      %v1226 = vld [vmem:[%s547 + $0x58] sm:$0xff]
      %v1227 = vld [vmem:[%s547 + $0x60] sm:$0xff]
      %v1228 = vld [vmem:[%s547 + $0x68] sm:$0xff]
      %v1229 = vld [vmem:[%s547 + $0x70] sm:$0xff]
      %v1230 = vld [vmem:[%s547 + $0x78] sm:$0xff]
      %v1231 = vld [vmem:[%s547 + $0x80] sm:$0xff]
      %v1232 = vld [vmem:[%s547 + $0x88] sm:$0xff]
      %v1233 = vld [vmem:[%s547 + $0x90] sm:$0xff]
      %v1234 = vld [vmem:[%s547 + $0x98] sm:$0xff]
      %v1235 = vld [vmem:[%s547 + $0xa0] sm:$0xff]
      %v1236 = vld [vmem:[%s547 + $0xa8] sm:$0xff]
      %v1237 = vld [vmem:[%s547 + $0xb0] sm:$0xff]
      %v1238 = vld [vmem:[%s547 + $0xb8] sm:$0xff]
      %v1239 = vld [vmem:[%s547 + $0xc0] sm:$0xff]
      %v1240 = vld [vmem:[%s547 + $0xc8] sm:$0xff]
      %v1241 = vld [vmem:[%s547 + $0xd0] sm:$0xff]
      %v1242 = vld [vmem:[%s547 + $0xd8] sm:$0xff]
      %v1243 = vld [vmem:[%s547 + $0xe0] sm:$0xff]
      %v1244 = vld [vmem:[%s547 + $0xe8] sm:$0xff]
      %v1245 = vld [vmem:[%s547 + $0xf0] sm:$0xff]
      %v1246 = vld [vmem:[%s547 + $0xf8] sm:$0xff]
      %vm1247 = vcmask 130048
      %v1248 = vsel %vm1247, %v1057, 0.0
      %v1249 = vsel %vm1247, %v1062, 0.0
      %v1250 = vadd.f32 %v1248, %v1249
      %v1251 = vsel %vm1247, %v1067, 0.0
      %v1252 = vadd.f32 %v1250, %v1251
      %v1253 = vsel %vm1247, %v1072, 0.0
      %v1254 = vadd.f32 %v1252, %v1253
      %v1255 = vsel %vm1247, %v1077, 0.0
      %v1256 = vadd.f32 %v1254, %v1255
      %v1257 = vsel %vm1247, %v1082, 0.0
      %v1258 = vadd.f32 %v1256, %v1257
      %v1259 = vsel %vm1247, %v1087, 0.0
      %v1260 = vadd.f32 %v1258, %v1259
      %v1261 = vsel %vm1247, %v1092, 0.0
      %v1262 = vadd.f32 %v1260, %v1261
      %v1263 = vsel %vm1247, %v1097, 0.0
      %v1264 = vadd.f32 %v1262, %v1263
      %v1265 = vsel %vm1247, %v1102, 0.0
      %v1266 = vadd.f32 %v1264, %v1265
      %v1267 = vsel %vm1247, %v1107, 0.0
      %v1268 = vadd.f32 %v1266, %v1267
      %v1269 = vsel %vm1247, %v1112, 0.0
      %v1270 = vadd.f32 %v1268, %v1269
      %v1271 = vsel %vm1247, %v1117, 0.0
      %v1272 = vadd.f32 %v1270, %v1271
      %v1273 = vsel %vm1247, %v1122, 0.0
      %v1274 = vadd.f32 %v1272, %v1273
      %v1275 = vsel %vm1247, %v1127, 0.0
      %v1276 = vadd.f32 %v1274, %v1275
      %v1277 = vsel %vm1247, %v1132, 0.0
      %v1278 = vadd.f32 %v1276, %v1277
      %v1279 = vsel %vm1247, %v1137, 0.0
      %v1280 = vadd.f32 %v1278, %v1279
      %v1281 = vsel %vm1247, %v1142, 0.0
      %v1282 = vadd.f32 %v1280, %v1281
      %v1283 = vsel %vm1247, %v1147, 0.0
      %v1284 = vadd.f32 %v1282, %v1283
      %v1285 = vsel %vm1247, %v1152, 0.0
      %v1286 = vadd.f32 %v1284, %v1285
      %v1287 = vsel %vm1247, %v1157, 0.0
      %v1288 = vadd.f32 %v1286, %v1287
      %v1289 = vsel %vm1247, %v1162, 0.0
      %v1290 = vadd.f32 %v1288, %v1289
      %v1291 = vsel %vm1247, %v1167, 0.0
      %v1292 = vadd.f32 %v1290, %v1291
      %v1293 = vsel %vm1247, %v1172, 0.0
      %v1294 = vadd.f32 %v1292, %v1293
      %v1295 = vsel %vm1247, %v1177, 0.0
      %v1296 = vadd.f32 %v1294, %v1295
      %v1297 = vsel %vm1247, %v1182, 0.0
      %v1298 = vadd.f32 %v1296, %v1297
      %v1299 = vsel %vm1247, %v1187, 0.0
      %v1300 = vadd.f32 %v1298, %v1299
      %v1301 = vsel %vm1247, %v1192, 0.0
      %v1302 = vadd.f32 %v1300, %v1301
      %v1303 = vsel %vm1247, %v1197, 0.0
      %v1304 = vadd.f32 %v1302, %v1303
      %v1305 = vsel %vm1247, %v1202, 0.0
      %v1306 = vadd.f32 %v1304, %v1305
      %v1307 = vsel %vm1247, %v1207, 0.0
      %v1308 = vadd.f32 %v1306, %v1307
      %v1309 = vsel %vm1247, %v1212, 0.0
      %v1310 = vadd.f32 %v1308, %v1309
      %v1311 = vrot.slane %v1310, 4
      %v1312 = vadd.f32 %v1310, %v1311
      %v1313 = vrot.slane %v1312, 2
      %v1314 = vadd.f32 %v1312, %v1313
      %v1315 = vrot.slane %v1314, 1
      %v1316 = vadd.f32 %v1314, %v1315
      %v1317 = vmul.f32 %v1057, %v1057
      %v1318 = vmul.f32 %v1062, %v1062
      %v1319 = vmul.f32 %v1067, %v1067
      %v1320 = vmul.f32 %v1072, %v1072
      %v1321 = vmul.f32 %v1077, %v1077
      %v1322 = vmul.f32 %v1082, %v1082
      %v1323 = vmul.f32 %v1087, %v1087
      %v1324 = vmul.f32 %v1092, %v1092
      %v1325 = vmul.f32 %v1097, %v1097
      %v1326 = vmul.f32 %v1102, %v1102
      %v1327 = vmul.f32 %v1107, %v1107
      %v1328 = vmul.f32 %v1112, %v1112
      %v1329 = vmul.f32 %v1117, %v1117
      %v1330 = vmul.f32 %v1122, %v1122
      %v1331 = vmul.f32 %v1127, %v1127
      %v1332 = vmul.f32 %v1132, %v1132
      %v1333 = vmul.f32 %v1137, %v1137
      %v1334 = vmul.f32 %v1142, %v1142
      %v1335 = vmul.f32 %v1147, %v1147
      %v1336 = vmul.f32 %v1152, %v1152
      %v1337 = vmul.f32 %v1157, %v1157
      %v1338 = vmul.f32 %v1162, %v1162
      %v1339 = vmul.f32 %v1167, %v1167
      %v1340 = vmul.f32 %v1172, %v1172
      %v1341 = vmul.f32 %v1177, %v1177
      %v1342 = vmul.f32 %v1182, %v1182
      %v1343 = vmul.f32 %v1187, %v1187
      %v1344 = vmul.f32 %v1192, %v1192
      %v1345 = vmul.f32 %v1197, %v1197
      %v1346 = vmul.f32 %v1202, %v1202
      %v1347 = vmul.f32 %v1207, %v1207
      %v1348 = vmul.f32 %v1212, %v1212
      %v1349 = vsel %vm1247, %v1317, 0.0
      %v1350 = vsel %vm1247, %v1318, 0.0
      %v1351 = vadd.f32 %v1349, %v1350
      %v1352 = vsel %vm1247, %v1319, 0.0
      %v1353 = vadd.f32 %v1351, %v1352
      %v1354 = vsel %vm1247, %v1320, 0.0
      %v1355 = vadd.f32 %v1353, %v1354
      %v1356 = vsel %vm1247, %v1321, 0.0
      %v1357 = vadd.f32 %v1355, %v1356
      %v1358 = vsel %vm1247, %v1322, 0.0
      %v1359 = vadd.f32 %v1357, %v1358
      %v1360 = vsel %vm1247, %v1323, 0.0
      %v1361 = vadd.f32 %v1359, %v1360
      %v1362 = vsel %vm1247, %v1324, 0.0
      %v1363 = vadd.f32 %v1361, %v1362
      %v1364 = vsel %vm1247, %v1325, 0.0
      %v1365 = vadd.f32 %v1363, %v1364
      %v1366 = vsel %vm1247, %v1326, 0.0
      %v1367 = vadd.f32 %v1365, %v1366
      %v1368 = vsel %vm1247, %v1327, 0.0
      %v1369 = vadd.f32 %v1367, %v1368
      %v1370 = vsel %vm1247, %v1328, 0.0
      %v1371 = vadd.f32 %v1369, %v1370
      %v1372 = vsel %vm1247, %v1329, 0.0
      %v1373 = vadd.f32 %v1371, %v1372
      %v1374 = vsel %vm1247, %v1330, 0.0
      %v1375 = vadd.f32 %v1373, %v1374
      %v1376 = vsel %vm1247, %v1331, 0.0
      %v1377 = vadd.f32 %v1375, %v1376
      %v1378 = vsel %vm1247, %v1332, 0.0
      %v1379 = vadd.f32 %v1377, %v1378
      %v1380 = vsel %vm1247, %v1333, 0.0
      %v1381 = vadd.f32 %v1379, %v1380
      %v1382 = vsel %vm1247, %v1334, 0.0
      %v1383 = vadd.f32 %v1381, %v1382
      %v1384 = vsel %vm1247, %v1335, 0.0
      %v1385 = vadd.f32 %v1383, %v1384
      %v1386 = vsel %vm1247, %v1336, 0.0
      %v1387 = vadd.f32 %v1385, %v1386
      %v1388 = vsel %vm1247, %v1337, 0.0
      %v1389 = vadd.f32 %v1387, %v1388
      %v1390 = vsel %vm1247, %v1338, 0.0
      %v1391 = vadd.f32 %v1389, %v1390
      %v1392 = vsel %vm1247, %v1339, 0.0
      %v1393 = vadd.f32 %v1391, %v1392
      %v1394 = vsel %vm1247, %v1340, 0.0
      %v1395 = vadd.f32 %v1393, %v1394
      %v1396 = vsel %vm1247, %v1341, 0.0
      %v1397 = vadd.f32 %v1395, %v1396
      %v1398 = vsel %vm1247, %v1342, 0.0
      %v1399 = vadd.f32 %v1397, %v1398
      %v1400 = vsel %vm1247, %v1343, 0.0
      %v1401 = vadd.f32 %v1399, %v1400
      %v1402 = vsel %vm1247, %v1344, 0.0
      %v1403 = vadd.f32 %v1401, %v1402
      %v1404 = vsel %vm1247, %v1345, 0.0
      %v1405 = vadd.f32 %v1403, %v1404
      %v1406 = vsel %vm1247, %v1346, 0.0
      %v1407 = vadd.f32 %v1405, %v1406
      %v1408 = vsel %vm1247, %v1347, 0.0
      %v1409 = vadd.f32 %v1407, %v1408
      %v1410 = vsel %vm1247, %v1348, 0.0
      %v1411 = vadd.f32 %v1409, %v1410
      %v1412 = vrot.slane %v1411, 4
      %v1413 = vadd.f32 %v1411, %v1412
      %v1414 = vrot.slane %v1413, 2
      %v1415 = vadd.f32 %v1413, %v1414
      %v1416 = vrot.slane %v1415, 1
      %v1417 = vadd.f32 %v1415, %v1416
      %v1418 = vld [vmem:[%s3] sm:$0xff]
      %v1419 = vld [vmem:[%s3 + $0x8] sm:$0xff]
      %v1421 = vsel %vm1247, %v1316, 0
      %1423 = vmatprep.subr.mxu0 0.0
      %1424 = vmatpush1.msra.mxu0 0.0
      %1425 = vmatprep.subr.mxu0 0.0
      %1426 = vmatpush1.msra.mxu0 0.0
      %1427 = vmatprep.subr.mxu0 0.0
      %1428 = vmatpush1.msra.mxu0 0.0
      %1429 = vmatprep.subr.mxu0 0.0
      %1430 = vmatpush1.msra.mxu0 0.0
      %1431 = vmatprep.subr.mxu0 0.0
      %1432 = vmatpush1.msra.mxu0 0.0
      %1433 = vmatprep.subr.mxu0 0.0
      %1434 = vmatpush1.msra.mxu0 0.0
      %1435 = vmatprep.subr.mxu0 0.0
      %1436 = vmatpush1.msra.mxu0 0.0
      %1437 = vmatprep.subr.mxu0 0.0
      %1438 = vmatpush1.msra.mxu0 0.0
      %1439 = vmatprep.subr.mxu0 0.0
      %1440 = vmatpush1.msra.mxu0 0.0
      %1441 = vmatprep.subr.mxu0 0.0
      %1442 = vmatpush1.msra.mxu0 0.0
      %1443 = vmatprep.subr.mxu0 0.0
      %1444 = vmatpush1.msra.mxu0 0.0
      %1445 = vmatprep.subr.mxu0 0.0
      %1446 = vmatpush1.msra.mxu0 0.0
      %1447 = vmatprep.subr.mxu0 0.0
      %1448 = vmatpush1.msra.mxu0 0.0
      %1449 = vmatprep.subr.mxu0 0.0
      %1450 = vmatpush1.msra.mxu0 0.0
      %1451 = vmatprep.subr.mxu0 0.0
      %1452 = vmatpush1.msra.mxu0 %v1419
      %1453 = vmatprep.subr.mxu0 0.0
      %1454 = vmatpush1.msra.mxu0 %v1418
      %1455 = vmatprep.subr.mxu0 0.0
      %1456 = vmatpush2.msra.mxu0 0.0
      %1457 = vmatprep.subr.mxu0 0.0
      %1458 = vmatpush2.msra.mxu0 0.0
      %1459 = vmatprep.subr.mxu0 0.0
      %1460 = vmatpush2.msra.mxu0 0.0
      %1461 = vmatprep.subr.mxu0 0.0
      %1462 = vmatpush2.msra.mxu0 0.0
      %1463 = vmatprep.subr.mxu0 0.0
      %1464 = vmatpush2.msra.mxu0 0.0
      %1465 = vmatprep.subr.mxu0 0.0
      %1466 = vmatpush2.msra.mxu0 0.0
      %1467 = vmatprep.subr.mxu0 0.0
      %1468 = vmatpush2.msra.mxu0 0.0
      %1469 = vmatprep.subr.mxu0 0.0
      %1470 = vmatpush2.msra.mxu0 0.0
      %1471 = vmatprep.subr.mxu0 0.0
      %1472 = vmatpush2.msra.mxu0 0.0
      %1473 = vmatprep.subr.mxu0 0.0
      %1474 = vmatpush2.msra.mxu0 0.0
      %1475 = vmatprep.subr.mxu0 0.0
      %1476 = vmatpush2.msra.mxu0 0.0
      %1477 = vmatprep.subr.mxu0 0.0
      %1478 = vmatpush2.msra.mxu0 0.0
      %1479 = vmatprep.subr.mxu0 0.0
      %1480 = vmatpush2.msra.mxu0 0.0
      %1481 = vmatprep.subr.mxu0 0.0
      %1482 = vmatpush2.msra.mxu0 0.0
      %1483 = vmatprep.subr.mxu0 0.0
      %1484 = vmatpush2.msra.mxu0 0.0
      %1485 = vmatprep.subr.mxu0 0.0
      %1486 = vmatpush2.msra.mxu0 0.0
      %1487 = vmatprep.mubr.f32.mxu0 0.0
      %1488 = vmatmul.mubr.f32.gmra.mxu0 %v1421
      %v1489 = vpop.f32.mrf.mxu0
      %v1490 = vadd.f32 0.0, %v1489
      %v1491 = vpop.f32.mrf.mxu0
      %1492 = vdwg.mxu0
      %v1494 = vsel %vm1247, %v1417, 0
      %1496 = vmatprep.subr.mxu0 0.0
      %1497 = vmatpush1.msra.mxu0 0.0
      %1498 = vmatprep.subr.mxu0 0.0
      %1499 = vmatpush1.msra.mxu0 0.0
      %1500 = vmatprep.subr.mxu0 0.0
      %1501 = vmatpush1.msra.mxu0 0.0
      %1502 = vmatprep.subr.mxu0 0.0
      %1503 = vmatpush1.msra.mxu0 0.0
      %1504 = vmatprep.subr.mxu0 0.0
      %1505 = vmatpush1.msra.mxu0 0.0
      %1506 = vmatprep.subr.mxu0 0.0
      %1507 = vmatpush1.msra.mxu0 0.0
      %1508 = vmatprep.subr.mxu0 0.0
      %1509 = vmatpush1.msra.mxu0 0.0
      %1510 = vmatprep.subr.mxu0 0.0
      %1511 = vmatpush1.msra.mxu0 0.0
      %1512 = vmatprep.subr.mxu0 0.0
      %1513 = vmatpush1.msra.mxu0 0.0
      %1514 = vmatprep.subr.mxu0 0.0
      %1515 = vmatpush1.msra.mxu0 0.0
      %1516 = vmatprep.subr.mxu0 0.0
      %1517 = vmatpush1.msra.mxu0 0.0
      %1518 = vmatprep.subr.mxu0 0.0
      %1519 = vmatpush1.msra.mxu0 0.0
      %1520 = vmatprep.subr.mxu0 0.0
      %1521 = vmatpush1.msra.mxu0 0.0
      %1522 = vmatprep.subr.mxu0 0.0
      %1523 = vmatpush1.msra.mxu0 0.0
      %1524 = vmatprep.subr.mxu0 0.0
      %1525 = vmatpush1.msra.mxu0 %v1419
      %1526 = vmatprep.subr.mxu0 0.0
      %1527 = vmatpush1.msra.mxu0 %v1418
      %1528 = vmatprep.subr.mxu0 0.0
      %1529 = vmatpush2.msra.mxu0 0.0
      %1530 = vmatprep.subr.mxu0 0.0
      %1531 = vmatpush2.msra.mxu0 0.0
      %1532 = vmatprep.subr.mxu0 0.0
      %1533 = vmatpush2.msra.mxu0 0.0
      %1534 = vmatprep.subr.mxu0 0.0
      %1535 = vmatpush2.msra.mxu0 0.0
      %1536 = vmatprep.subr.mxu0 0.0
      %1537 = vmatpush2.msra.mxu0 0.0
      %1538 = vmatprep.subr.mxu0 0.0
      %1539 = vmatpush2.msra.mxu0 0.0
      %1540 = vmatprep.subr.mxu0 0.0
      %1541 = vmatpush2.msra.mxu0 0.0
      %1542 = vmatprep.subr.mxu0 0.0
      %1543 = vmatpush2.msra.mxu0 0.0
      %1544 = vmatprep.subr.mxu0 0.0
      %1545 = vmatpush2.msra.mxu0 0.0
      %1546 = vmatprep.subr.mxu0 0.0
      %1547 = vmatpush2.msra.mxu0 0.0
      %1548 = vmatprep.subr.mxu0 0.0
      %1549 = vmatpush2.msra.mxu0 0.0
      %1550 = vmatprep.subr.mxu0 0.0
      %1551 = vmatpush2.msra.mxu0 0.0
      %1552 = vmatprep.subr.mxu0 0.0
      %1553 = vmatpush2.msra.mxu0 0.0
      %1554 = vmatprep.subr.mxu0 0.0
      %1555 = vmatpush2.msra.mxu0 0.0
      %1556 = vmatprep.subr.mxu0 0.0
      %1557 = vmatpush2.msra.mxu0 0.0
      %1558 = vmatprep.subr.mxu0 0.0
      %1559 = vmatpush2.msra.mxu0 0.0
      %1560 = vmatprep.mubr.f32.mxu0 0.0
      %1561 = vmatmul.mubr.f32.gmra.mxu0 %v1494
      %v1562 = vpop.f32.mrf.mxu0
      %v1563 = vadd.f32 0.0, %v1562
      %v1564 = vpop.f32.mrf.mxu0
      %1565 = vdwg.mxu0
      %v1566 = vmul.f32 %v1490, 0.001953125
      %v1567 = vmul.f32 %v1563, 0.001953125
      %v1568 = vmul.f32 %v1566, %v1566
      %v1569 = vsub.f32 %v1567, %v1568
      %v1570 = vmax.f32 %v1569, 0.0
      %v1571 = vadd.f32 %v1570, 1e-05
      %v1572 = vrsqrt.pop %v1571
      %v1573 = vld [vmem:[%s6] sm:$0x1]
      %v1574 = vmul.f32 %v1572, %v1573
      %v1575 = vld [vmem:[%s7] sm:$0x1]
      %v1576 = vmul.f32 %v1566, %v1574
      %v1577 = vsub.f32 %v1575, %v1576
      %v1578 = vlaneseq
      %v1579 = vshrl.u32 %v1578, 7
      %v1580 = vsub.s32 0, %v1579
      %v1581 = vrot.slane %v1574, %v1580
      %v1582 = vmul.f32 %v1057, %v1581
      %v1583 = vmul.f32 %v1062, %v1581
      %v1584 = vmul.f32 %v1067, %v1581
      %v1585 = vmul.f32 %v1072, %v1581
      %v1586 = vmul.f32 %v1077, %v1581
      %v1587 = vmul.f32 %v1082, %v1581
      %v1588 = vmul.f32 %v1087, %v1581
      %v1589 = vmul.f32 %v1092, %v1581
      %v1590 = vmul.f32 %v1097, %v1581
      %v1591 = vmul.f32 %v1102, %v1581
      %v1592 = vmul.f32 %v1107, %v1581
      %v1593 = vmul.f32 %v1112, %v1581
      %v1594 = vmul.f32 %v1117, %v1581
      %v1595 = vmul.f32 %v1122, %v1581
      %v1596 = vmul.f32 %v1127, %v1581
      %v1597 = vmul.f32 %v1132, %v1581
      %v1598 = vmul.f32 %v1137, %v1581
      %v1599 = vmul.f32 %v1142, %v1581
      %v1600 = vmul.f32 %v1147, %v1581
      %v1601 = vmul.f32 %v1152, %v1581
      %v1602 = vmul.f32 %v1157, %v1581
      %v1603 = vmul.f32 %v1162, %v1581
      %v1604 = vmul.f32 %v1167, %v1581
      %v1605 = vmul.f32 %v1172, %v1581
      %v1606 = vmul.f32 %v1177, %v1581
      %v1607 = vmul.f32 %v1182, %v1581
      %v1608 = vmul.f32 %v1187, %v1581
      %v1609 = vmul.f32 %v1192, %v1581
      %v1610 = vmul.f32 %v1197, %v1581
      %v1611 = vmul.f32 %v1202, %v1581
      %v1612 = vmul.f32 %v1207, %v1581
      %v1613 = vmul.f32 %v1212, %v1581
      %v1615 = vlaneseq
      %v1616 = vshrl.u32 %v1615, 7
      %v1617 = vsub.s32 0, %v1616
      %v1618 = vrot.slane %v1577, %v1617
      %v1620 = vadd.f32 %v1582, %v1618
      %v1621 = vadd.f32 %v1583, %v1618
      %v1622 = vadd.f32 %v1584, %v1618
      %v1623 = vadd.f32 %v1585, %v1618
      %v1624 = vadd.f32 %v1586, %v1618
      %v1625 = vadd.f32 %v1587, %v1618
      %v1626 = vadd.f32 %v1588, %v1618
      %v1627 = vadd.f32 %v1589, %v1618
      %v1628 = vadd.f32 %v1590, %v1618
      %v1629 = vadd.f32 %v1591, %v1618
      %v1630 = vadd.f32 %v1592, %v1618
      %v1631 = vadd.f32 %v1593, %v1618
      %v1632 = vadd.f32 %v1594, %v1618
      %v1633 = vadd.f32 %v1595, %v1618
      %v1634 = vadd.f32 %v1596, %v1618
      %v1635 = vadd.f32 %v1597, %v1618
      %v1636 = vadd.f32 %v1598, %v1618
      %v1637 = vadd.f32 %v1599, %v1618
      %v1638 = vadd.f32 %v1600, %v1618
      %v1639 = vadd.f32 %v1601, %v1618
      %v1640 = vadd.f32 %v1602, %v1618
      %v1641 = vadd.f32 %v1603, %v1618
      %v1642 = vadd.f32 %v1604, %v1618
      %v1643 = vadd.f32 %v1605, %v1618
      %v1644 = vadd.f32 %v1606, %v1618
      %v1645 = vadd.f32 %v1607, %v1618
      %v1646 = vadd.f32 %v1608, %v1618
      %v1647 = vadd.f32 %v1609, %v1618
      %v1648 = vadd.f32 %v1610, %v1618
      %v1649 = vadd.f32 %v1611, %v1618
      %v1650 = vadd.f32 %v1612, %v1618
      %v1651 = vadd.f32 %v1613, %v1618
      %v1652 = vmin.f32 %v1620, 20.0
      %v1653 = vmin.f32 %v1621, 20.0
      %v1654 = vmin.f32 %v1622, 20.0
      %v1655 = vmin.f32 %v1623, 20.0
      %v1656 = vmin.f32 %v1624, 20.0
      %v1657 = vmin.f32 %v1625, 20.0
      %v1658 = vmin.f32 %v1626, 20.0
      %v1659 = vmin.f32 %v1627, 20.0
      %v1660 = vmin.f32 %v1628, 20.0
      %v1661 = vmin.f32 %v1629, 20.0
      %v1662 = vmin.f32 %v1630, 20.0
      %v1663 = vmin.f32 %v1631, 20.0
      %v1664 = vmin.f32 %v1632, 20.0
      %v1665 = vmin.f32 %v1633, 20.0
      %v1666 = vmin.f32 %v1634, 20.0
      %v1667 = vmin.f32 %v1635, 20.0
      %v1668 = vmin.f32 %v1636, 20.0
      %v1669 = vmin.f32 %v1637, 20.0
      %v1670 = vmin.f32 %v1638, 20.0
      %v1671 = vmin.f32 %v1639, 20.0
      %v1672 = vmin.f32 %v1640, 20.0
      %v1673 = vmin.f32 %v1641, 20.0
      %v1674 = vmin.f32 %v1642, 20.0
      %v1675 = vmin.f32 %v1643, 20.0
      %v1676 = vmin.f32 %v1644, 20.0
      %v1677 = vmin.f32 %v1645, 20.0
      %v1678 = vmin.f32 %v1646, 20.0
      %v1679 = vmin.f32 %v1647, 20.0
      %v1680 = vmin.f32 %v1648, 20.0
      %v1681 = vmin.f32 %v1649, 20.0
      %v1682 = vmin.f32 %v1650, 20.0
      %v1683 = vmin.f32 %v1651, 20.0
      %v1684 = vmul.f32 %v1652, 1.442695
      %v1685 = vpow.pop %v1684
      %v1686 = vmul.f32 %v1653, 1.442695
      %v1687 = vpow.pop %v1686
      %v1688 = vmul.f32 %v1654, 1.442695
      %v1689 = vpow.pop %v1688
      %v1690 = vmul.f32 %v1655, 1.442695
      %v1691 = vpow.pop %v1690
      %v1692 = vmul.f32 %v1656, 1.442695
      %v1693 = vpow.pop %v1692
      %v1694 = vmul.f32 %v1657, 1.442695
      %v1695 = vpow.pop %v1694
      %v1696 = vmul.f32 %v1658, 1.442695
      %v1697 = vpow.pop %v1696
      %v1698 = vmul.f32 %v1659, 1.442695
      %v1699 = vpow.pop %v1698
      %v1700 = vmul.f32 %v1660, 1.442695
      %v1701 = vpow.pop %v1700
      %v1702 = vmul.f32 %v1661, 1.442695
      %v1703 = vpow.pop %v1702
      %v1704 = vmul.f32 %v1662, 1.442695
      %v1705 = vpow.pop %v1704
      %v1706 = vmul.f32 %v1663, 1.442695
      %v1707 = vpow.pop %v1706
      %v1708 = vmul.f32 %v1664, 1.442695
      %v1709 = vpow.pop %v1708
      %v1710 = vmul.f32 %v1665, 1.442695
      %v1711 = vpow.pop %v1710
      %v1712 = vmul.f32 %v1666, 1.442695
      %v1713 = vpow.pop %v1712
      %v1714 = vmul.f32 %v1667, 1.442695
      %v1715 = vpow.pop %v1714
      %v1716 = vmul.f32 %v1668, 1.442695
      %v1717 = vpow.pop %v1716
      %v1718 = vmul.f32 %v1669, 1.442695
      %v1719 = vpow.pop %v1718
      %v1720 = vmul.f32 %v1670, 1.442695
      %v1721 = vpow.pop %v1720
      %v1722 = vmul.f32 %v1671, 1.442695
      %v1723 = vpow.pop %v1722
      %v1724 = vmul.f32 %v1672, 1.442695
      %v1725 = vpow.pop %v1724
      %v1726 = vmul.f32 %v1673, 1.442695
      %v1727 = vpow.pop %v1726
      %v1728 = vmul.f32 %v1674, 1.442695
      %v1729 = vpow.pop %v1728
      %v1730 = vmul.f32 %v1675, 1.442695
      %v1731 = vpow.pop %v1730
      %v1732 = vmul.f32 %v1676, 1.442695
      %v1733 = vpow.pop %v1732
      %v1734 = vmul.f32 %v1677, 1.442695
      %v1735 = vpow.pop %v1734
      %v1736 = vmul.f32 %v1678, 1.442695
      %v1737 = vpow.pop %v1736
      %v1738 = vmul.f32 %v1679, 1.442695
      %v1739 = vpow.pop %v1738
      %v1740 = vmul.f32 %v1680, 1.442695
      %v1741 = vpow.pop %v1740
      %v1742 = vmul.f32 %v1681, 1.442695
      %v1743 = vpow.pop %v1742
      %v1744 = vmul.f32 %v1682, 1.442695
      %v1745 = vpow.pop %v1744
      %v1746 = vmul.f32 %v1683, 1.442695
      %v1747 = vpow.pop %v1746
      %v1748 = vadd.f32 %v1685, 2.0
      %v1749 = vadd.f32 %v1687, 2.0
      %v1750 = vadd.f32 %v1689, 2.0
      %v1751 = vadd.f32 %v1691, 2.0
      %v1752 = vadd.f32 %v1693, 2.0
      %v1753 = vadd.f32 %v1695, 2.0
      %v1754 = vadd.f32 %v1697, 2.0
      %v1755 = vadd.f32 %v1699, 2.0
      %v1756 = vadd.f32 %v1701, 2.0
      %v1757 = vadd.f32 %v1703, 2.0
      %v1758 = vadd.f32 %v1705, 2.0
      %v1759 = vadd.f32 %v1707, 2.0
      %v1760 = vadd.f32 %v1709, 2.0
      %v1761 = vadd.f32 %v1711, 2.0
      %v1762 = vadd.f32 %v1713, 2.0
      %v1763 = vadd.f32 %v1715, 2.0
      %v1764 = vadd.f32 %v1717, 2.0
      %v1765 = vadd.f32 %v1719, 2.0
      %v1766 = vadd.f32 %v1721, 2.0
      %v1767 = vadd.f32 %v1723, 2.0
      %v1768 = vadd.f32 %v1725, 2.0
      %v1769 = vadd.f32 %v1727, 2.0
      %v1770 = vadd.f32 %v1729, 2.0
      %v1771 = vadd.f32 %v1731, 2.0
      %v1772 = vadd.f32 %v1733, 2.0
      %v1773 = vadd.f32 %v1735, 2.0
      %v1774 = vadd.f32 %v1737, 2.0
      %v1775 = vadd.f32 %v1739, 2.0
      %v1776 = vadd.f32 %v1741, 2.0
      %v1777 = vadd.f32 %v1743, 2.0
      %v1778 = vadd.f32 %v1745, 2.0
      %v1779 = vadd.f32 %v1747, 2.0
      %v1780 = vmul.f32 %v1685, %v1748
      %v1781 = vmul.f32 %v1687, %v1749
      %v1782 = vmul.f32 %v1689, %v1750
      %v1783 = vmul.f32 %v1691, %v1751
      %v1784 = vmul.f32 %v1693, %v1752
      %v1785 = vmul.f32 %v1695, %v1753
      %v1786 = vmul.f32 %v1697, %v1754
      %v1787 = vmul.f32 %v1699, %v1755
      %v1788 = vmul.f32 %v1701, %v1756
      %v1789 = vmul.f32 %v1703, %v1757
      %v1790 = vmul.f32 %v1705, %v1758
      %v1791 = vmul.f32 %v1707, %v1759
      %v1792 = vmul.f32 %v1709, %v1760
      %v1793 = vmul.f32 %v1711, %v1761
      %v1794 = vmul.f32 %v1713, %v1762
      %v1795 = vmul.f32 %v1715, %v1763
      %v1796 = vmul.f32 %v1717, %v1764
      %v1797 = vmul.f32 %v1719, %v1765
      %v1798 = vmul.f32 %v1721, %v1766
      %v1799 = vmul.f32 %v1723, %v1767
      %v1800 = vmul.f32 %v1725, %v1768
      %v1801 = vmul.f32 %v1727, %v1769
      %v1802 = vmul.f32 %v1729, %v1770
      %v1803 = vmul.f32 %v1731, %v1771
      %v1804 = vmul.f32 %v1733, %v1772
      %v1805 = vmul.f32 %v1735, %v1773
      %v1806 = vmul.f32 %v1737, %v1774
      %v1807 = vmul.f32 %v1739, %v1775
      %v1808 = vmul.f32 %v1741, %v1776
      %v1809 = vmul.f32 %v1743, %v1777
      %v1810 = vmul.f32 %v1745, %v1778
      %v1811 = vmul.f32 %v1747, %v1779
      %v1812 = vmul.f32 %v1620, %v1780
      %v1813 = vmul.f32 %v1621, %v1781
      %v1814 = vmul.f32 %v1622, %v1782
      %v1815 = vmul.f32 %v1623, %v1783
      %v1816 = vmul.f32 %v1624, %v1784
      %v1817 = vmul.f32 %v1625, %v1785
      %v1818 = vmul.f32 %v1626, %v1786
      %v1819 = vmul.f32 %v1627, %v1787
      %v1820 = vmul.f32 %v1628, %v1788
      %v1821 = vmul.f32 %v1629, %v1789
      %v1822 = vmul.f32 %v1630, %v1790
      %v1823 = vmul.f32 %v1631, %v1791
      %v1824 = vmul.f32 %v1632, %v1792
      %v1825 = vmul.f32 %v1633, %v1793
      %v1826 = vmul.f32 %v1634, %v1794
      %v1827 = vmul.f32 %v1635, %v1795
      %v1828 = vmul.f32 %v1636, %v1796
      %v1829 = vmul.f32 %v1637, %v1797
      %v1830 = vmul.f32 %v1638, %v1798
      %v1831 = vmul.f32 %v1639, %v1799
      %v1832 = vmul.f32 %v1640, %v1800
      %v1833 = vmul.f32 %v1641, %v1801
      %v1834 = vmul.f32 %v1642, %v1802
      %v1835 = vmul.f32 %v1643, %v1803
      %v1836 = vmul.f32 %v1644, %v1804
      %v1837 = vmul.f32 %v1645, %v1805
      %v1838 = vmul.f32 %v1646, %v1806
      %v1839 = vmul.f32 %v1647, %v1807
      %v1840 = vmul.f32 %v1648, %v1808
      %v1841 = vmul.f32 %v1649, %v1809
      %v1842 = vmul.f32 %v1650, %v1810
      %v1843 = vmul.f32 %v1651, %v1811
      %v1844 = vadd.f32 %v1780, 2.0
      %v1845 = vadd.f32 %v1781, 2.0
      %v1846 = vadd.f32 %v1782, 2.0
      %v1847 = vadd.f32 %v1783, 2.0
      %v1848 = vadd.f32 %v1784, 2.0
      %v1849 = vadd.f32 %v1785, 2.0
      %v1850 = vadd.f32 %v1786, 2.0
      %v1851 = vadd.f32 %v1787, 2.0
      %v1852 = vadd.f32 %v1788, 2.0
      %v1853 = vadd.f32 %v1789, 2.0
      %v1854 = vadd.f32 %v1790, 2.0
      %v1855 = vadd.f32 %v1791, 2.0
      %v1856 = vadd.f32 %v1792, 2.0
      %v1857 = vadd.f32 %v1793, 2.0
      %v1858 = vadd.f32 %v1794, 2.0
      %v1859 = vadd.f32 %v1795, 2.0
      %v1860 = vadd.f32 %v1796, 2.0
      %v1861 = vadd.f32 %v1797, 2.0
      %v1862 = vadd.f32 %v1798, 2.0
      %v1863 = vadd.f32 %v1799, 2.0
      %v1864 = vadd.f32 %v1800, 2.0
      %v1865 = vadd.f32 %v1801, 2.0
      %v1866 = vadd.f32 %v1802, 2.0
      %v1867 = vadd.f32 %v1803, 2.0
      %v1868 = vadd.f32 %v1804, 2.0
      %v1869 = vadd.f32 %v1805, 2.0
      %v1870 = vadd.f32 %v1806, 2.0
      %v1871 = vadd.f32 %v1807, 2.0
      %v1872 = vadd.f32 %v1808, 2.0
      %v1873 = vadd.f32 %v1809, 2.0
      %v1874 = vadd.f32 %v1810, 2.0
      %v1875 = vadd.f32 %v1811, 2.0
      %v1876 = vrcp.pop %v1844
      %v1877 = vrcp.pop %v1845
      %v1878 = vrcp.pop %v1846
      %v1879 = vrcp.pop %v1847
      %v1880 = vrcp.pop %v1848
      %v1881 = vrcp.pop %v1849
      %v1882 = vrcp.pop %v1850
      %v1883 = vrcp.pop %v1851
      %v1884 = vrcp.pop %v1852
      %v1885 = vrcp.pop %v1853
      %v1886 = vrcp.pop %v1854
      %v1887 = vrcp.pop %v1855
      %v1888 = vrcp.pop %v1856
      %v1889 = vrcp.pop %v1857
      %v1890 = vrcp.pop %v1858
      %v1891 = vrcp.pop %v1859
      %v1892 = vrcp.pop %v1860
      %v1893 = vrcp.pop %v1861
      %v1894 = vrcp.pop %v1862
      %v1895 = vrcp.pop %v1863
      %v1896 = vrcp.pop %v1864
      %v1897 = vrcp.pop %v1865
      %v1898 = vrcp.pop %v1866
      %v1899 = vrcp.pop %v1867
      %v1900 = vrcp.pop %v1868
      %v1901 = vrcp.pop %v1869
      %v1902 = vrcp.pop %v1870
      %v1903 = vrcp.pop %v1871
      %v1904 = vrcp.pop %v1872
      %v1905 = vrcp.pop %v1873
      %v1906 = vrcp.pop %v1874
      %v1907 = vrcp.pop %v1875
      %v1908 = vmul.f32 %v1812, %v1876
      %v1909 = vmul.f32 %v1813, %v1877
      %v1910 = vmul.f32 %v1814, %v1878
      %v1911 = vmul.f32 %v1815, %v1879
      %v1912 = vmul.f32 %v1816, %v1880
      %v1913 = vmul.f32 %v1817, %v1881
      %v1914 = vmul.f32 %v1818, %v1882
      %v1915 = vmul.f32 %v1819, %v1883
      %v1916 = vmul.f32 %v1820, %v1884
      %v1917 = vmul.f32 %v1821, %v1885
      %v1918 = vmul.f32 %v1822, %v1886
      %v1919 = vmul.f32 %v1823, %v1887
      %v1920 = vmul.f32 %v1824, %v1888
      %v1921 = vmul.f32 %v1825, %v1889
      %v1922 = vmul.f32 %v1826, %v1890
      %v1923 = vmul.f32 %v1827, %v1891
      %v1924 = vmul.f32 %v1828, %v1892
      %v1925 = vmul.f32 %v1829, %v1893
      %v1926 = vmul.f32 %v1830, %v1894
      %v1927 = vmul.f32 %v1831, %v1895
      %v1928 = vmul.f32 %v1832, %v1896
      %v1929 = vmul.f32 %v1833, %v1897
      %v1930 = vmul.f32 %v1834, %v1898
      %v1931 = vmul.f32 %v1835, %v1899
      %v1932 = vmul.f32 %v1836, %v1900
      %v1933 = vmul.f32 %v1837, %v1901
      %v1934 = vmul.f32 %v1838, %v1902
      %v1935 = vmul.f32 %v1839, %v1903
      %v1936 = vmul.f32 %v1840, %v1904
      %v1937 = vmul.f32 %v1841, %v1905
      %v1938 = vmul.f32 %v1842, %v1906
      %v1939 = vmul.f32 %v1843, %v1907
      %v1940 = vld [vmem:[%s550] sm:$0x1]
      %v1941 = vmin.f32 %v1940, 20.0
      %v1942 = vmul.f32 %v1941, 1.442695
      %v1943 = vpow.pop %v1942
      %v1944 = vadd.f32 %v1943, 2.0
      %v1945 = vmul.f32 %v1943, %v1944
      %v1946 = vmul.f32 %v1940, %v1945
      %v1947 = vadd.f32 %v1945, 2.0
      %v1948 = vrcp.pop %v1947
      %v1949 = vmul.f32 %v1946, %v1948
      %v1950 = vld [vmem:[%s8] sm:$0xff]
      %v1951 = vld [vmem:[%s8 + $0x8] sm:$0xff]
      %v1952 = vld [vmem:[%s8 + $0x10] sm:$0xff]
      %v1953 = vld [vmem:[%s8 + $0x18] sm:$0xff]
      %v1954 = vld [vmem:[%s9] sm:$0x1]
      %vm1955 = vcmask 261120
      %v1957 = vsel %vm1955, %v1949, 0
      %1959 = vmatprep.subr.mxu0 0.0
      %1960 = vmatpush1.msra.mxu0 0.0
      %1961 = vmatprep.subr.mxu0 0.0
      %1962 = vmatpush1.msra.mxu0 0.0
      %1963 = vmatprep.subr.mxu0 0.0
      %1964 = vmatpush1.msra.mxu0 0.0
      %1965 = vmatprep.subr.mxu0 0.0
      %1966 = vmatpush1.msra.mxu0 0.0
      %1967 = vmatprep.subr.mxu0 0.0
      %1968 = vmatpush1.msra.mxu0 0.0
      %1969 = vmatprep.subr.mxu0 0.0
      %1970 = vmatpush1.msra.mxu0 0.0
      %1971 = vmatprep.subr.mxu0 0.0
      %1972 = vmatpush1.msra.mxu0 0.0
      %1973 = vmatprep.subr.mxu0 0.0
      %1974 = vmatpush1.msra.mxu0 0.0
      %1975 = vmatprep.subr.mxu0 0.0
      %1976 = vmatpush1.msra.mxu0 0.0
      %1977 = vmatprep.subr.mxu0 0.0
      %1978 = vmatpush1.msra.mxu0 0.0
      %1979 = vmatprep.subr.mxu0 0.0
      %1980 = vmatpush1.msra.mxu0 0.0
      %1981 = vmatprep.subr.mxu0 0.0
      %1982 = vmatpush1.msra.mxu0 0.0
      %1983 = vmatprep.subr.mxu0 0.0
      %1984 = vmatpush1.msra.mxu0 %v1953
      %1985 = vmatprep.subr.mxu0 0.0
      %1986 = vmatpush1.msra.mxu0 %v1952
      %1987 = vmatprep.subr.mxu0 0.0
      %1988 = vmatpush1.msra.mxu0 %v1951
      %1989 = vmatprep.subr.mxu0 0.0
      %1990 = vmatpush1.msra.mxu0 %v1950
      %1991 = vmatprep.subr.mxu0 0.0
      %1992 = vmatpush2.msra.mxu0 0.0
      %1993 = vmatprep.subr.mxu0 0.0
      %1994 = vmatpush2.msra.mxu0 0.0
      %1995 = vmatprep.subr.mxu0 0.0
      %1996 = vmatpush2.msra.mxu0 0.0
      %1997 = vmatprep.subr.mxu0 0.0
      %1998 = vmatpush2.msra.mxu0 0.0
      %1999 = vmatprep.subr.mxu0 0.0
      %2000 = vmatpush2.msra.mxu0 0.0
      %2001 = vmatprep.subr.mxu0 0.0
      %2002 = vmatpush2.msra.mxu0 0.0
      %2003 = vmatprep.subr.mxu0 0.0
      %2004 = vmatpush2.msra.mxu0 0.0
      %2005 = vmatprep.subr.mxu0 0.0
      %2006 = vmatpush2.msra.mxu0 0.0
      %2007 = vmatprep.subr.mxu0 0.0
      %2008 = vmatpush2.msra.mxu0 0.0
      %2009 = vmatprep.subr.mxu0 0.0
      %2010 = vmatpush2.msra.mxu0 0.0
      %2011 = vmatprep.subr.mxu0 0.0
      %2012 = vmatpush2.msra.mxu0 0.0
      %2013 = vmatprep.subr.mxu0 0.0
      %2014 = vmatpush2.msra.mxu0 0.0
      %2015 = vmatprep.subr.mxu0 0.0
      %2016 = vmatpush2.msra.mxu0 0.0
      %2017 = vmatprep.subr.mxu0 0.0
      %2018 = vmatpush2.msra.mxu0 0.0
      %2019 = vmatprep.subr.mxu0 0.0
      %2020 = vmatpush2.msra.mxu0 0.0
      %2021 = vmatprep.subr.mxu0 0.0
      %2022 = vmatpush2.msra.mxu0 0.0
      %2023 = vmatprep.mubr.f32.mxu0 0.0
      %2024 = vmatmul.mubr.f32.gmra.mxu0 %v1957
      %v2025 = vpop.f32.mrf.mxu0
      %v2026 = vadd.f32 %v1954, %v2025
      %v2027 = vpop.f32.mrf.mxu0
      %2028 = vdwg.mxu0
      %v2029 = vlaneseq
      %v2030 = vshrl.u32 %v2029, 7
      %v2031 = vsub.s32 0, %v2030
      %v2032 = vrot.slane %v2026, %v2031
      %v2033 = vadd.f32 %v1908, %v2032
      %v2034 = vadd.f32 %v1909, %v2032
      %v2035 = vadd.f32 %v1910, %v2032
      %v2036 = vadd.f32 %v1911, %v2032
      %v2037 = vadd.f32 %v1912, %v2032
      %v2038 = vadd.f32 %v1913, %v2032
      %v2039 = vadd.f32 %v1914, %v2032
      %v2040 = vadd.f32 %v1915, %v2032
      %v2041 = vadd.f32 %v1916, %v2032
      %v2042 = vadd.f32 %v1917, %v2032
      %v2043 = vadd.f32 %v1918, %v2032
      %v2044 = vadd.f32 %v1919, %v2032
      %v2045 = vadd.f32 %v1920, %v2032
      %v2046 = vadd.f32 %v1921, %v2032
      %v2047 = vadd.f32 %v1922, %v2032
      %v2048 = vadd.f32 %v1923, %v2032
      %v2049 = vadd.f32 %v1924, %v2032
      %v2050 = vadd.f32 %v1925, %v2032
      %v2051 = vadd.f32 %v1926, %v2032
      %v2052 = vadd.f32 %v1927, %v2032
      %v2053 = vadd.f32 %v1928, %v2032
      %v2054 = vadd.f32 %v1929, %v2032
      %v2055 = vadd.f32 %v1930, %v2032
      %v2056 = vadd.f32 %v1931, %v2032
      %v2057 = vadd.f32 %v1932, %v2032
      %v2058 = vadd.f32 %v1933, %v2032
      %v2059 = vadd.f32 %v1934, %v2032
      %v2060 = vadd.f32 %v1935, %v2032
      %v2061 = vadd.f32 %v1936, %v2032
      %v2062 = vadd.f32 %v1937, %v2032
      %v2063 = vadd.f32 %v1938, %v2032
      %v2064 = vadd.f32 %v1939, %v2032
      %2065 = vst.msk [vmem:[#allocation2] sm:$0xff] %vm1247, 0.0
      %2066 = vst.msk [vmem:[#allocation2 + $0x8] sm:$0xff] %vm1247, 0.0
      %2067 = vst.msk [vmem:[#allocation2 + $0x10] sm:$0xff] %vm1247, 0.0
      %2068 = vst.msk [vmem:[#allocation2 + $0x118] sm:$0xff] %vm1247, 0.0
      %2069 = vst.msk [vmem:[#allocation2 + $0x120] sm:$0xff] %vm1247, 0.0
      %2070 = vst.msk [vmem:[#allocation2 + $0x128] sm:$0xff] %vm1247, 0.0
      %2071 = vst.msk [vmem:[#allocation2 + $0x18] sm:$0xff] %vm1247, %v2033
      %2072 = vst.msk [vmem:[#allocation2 + $0x20] sm:$0xff] %vm1247, %v2034
      %2073 = vst.msk [vmem:[#allocation2 + $0x28] sm:$0xff] %vm1247, %v2035
      %2074 = vst.msk [vmem:[#allocation2 + $0x30] sm:$0xff] %vm1247, %v2036
      %2075 = vst.msk [vmem:[#allocation2 + $0x38] sm:$0xff] %vm1247, %v2037
      %2076 = vst.msk [vmem:[#allocation2 + $0x40] sm:$0xff] %vm1247, %v2038
      %2077 = vst.msk [vmem:[#allocation2 + $0x48] sm:$0xff] %vm1247, %v2039
      %2078 = vst.msk [vmem:[#allocation2 + $0x50] sm:$0xff] %vm1247, %v2040
      %2079 = vst.msk [vmem:[#allocation2 + $0x58] sm:$0xff] %vm1247, %v2041
      %2080 = vst.msk [vmem:[#allocation2 + $0x60] sm:$0xff] %vm1247, %v2042
      %2081 = vst.msk [vmem:[#allocation2 + $0x68] sm:$0xff] %vm1247, %v2043
      %2082 = vst.msk [vmem:[#allocation2 + $0x70] sm:$0xff] %vm1247, %v2044
      %2083 = vst.msk [vmem:[#allocation2 + $0x78] sm:$0xff] %vm1247, %v2045
      %2084 = vst.msk [vmem:[#allocation2 + $0x80] sm:$0xff] %vm1247, %v2046
      %2085 = vst.msk [vmem:[#allocation2 + $0x88] sm:$0xff] %vm1247, %v2047
      %2086 = vst.msk [vmem:[#allocation2 + $0x90] sm:$0xff] %vm1247, %v2048
      %2087 = vst.msk [vmem:[#allocation2 + $0x98] sm:$0xff] %vm1247, %v2049
      %2088 = vst.msk [vmem:[#allocation2 + $0xa0] sm:$0xff] %vm1247, %v2050
      %2089 = vst.msk [vmem:[#allocation2 + $0xa8] sm:$0xff] %vm1247, %v2051
      %2090 = vst.msk [vmem:[#allocation2 + $0xb0] sm:$0xff] %vm1247, %v2052
      %2091 = vst.msk [vmem:[#allocation2 + $0xb8] sm:$0xff] %vm1247, %v2053
      %2092 = vst.msk [vmem:[#allocation2 + $0xc0] sm:$0xff] %vm1247, %v2054
      %2093 = vst.msk [vmem:[#allocation2 + $0xc8] sm:$0xff] %vm1247, %v2055
      %2094 = vst.msk [vmem:[#allocation2 + $0xd0] sm:$0xff] %vm1247, %v2056
      %2095 = vst.msk [vmem:[#allocation2 + $0xd8] sm:$0xff] %vm1247, %v2057
      %2096 = vst.msk [vmem:[#allocation2 + $0xe0] sm:$0xff] %vm1247, %v2058
      %2097 = vst.msk [vmem:[#allocation2 + $0xe8] sm:$0xff] %vm1247, %v2059
      %2098 = vst.msk [vmem:[#allocation2 + $0xf0] sm:$0xff] %vm1247, %v2060
      %2099 = vst.msk [vmem:[#allocation2 + $0xf8] sm:$0xff] %vm1247, %v2061
      %2100 = vst.msk [vmem:[#allocation2 + $0x100] sm:$0xff] %vm1247, %v2062
      %2101 = vst.msk [vmem:[#allocation2 + $0x108] sm:$0xff] %vm1247, %v2063
      %2102 = vst.msk [vmem:[#allocation2 + $0x110] sm:$0xff] %vm1247, %v2064
      %v2103 = vsel %vm781, 1, 0
      %v2104 = vsel %vm782, 1, 0
      %v2105 = vsel %vm783, 1, 0
      %v2106 = vsel %vm784, 1, 0
      %v2107 = vsel %vm785, 1, 0
      %v2108 = vsel %vm786, 1, 0
      %v2109 = vsel %vm787, 1, 0
      %v2110 = vsel %vm788, 1, 0
      %v2111 = vsel %vm789, 1, 0
      %v2112 = vsel %vm790, 1, 0
      %v2113 = vsel %vm791, 1, 0
      %v2114 = vsel %vm792, 1, 0
      %v2115 = vsel %vm793, 1, 0
      %v2116 = vsel %vm794, 1, 0
      %v2117 = vsel %vm795, 1, 0
      %v2118 = vsel %vm796, 1, 0
      %v2119 = vsel %vm797, 1, 0
      %v2120 = vsel %vm798, 1, 0
      %v2121 = vsel %vm799, 1, 0
      %v2122 = vsel %vm800, 1, 0
      %v2123 = vsel %vm801, 1, 0
      %v2124 = vsel %vm802, 1, 0
      %v2125 = vsel %vm803, 1, 0
      %v2126 = vsel %vm804, 1, 0
      %v2127 = vsel %vm805, 1, 0
      %v2128 = vsel %vm806, 1, 0
      %v2129 = vsel %vm807, 1, 0
      %v2130 = vsel %vm808, 1, 0
      %v2131 = vsel %vm809, 1, 0
      %v2132 = vsel %vm810, 1, 0
      %v2133 = vsel %vm811, 1, 0
      %v2134 = vsel %vm812, 1, 0
      %vm2135 = vcmp.eq.s32.totalorder %v2103, 1
      %vm2136 = vcmp.eq.s32.totalorder %v2104, 1
      %vm2137 = vcmp.eq.s32.totalorder %v2105, 1
      %vm2138 = vcmp.eq.s32.totalorder %v2106, 1
      %vm2139 = vcmp.eq.s32.totalorder %v2107, 1
      %vm2140 = vcmp.eq.s32.totalorder %v2108, 1
      %vm2141 = vcmp.eq.s32.totalorder %v2109, 1
      %vm2142 = vcmp.eq.s32.totalorder %v2110, 1
      %vm2143 = vcmp.eq.s32.totalorder %v2111, 1
      %vm2144 = vcmp.eq.s32.totalorder %v2112, 1
      %vm2145 = vcmp.eq.s32.totalorder %v2113, 1
      %vm2146 = vcmp.eq.s32.totalorder %v2114, 1
      %vm2147 = vcmp.eq.s32.totalorder %v2115, 1
      %vm2148 = vcmp.eq.s32.totalorder %v2116, 1
      %vm2149 = vcmp.eq.s32.totalorder %v2117, 1
      %vm2150 = vcmp.eq.s32.totalorder %v2118, 1
      %vm2151 = vcmp.eq.s32.totalorder %v2119, 1
      %vm2152 = vcmp.eq.s32.totalorder %v2120, 1
      %vm2153 = vcmp.eq.s32.totalorder %v2121, 1
      %vm2154 = vcmp.eq.s32.totalorder %v2122, 1
      %vm2155 = vcmp.eq.s32.totalorder %v2123, 1
      %vm2156 = vcmp.eq.s32.totalorder %v2124, 1
      %vm2157 = vcmp.eq.s32.totalorder %v2125, 1
      %vm2158 = vcmp.eq.s32.totalorder %v2126, 1
      %vm2159 = vcmp.eq.s32.totalorder %v2127, 1
      %vm2160 = vcmp.eq.s32.totalorder %v2128, 1
      %vm2161 = vcmp.eq.s32.totalorder %v2129, 1
      %vm2162 = vcmp.eq.s32.totalorder %v2130, 1
      %vm2163 = vcmp.eq.s32.totalorder %v2131, 1
      %vm2164 = vcmp.eq.s32.totalorder %v2132, 1
      %vm2165 = vcmp.eq.s32.totalorder %v2133, 1
      %vm2166 = vcmp.eq.s32.totalorder %v2134, 1
      %v2167 = vsel %vm813, 1, 0
      %v2168 = vsel %vm814, 1, 0
      %v2169 = vsel %vm815, 1, 0
      %v2170 = vsel %vm816, 1, 0
      %v2171 = vsel %vm817, 1, 0
      %v2172 = vsel %vm818, 1, 0
      %v2173 = vsel %vm819, 1, 0
      %v2174 = vsel %vm820, 1, 0
      %v2175 = vsel %vm821, 1, 0
      %v2176 = vsel %vm822, 1, 0
      %v2177 = vsel %vm823, 1, 0
      %v2178 = vsel %vm824, 1, 0
      %v2179 = vsel %vm825, 1, 0
      %v2180 = vsel %vm826, 1, 0
      %v2181 = vsel %vm827, 1, 0
      %v2182 = vsel %vm828, 1, 0
      %v2183 = vsel %vm829, 1, 0
      %v2184 = vsel %vm830, 1, 0
      %v2185 = vsel %vm831, 1, 0
      %v2186 = vsel %vm832, 1, 0
      %v2187 = vsel %vm833, 1, 0
      %v2188 = vsel %vm834, 1, 0
      %v2189 = vsel %vm835, 1, 0
      %v2190 = vsel %vm836, 1, 0
      %v2191 = vsel %vm837, 1, 0
      %v2192 = vsel %vm838, 1, 0
      %v2193 = vsel %vm839, 1, 0
      %v2194 = vsel %vm840, 1, 0
      %v2195 = vsel %vm841, 1, 0
      %v2196 = vsel %vm842, 1, 0
      %v2197 = vsel %vm843, 1, 0
      %v2198 = vsel %vm844, 1, 0
      %vm2199 = vcmp.eq.s32.totalorder %v2167, 1
      %vm2200 = vcmp.eq.s32.totalorder %v2168, 1
      %vm2201 = vcmp.eq.s32.totalorder %v2169, 1
      %vm2202 = vcmp.eq.s32.totalorder %v2170, 1
      %vm2203 = vcmp.eq.s32.totalorder %v2171, 1
      %vm2204 = vcmp.eq.s32.totalorder %v2172, 1
      %vm2205 = vcmp.eq.s32.totalorder %v2173, 1
      %vm2206 = vcmp.eq.s32.totalorder %v2174, 1
      %vm2207 = vcmp.eq.s32.totalorder %v2175, 1
      %vm2208 = vcmp.eq.s32.totalorder %v2176, 1
      %vm2209 = vcmp.eq.s32.totalorder %v2177, 1
      %vm2210 = vcmp.eq.s32.totalorder %v2178, 1
      %vm2211 = vcmp.eq.s32.totalorder %v2179, 1
      %vm2212 = vcmp.eq.s32.totalorder %v2180, 1
      %vm2213 = vcmp.eq.s32.totalorder %v2181, 1
      %vm2214 = vcmp.eq.s32.totalorder %v2182, 1
      %vm2215 = vcmp.eq.s32.totalorder %v2183, 1
      %vm2216 = vcmp.eq.s32.totalorder %v2184, 1
      %vm2217 = vcmp.eq.s32.totalorder %v2185, 1
      %vm2218 = vcmp.eq.s32.totalorder %v2186, 1
      %vm2219 = vcmp.eq.s32.totalorder %v2187, 1
      %vm2220 = vcmp.eq.s32.totalorder %v2188, 1
      %vm2221 = vcmp.eq.s32.totalorder %v2189, 1
      %vm2222 = vcmp.eq.s32.totalorder %v2190, 1
      %vm2223 = vcmp.eq.s32.totalorder %v2191, 1
      %vm2224 = vcmp.eq.s32.totalorder %v2192, 1
      %vm2225 = vcmp.eq.s32.totalorder %v2193, 1
      %vm2226 = vcmp.eq.s32.totalorder %v2194, 1
      %vm2227 = vcmp.eq.s32.totalorder %v2195, 1
      %vm2228 = vcmp.eq.s32.totalorder %v2196, 1
      %vm2229 = vcmp.eq.s32.totalorder %v2197, 1
      %vm2230 = vcmp.eq.s32.totalorder %v2198, 1
      %v2231 = vld [vmem:[#allocation2 + $0x7] sm:$0xff]
      %v2232 = vld [vmem:[#allocation2 + $0xf] sm:$0xff]
      %v2233 = vld [vmem:[#allocation2 + $0x17] sm:$0xff]
      %v2234 = vld [vmem:[#allocation2 + $0x1f] sm:$0xff]
      %v2235 = vld [vmem:[#allocation2 + $0x27] sm:$0xff]
      %v2236 = vld [vmem:[#allocation2 + $0x2f] sm:$0xff]
      %v2237 = vld [vmem:[#allocation2 + $0x37] sm:$0xff]
      %v2238 = vld [vmem:[#allocation2 + $0x3f] sm:$0xff]
      %v2239 = vld [vmem:[#allocation2 + $0x47] sm:$0xff]
      %v2240 = vld [vmem:[#allocation2 + $0x4f] sm:$0xff]
      %v2241 = vld [vmem:[#allocation2 + $0x57] sm:$0xff]
      %v2242 = vld [vmem:[#allocation2 + $0x5f] sm:$0xff]
      %v2243 = vld [vmem:[#allocation2 + $0x67] sm:$0xff]
      %v2244 = vld [vmem:[#allocation2 + $0x6f] sm:$0xff]
      %v2245 = vld [vmem:[#allocation2 + $0x77] sm:$0xff]
      %v2246 = vld [vmem:[#allocation2 + $0x7f] sm:$0xff]
      %v2247 = vld [vmem:[#allocation2 + $0x87] sm:$0xff]
      %v2248 = vld [vmem:[#allocation2 + $0x8f] sm:$0xff]
      %v2249 = vld [vmem:[#allocation2 + $0x97] sm:$0xff]
      %v2250 = vld [vmem:[#allocation2 + $0x9f] sm:$0xff]
      %v2251 = vld [vmem:[#allocation2 + $0xa7] sm:$0xff]
      %v2252 = vld [vmem:[#allocation2 + $0xaf] sm:$0xff]
      %v2253 = vld [vmem:[#allocation2 + $0xb7] sm:$0xff]
      %v2254 = vld [vmem:[#allocation2 + $0xbf] sm:$0xff]
      %v2255 = vld [vmem:[#allocation2 + $0xc7] sm:$0xff]
      %v2256 = vld [vmem:[#allocation2 + $0xcf] sm:$0xff]
      %v2257 = vld [vmem:[#allocation2 + $0xd7] sm:$0xff]
      %v2258 = vld [vmem:[#allocation2 + $0xdf] sm:$0xff]
      %v2259 = vld [vmem:[#allocation2 + $0xe7] sm:$0xff]
      %v2260 = vld [vmem:[#allocation2 + $0xef] sm:$0xff]
      %v2261 = vld [vmem:[#allocation2 + $0xf7] sm:$0xff]
      %v2262 = vld [vmem:[#allocation2 + $0xff] sm:$0xff]
      %v2263 = vsel %vm2135, %v2231, 0.0
      %v2264 = vsel %vm2136, %v2232, 0.0
      %v2265 = vsel %vm2137, %v2233, 0.0
      %v2266 = vsel %vm2138, %v2234, 0.0
      %v2267 = vsel %vm2139, %v2235, 0.0
      %v2268 = vsel %vm2140, %v2236, 0.0
      %v2269 = vsel %vm2141, %v2237, 0.0
      %v2270 = vsel %vm2142, %v2238, 0.0
      %v2271 = vsel %vm2143, %v2239, 0.0
      %v2272 = vsel %vm2144, %v2240, 0.0
      %v2273 = vsel %vm2145, %v2241, 0.0
      %v2274 = vsel %vm2146, %v2242, 0.0
      %v2275 = vsel %vm2147, %v2243, 0.0
      %v2276 = vsel %vm2148, %v2244, 0.0
      %v2277 = vsel %vm2149, %v2245, 0.0
      %v2278 = vsel %vm2150, %v2246, 0.0
      %v2279 = vsel %vm2151, %v2247, 0.0
      %v2280 = vsel %vm2152, %v2248, 0.0
      %v2281 = vsel %vm2153, %v2249, 0.0
      %v2282 = vsel %vm2154, %v2250, 0.0
      %v2283 = vsel %vm2155, %v2251, 0.0
      %v2284 = vsel %vm2156, %v2252, 0.0
      %v2285 = vsel %vm2157, %v2253, 0.0
      %v2286 = vsel %vm2158, %v2254, 0.0
      %v2287 = vsel %vm2159, %v2255, 0.0
      %v2288 = vsel %vm2160, %v2256, 0.0
      %v2289 = vsel %vm2161, %v2257, 0.0
      %v2290 = vsel %vm2162, %v2258, 0.0
      %v2291 = vsel %vm2163, %v2259, 0.0
      %v2292 = vsel %vm2164, %v2260, 0.0
      %v2293 = vsel %vm2165, %v2261, 0.0
      %v2294 = vsel %vm2166, %v2262, 0.0
      %v2295 = vld [vmem:[%s10] sm:$0xff]
      %v2296 = vld [vmem:[%s10 + $0x8] sm:$0xff]
      %v2297 = vld [vmem:[#allocation2 + $0x8] sm:$0xff]
      %v2298 = vld [vmem:[#allocation2 + $0x10] sm:$0xff]
      %v2299 = vld [vmem:[#allocation2 + $0x18] sm:$0xff]
      %v2300 = vld [vmem:[#allocation2 + $0x20] sm:$0xff]
      %v2301 = vld [vmem:[#allocation2 + $0x28] sm:$0xff]
      %v2302 = vld [vmem:[#allocation2 + $0x30] sm:$0xff]
      %v2303 = vld [vmem:[#allocation2 + $0x38] sm:$0xff]
      %v2304 = vld [vmem:[#allocation2 + $0x40] sm:$0xff]
      %v2305 = vld [vmem:[#allocation2 + $0x48] sm:$0xff]
      %v2306 = vld [vmem:[#allocation2 + $0x50] sm:$0xff]
      %v2307 = vld [vmem:[#allocation2 + $0x58] sm:$0xff]
      %v2308 = vld [vmem:[#allocation2 + $0x60] sm:$0xff]
      %v2309 = vld [vmem:[#allocation2 + $0x68] sm:$0xff]
      %v2310 = vld [vmem:[#allocation2 + $0x70] sm:$0xff]
      %v2311 = vld [vmem:[#allocation2 + $0x78] sm:$0xff]
      %v2312 = vld [vmem:[#allocation2 + $0x80] sm:$0xff]
      %v2313 = vld [vmem:[#allocation2 + $0x88] sm:$0xff]
      %v2314 = vld [vmem:[#allocation2 + $0x90] sm:$0xff]
      %v2315 = vld [vmem:[#allocation2 + $0x98] sm:$0xff]
      %v2316 = vld [vmem:[#allocation2 + $0xa0] sm:$0xff]
      %v2317 = vld [vmem:[#allocation2 + $0xa8] sm:$0xff]
      %v2318 = vld [vmem:[#allocation2 + $0xb0] sm:$0xff]
      %v2319 = vld [vmem:[#allocation2 + $0xb8] sm:$0xff]
      %v2320 = vld [vmem:[#allocation2 + $0xc0] sm:$0xff]
      %v2321 = vld [vmem:[#allocation2 + $0xc8] sm:$0xff]
      %v2322 = vld [vmem:[#allocation2 + $0xd0] sm:$0xff]
      %v2323 = vld [vmem:[#allocation2 + $0xd8] sm:$0xff]
      %v2324 = vld [vmem:[#allocation2 + $0xe0] sm:$0xff]
      %v2325 = vld [vmem:[#allocation2 + $0xe8] sm:$0xff]
      %v2326 = vld [vmem:[#allocation2 + $0xf0] sm:$0xff]
      %v2327 = vld [vmem:[#allocation2 + $0xf8] sm:$0xff]
      %v2328 = vld [vmem:[#allocation2 + $0x100] sm:$0xff]
      %s2329 = scalar_lea.vmem %s10, 16
      %v2330 = vld [vmem:[%s2329] sm:$0xff]
      %v2331 = vld [vmem:[%s2329 + $0x8] sm:$0xff]
      %v2333 = vsel %vm1247, %v2297, 0
      %v2336 = vsel %vm1247, %v2298, 0
      %v2339 = vsel %vm1247, %v2299, 0
      %v2342 = vsel %vm1247, %v2300, 0
      %v2345 = vsel %vm1247, %v2301, 0
      %v2348 = vsel %vm1247, %v2302, 0
      %v2351 = vsel %vm1247, %v2303, 0
      %v2354 = vsel %vm1247, %v2304, 0
      %v2357 = vsel %vm1247, %v2305, 0
      %v2360 = vsel %vm1247, %v2306, 0
      %v2363 = vsel %vm1247, %v2307, 0
      %v2366 = vsel %vm1247, %v2308, 0
      %v2369 = vsel %vm1247, %v2309, 0
      %v2372 = vsel %vm1247, %v2310, 0
      %v2375 = vsel %vm1247, %v2311, 0
      %v2378 = vsel %vm1247, %v2312, 0
      %v2381 = vsel %vm1247, %v2313, 0
      %v2384 = vsel %vm1247, %v2314, 0
      %v2387 = vsel %vm1247, %v2315, 0
      %v2390 = vsel %vm1247, %v2316, 0
      %v2393 = vsel %vm1247, %v2317, 0
      %v2396 = vsel %vm1247, %v2318, 0
      %v2399 = vsel %vm1247, %v2319, 0
      %v2402 = vsel %vm1247, %v2320, 0
      %v2405 = vsel %vm1247, %v2321, 0
      %v2408 = vsel %vm1247, %v2322, 0
      %v2411 = vsel %vm1247, %v2323, 0
      %v2414 = vsel %vm1247, %v2324, 0
      %v2417 = vsel %vm1247, %v2325, 0
      %v2420 = vsel %vm1247, %v2326, 0
      %v2423 = vsel %vm1247, %v2327, 0
      %v2426 = vsel %vm1247, %v2328, 0
      %2428 = vmatprep.subr.mxu0 0.0
      %2429 = vmatpush1.msra.mxu0 0.0
      %2430 = vmatprep.subr.mxu0 0.0
      %2431 = vmatpush1.msra.mxu0 0.0
      %2432 = vmatprep.subr.mxu0 0.0
      %2433 = vmatpush1.msra.mxu0 0.0
      %2434 = vmatprep.subr.mxu0 0.0
      %2435 = vmatpush1.msra.mxu0 0.0
      %2436 = vmatprep.subr.mxu0 0.0
      %2437 = vmatpush1.msra.mxu0 0.0
      %2438 = vmatprep.subr.mxu0 0.0
      %2439 = vmatpush1.msra.mxu0 0.0
      %2440 = vmatprep.subr.mxu0 0.0
      %2441 = vmatpush1.msra.mxu0 0.0
      %2442 = vmatprep.subr.mxu0 0.0
      %2443 = vmatpush1.msra.mxu0 0.0
      %2444 = vmatprep.subr.mxu0 0.0
      %2445 = vmatpush1.msra.mxu0 0.0
      %2446 = vmatprep.subr.mxu0 0.0
      %2447 = vmatpush1.msra.mxu0 0.0
      %2448 = vmatprep.subr.mxu0 0.0
      %2449 = vmatpush1.msra.mxu0 0.0
      %2450 = vmatprep.subr.mxu0 0.0
      %2451 = vmatpush1.msra.mxu0 0.0
      %2452 = vmatprep.subr.mxu0 0.0
      %2453 = vmatpush1.msra.mxu0 0.0
      %2454 = vmatprep.subr.mxu0 0.0
      %2455 = vmatpush1.msra.mxu0 0.0
      %2456 = vmatprep.subr.mxu0 0.0
      %2457 = vmatpush1.msra.mxu0 %v2331
      %2458 = vmatprep.subr.mxu0 0.0
      %2459 = vmatpush1.msra.mxu0 %v2330
      %2460 = vmatprep.subr.mxu0 0.0
      %2461 = vmatpush2.msra.mxu0 0.0
      %2462 = vmatprep.subr.mxu0 0.0
      %2463 = vmatpush2.msra.mxu0 0.0
      %2464 = vmatprep.subr.mxu0 0.0
      %2465 = vmatpush2.msra.mxu0 0.0
      %2466 = vmatprep.subr.mxu0 0.0
      %2467 = vmatpush2.msra.mxu0 0.0
      %2468 = vmatprep.subr.mxu0 0.0
      %2469 = vmatpush2.msra.mxu0 0.0
      %2470 = vmatprep.subr.mxu0 0.0
      %2471 = vmatpush2.msra.mxu0 0.0
      %2472 = vmatprep.subr.mxu0 0.0
      %2473 = vmatpush2.msra.mxu0 0.0
      %2474 = vmatprep.subr.mxu0 0.0
      %2475 = vmatpush2.msra.mxu0 0.0
      %2476 = vmatprep.subr.mxu0 0.0
      %2477 = vmatpush2.msra.mxu0 0.0
      %2478 = vmatprep.subr.mxu0 0.0
      %2479 = vmatpush2.msra.mxu0 0.0
      %2480 = vmatprep.subr.mxu0 0.0
      %2481 = vmatpush2.msra.mxu0 0.0
      %2482 = vmatprep.subr.mxu0 0.0
      %2483 = vmatpush2.msra.mxu0 0.0
      %2484 = vmatprep.subr.mxu0 0.0
      %2485 = vmatpush2.msra.mxu0 0.0
      %2486 = vmatprep.subr.mxu0 0.0
      %2487 = vmatpush2.msra.mxu0 0.0
      %2488 = vmatprep.subr.mxu0 0.0
      %2489 = vmatpush2.msra.mxu0 0.0
      %2490 = vmatprep.subr.mxu0 0.0
      %2491 = vmatpush2.msra.mxu0 0.0
      %2492 = vmatprep.mubr.f32.mxu0 0.0
      %2493 = vmatmul.mubr.f32.gmra.mxu0 %v2333
      %v2494 = vpop.f32.mrf.mxu0
      %v2495 = vadd.f32 0.0, %v2494
      %v2496 = vpop.f32.mrf.mxu0
      %2497 = vmatprep.mubr.f32.mxu0 0.0
      %2498 = vmatmul.mubr.f32.gmra.mxu0 %v2336
      %v2499 = vpop.f32.mrf.mxu0
      %v2500 = vadd.f32 0.0, %v2499
      %v2501 = vpop.f32.mrf.mxu0
      %2502 = vmatprep.mubr.f32.mxu0 0.0
      %2503 = vmatmul.mubr.f32.gmra.mxu0 %v2339
      %v2504 = vpop.f32.mrf.mxu0
      %v2505 = vadd.f32 0.0, %v2504
      %v2506 = vpop.f32.mrf.mxu0
      %2507 = vmatprep.mubr.f32.mxu0 0.0
      %2508 = vmatmul.mubr.f32.gmra.mxu0 %v2342
      %v2509 = vpop.f32.mrf.mxu0
      %v2510 = vadd.f32 0.0, %v2509
      %v2511 = vpop.f32.mrf.mxu0
      %2512 = vmatprep.mubr.f32.mxu0 0.0
      %2513 = vmatmul.mubr.f32.gmra.mxu0 %v2345
      %v2514 = vpop.f32.mrf.mxu0
      %v2515 = vadd.f32 0.0, %v2514
      %v2516 = vpop.f32.mrf.mxu0
      %2517 = vmatprep.mubr.f32.mxu0 0.0
      %2518 = vmatmul.mubr.f32.gmra.mxu0 %v2348
      %v2519 = vpop.f32.mrf.mxu0
      %v2520 = vadd.f32 0.0, %v2519
      %v2521 = vpop.f32.mrf.mxu0
      %2522 = vmatprep.mubr.f32.mxu0 0.0
      %2523 = vmatmul.mubr.f32.gmra.mxu0 %v2351
      %v2524 = vpop.f32.mrf.mxu0
      %v2525 = vadd.f32 0.0, %v2524
      %v2526 = vpop.f32.mrf.mxu0
      %2527 = vmatprep.mubr.f32.mxu0 0.0
      %2528 = vmatmul.mubr.f32.gmra.mxu0 %v2354
      %v2529 = vpop.f32.mrf.mxu0
      %v2530 = vadd.f32 0.0, %v2529
      %v2531 = vpop.f32.mrf.mxu0
      %2532 = vmatprep.mubr.f32.mxu0 0.0
      %2533 = vmatmul.mubr.f32.gmra.mxu0 %v2357
      %v2534 = vpop.f32.mrf.mxu0
      %v2535 = vadd.f32 0.0, %v2534
      %v2536 = vpop.f32.mrf.mxu0
      %2537 = vmatprep.mubr.f32.mxu0 0.0
      %2538 = vmatmul.mubr.f32.gmra.mxu0 %v2360
      %v2539 = vpop.f32.mrf.mxu0
      %v2540 = vadd.f32 0.0, %v2539
      %v2541 = vpop.f32.mrf.mxu0
      %2542 = vmatprep.mubr.f32.mxu0 0.0
      %2543 = vmatmul.mubr.f32.gmra.mxu0 %v2363
      %v2544 = vpop.f32.mrf.mxu0
      %v2545 = vadd.f32 0.0, %v2544
      %v2546 = vpop.f32.mrf.mxu0
      %2547 = vmatprep.mubr.f32.mxu0 0.0
      %2548 = vmatmul.mubr.f32.gmra.mxu0 %v2366
      %v2549 = vpop.f32.mrf.mxu0
      %v2550 = vadd.f32 0.0, %v2549
      %v2551 = vpop.f32.mrf.mxu0
      %2552 = vmatprep.mubr.f32.mxu0 0.0
      %2553 = vmatmul.mubr.f32.gmra.mxu0 %v2369
      %v2554 = vpop.f32.mrf.mxu0
      %v2555 = vadd.f32 0.0, %v2554
      %v2556 = vpop.f32.mrf.mxu0
      %2557 = vmatprep.mubr.f32.mxu0 0.0
      %2558 = vmatmul.mubr.f32.gmra.mxu0 %v2372
      %v2559 = vpop.f32.mrf.mxu0
      %v2560 = vadd.f32 0.0, %v2559
      %v2561 = vpop.f32.mrf.mxu0
      %2562 = vmatprep.mubr.f32.mxu0 0.0
      %2563 = vmatmul.mubr.f32.gmra.mxu0 %v2375
      %v2564 = vpop.f32.mrf.mxu0
      %v2565 = vadd.f32 0.0, %v2564
      %v2566 = vpop.f32.mrf.mxu0
      %2567 = vmatprep.mubr.f32.mxu0 0.0
      %2568 = vmatmul.mubr.f32.gmra.mxu0 %v2378
      %v2569 = vpop.f32.mrf.mxu0
      %v2570 = vadd.f32 0.0, %v2569
      %v2571 = vpop.f32.mrf.mxu0
      %2572 = vmatprep.mubr.f32.mxu0 0.0
      %2573 = vmatmul.mubr.f32.gmra.mxu0 %v2381
      %v2574 = vpop.f32.mrf.mxu0
      %v2575 = vadd.f32 0.0, %v2574
      %v2576 = vpop.f32.mrf.mxu0
      %2577 = vmatprep.mubr.f32.mxu0 0.0
      %2578 = vmatmul.mubr.f32.gmra.mxu0 %v2384
      %v2579 = vpop.f32.mrf.mxu0
      %v2580 = vadd.f32 0.0, %v2579
      %v2581 = vpop.f32.mrf.mxu0
      %2582 = vmatprep.mubr.f32.mxu0 0.0
      %2583 = vmatmul.mubr.f32.gmra.mxu0 %v2387
      %v2584 = vpop.f32.mrf.mxu0
      %v2585 = vadd.f32 0.0, %v2584
      %v2586 = vpop.f32.mrf.mxu0
      %2587 = vmatprep.mubr.f32.mxu0 0.0
      %2588 = vmatmul.mubr.f32.gmra.mxu0 %v2390
      %v2589 = vpop.f32.mrf.mxu0
      %v2590 = vadd.f32 0.0, %v2589
      %v2591 = vpop.f32.mrf.mxu0
      %2592 = vmatprep.mubr.f32.mxu0 0.0
      %2593 = vmatmul.mubr.f32.gmra.mxu0 %v2393
      %v2594 = vpop.f32.mrf.mxu0
      %v2595 = vadd.f32 0.0, %v2594
      %v2596 = vpop.f32.mrf.mxu0
      %2597 = vmatprep.mubr.f32.mxu0 0.0
      %2598 = vmatmul.mubr.f32.gmra.mxu0 %v2396
      %v2599 = vpop.f32.mrf.mxu0
      %v2600 = vadd.f32 0.0, %v2599
      %v2601 = vpop.f32.mrf.mxu0
      %2602 = vmatprep.mubr.f32.mxu0 0.0
      %2603 = vmatmul.mubr.f32.gmra.mxu0 %v2399
      %v2604 = vpop.f32.mrf.mxu0
      %v2605 = vadd.f32 0.0, %v2604
      %v2606 = vpop.f32.mrf.mxu0
      %2607 = vmatprep.mubr.f32.mxu0 0.0
      %2608 = vmatmul.mubr.f32.gmra.mxu0 %v2402
      %v2609 = vpop.f32.mrf.mxu0
      %v2610 = vadd.f32 0.0, %v2609
      %v2611 = vpop.f32.mrf.mxu0
      %2612 = vmatprep.mubr.f32.mxu0 0.0
      %2613 = vmatmul.mubr.f32.gmra.mxu0 %v2405
      %v2614 = vpop.f32.mrf.mxu0
      %v2615 = vadd.f32 0.0, %v2614
      %v2616 = vpop.f32.mrf.mxu0
      %2617 = vmatprep.mubr.f32.mxu0 0.0
      %2618 = vmatmul.mubr.f32.gmra.mxu0 %v2408
      %v2619 = vpop.f32.mrf.mxu0
      %v2620 = vadd.f32 0.0, %v2619
      %v2621 = vpop.f32.mrf.mxu0
      %2622 = vmatprep.mubr.f32.mxu0 0.0
      %2623 = vmatmul.mubr.f32.gmra.mxu0 %v2411
      %v2624 = vpop.f32.mrf.mxu0
      %v2625 = vadd.f32 0.0, %v2624
      %v2626 = vpop.f32.mrf.mxu0
      %2627 = vmatprep.mubr.f32.mxu0 0.0
      %2628 = vmatmul.mubr.f32.gmra.mxu0 %v2414
      %v2629 = vpop.f32.mrf.mxu0
      %v2630 = vadd.f32 0.0, %v2629
      %v2631 = vpop.f32.mrf.mxu0
      %2632 = vmatprep.mubr.f32.mxu0 0.0
      %2633 = vmatmul.mubr.f32.gmra.mxu0 %v2417
      %v2634 = vpop.f32.mrf.mxu0
      %v2635 = vadd.f32 0.0, %v2634
      %v2636 = vpop.f32.mrf.mxu0
      %2637 = vmatprep.mubr.f32.mxu0 0.0
      %2638 = vmatmul.mubr.f32.gmra.mxu0 %v2420
      %v2639 = vpop.f32.mrf.mxu0
      %v2640 = vadd.f32 0.0, %v2639
      %v2641 = vpop.f32.mrf.mxu0
      %2642 = vmatprep.mubr.f32.mxu0 0.0
      %2643 = vmatmul.mubr.f32.gmra.mxu0 %v2423
      %v2644 = vpop.f32.mrf.mxu0
      %v2645 = vadd.f32 0.0, %v2644
      %v2646 = vpop.f32.mrf.mxu0
      %2647 = vmatprep.mubr.f32.mxu0 0.0
      %2648 = vmatmul.mubr.f32.gmra.mxu0 %v2426
      %v2649 = vpop.f32.mrf.mxu0
      %v2650 = vadd.f32 0.0, %v2649
      %v2651 = vpop.f32.mrf.mxu0
      %2652 = vdwg.mxu0
      %v2654 = vsel %vm1247, %v2263, 0
      %v2657 = vsel %vm1247, %v2264, 0
      %v2660 = vsel %vm1247, %v2265, 0
      %v2663 = vsel %vm1247, %v2266, 0
      %v2666 = vsel %vm1247, %v2267, 0
      %v2669 = vsel %vm1247, %v2268, 0
      %v2672 = vsel %vm1247, %v2269, 0
      %v2675 = vsel %vm1247, %v2270, 0
      %v2678 = vsel %vm1247, %v2271, 0
      %v2681 = vsel %vm1247, %v2272, 0
      %v2684 = vsel %vm1247, %v2273, 0
      %v2687 = vsel %vm1247, %v2274, 0
      %v2690 = vsel %vm1247, %v2275, 0
      %v2693 = vsel %vm1247, %v2276, 0
      %v2696 = vsel %vm1247, %v2277, 0
      %v2699 = vsel %vm1247, %v2278, 0
      %v2702 = vsel %vm1247, %v2279, 0
      %v2705 = vsel %vm1247, %v2280, 0
      %v2708 = vsel %vm1247, %v2281, 0
      %v2711 = vsel %vm1247, %v2282, 0
      %v2714 = vsel %vm1247, %v2283, 0
      %v2717 = vsel %vm1247, %v2284, 0
      %v2720 = vsel %vm1247, %v2285, 0
      %v2723 = vsel %vm1247, %v2286, 0
      %v2726 = vsel %vm1247, %v2287, 0
      %v2729 = vsel %vm1247, %v2288, 0
      %v2732 = vsel %vm1247, %v2289, 0
      %v2735 = vsel %vm1247, %v2290, 0
      %v2738 = vsel %vm1247, %v2291, 0
      %v2741 = vsel %vm1247, %v2292, 0
      %v2744 = vsel %vm1247, %v2293, 0
      %v2747 = vsel %vm1247, %v2294, 0
      %2749 = vmatprep.subr.mxu0 0.0
      %2750 = vmatpush1.msra.mxu0 0.0
      %2751 = vmatprep.subr.mxu0 0.0
      %2752 = vmatpush1.msra.mxu0 0.0
      %2753 = vmatprep.subr.mxu0 0.0
      %2754 = vmatpush1.msra.mxu0 0.0
      %2755 = vmatprep.subr.mxu0 0.0
      %2756 = vmatpush1.msra.mxu0 0.0
      %2757 = vmatprep.subr.mxu0 0.0
      %2758 = vmatpush1.msra.mxu0 0.0
      %2759 = vmatprep.subr.mxu0 0.0
      %2760 = vmatpush1.msra.mxu0 0.0
      %2761 = vmatprep.subr.mxu0 0.0
      %2762 = vmatpush1.msra.mxu0 0.0
      %2763 = vmatprep.subr.mxu0 0.0
      %2764 = vmatpush1.msra.mxu0 0.0
      %2765 = vmatprep.subr.mxu0 0.0
      %2766 = vmatpush1.msra.mxu0 0.0
      %2767 = vmatprep.subr.mxu0 0.0
      %2768 = vmatpush1.msra.mxu0 0.0
      %2769 = vmatprep.subr.mxu0 0.0
      %2770 = vmatpush1.msra.mxu0 0.0
      %2771 = vmatprep.subr.mxu0 0.0
      %2772 = vmatpush1.msra.mxu0 0.0
      %2773 = vmatprep.subr.mxu0 0.0
      %2774 = vmatpush1.msra.mxu0 0.0
      %2775 = vmatprep.subr.mxu0 0.0
      %2776 = vmatpush1.msra.mxu0 0.0
      %2777 = vmatprep.subr.mxu0 0.0
      %2778 = vmatpush1.msra.mxu0 %v2296
      %2779 = vmatprep.subr.mxu0 0.0
      %2780 = vmatpush1.msra.mxu0 %v2295
      %2781 = vmatprep.subr.mxu0 0.0
      %2782 = vmatpush2.msra.mxu0 0.0
      %2783 = vmatprep.subr.mxu0 0.0
      %2784 = vmatpush2.msra.mxu0 0.0
      %2785 = vmatprep.subr.mxu0 0.0
      %2786 = vmatpush2.msra.mxu0 0.0
      %2787 = vmatprep.subr.mxu0 0.0
      %2788 = vmatpush2.msra.mxu0 0.0
      %2789 = vmatprep.subr.mxu0 0.0
      %2790 = vmatpush2.msra.mxu0 0.0
      %2791 = vmatprep.subr.mxu0 0.0
      %2792 = vmatpush2.msra.mxu0 0.0
      %2793 = vmatprep.subr.mxu0 0.0
      %2794 = vmatpush2.msra.mxu0 0.0
      %2795 = vmatprep.subr.mxu0 0.0
      %2796 = vmatpush2.msra.mxu0 0.0
      %2797 = vmatprep.subr.mxu0 0.0
      %2798 = vmatpush2.msra.mxu0 0.0
      %2799 = vmatprep.subr.mxu0 0.0
      %2800 = vmatpush2.msra.mxu0 0.0
      %2801 = vmatprep.subr.mxu0 0.0
      %2802 = vmatpush2.msra.mxu0 0.0
      %2803 = vmatprep.subr.mxu0 0.0
      %2804 = vmatpush2.msra.mxu0 0.0
      %2805 = vmatprep.subr.mxu0 0.0
      %2806 = vmatpush2.msra.mxu0 0.0
      %2807 = vmatprep.subr.mxu0 0.0
      %2808 = vmatpush2.msra.mxu0 0.0
      %2809 = vmatprep.subr.mxu0 0.0
      %2810 = vmatpush2.msra.mxu0 0.0
      %2811 = vmatprep.subr.mxu0 0.0
      %2812 = vmatpush2.msra.mxu0 0.0
      %2813 = vmatprep.mubr.f32.mxu0 0.0
      %2814 = vmatmul.mubr.f32.gmra.mxu0 %v2654
      %v2815 = vpop.f32.mrf.mxu0
      %v2816 = vadd.f32 %v2495, %v2815
      %v2817 = vpop.f32.mrf.mxu0
      %2818 = vmatprep.mubr.f32.mxu0 0.0
      %2819 = vmatmul.mubr.f32.gmra.mxu0 %v2657
      %v2820 = vpop.f32.mrf.mxu0
      %v2821 = vadd.f32 %v2500, %v2820
      %v2822 = vpop.f32.mrf.mxu0
      %2823 = vmatprep.mubr.f32.mxu0 0.0
      %2824 = vmatmul.mubr.f32.gmra.mxu0 %v2660
      %v2825 = vpop.f32.mrf.mxu0
      %v2826 = vadd.f32 %v2505, %v2825
      %v2827 = vpop.f32.mrf.mxu0
      %2828 = vmatprep.mubr.f32.mxu0 0.0
      %2829 = vmatmul.mubr.f32.gmra.mxu0 %v2663
      %v2830 = vpop.f32.mrf.mxu0
      %v2831 = vadd.f32 %v2510, %v2830
      %v2832 = vpop.f32.mrf.mxu0
      %2833 = vmatprep.mubr.f32.mxu0 0.0
      %2834 = vmatmul.mubr.f32.gmra.mxu0 %v2666
      %v2835 = vpop.f32.mrf.mxu0
      %v2836 = vadd.f32 %v2515, %v2835
      %v2837 = vpop.f32.mrf.mxu0
      %2838 = vmatprep.mubr.f32.mxu0 0.0
      %2839 = vmatmul.mubr.f32.gmra.mxu0 %v2669
      %v2840 = vpop.f32.mrf.mxu0
      %v2841 = vadd.f32 %v2520, %v2840
      %v2842 = vpop.f32.mrf.mxu0
      %2843 = vmatprep.mubr.f32.mxu0 0.0
      %2844 = vmatmul.mubr.f32.gmra.mxu0 %v2672
      %v2845 = vpop.f32.mrf.mxu0
      %v2846 = vadd.f32 %v2525, %v2845
      %v2847 = vpop.f32.mrf.mxu0
      %2848 = vmatprep.mubr.f32.mxu0 0.0
      %2849 = vmatmul.mubr.f32.gmra.mxu0 %v2675
      %v2850 = vpop.f32.mrf.mxu0
      %v2851 = vadd.f32 %v2530, %v2850
      %v2852 = vpop.f32.mrf.mxu0
      %2853 = vmatprep.mubr.f32.mxu0 0.0
      %2854 = vmatmul.mubr.f32.gmra.mxu0 %v2678
      %v2855 = vpop.f32.mrf.mxu0
      %v2856 = vadd.f32 %v2535, %v2855
      %v2857 = vpop.f32.mrf.mxu0
      %2858 = vmatprep.mubr.f32.mxu0 0.0
      %2859 = vmatmul.mubr.f32.gmra.mxu0 %v2681
      %v2860 = vpop.f32.mrf.mxu0
      %v2861 = vadd.f32 %v2540, %v2860
      %v2862 = vpop.f32.mrf.mxu0
      %2863 = vmatprep.mubr.f32.mxu0 0.0
      %2864 = vmatmul.mubr.f32.gmra.mxu0 %v2684
      %v2865 = vpop.f32.mrf.mxu0
      %v2866 = vadd.f32 %v2545, %v2865
      %v2867 = vpop.f32.mrf.mxu0
      %2868 = vmatprep.mubr.f32.mxu0 0.0
      %2869 = vmatmul.mubr.f32.gmra.mxu0 %v2687
      %v2870 = vpop.f32.mrf.mxu0
      %v2871 = vadd.f32 %v2550, %v2870
      %v2872 = vpop.f32.mrf.mxu0
      %2873 = vmatprep.mubr.f32.mxu0 0.0
      %2874 = vmatmul.mubr.f32.gmra.mxu0 %v2690
      %v2875 = vpop.f32.mrf.mxu0
      %v2876 = vadd.f32 %v2555, %v2875
      %v2877 = vpop.f32.mrf.mxu0
      %2878 = vmatprep.mubr.f32.mxu0 0.0
      %2879 = vmatmul.mubr.f32.gmra.mxu0 %v2693
      %v2880 = vpop.f32.mrf.mxu0
      %v2881 = vadd.f32 %v2560, %v2880
      %v2882 = vpop.f32.mrf.mxu0
      %2883 = vmatprep.mubr.f32.mxu0 0.0
      %2884 = vmatmul.mubr.f32.gmra.mxu0 %v2696
      %v2885 = vpop.f32.mrf.mxu0
      %v2886 = vadd.f32 %v2565, %v2885
      %v2887 = vpop.f32.mrf.mxu0
      %2888 = vmatprep.mubr.f32.mxu0 0.0
      %2889 = vmatmul.mubr.f32.gmra.mxu0 %v2699
      %v2890 = vpop.f32.mrf.mxu0
      %v2891 = vadd.f32 %v2570, %v2890
      %v2892 = vpop.f32.mrf.mxu0
      %2893 = vmatprep.mubr.f32.mxu0 0.0
      %2894 = vmatmul.mubr.f32.gmra.mxu0 %v2702
      %v2895 = vpop.f32.mrf.mxu0
      %v2896 = vadd.f32 %v2575, %v2895
      %v2897 = vpop.f32.mrf.mxu0
      %2898 = vmatprep.mubr.f32.mxu0 0.0
      %2899 = vmatmul.mubr.f32.gmra.mxu0 %v2705
      %v2900 = vpop.f32.mrf.mxu0
      %v2901 = vadd.f32 %v2580, %v2900
      %v2902 = vpop.f32.mrf.mxu0
      %2903 = vmatprep.mubr.f32.mxu0 0.0
      %2904 = vmatmul.mubr.f32.gmra.mxu0 %v2708
      %v2905 = vpop.f32.mrf.mxu0
      %v2906 = vadd.f32 %v2585, %v2905
      %v2907 = vpop.f32.mrf.mxu0
      %2908 = vmatprep.mubr.f32.mxu0 0.0
      %2909 = vmatmul.mubr.f32.gmra.mxu0 %v2711
      %v2910 = vpop.f32.mrf.mxu0
      %v2911 = vadd.f32 %v2590, %v2910
      %v2912 = vpop.f32.mrf.mxu0
      %2913 = vmatprep.mubr.f32.mxu0 0.0
      %2914 = vmatmul.mubr.f32.gmra.mxu0 %v2714
      %v2915 = vpop.f32.mrf.mxu0
      %v2916 = vadd.f32 %v2595, %v2915
      %v2917 = vpop.f32.mrf.mxu0
      %2918 = vmatprep.mubr.f32.mxu0 0.0
      %2919 = vmatmul.mubr.f32.gmra.mxu0 %v2717
      %v2920 = vpop.f32.mrf.mxu0
      %v2921 = vadd.f32 %v2600, %v2920
      %v2922 = vpop.f32.mrf.mxu0
      %2923 = vmatprep.mubr.f32.mxu0 0.0
      %2924 = vmatmul.mubr.f32.gmra.mxu0 %v2720
      %v2925 = vpop.f32.mrf.mxu0
      %v2926 = vadd.f32 %v2605, %v2925
      %v2927 = vpop.f32.mrf.mxu0
      %2928 = vmatprep.mubr.f32.mxu0 0.0
      %2929 = vmatmul.mubr.f32.gmra.mxu0 %v2723
      %v2930 = vpop.f32.mrf.mxu0
      %v2931 = vadd.f32 %v2610, %v2930
      %v2932 = vpop.f32.mrf.mxu0
      %2933 = vmatprep.mubr.f32.mxu0 0.0
      %2934 = vmatmul.mubr.f32.gmra.mxu0 %v2726
      %v2935 = vpop.f32.mrf.mxu0
      %v2936 = vadd.f32 %v2615, %v2935
      %v2937 = vpop.f32.mrf.mxu0
      %2938 = vmatprep.mubr.f32.mxu0 0.0
      %2939 = vmatmul.mubr.f32.gmra.mxu0 %v2729
      %v2940 = vpop.f32.mrf.mxu0
      %v2941 = vadd.f32 %v2620, %v2940
      %v2942 = vpop.f32.mrf.mxu0
      %2943 = vmatprep.mubr.f32.mxu0 0.0
      %2944 = vmatmul.mubr.f32.gmra.mxu0 %v2732
      %v2945 = vpop.f32.mrf.mxu0
      %v2946 = vadd.f32 %v2625, %v2945
      %v2947 = vpop.f32.mrf.mxu0
      %2948 = vmatprep.mubr.f32.mxu0 0.0
      %2949 = vmatmul.mubr.f32.gmra.mxu0 %v2735
      %v2950 = vpop.f32.mrf.mxu0
      %v2951 = vadd.f32 %v2630, %v2950
      %v2952 = vpop.f32.mrf.mxu0
      %2953 = vmatprep.mubr.f32.mxu0 0.0
      %2954 = vmatmul.mubr.f32.gmra.mxu0 %v2738
      %v2955 = vpop.f32.mrf.mxu0
      %v2956 = vadd.f32 %v2635, %v2955
      %v2957 = vpop.f32.mrf.mxu0
      %2958 = vmatprep.mubr.f32.mxu0 0.0
      %2959 = vmatmul.mubr.f32.gmra.mxu0 %v2741
      %v2960 = vpop.f32.mrf.mxu0
      %v2961 = vadd.f32 %v2640, %v2960
      %v2962 = vpop.f32.mrf.mxu0
      %2963 = vmatprep.mubr.f32.mxu0 0.0
      %2964 = vmatmul.mubr.f32.gmra.mxu0 %v2744
      %v2965 = vpop.f32.mrf.mxu0
      %v2966 = vadd.f32 %v2645, %v2965
      %v2967 = vpop.f32.mrf.mxu0
      %2968 = vmatprep.mubr.f32.mxu0 0.0
      %2969 = vmatmul.mubr.f32.gmra.mxu0 %v2747
      %v2970 = vpop.f32.mrf.mxu0
      %v2971 = vadd.f32 %v2650, %v2970
      %v2972 = vpop.f32.mrf.mxu0
      %2973 = vdwg.mxu0
      %v2974 = vld [vmem:[#allocation2 + $0x9] sm:$0xff]
      %v2975 = vld [vmem:[#allocation2 + $0x11] sm:$0xff]
      %v2976 = vld [vmem:[#allocation2 + $0x19] sm:$0xff]
      %v2977 = vld [vmem:[#allocation2 + $0x21] sm:$0xff]
      %v2978 = vld [vmem:[#allocation2 + $0x29] sm:$0xff]
      %v2979 = vld [vmem:[#allocation2 + $0x31] sm:$0xff]
      %v2980 = vld [vmem:[#allocation2 + $0x39] sm:$0xff]
      %v2981 = vld [vmem:[#allocation2 + $0x41] sm:$0xff]
      %v2982 = vld [vmem:[#allocation2 + $0x49] sm:$0xff]
      %v2983 = vld [vmem:[#allocation2 + $0x51] sm:$0xff]
      %v2984 = vld [vmem:[#allocation2 + $0x59] sm:$0xff]
      %v2985 = vld [vmem:[#allocation2 + $0x61] sm:$0xff]
      %v2986 = vld [vmem:[#allocation2 + $0x69] sm:$0xff]
      %v2987 = vld [vmem:[#allocation2 + $0x71] sm:$0xff]
      %v2988 = vld [vmem:[#allocation2 + $0x79] sm:$0xff]
      %v2989 = vld [vmem:[#allocation2 + $0x81] sm:$0xff]
      %v2990 = vld [vmem:[#allocation2 + $0x89] sm:$0xff]
      %v2991 = vld [vmem:[#allocation2 + $0x91] sm:$0xff]
      %v2992 = vld [vmem:[#allocation2 + $0x99] sm:$0xff]
      %v2993 = vld [vmem:[#allocation2 + $0xa1] sm:$0xff]
      %v2994 = vld [vmem:[#allocation2 + $0xa9] sm:$0xff]
      %v2995 = vld [vmem:[#allocation2 + $0xb1] sm:$0xff]
      %v2996 = vld [vmem:[#allocation2 + $0xb9] sm:$0xff]
      %v2997 = vld [vmem:[#allocation2 + $0xc1] sm:$0xff]
      %v2998 = vld [vmem:[#allocation2 + $0xc9] sm:$0xff]
      %v2999 = vld [vmem:[#allocation2 + $0xd1] sm:$0xff]
      %v3000 = vld [vmem:[#allocation2 + $0xd9] sm:$0xff]
      %v3001 = vld [vmem:[#allocation2 + $0xe1] sm:$0xff]
      %v3002 = vld [vmem:[#allocation2 + $0xe9] sm:$0xff]
      %v3003 = vld [vmem:[#allocation2 + $0xf1] sm:$0xff]
      %v3004 = vld [vmem:[#allocation2 + $0xf9] sm:$0xff]
      %v3005 = vld [vmem:[#allocation2 + $0x101] sm:$0xff]
      %v3006 = vsel %vm2199, %v2974, 0.0
      %v3007 = vsel %vm2200, %v2975, 0.0
      %v3008 = vsel %vm2201, %v2976, 0.0
      %v3009 = vsel %vm2202, %v2977, 0.0
      %v3010 = vsel %vm2203, %v2978, 0.0
      %v3011 = vsel %vm2204, %v2979, 0.0
      %v3012 = vsel %vm2205, %v2980, 0.0
      %v3013 = vsel %vm2206, %v2981, 0.0
      %v3014 = vsel %vm2207, %v2982, 0.0
      %v3015 = vsel %vm2208, %v2983, 0.0
      %v3016 = vsel %vm2209, %v2984, 0.0
      %v3017 = vsel %vm2210, %v2985, 0.0
      %v3018 = vsel %vm2211, %v2986, 0.0
      %v3019 = vsel %vm2212, %v2987, 0.0
      %v3020 = vsel %vm2213, %v2988, 0.0
      %v3021 = vsel %vm2214, %v2989, 0.0
      %v3022 = vsel %vm2215, %v2990, 0.0
      %v3023 = vsel %vm2216, %v2991, 0.0
      %v3024 = vsel %vm2217, %v2992, 0.0
      %v3025 = vsel %vm2218, %v2993, 0.0
      %v3026 = vsel %vm2219, %v2994, 0.0
      %v3027 = vsel %vm2220, %v2995, 0.0
      %v3028 = vsel %vm2221, %v2996, 0.0
      %v3029 = vsel %vm2222, %v2997, 0.0
      %v3030 = vsel %vm2223, %v2998, 0.0
      %v3031 = vsel %vm2224, %v2999, 0.0
      %v3032 = vsel %vm2225, %v3000, 0.0
      %v3033 = vsel %vm2226, %v3001, 0.0
      %v3034 = vsel %vm2227, %v3002, 0.0
      %v3035 = vsel %vm2228, %v3003, 0.0
      %v3036 = vsel %vm2229, %v3004, 0.0
      %v3037 = vsel %vm2230, %v3005, 0.0
      %s3038 = scalar_lea.vmem %s10, 32
      %v3039 = vld [vmem:[%s3038] sm:$0xff]
      %v3040 = vld [vmem:[%s3038 + $0x8] sm:$0xff]
      %v3042 = vsel %vm1247, %v3006, 0
      %v3045 = vsel %vm1247, %v3007, 0
      %v3048 = vsel %vm1247, %v3008, 0
      %v3051 = vsel %vm1247, %v3009, 0
      %v3054 = vsel %vm1247, %v3010, 0
      %v3057 = vsel %vm1247, %v3011, 0
      %v3060 = vsel %vm1247, %v3012, 0
      %v3063 = vsel %vm1247, %v3013, 0
      %v3066 = vsel %vm1247, %v3014, 0
      %v3069 = vsel %vm1247, %v3015, 0
      %v3072 = vsel %vm1247, %v3016, 0
      %v3075 = vsel %vm1247, %v3017, 0
      %v3078 = vsel %vm1247, %v3018, 0
      %v3081 = vsel %vm1247, %v3019, 0
      %v3084 = vsel %vm1247, %v3020, 0
      %v3087 = vsel %vm1247, %v3021, 0
      %v3090 = vsel %vm1247, %v3022, 0
      %v3093 = vsel %vm1247, %v3023, 0
      %v3096 = vsel %vm1247, %v3024, 0
      %v3099 = vsel %vm1247, %v3025, 0
      %v3102 = vsel %vm1247, %v3026, 0
      %v3105 = vsel %vm1247, %v3027, 0
      %v3108 = vsel %vm1247, %v3028, 0
      %v3111 = vsel %vm1247, %v3029, 0
      %v3114 = vsel %vm1247, %v3030, 0
      %v3117 = vsel %vm1247, %v3031, 0
      %v3120 = vsel %vm1247, %v3032, 0
      %v3123 = vsel %vm1247, %v3033, 0
      %v3126 = vsel %vm1247, %v3034, 0
      %v3129 = vsel %vm1247, %v3035, 0
      %v3132 = vsel %vm1247, %v3036, 0
      %v3135 = vsel %vm1247, %v3037, 0
      %3137 = vmatprep.subr.mxu0 0.0
      %3138 = vmatpush1.msra.mxu0 0.0
      %3139 = vmatprep.subr.mxu0 0.0
      %3140 = vmatpush1.msra.mxu0 0.0
      %3141 = vmatprep.subr.mxu0 0.0
      %3142 = vmatpush1.msra.mxu0 0.0
      %3143 = vmatprep.subr.mxu0 0.0
      %3144 = vmatpush1.msra.mxu0 0.0
      %3145 = vmatprep.subr.mxu0 0.0
      %3146 = vmatpush1.msra.mxu0 0.0
      %3147 = vmatprep.subr.mxu0 0.0
      %3148 = vmatpush1.msra.mxu0 0.0
      %3149 = vmatprep.subr.mxu0 0.0
      %3150 = vmatpush1.msra.mxu0 0.0
      %3151 = vmatprep.subr.mxu0 0.0
      %3152 = vmatpush1.msra.mxu0 0.0
      %3153 = vmatprep.subr.mxu0 0.0
      %3154 = vmatpush1.msra.mxu0 0.0
      %3155 = vmatprep.subr.mxu0 0.0
      %3156 = vmatpush1.msra.mxu0 0.0
      %3157 = vmatprep.subr.mxu0 0.0
      %3158 = vmatpush1.msra.mxu0 0.0
      %3159 = vmatprep.subr.mxu0 0.0
      %3160 = vmatpush1.msra.mxu0 0.0
      %3161 = vmatprep.subr.mxu0 0.0
      %3162 = vmatpush1.msra.mxu0 0.0
      %3163 = vmatprep.subr.mxu0 0.0
      %3164 = vmatpush1.msra.mxu0 0.0
      %3165 = vmatprep.subr.mxu0 0.0
      %3166 = vmatpush1.msra.mxu0 %v3040
      %3167 = vmatprep.subr.mxu0 0.0
      %3168 = vmatpush1.msra.mxu0 %v3039
      %3169 = vmatprep.subr.mxu0 0.0
      %3170 = vmatpush2.msra.mxu0 0.0
      %3171 = vmatprep.subr.mxu0 0.0
      %3172 = vmatpush2.msra.mxu0 0.0
      %3173 = vmatprep.subr.mxu0 0.0
      %3174 = vmatpush2.msra.mxu0 0.0
      %3175 = vmatprep.subr.mxu0 0.0
      %3176 = vmatpush2.msra.mxu0 0.0
      %3177 = vmatprep.subr.mxu0 0.0
      %3178 = vmatpush2.msra.mxu0 0.0
      %3179 = vmatprep.subr.mxu0 0.0
      %3180 = vmatpush2.msra.mxu0 0.0
      %3181 = vmatprep.subr.mxu0 0.0
      %3182 = vmatpush2.msra.mxu0 0.0
      %3183 = vmatprep.subr.mxu0 0.0
      %3184 = vmatpush2.msra.mxu0 0.0
      %3185 = vmatprep.subr.mxu0 0.0
      %3186 = vmatpush2.msra.mxu0 0.0
      %3187 = vmatprep.subr.mxu0 0.0
      %3188 = vmatpush2.msra.mxu0 0.0
      %3189 = vmatprep.subr.mxu0 0.0
      %3190 = vmatpush2.msra.mxu0 0.0
      %3191 = vmatprep.subr.mxu0 0.0
      %3192 = vmatpush2.msra.mxu0 0.0
      %3193 = vmatprep.subr.mxu0 0.0
      %3194 = vmatpush2.msra.mxu0 0.0
      %3195 = vmatprep.subr.mxu0 0.0
      %3196 = vmatpush2.msra.mxu0 0.0
      %3197 = vmatprep.subr.mxu0 0.0
      %3198 = vmatpush2.msra.mxu0 0.0
      %3199 = vmatprep.subr.mxu0 0.0
      %3200 = vmatpush2.msra.mxu0 0.0
      %3201 = vmatprep.mubr.f32.mxu0 0.0
      %3202 = vmatmul.mubr.f32.gmra.mxu0 %v3042
      %v3203 = vpop.f32.mrf.mxu0
      %v3204 = vadd.f32 0.0, %v3203
      %v3205 = vpop.f32.mrf.mxu0
      %3206 = vmatprep.mubr.f32.mxu0 0.0
      %3207 = vmatmul.mubr.f32.gmra.mxu0 %v3045
      %v3208 = vpop.f32.mrf.mxu0
      %v3209 = vadd.f32 0.0, %v3208
      %v3210 = vpop.f32.mrf.mxu0
      %3211 = vmatprep.mubr.f32.mxu0 0.0
      %3212 = vmatmul.mubr.f32.gmra.mxu0 %v3048
      %v3213 = vpop.f32.mrf.mxu0
      %v3214 = vadd.f32 0.0, %v3213
      %v3215 = vpop.f32.mrf.mxu0
      %3216 = vmatprep.mubr.f32.mxu0 0.0
      %3217 = vmatmul.mubr.f32.gmra.mxu0 %v3051
      %v3218 = vpop.f32.mrf.mxu0
      %v3219 = vadd.f32 0.0, %v3218
      %v3220 = vpop.f32.mrf.mxu0
      %3221 = vmatprep.mubr.f32.mxu0 0.0
      %3222 = vmatmul.mubr.f32.gmra.mxu0 %v3054
      %v3223 = vpop.f32.mrf.mxu0
      %v3224 = vadd.f32 0.0, %v3223
      %v3225 = vpop.f32.mrf.mxu0
      %3226 = vmatprep.mubr.f32.mxu0 0.0
      %3227 = vmatmul.mubr.f32.gmra.mxu0 %v3057
      %v3228 = vpop.f32.mrf.mxu0
      %v3229 = vadd.f32 0.0, %v3228
      %v3230 = vpop.f32.mrf.mxu0
      %3231 = vmatprep.mubr.f32.mxu0 0.0
      %3232 = vmatmul.mubr.f32.gmra.mxu0 %v3060
      %v3233 = vpop.f32.mrf.mxu0
      %v3234 = vadd.f32 0.0, %v3233
      %v3235 = vpop.f32.mrf.mxu0
      %3236 = vmatprep.mubr.f32.mxu0 0.0
      %3237 = vmatmul.mubr.f32.gmra.mxu0 %v3063
      %v3238 = vpop.f32.mrf.mxu0
      %v3239 = vadd.f32 0.0, %v3238
      %v3240 = vpop.f32.mrf.mxu0
      %3241 = vmatprep.mubr.f32.mxu0 0.0
      %3242 = vmatmul.mubr.f32.gmra.mxu0 %v3066
      %v3243 = vpop.f32.mrf.mxu0
      %v3244 = vadd.f32 0.0, %v3243
      %v3245 = vpop.f32.mrf.mxu0
      %3246 = vmatprep.mubr.f32.mxu0 0.0
      %3247 = vmatmul.mubr.f32.gmra.mxu0 %v3069
      %v3248 = vpop.f32.mrf.mxu0
      %v3249 = vadd.f32 0.0, %v3248
      %v3250 = vpop.f32.mrf.mxu0
      %3251 = vmatprep.mubr.f32.mxu0 0.0
      %3252 = vmatmul.mubr.f32.gmra.mxu0 %v3072
      %v3253 = vpop.f32.mrf.mxu0
      %v3254 = vadd.f32 0.0, %v3253
      %v3255 = vpop.f32.mrf.mxu0
      %3256 = vmatprep.mubr.f32.mxu0 0.0
      %3257 = vmatmul.mubr.f32.gmra.mxu0 %v3075
      %v3258 = vpop.f32.mrf.mxu0
      %v3259 = vadd.f32 0.0, %v3258
      %v3260 = vpop.f32.mrf.mxu0
      %3261 = vmatprep.mubr.f32.mxu0 0.0
      %3262 = vmatmul.mubr.f32.gmra.mxu0 %v3078
      %v3263 = vpop.f32.mrf.mxu0
      %v3264 = vadd.f32 0.0, %v3263
      %v3265 = vpop.f32.mrf.mxu0
      %3266 = vmatprep.mubr.f32.mxu0 0.0
      %3267 = vmatmul.mubr.f32.gmra.mxu0 %v3081
      %v3268 = vpop.f32.mrf.mxu0
      %v3269 = vadd.f32 0.0, %v3268
      %v3270 = vpop.f32.mrf.mxu0
      %3271 = vmatprep.mubr.f32.mxu0 0.0
      %3272 = vmatmul.mubr.f32.gmra.mxu0 %v3084
      %v3273 = vpop.f32.mrf.mxu0
      %v3274 = vadd.f32 0.0, %v3273
      %v3275 = vpop.f32.mrf.mxu0
      %3276 = vmatprep.mubr.f32.mxu0 0.0
      %3277 = vmatmul.mubr.f32.gmra.mxu0 %v3087
      %v3278 = vpop.f32.mrf.mxu0
      %v3279 = vadd.f32 0.0, %v3278
      %v3280 = vpop.f32.mrf.mxu0
      %3281 = vmatprep.mubr.f32.mxu0 0.0
      %3282 = vmatmul.mubr.f32.gmra.mxu0 %v3090
      %v3283 = vpop.f32.mrf.mxu0
      %v3284 = vadd.f32 0.0, %v3283
      %v3285 = vpop.f32.mrf.mxu0
      %3286 = vmatprep.mubr.f32.mxu0 0.0
      %3287 = vmatmul.mubr.f32.gmra.mxu0 %v3093
      %v3288 = vpop.f32.mrf.mxu0
      %v3289 = vadd.f32 0.0, %v3288
      %v3290 = vpop.f32.mrf.mxu0
      %3291 = vmatprep.mubr.f32.mxu0 0.0
      %3292 = vmatmul.mubr.f32.gmra.mxu0 %v3096
      %v3293 = vpop.f32.mrf.mxu0
      %v3294 = vadd.f32 0.0, %v3293
      %v3295 = vpop.f32.mrf.mxu0
      %3296 = vmatprep.mubr.f32.mxu0 0.0
      %3297 = vmatmul.mubr.f32.gmra.mxu0 %v3099
      %v3298 = vpop.f32.mrf.mxu0
      %v3299 = vadd.f32 0.0, %v3298
      %v3300 = vpop.f32.mrf.mxu0
      %3301 = vmatprep.mubr.f32.mxu0 0.0
      %3302 = vmatmul.mubr.f32.gmra.mxu0 %v3102
      %v3303 = vpop.f32.mrf.mxu0
      %v3304 = vadd.f32 0.0, %v3303
      %v3305 = vpop.f32.mrf.mxu0
      %3306 = vmatprep.mubr.f32.mxu0 0.0
      %3307 = vmatmul.mubr.f32.gmra.mxu0 %v3105
      %v3308 = vpop.f32.mrf.mxu0
      %v3309 = vadd.f32 0.0, %v3308
      %v3310 = vpop.f32.mrf.mxu0
      %3311 = vmatprep.mubr.f32.mxu0 0.0
      %3312 = vmatmul.mubr.f32.gmra.mxu0 %v3108
      %v3313 = vpop.f32.mrf.mxu0
      %v3314 = vadd.f32 0.0, %v3313
      %v3315 = vpop.f32.mrf.mxu0
      %3316 = vmatprep.mubr.f32.mxu0 0.0
      %3317 = vmatmul.mubr.f32.gmra.mxu0 %v3111
      %v3318 = vpop.f32.mrf.mxu0
      %v3319 = vadd.f32 0.0, %v3318
      %v3320 = vpop.f32.mrf.mxu0
      %3321 = vmatprep.mubr.f32.mxu0 0.0
      %3322 = vmatmul.mubr.f32.gmra.mxu0 %v3114
      %v3323 = vpop.f32.mrf.mxu0
      %v3324 = vadd.f32 0.0, %v3323
      %v3325 = vpop.f32.mrf.mxu0
      %3326 = vmatprep.mubr.f32.mxu0 0.0
      %3327 = vmatmul.mubr.f32.gmra.mxu0 %v3117
      %v3328 = vpop.f32.mrf.mxu0
      %v3329 = vadd.f32 0.0, %v3328
      %v3330 = vpop.f32.mrf.mxu0
      %3331 = vmatprep.mubr.f32.mxu0 0.0
      %3332 = vmatmul.mubr.f32.gmra.mxu0 %v3120
      %v3333 = vpop.f32.mrf.mxu0
      %v3334 = vadd.f32 0.0, %v3333
      %v3335 = vpop.f32.mrf.mxu0
      %3336 = vmatprep.mubr.f32.mxu0 0.0
      %3337 = vmatmul.mubr.f32.gmra.mxu0 %v3123
      %v3338 = vpop.f32.mrf.mxu0
      %v3339 = vadd.f32 0.0, %v3338
      %v3340 = vpop.f32.mrf.mxu0
      %3341 = vmatprep.mubr.f32.mxu0 0.0
      %3342 = vmatmul.mubr.f32.gmra.mxu0 %v3126
      %v3343 = vpop.f32.mrf.mxu0
      %v3344 = vadd.f32 0.0, %v3343
      %v3345 = vpop.f32.mrf.mxu0
      %3346 = vmatprep.mubr.f32.mxu0 0.0
      %3347 = vmatmul.mubr.f32.gmra.mxu0 %v3129
      %v3348 = vpop.f32.mrf.mxu0
      %v3349 = vadd.f32 0.0, %v3348
      %v3350 = vpop.f32.mrf.mxu0
      %3351 = vmatprep.mubr.f32.mxu0 0.0
      %3352 = vmatmul.mubr.f32.gmra.mxu0 %v3132
      %v3353 = vpop.f32.mrf.mxu0
      %v3354 = vadd.f32 0.0, %v3353
      %v3355 = vpop.f32.mrf.mxu0
      %3356 = vmatprep.mubr.f32.mxu0 0.0
      %3357 = vmatmul.mubr.f32.gmra.mxu0 %v3135
      %v3358 = vpop.f32.mrf.mxu0
      %v3359 = vadd.f32 0.0, %v3358
      %v3360 = vpop.f32.mrf.mxu0
      %3361 = vdwg.mxu0
      %v3362 = vadd.f32 %v2816, %v3204
      %v3363 = vadd.f32 %v2821, %v3209
      %v3364 = vadd.f32 %v2826, %v3214
      %v3365 = vadd.f32 %v2831, %v3219
      %v3366 = vadd.f32 %v2836, %v3224
      %v3367 = vadd.f32 %v2841, %v3229
      %v3368 = vadd.f32 %v2846, %v3234
      %v3369 = vadd.f32 %v2851, %v3239
      %v3370 = vadd.f32 %v2856, %v3244
      %v3371 = vadd.f32 %v2861, %v3249
      %v3372 = vadd.f32 %v2866, %v3254
      %v3373 = vadd.f32 %v2871, %v3259
      %v3374 = vadd.f32 %v2876, %v3264
      %v3375 = vadd.f32 %v2881, %v3269
      %v3376 = vadd.f32 %v2886, %v3274
      %v3377 = vadd.f32 %v2891, %v3279
      %v3378 = vadd.f32 %v2896, %v3284
      %v3379 = vadd.f32 %v2901, %v3289
      %v3380 = vadd.f32 %v2906, %v3294
      %v3381 = vadd.f32 %v2911, %v3299
      %v3382 = vadd.f32 %v2916, %v3304
      %v3383 = vadd.f32 %v2921, %v3309
      %v3384 = vadd.f32 %v2926, %v3314
      %v3385 = vadd.f32 %v2931, %v3319
      %v3386 = vadd.f32 %v2936, %v3324
      %v3387 = vadd.f32 %v2941, %v3329
      %v3388 = vadd.f32 %v2946, %v3334
      %v3389 = vadd.f32 %v2951, %v3339
      %v3390 = vadd.f32 %v2956, %v3344
      %v3391 = vadd.f32 %v2961, %v3349
      %v3392 = vadd.f32 %v2966, %v3354
      %v3393 = vadd.f32 %v2971, %v3359
      %v3394 = vld [vmem:[#allocation2 + $0x17] sm:$0xff]
      %v3395 = vld [vmem:[#allocation2 + $0x1f] sm:$0xff]
      %v3396 = vld [vmem:[#allocation2 + $0x27] sm:$0xff]
      %v3397 = vld [vmem:[#allocation2 + $0x2f] sm:$0xff]
      %v3398 = vld [vmem:[#allocation2 + $0x37] sm:$0xff]
      %v3399 = vld [vmem:[#allocation2 + $0x3f] sm:$0xff]
      %v3400 = vld [vmem:[#allocation2 + $0x47] sm:$0xff]
      %v3401 = vld [vmem:[#allocation2 + $0x4f] sm:$0xff]
      %v3402 = vld [vmem:[#allocation2 + $0x57] sm:$0xff]
      %v3403 = vld [vmem:[#allocation2 + $0x5f] sm:$0xff]
      %v3404 = vld [vmem:[#allocation2 + $0x67] sm:$0xff]
      %v3405 = vld [vmem:[#allocation2 + $0x6f] sm:$0xff]
      %v3406 = vld [vmem:[#allocation2 + $0x77] sm:$0xff]
      %v3407 = vld [vmem:[#allocation2 + $0x7f] sm:$0xff]
      %v3408 = vld [vmem:[#allocation2 + $0x87] sm:$0xff]
      %v3409 = vld [vmem:[#allocation2 + $0x8f] sm:$0xff]
      %v3410 = vld [vmem:[#allocation2 + $0x97] sm:$0xff]
      %v3411 = vld [vmem:[#allocation2 + $0x9f] sm:$0xff]
      %v3412 = vld [vmem:[#allocation2 + $0xa7] sm:$0xff]
      %v3413 = vld [vmem:[#allocation2 + $0xaf] sm:$0xff]
      %v3414 = vld [vmem:[#allocation2 + $0xb7] sm:$0xff]
      %v3415 = vld [vmem:[#allocation2 + $0xbf] sm:$0xff]
      %v3416 = vld [vmem:[#allocation2 + $0xc7] sm:$0xff]
      %v3417 = vld [vmem:[#allocation2 + $0xcf] sm:$0xff]
      %v3418 = vld [vmem:[#allocation2 + $0xd7] sm:$0xff]
      %v3419 = vld [vmem:[#allocation2 + $0xdf] sm:$0xff]
      %v3420 = vld [vmem:[#allocation2 + $0xe7] sm:$0xff]
      %v3421 = vld [vmem:[#allocation2 + $0xef] sm:$0xff]
      %v3422 = vld [vmem:[#allocation2 + $0xf7] sm:$0xff]
      %v3423 = vld [vmem:[#allocation2 + $0xff] sm:$0xff]
      %v3424 = vld [vmem:[#allocation2 + $0x107] sm:$0xff]
      %v3425 = vld [vmem:[#allocation2 + $0x10f] sm:$0xff]
      %v3426 = vsel %vm2135, %v3394, 0.0
      %v3427 = vsel %vm2136, %v3395, 0.0
      %v3428 = vsel %vm2137, %v3396, 0.0
      %v3429 = vsel %vm2138, %v3397, 0.0
      %v3430 = vsel %vm2139, %v3398, 0.0
      %v3431 = vsel %vm2140, %v3399, 0.0
      %v3432 = vsel %vm2141, %v3400, 0.0
      %v3433 = vsel %vm2142, %v3401, 0.0
      %v3434 = vsel %vm2143, %v3402, 0.0
      %v3435 = vsel %vm2144, %v3403, 0.0
      %v3436 = vsel %vm2145, %v3404, 0.0
      %v3437 = vsel %vm2146, %v3405, 0.0
      %v3438 = vsel %vm2147, %v3406, 0.0
      %v3439 = vsel %vm2148, %v3407, 0.0
      %v3440 = vsel %vm2149, %v3408, 0.0
      %v3441 = vsel %vm2150, %v3409, 0.0
      %v3442 = vsel %vm2151, %v3410, 0.0
      %v3443 = vsel %vm2152, %v3411, 0.0
      %v3444 = vsel %vm2153, %v3412, 0.0
      %v3445 = vsel %vm2154, %v3413, 0.0
      %v3446 = vsel %vm2155, %v3414, 0.0
      %v3447 = vsel %vm2156, %v3415, 0.0
      %v3448 = vsel %vm2157, %v3416, 0.0
      %v3449 = vsel %vm2158, %v3417, 0.0
      %v3450 = vsel %vm2159, %v3418, 0.0
      %v3451 = vsel %vm2160, %v3419, 0.0
      %v3452 = vsel %vm2161, %v3420, 0.0
      %v3453 = vsel %vm2162, %v3421, 0.0
      %v3454 = vsel %vm2163, %v3422, 0.0
      %v3455 = vsel %vm2164, %v3423, 0.0
      %v3456 = vsel %vm2165, %v3424, 0.0
      %v3457 = vsel %vm2166, %v3425, 0.0
      %s3458 = scalar_lea.vmem %s10, 48
      %v3459 = vld [vmem:[%s3458] sm:$0xff]
      %v3460 = vld [vmem:[%s3458 + $0x8] sm:$0xff]
      %v3462 = vsel %vm1247, %v3426, 0
      %v3465 = vsel %vm1247, %v3427, 0
      %v3468 = vsel %vm1247, %v3428, 0
      %v3471 = vsel %vm1247, %v3429, 0
      %v3474 = vsel %vm1247, %v3430, 0
      %v3477 = vsel %vm1247, %v3431, 0
      %v3480 = vsel %vm1247, %v3432, 0
      %v3483 = vsel %vm1247, %v3433, 0
      %v3486 = vsel %vm1247, %v3434, 0
      %v3489 = vsel %vm1247, %v3435, 0
      %v3492 = vsel %vm1247, %v3436, 0
      %v3495 = vsel %vm1247, %v3437, 0
      %v3498 = vsel %vm1247, %v3438, 0
      %v3501 = vsel %vm1247, %v3439, 0
      %v3504 = vsel %vm1247, %v3440, 0
      %v3507 = vsel %vm1247, %v3441, 0
      %v3510 = vsel %vm1247, %v3442, 0
      %v3513 = vsel %vm1247, %v3443, 0
      %v3516 = vsel %vm1247, %v3444, 0
      %v3519 = vsel %vm1247, %v3445, 0
      %v3522 = vsel %vm1247, %v3446, 0
      %v3525 = vsel %vm1247, %v3447, 0
      %v3528 = vsel %vm1247, %v3448, 0
      %v3531 = vsel %vm1247, %v3449, 0
      %v3534 = vsel %vm1247, %v3450, 0
      %v3537 = vsel %vm1247, %v3451, 0
      %v3540 = vsel %vm1247, %v3452, 0
      %v3543 = vsel %vm1247, %v3453, 0
      %v3546 = vsel %vm1247, %v3454, 0
      %v3549 = vsel %vm1247, %v3455, 0
      %v3552 = vsel %vm1247, %v3456, 0
      %v3555 = vsel %vm1247, %v3457, 0
      %3557 = vmatprep.subr.mxu0 0.0
      %3558 = vmatpush1.msra.mxu0 0.0
      %3559 = vmatprep.subr.mxu0 0.0
      %3560 = vmatpush1.msra.mxu0 0.0
      %3561 = vmatprep.subr.mxu0 0.0
      %3562 = vmatpush1.msra.mxu0 0.0
      %3563 = vmatprep.subr.mxu0 0.0
      %3564 = vmatpush1.msra.mxu0 0.0
      %3565 = vmatprep.subr.mxu0 0.0
      %3566 = vmatpush1.msra.mxu0 0.0
      %3567 = vmatprep.subr.mxu0 0.0
      %3568 = vmatpush1.msra.mxu0 0.0
      %3569 = vmatprep.subr.mxu0 0.0
      %3570 = vmatpush1.msra.mxu0 0.0
      %3571 = vmatprep.subr.mxu0 0.0
      %3572 = vmatpush1.msra.mxu0 0.0
      %3573 = vmatprep.subr.mxu0 0.0
      %3574 = vmatpush1.msra.mxu0 0.0
      %3575 = vmatprep.subr.mxu0 0.0
      %3576 = vmatpush1.msra.mxu0 0.0
      %3577 = vmatprep.subr.mxu0 0.0
      %3578 = vmatpush1.msra.mxu0 0.0
      %3579 = vmatprep.subr.mxu0 0.0
      %3580 = vmatpush1.msra.mxu0 0.0
      %3581 = vmatprep.subr.mxu0 0.0
      %3582 = vmatpush1.msra.mxu0 0.0
      %3583 = vmatprep.subr.mxu0 0.0
      %3584 = vmatpush1.msra.mxu0 0.0
      %3585 = vmatprep.subr.mxu0 0.0
      %3586 = vmatpush1.msra.mxu0 %v3460
      %3587 = vmatprep.subr.mxu0 0.0
      %3588 = vmatpush1.msra.mxu0 %v3459
      %3589 = vmatprep.subr.mxu0 0.0
      %3590 = vmatpush2.msra.mxu0 0.0
      %3591 = vmatprep.subr.mxu0 0.0
      %3592 = vmatpush2.msra.mxu0 0.0
      %3593 = vmatprep.subr.mxu0 0.0
      %3594 = vmatpush2.msra.mxu0 0.0
      %3595 = vmatprep.subr.mxu0 0.0
      %3596 = vmatpush2.msra.mxu0 0.0
      %3597 = vmatprep.subr.mxu0 0.0
      %3598 = vmatpush2.msra.mxu0 0.0
      %3599 = vmatprep.subr.mxu0 0.0
      %3600 = vmatpush2.msra.mxu0 0.0
      %3601 = vmatprep.subr.mxu0 0.0
      %3602 = vmatpush2.msra.mxu0 0.0
      %3603 = vmatprep.subr.mxu0 0.0
      %3604 = vmatpush2.msra.mxu0 0.0
      %3605 = vmatprep.subr.mxu0 0.0
      %3606 = vmatpush2.msra.mxu0 0.0
      %3607 = vmatprep.subr.mxu0 0.0
      %3608 = vmatpush2.msra.mxu0 0.0
      %3609 = vmatprep.subr.mxu0 0.0
      %3610 = vmatpush2.msra.mxu0 0.0
      %3611 = vmatprep.subr.mxu0 0.0
      %3612 = vmatpush2.msra.mxu0 0.0
      %3613 = vmatprep.subr.mxu0 0.0
      %3614 = vmatpush2.msra.mxu0 0.0
      %3615 = vmatprep.subr.mxu0 0.0
      %3616 = vmatpush2.msra.mxu0 0.0
      %3617 = vmatprep.subr.mxu0 0.0
      %3618 = vmatpush2.msra.mxu0 0.0
      %3619 = vmatprep.subr.mxu0 0.0
      %3620 = vmatpush2.msra.mxu0 0.0
      %3621 = vmatprep.mubr.f32.mxu0 0.0
      %3622 = vmatmul.mubr.f32.gmra.mxu0 %v3462
      %v3623 = vpop.f32.mrf.mxu0
      %v3624 = vadd.f32 0.0, %v3623
      %v3625 = vpop.f32.mrf.mxu0
      %3626 = vmatprep.mubr.f32.mxu0 0.0
      %3627 = vmatmul.mubr.f32.gmra.mxu0 %v3465
      %v3628 = vpop.f32.mrf.mxu0
      %v3629 = vadd.f32 0.0, %v3628
      %v3630 = vpop.f32.mrf.mxu0
      %3631 = vmatprep.mubr.f32.mxu0 0.0
      %3632 = vmatmul.mubr.f32.gmra.mxu0 %v3468
      %v3633 = vpop.f32.mrf.mxu0
      %v3634 = vadd.f32 0.0, %v3633
      %v3635 = vpop.f32.mrf.mxu0
      %3636 = vmatprep.mubr.f32.mxu0 0.0
      %3637 = vmatmul.mubr.f32.gmra.mxu0 %v3471
      %v3638 = vpop.f32.mrf.mxu0
      %v3639 = vadd.f32 0.0, %v3638
      %v3640 = vpop.f32.mrf.mxu0
      %3641 = vmatprep.mubr.f32.mxu0 0.0
      %3642 = vmatmul.mubr.f32.gmra.mxu0 %v3474
      %v3643 = vpop.f32.mrf.mxu0
      %v3644 = vadd.f32 0.0, %v3643
      %v3645 = vpop.f32.mrf.mxu0
      %3646 = vmatprep.mubr.f32.mxu0 0.0
      %3647 = vmatmul.mubr.f32.gmra.mxu0 %v3477
      %v3648 = vpop.f32.mrf.mxu0
      %v3649 = vadd.f32 0.0, %v3648
      %v3650 = vpop.f32.mrf.mxu0
      %3651 = vmatprep.mubr.f32.mxu0 0.0
      %3652 = vmatmul.mubr.f32.gmra.mxu0 %v3480
      %v3653 = vpop.f32.mrf.mxu0
      %v3654 = vadd.f32 0.0, %v3653
      %v3655 = vpop.f32.mrf.mxu0
      %3656 = vmatprep.mubr.f32.mxu0 0.0
      %3657 = vmatmul.mubr.f32.gmra.mxu0 %v3483
      %v3658 = vpop.f32.mrf.mxu0
      %v3659 = vadd.f32 0.0, %v3658
      %v3660 = vpop.f32.mrf.mxu0
      %3661 = vmatprep.mubr.f32.mxu0 0.0
      %3662 = vmatmul.mubr.f32.gmra.mxu0 %v3486
      %v3663 = vpop.f32.mrf.mxu0
      %v3664 = vadd.f32 0.0, %v3663
      %v3665 = vpop.f32.mrf.mxu0
      %3666 = vmatprep.mubr.f32.mxu0 0.0
      %3667 = vmatmul.mubr.f32.gmra.mxu0 %v3489
      %v3668 = vpop.f32.mrf.mxu0
      %v3669 = vadd.f32 0.0, %v3668
      %v3670 = vpop.f32.mrf.mxu0
      %3671 = vmatprep.mubr.f32.mxu0 0.0
      %3672 = vmatmul.mubr.f32.gmra.mxu0 %v3492
      %v3673 = vpop.f32.mrf.mxu0
      %v3674 = vadd.f32 0.0, %v3673
      %v3675 = vpop.f32.mrf.mxu0
      %3676 = vmatprep.mubr.f32.mxu0 0.0
      %3677 = vmatmul.mubr.f32.gmra.mxu0 %v3495
      %v3678 = vpop.f32.mrf.mxu0
      %v3679 = vadd.f32 0.0, %v3678
      %v3680 = vpop.f32.mrf.mxu0
      %3681 = vmatprep.mubr.f32.mxu0 0.0
      %3682 = vmatmul.mubr.f32.gmra.mxu0 %v3498
      %v3683 = vpop.f32.mrf.mxu0
      %v3684 = vadd.f32 0.0, %v3683
      %v3685 = vpop.f32.mrf.mxu0
      %3686 = vmatprep.mubr.f32.mxu0 0.0
      %3687 = vmatmul.mubr.f32.gmra.mxu0 %v3501
      %v3688 = vpop.f32.mrf.mxu0
      %v3689 = vadd.f32 0.0, %v3688
      %v3690 = vpop.f32.mrf.mxu0
      %3691 = vmatprep.mubr.f32.mxu0 0.0
      %3692 = vmatmul.mubr.f32.gmra.mxu0 %v3504
      %v3693 = vpop.f32.mrf.mxu0
      %v3694 = vadd.f32 0.0, %v3693
      %v3695 = vpop.f32.mrf.mxu0
      %3696 = vmatprep.mubr.f32.mxu0 0.0
      %3697 = vmatmul.mubr.f32.gmra.mxu0 %v3507
      %v3698 = vpop.f32.mrf.mxu0
      %v3699 = vadd.f32 0.0, %v3698
      %v3700 = vpop.f32.mrf.mxu0
      %3701 = vmatprep.mubr.f32.mxu0 0.0
      %3702 = vmatmul.mubr.f32.gmra.mxu0 %v3510
      %v3703 = vpop.f32.mrf.mxu0
      %v3704 = vadd.f32 0.0, %v3703
      %v3705 = vpop.f32.mrf.mxu0
      %3706 = vmatprep.mubr.f32.mxu0 0.0
      %3707 = vmatmul.mubr.f32.gmra.mxu0 %v3513
      %v3708 = vpop.f32.mrf.mxu0
      %v3709 = vadd.f32 0.0, %v3708
      %v3710 = vpop.f32.mrf.mxu0
      %3711 = vmatprep.mubr.f32.mxu0 0.0
      %3712 = vmatmul.mubr.f32.gmra.mxu0 %v3516
      %v3713 = vpop.f32.mrf.mxu0
      %v3714 = vadd.f32 0.0, %v3713
      %v3715 = vpop.f32.mrf.mxu0
      %3716 = vmatprep.mubr.f32.mxu0 0.0
      %3717 = vmatmul.mubr.f32.gmra.mxu0 %v3519
      %v3718 = vpop.f32.mrf.mxu0
      %v3719 = vadd.f32 0.0, %v3718
      %v3720 = vpop.f32.mrf.mxu0
      %3721 = vmatprep.mubr.f32.mxu0 0.0
      %3722 = vmatmul.mubr.f32.gmra.mxu0 %v3522
      %v3723 = vpop.f32.mrf.mxu0
      %v3724 = vadd.f32 0.0, %v3723
      %v3725 = vpop.f32.mrf.mxu0
      %3726 = vmatprep.mubr.f32.mxu0 0.0
      %3727 = vmatmul.mubr.f32.gmra.mxu0 %v3525
      %v3728 = vpop.f32.mrf.mxu0
      %v3729 = vadd.f32 0.0, %v3728
      %v3730 = vpop.f32.mrf.mxu0
      %3731 = vmatprep.mubr.f32.mxu0 0.0
      %3732 = vmatmul.mubr.f32.gmra.mxu0 %v3528
      %v3733 = vpop.f32.mrf.mxu0
      %v3734 = vadd.f32 0.0, %v3733
      %v3735 = vpop.f32.mrf.mxu0
      %3736 = vmatprep.mubr.f32.mxu0 0.0
      %3737 = vmatmul.mubr.f32.gmra.mxu0 %v3531
      %v3738 = vpop.f32.mrf.mxu0
      %v3739 = vadd.f32 0.0, %v3738
      %v3740 = vpop.f32.mrf.mxu0
      %3741 = vmatprep.mubr.f32.mxu0 0.0
      %3742 = vmatmul.mubr.f32.gmra.mxu0 %v3534
      %v3743 = vpop.f32.mrf.mxu0
      %v3744 = vadd.f32 0.0, %v3743
      %v3745 = vpop.f32.mrf.mxu0
      %3746 = vmatprep.mubr.f32.mxu0 0.0
      %3747 = vmatmul.mubr.f32.gmra.mxu0 %v3537
      %v3748 = vpop.f32.mrf.mxu0
      %v3749 = vadd.f32 0.0, %v3748
      %v3750 = vpop.f32.mrf.mxu0
      %3751 = vmatprep.mubr.f32.mxu0 0.0
      %3752 = vmatmul.mubr.f32.gmra.mxu0 %v3540
      %v3753 = vpop.f32.mrf.mxu0
      %v3754 = vadd.f32 0.0, %v3753
      %v3755 = vpop.f32.mrf.mxu0
      %3756 = vmatprep.mubr.f32.mxu0 0.0
      %3757 = vmatmul.mubr.f32.gmra.mxu0 %v3543
      %v3758 = vpop.f32.mrf.mxu0
      %v3759 = vadd.f32 0.0, %v3758
      %v3760 = vpop.f32.mrf.mxu0
      %3761 = vmatprep.mubr.f32.mxu0 0.0
      %3762 = vmatmul.mubr.f32.gmra.mxu0 %v3546
      %v3763 = vpop.f32.mrf.mxu0
      %v3764 = vadd.f32 0.0, %v3763
      %v3765 = vpop.f32.mrf.mxu0
      %3766 = vmatprep.mubr.f32.mxu0 0.0
      %3767 = vmatmul.mubr.f32.gmra.mxu0 %v3549
      %v3768 = vpop.f32.mrf.mxu0
      %v3769 = vadd.f32 0.0, %v3768
      %v3770 = vpop.f32.mrf.mxu0
      %3771 = vmatprep.mubr.f32.mxu0 0.0
      %3772 = vmatmul.mubr.f32.gmra.mxu0 %v3552
      %v3773 = vpop.f32.mrf.mxu0
      %v3774 = vadd.f32 0.0, %v3773
      %v3775 = vpop.f32.mrf.mxu0
      %3776 = vmatprep.mubr.f32.mxu0 0.0
      %3777 = vmatmul.mubr.f32.gmra.mxu0 %v3555
      %v3778 = vpop.f32.mrf.mxu0
      %v3779 = vadd.f32 0.0, %v3778
      %v3780 = vpop.f32.mrf.mxu0
      %3781 = vdwg.mxu0
      %v3782 = vadd.f32 %v3362, %v3624
      %v3783 = vadd.f32 %v3363, %v3629
      %v3784 = vadd.f32 %v3364, %v3634
      %v3785 = vadd.f32 %v3365, %v3639
      %v3786 = vadd.f32 %v3366, %v3644
      %v3787 = vadd.f32 %v3367, %v3649
      %v3788 = vadd.f32 %v3368, %v3654
      %v3789 = vadd.f32 %v3369, %v3659
      %v3790 = vadd.f32 %v3370, %v3664
      %v3791 = vadd.f32 %v3371, %v3669
      %v3792 = vadd.f32 %v3372, %v3674
      %v3793 = vadd.f32 %v3373, %v3679
      %v3794 = vadd.f32 %v3374, %v3684
      %v3795 = vadd.f32 %v3375, %v3689
      %v3796 = vadd.f32 %v3376, %v3694
      %v3797 = vadd.f32 %v3377, %v3699
      %v3798 = vadd.f32 %v3378, %v3704
      %v3799 = vadd.f32 %v3379, %v3709
      %v3800 = vadd.f32 %v3380, %v3714
      %v3801 = vadd.f32 %v3381, %v3719
      %v3802 = vadd.f32 %v3382, %v3724
      %v3803 = vadd.f32 %v3383, %v3729
      %v3804 = vadd.f32 %v3384, %v3734
      %v3805 = vadd.f32 %v3385, %v3739
      %v3806 = vadd.f32 %v3386, %v3744
      %v3807 = vadd.f32 %v3387, %v3749
      %v3808 = vadd.f32 %v3388, %v3754
      %v3809 = vadd.f32 %v3389, %v3759
      %v3810 = vadd.f32 %v3390, %v3764
      %v3811 = vadd.f32 %v3391, %v3769
      %v3812 = vadd.f32 %v3392, %v3774
      %v3813 = vadd.f32 %v3393, %v3779
      %v3814 = vld [vmem:[#allocation2 + $0x18] sm:$0xff]
      %v3815 = vld [vmem:[#allocation2 + $0x20] sm:$0xff]
      %v3816 = vld [vmem:[#allocation2 + $0x28] sm:$0xff]
      %v3817 = vld [vmem:[#allocation2 + $0x30] sm:$0xff]
      %v3818 = vld [vmem:[#allocation2 + $0x38] sm:$0xff]
      %v3819 = vld [vmem:[#allocation2 + $0x40] sm:$0xff]
      %v3820 = vld [vmem:[#allocation2 + $0x48] sm:$0xff]
      %v3821 = vld [vmem:[#allocation2 + $0x50] sm:$0xff]
      %v3822 = vld [vmem:[#allocation2 + $0x58] sm:$0xff]
      %v3823 = vld [vmem:[#allocation2 + $0x60] sm:$0xff]
      %v3824 = vld [vmem:[#allocation2 + $0x68] sm:$0xff]
      %v3825 = vld [vmem:[#allocation2 + $0x70] sm:$0xff]
      %v3826 = vld [vmem:[#allocation2 + $0x78] sm:$0xff]
      %v3827 = vld [vmem:[#allocation2 + $0x80] sm:$0xff]
      %v3828 = vld [vmem:[#allocation2 + $0x88] sm:$0xff]
      %v3829 = vld [vmem:[#allocation2 + $0x90] sm:$0xff]
      %v3830 = vld [vmem:[#allocation2 + $0x98] sm:$0xff]
      %v3831 = vld [vmem:[#allocation2 + $0xa0] sm:$0xff]
      %v3832 = vld [vmem:[#allocation2 + $0xa8] sm:$0xff]
      %v3833 = vld [vmem:[#allocation2 + $0xb0] sm:$0xff]
      %v3834 = vld [vmem:[#allocation2 + $0xb8] sm:$0xff]
      %v3835 = vld [vmem:[#allocation2 + $0xc0] sm:$0xff]
      %v3836 = vld [vmem:[#allocation2 + $0xc8] sm:$0xff]
      %v3837 = vld [vmem:[#allocation2 + $0xd0] sm:$0xff]
      %v3838 = vld [vmem:[#allocation2 + $0xd8] sm:$0xff]
      %v3839 = vld [vmem:[#allocation2 + $0xe0] sm:$0xff]
      %v3840 = vld [vmem:[#allocation2 + $0xe8] sm:$0xff]
      %v3841 = vld [vmem:[#allocation2 + $0xf0] sm:$0xff]
      %v3842 = vld [vmem:[#allocation2 + $0xf8] sm:$0xff]
      %v3843 = vld [vmem:[#allocation2 + $0x100] sm:$0xff]
      %v3844 = vld [vmem:[#allocation2 + $0x108] sm:$0xff]
      %v3845 = vld [vmem:[#allocation2 + $0x110] sm:$0xff]
      %s3846 = scalar_lea.vmem %s10, 64
      %v3847 = vld [vmem:[%s3846] sm:$0xff]
      %v3848 = vld [vmem:[%s3846 + $0x8] sm:$0xff]
      %v3850 = vsel %vm1247, %v3814, 0
      %v3853 = vsel %vm1247, %v3815, 0
      %v3856 = vsel %vm1247, %v3816, 0
      %v3859 = vsel %vm1247, %v3817, 0
      %v3862 = vsel %vm1247, %v3818, 0
      %v3865 = vsel %vm1247, %v3819, 0
      %v3868 = vsel %vm1247, %v3820, 0
      %v3871 = vsel %vm1247, %v3821, 0
      %v3874 = vsel %vm1247, %v3822, 0
      %v3877 = vsel %vm1247, %v3823, 0
      %v3880 = vsel %vm1247, %v3824, 0
      %v3883 = vsel %vm1247, %v3825, 0
      %v3886 = vsel %vm1247, %v3826, 0
      %v3889 = vsel %vm1247, %v3827, 0
      %v3892 = vsel %vm1247, %v3828, 0
      %v3895 = vsel %vm1247, %v3829, 0
      %v3898 = vsel %vm1247, %v3830, 0
      %v3901 = vsel %vm1247, %v3831, 0
      %v3904 = vsel %vm1247, %v3832, 0
      %v3907 = vsel %vm1247, %v3833, 0
      %v3910 = vsel %vm1247, %v3834, 0
      %v3913 = vsel %vm1247, %v3835, 0
      %v3916 = vsel %vm1247, %v3836, 0
      %v3919 = vsel %vm1247, %v3837, 0
      %v3922 = vsel %vm1247, %v3838, 0
      %v3925 = vsel %vm1247, %v3839, 0
      %v3928 = vsel %vm1247, %v3840, 0
      %v3931 = vsel %vm1247, %v3841, 0
      %v3934 = vsel %vm1247, %v3842, 0
      %v3937 = vsel %vm1247, %v3843, 0
      %v3940 = vsel %vm1247, %v3844, 0
      %v3943 = vsel %vm1247, %v3845, 0
      %3945 = vmatprep.subr.mxu0 0.0
      %3946 = vmatpush1.msra.mxu0 0.0
      %3947 = vmatprep.subr.mxu0 0.0
      %3948 = vmatpush1.msra.mxu0 0.0
      %3949 = vmatprep.subr.mxu0 0.0
      %3950 = vmatpush1.msra.mxu0 0.0
      %3951 = vmatprep.subr.mxu0 0.0
      %3952 = vmatpush1.msra.mxu0 0.0
      %3953 = vmatprep.subr.mxu0 0.0
      %3954 = vmatpush1.msra.mxu0 0.0
      %3955 = vmatprep.subr.mxu0 0.0
      %3956 = vmatpush1.msra.mxu0 0.0
      %3957 = vmatprep.subr.mxu0 0.0
      %3958 = vmatpush1.msra.mxu0 0.0
      %3959 = vmatprep.subr.mxu0 0.0
      %3960 = vmatpush1.msra.mxu0 0.0
      %3961 = vmatprep.subr.mxu0 0.0
      %3962 = vmatpush1.msra.mxu0 0.0
      %3963 = vmatprep.subr.mxu0 0.0
      %3964 = vmatpush1.msra.mxu0 0.0
      %3965 = vmatprep.subr.mxu0 0.0
      %3966 = vmatpush1.msra.mxu0 0.0
      %3967 = vmatprep.subr.mxu0 0.0
      %3968 = vmatpush1.msra.mxu0 0.0
      %3969 = vmatprep.subr.mxu0 0.0
      %3970 = vmatpush1.msra.mxu0 0.0
      %3971 = vmatprep.subr.mxu0 0.0
      %3972 = vmatpush1.msra.mxu0 0.0
      %3973 = vmatprep.subr.mxu0 0.0
      %3974 = vmatpush1.msra.mxu0 %v3848
      %3975 = vmatprep.subr.mxu0 0.0
      %3976 = vmatpush1.msra.mxu0 %v3847
      %3977 = vmatprep.subr.mxu0 0.0
      %3978 = vmatpush2.msra.mxu0 0.0
      %3979 = vmatprep.subr.mxu0 0.0
      %3980 = vmatpush2.msra.mxu0 0.0
      %3981 = vmatprep.subr.mxu0 0.0
      %3982 = vmatpush2.msra.mxu0 0.0
      %3983 = vmatprep.subr.mxu0 0.0
      %3984 = vmatpush2.msra.mxu0 0.0
      %3985 = vmatprep.subr.mxu0 0.0
      %3986 = vmatpush2.msra.mxu0 0.0
      %3987 = vmatprep.subr.mxu0 0.0
      %3988 = vmatpush2.msra.mxu0 0.0
      %3989 = vmatprep.subr.mxu0 0.0
      %3990 = vmatpush2.msra.mxu0 0.0
      %3991 = vmatprep.subr.mxu0 0.0
      %3992 = vmatpush2.msra.mxu0 0.0
      %3993 = vmatprep.subr.mxu0 0.0
      %3994 = vmatpush2.msra.mxu0 0.0
      %3995 = vmatprep.subr.mxu0 0.0
      %3996 = vmatpush2.msra.mxu0 0.0
      %3997 = vmatprep.subr.mxu0 0.0
      %3998 = vmatpush2.msra.mxu0 0.0
      %3999 = vmatprep.subr.mxu0 0.0
      %4000 = vmatpush2.msra.mxu0 0.0
      %4001 = vmatprep.subr.mxu0 0.0
      %4002 = vmatpush2.msra.mxu0 0.0
      %4003 = vmatprep.subr.mxu0 0.0
      %4004 = vmatpush2.msra.mxu0 0.0
      %4005 = vmatprep.subr.mxu0 0.0
      %4006 = vmatpush2.msra.mxu0 0.0
      %4007 = vmatprep.subr.mxu0 0.0
      %4008 = vmatpush2.msra.mxu0 0.0
      %4009 = vmatprep.mubr.f32.mxu0 0.0
      %4010 = vmatmul.mubr.f32.gmra.mxu0 %v3850
      %v4011 = vpop.f32.mrf.mxu0
      %v4012 = vadd.f32 0.0, %v4011
      %v4013 = vpop.f32.mrf.mxu0
      %4014 = vmatprep.mubr.f32.mxu0 0.0
      %4015 = vmatmul.mubr.f32.gmra.mxu0 %v3853
      %v4016 = vpop.f32.mrf.mxu0
      %v4017 = vadd.f32 0.0, %v4016
      %v4018 = vpop.f32.mrf.mxu0
      %4019 = vmatprep.mubr.f32.mxu0 0.0
      %4020 = vmatmul.mubr.f32.gmra.mxu0 %v3856
      %v4021 = vpop.f32.mrf.mxu0
      %v4022 = vadd.f32 0.0, %v4021
      %v4023 = vpop.f32.mrf.mxu0
      %4024 = vmatprep.mubr.f32.mxu0 0.0
      %4025 = vmatmul.mubr.f32.gmra.mxu0 %v3859
      %v4026 = vpop.f32.mrf.mxu0
      %v4027 = vadd.f32 0.0, %v4026
      %v4028 = vpop.f32.mrf.mxu0
      %4029 = vmatprep.mubr.f32.mxu0 0.0
      %4030 = vmatmul.mubr.f32.gmra.mxu0 %v3862
      %v4031 = vpop.f32.mrf.mxu0
      %v4032 = vadd.f32 0.0, %v4031
      %v4033 = vpop.f32.mrf.mxu0
      %4034 = vmatprep.mubr.f32.mxu0 0.0
      %4035 = vmatmul.mubr.f32.gmra.mxu0 %v3865
      %v4036 = vpop.f32.mrf.mxu0
      %v4037 = vadd.f32 0.0, %v4036
      %v4038 = vpop.f32.mrf.mxu0
      %4039 = vmatprep.mubr.f32.mxu0 0.0
      %4040 = vmatmul.mubr.f32.gmra.mxu0 %v3868
      %v4041 = vpop.f32.mrf.mxu0
      %v4042 = vadd.f32 0.0, %v4041
      %v4043 = vpop.f32.mrf.mxu0
      %4044 = vmatprep.mubr.f32.mxu0 0.0
      %4045 = vmatmul.mubr.f32.gmra.mxu0 %v3871
      %v4046 = vpop.f32.mrf.mxu0
      %v4047 = vadd.f32 0.0, %v4046
      %v4048 = vpop.f32.mrf.mxu0
      %4049 = vmatprep.mubr.f32.mxu0 0.0
      %4050 = vmatmul.mubr.f32.gmra.mxu0 %v3874
      %v4051 = vpop.f32.mrf.mxu0
      %v4052 = vadd.f32 0.0, %v4051
      %v4053 = vpop.f32.mrf.mxu0
      %4054 = vmatprep.mubr.f32.mxu0 0.0
      %4055 = vmatmul.mubr.f32.gmra.mxu0 %v3877
      %v4056 = vpop.f32.mrf.mxu0
      %v4057 = vadd.f32 0.0, %v4056
      %v4058 = vpop.f32.mrf.mxu0
      %4059 = vmatprep.mubr.f32.mxu0 0.0
      %4060 = vmatmul.mubr.f32.gmra.mxu0 %v3880
      %v4061 = vpop.f32.mrf.mxu0
      %v4062 = vadd.f32 0.0, %v4061
      %v4063 = vpop.f32.mrf.mxu0
      %4064 = vmatprep.mubr.f32.mxu0 0.0
      %4065 = vmatmul.mubr.f32.gmra.mxu0 %v3883
      %v4066 = vpop.f32.mrf.mxu0
      %v4067 = vadd.f32 0.0, %v4066
      %v4068 = vpop.f32.mrf.mxu0
      %4069 = vmatprep.mubr.f32.mxu0 0.0
      %4070 = vmatmul.mubr.f32.gmra.mxu0 %v3886
      %v4071 = vpop.f32.mrf.mxu0
      %v4072 = vadd.f32 0.0, %v4071
      %v4073 = vpop.f32.mrf.mxu0
      %4074 = vmatprep.mubr.f32.mxu0 0.0
      %4075 = vmatmul.mubr.f32.gmra.mxu0 %v3889
      %v4076 = vpop.f32.mrf.mxu0
      %v4077 = vadd.f32 0.0, %v4076
      %v4078 = vpop.f32.mrf.mxu0
      %4079 = vmatprep.mubr.f32.mxu0 0.0
      %4080 = vmatmul.mubr.f32.gmra.mxu0 %v3892
      %v4081 = vpop.f32.mrf.mxu0
      %v4082 = vadd.f32 0.0, %v4081
      %v4083 = vpop.f32.mrf.mxu0
      %4084 = vmatprep.mubr.f32.mxu0 0.0
      %4085 = vmatmul.mubr.f32.gmra.mxu0 %v3895
      %v4086 = vpop.f32.mrf.mxu0
      %v4087 = vadd.f32 0.0, %v4086
      %v4088 = vpop.f32.mrf.mxu0
      %4089 = vmatprep.mubr.f32.mxu0 0.0
      %4090 = vmatmul.mubr.f32.gmra.mxu0 %v3898
      %v4091 = vpop.f32.mrf.mxu0
      %v4092 = vadd.f32 0.0, %v4091
      %v4093 = vpop.f32.mrf.mxu0
      %4094 = vmatprep.mubr.f32.mxu0 0.0
      %4095 = vmatmul.mubr.f32.gmra.mxu0 %v3901
      %v4096 = vpop.f32.mrf.mxu0
      %v4097 = vadd.f32 0.0, %v4096
      %v4098 = vpop.f32.mrf.mxu0
      %4099 = vmatprep.mubr.f32.mxu0 0.0
      %4100 = vmatmul.mubr.f32.gmra.mxu0 %v3904
      %v4101 = vpop.f32.mrf.mxu0
      %v4102 = vadd.f32 0.0, %v4101
      %v4103 = vpop.f32.mrf.mxu0
      %4104 = vmatprep.mubr.f32.mxu0 0.0
      %4105 = vmatmul.mubr.f32.gmra.mxu0 %v3907
      %v4106 = vpop.f32.mrf.mxu0
      %v4107 = vadd.f32 0.0, %v4106
      %v4108 = vpop.f32.mrf.mxu0
      %4109 = vmatprep.mubr.f32.mxu0 0.0
      %4110 = vmatmul.mubr.f32.gmra.mxu0 %v3910
      %v4111 = vpop.f32.mrf.mxu0
      %v4112 = vadd.f32 0.0, %v4111
      %v4113 = vpop.f32.mrf.mxu0
      %4114 = vmatprep.mubr.f32.mxu0 0.0
      %4115 = vmatmul.mubr.f32.gmra.mxu0 %v3913
      %v4116 = vpop.f32.mrf.mxu0
      %v4117 = vadd.f32 0.0, %v4116
      %v4118 = vpop.f32.mrf.mxu0
      %4119 = vmatprep.mubr.f32.mxu0 0.0
      %4120 = vmatmul.mubr.f32.gmra.mxu0 %v3916
      %v4121 = vpop.f32.mrf.mxu0
      %v4122 = vadd.f32 0.0, %v4121
      %v4123 = vpop.f32.mrf.mxu0
      %4124 = vmatprep.mubr.f32.mxu0 0.0
      %4125 = vmatmul.mubr.f32.gmra.mxu0 %v3919
      %v4126 = vpop.f32.mrf.mxu0
      %v4127 = vadd.f32 0.0, %v4126
      %v4128 = vpop.f32.mrf.mxu0
      %4129 = vmatprep.mubr.f32.mxu0 0.0
      %4130 = vmatmul.mubr.f32.gmra.mxu0 %v3922
      %v4131 = vpop.f32.mrf.mxu0
      %v4132 = vadd.f32 0.0, %v4131
      %v4133 = vpop.f32.mrf.mxu0
      %4134 = vmatprep.mubr.f32.mxu0 0.0
      %4135 = vmatmul.mubr.f32.gmra.mxu0 %v3925
      %v4136 = vpop.f32.mrf.mxu0
      %v4137 = vadd.f32 0.0, %v4136
      %v4138 = vpop.f32.mrf.mxu0
      %4139 = vmatprep.mubr.f32.mxu0 0.0
      %4140 = vmatmul.mubr.f32.gmra.mxu0 %v3928
      %v4141 = vpop.f32.mrf.mxu0
      %v4142 = vadd.f32 0.0, %v4141
      %v4143 = vpop.f32.mrf.mxu0
      %4144 = vmatprep.mubr.f32.mxu0 0.0
      %4145 = vmatmul.mubr.f32.gmra.mxu0 %v3931
      %v4146 = vpop.f32.mrf.mxu0
      %v4147 = vadd.f32 0.0, %v4146
      %v4148 = vpop.f32.mrf.mxu0
      %4149 = vmatprep.mubr.f32.mxu0 0.0
      %4150 = vmatmul.mubr.f32.gmra.mxu0 %v3934
      %v4151 = vpop.f32.mrf.mxu0
      %v4152 = vadd.f32 0.0, %v4151
      %v4153 = vpop.f32.mrf.mxu0
      %4154 = vmatprep.mubr.f32.mxu0 0.0
      %4155 = vmatmul.mubr.f32.gmra.mxu0 %v3937
      %v4156 = vpop.f32.mrf.mxu0
      %v4157 = vadd.f32 0.0, %v4156
      %v4158 = vpop.f32.mrf.mxu0
      %4159 = vmatprep.mubr.f32.mxu0 0.0
      %4160 = vmatmul.mubr.f32.gmra.mxu0 %v3940
      %v4161 = vpop.f32.mrf.mxu0
      %v4162 = vadd.f32 0.0, %v4161
      %v4163 = vpop.f32.mrf.mxu0
      %4164 = vmatprep.mubr.f32.mxu0 0.0
      %4165 = vmatmul.mubr.f32.gmra.mxu0 %v3943
      %v4166 = vpop.f32.mrf.mxu0
      %v4167 = vadd.f32 0.0, %v4166
      %v4168 = vpop.f32.mrf.mxu0
      %4169 = vdwg.mxu0
      %v4170 = vadd.f32 %v3782, %v4012
      %v4171 = vadd.f32 %v3783, %v4017
      %v4172 = vadd.f32 %v3784, %v4022
      %v4173 = vadd.f32 %v3785, %v4027
      %v4174 = vadd.f32 %v3786, %v4032
      %v4175 = vadd.f32 %v3787, %v4037
      %v4176 = vadd.f32 %v3788, %v4042
      %v4177 = vadd.f32 %v3789, %v4047
      %v4178 = vadd.f32 %v3790, %v4052
      %v4179 = vadd.f32 %v3791, %v4057
      %v4180 = vadd.f32 %v3792, %v4062
      %v4181 = vadd.f32 %v3793, %v4067
      %v4182 = vadd.f32 %v3794, %v4072
      %v4183 = vadd.f32 %v3795, %v4077
      %v4184 = vadd.f32 %v3796, %v4082
      %v4185 = vadd.f32 %v3797, %v4087
      %v4186 = vadd.f32 %v3798, %v4092
      %v4187 = vadd.f32 %v3799, %v4097
      %v4188 = vadd.f32 %v3800, %v4102
      %v4189 = vadd.f32 %v3801, %v4107
      %v4190 = vadd.f32 %v3802, %v4112
      %v4191 = vadd.f32 %v3803, %v4117
      %v4192 = vadd.f32 %v3804, %v4122
      %v4193 = vadd.f32 %v3805, %v4127
      %v4194 = vadd.f32 %v3806, %v4132
      %v4195 = vadd.f32 %v3807, %v4137
      %v4196 = vadd.f32 %v3808, %v4142
      %v4197 = vadd.f32 %v3809, %v4147
      %v4198 = vadd.f32 %v3810, %v4152
      %v4199 = vadd.f32 %v3811, %v4157
      %v4200 = vadd.f32 %v3812, %v4162
      %v4201 = vadd.f32 %v3813, %v4167
      %v4202 = vld [vmem:[#allocation2 + $0x19] sm:$0xff]
      %v4203 = vld [vmem:[#allocation2 + $0x21] sm:$0xff]
      %v4204 = vld [vmem:[#allocation2 + $0x29] sm:$0xff]
      %v4205 = vld [vmem:[#allocation2 + $0x31] sm:$0xff]
      %v4206 = vld [vmem:[#allocation2 + $0x39] sm:$0xff]
      %v4207 = vld [vmem:[#allocation2 + $0x41] sm:$0xff]
      %v4208 = vld [vmem:[#allocation2 + $0x49] sm:$0xff]
      %v4209 = vld [vmem:[#allocation2 + $0x51] sm:$0xff]
      %v4210 = vld [vmem:[#allocation2 + $0x59] sm:$0xff]
      %v4211 = vld [vmem:[#allocation2 + $0x61] sm:$0xff]
      %v4212 = vld [vmem:[#allocation2 + $0x69] sm:$0xff]
      %v4213 = vld [vmem:[#allocation2 + $0x71] sm:$0xff]
      %v4214 = vld [vmem:[#allocation2 + $0x79] sm:$0xff]
      %v4215 = vld [vmem:[#allocation2 + $0x81] sm:$0xff]
      %v4216 = vld [vmem:[#allocation2 + $0x89] sm:$0xff]
      %v4217 = vld [vmem:[#allocation2 + $0x91] sm:$0xff]
      %v4218 = vld [vmem:[#allocation2 + $0x99] sm:$0xff]
      %v4219 = vld [vmem:[#allocation2 + $0xa1] sm:$0xff]
      %v4220 = vld [vmem:[#allocation2 + $0xa9] sm:$0xff]
      %v4221 = vld [vmem:[#allocation2 + $0xb1] sm:$0xff]
      %v4222 = vld [vmem:[#allocation2 + $0xb9] sm:$0xff]
      %v4223 = vld [vmem:[#allocation2 + $0xc1] sm:$0xff]
      %v4224 = vld [vmem:[#allocation2 + $0xc9] sm:$0xff]
      %v4225 = vld [vmem:[#allocation2 + $0xd1] sm:$0xff]
      %v4226 = vld [vmem:[#allocation2 + $0xd9] sm:$0xff]
      %v4227 = vld [vmem:[#allocation2 + $0xe1] sm:$0xff]
      %v4228 = vld [vmem:[#allocation2 + $0xe9] sm:$0xff]
      %v4229 = vld [vmem:[#allocation2 + $0xf1] sm:$0xff]
      %v4230 = vld [vmem:[#allocation2 + $0xf9] sm:$0xff]
      %v4231 = vld [vmem:[#allocation2 + $0x101] sm:$0xff]
      %v4232 = vld [vmem:[#allocation2 + $0x109] sm:$0xff]
      %v4233 = vld [vmem:[#allocation2 + $0x111] sm:$0xff]
      %v4234 = vsel %vm2199, %v4202, 0.0
      %v4235 = vsel %vm2200, %v4203, 0.0
      %v4236 = vsel %vm2201, %v4204, 0.0
      %v4237 = vsel %vm2202, %v4205, 0.0
      %v4238 = vsel %vm2203, %v4206, 0.0
      %v4239 = vsel %vm2204, %v4207, 0.0
      %v4240 = vsel %vm2205, %v4208, 0.0
      %v4241 = vsel %vm2206, %v4209, 0.0
      %v4242 = vsel %vm2207, %v4210, 0.0
      %v4243 = vsel %vm2208, %v4211, 0.0
      %v4244 = vsel %vm2209, %v4212, 0.0
      %v4245 = vsel %vm2210, %v4213, 0.0
      %v4246 = vsel %vm2211, %v4214, 0.0
      %v4247 = vsel %vm2212, %v4215, 0.0
      %v4248 = vsel %vm2213, %v4216, 0.0
      %v4249 = vsel %vm2214, %v4217, 0.0
      %v4250 = vsel %vm2215, %v4218, 0.0
      %v4251 = vsel %vm2216, %v4219, 0.0
      %v4252 = vsel %vm2217, %v4220, 0.0
      %v4253 = vsel %vm2218, %v4221, 0.0
      %v4254 = vsel %vm2219, %v4222, 0.0
      %v4255 = vsel %vm2220, %v4223, 0.0
      %v4256 = vsel %vm2221, %v4224, 0.0
      %v4257 = vsel %vm2222, %v4225, 0.0
      %v4258 = vsel %vm2223, %v4226, 0.0
      %v4259 = vsel %vm2224, %v4227, 0.0
      %v4260 = vsel %vm2225, %v4228, 0.0
      %v4261 = vsel %vm2226, %v4229, 0.0
      %v4262 = vsel %vm2227, %v4230, 0.0
      %v4263 = vsel %vm2228, %v4231, 0.0
      %v4264 = vsel %vm2229, %v4232, 0.0
      %v4265 = vsel %vm2230, %v4233, 0.0
      %s4266 = scalar_lea.vmem %s10, 80
      %v4267 = vld [vmem:[%s4266] sm:$0xff]
      %v4268 = vld [vmem:[%s4266 + $0x8] sm:$0xff]
      %v4270 = vsel %vm1247, %v4234, 0
      %v4273 = vsel %vm1247, %v4235, 0
      %v4276 = vsel %vm1247, %v4236, 0
      %v4279 = vsel %vm1247, %v4237, 0
      %v4282 = vsel %vm1247, %v4238, 0
      %v4285 = vsel %vm1247, %v4239, 0
      %v4288 = vsel %vm1247, %v4240, 0
      %v4291 = vsel %vm1247, %v4241, 0
      %v4294 = vsel %vm1247, %v4242, 0
      %v4297 = vsel %vm1247, %v4243, 0
      %v4300 = vsel %vm1247, %v4244, 0
      %v4303 = vsel %vm1247, %v4245, 0
      %v4306 = vsel %vm1247, %v4246, 0
      %v4309 = vsel %vm1247, %v4247, 0
      %v4312 = vsel %vm1247, %v4248, 0
      %v4315 = vsel %vm1247, %v4249, 0
      %v4318 = vsel %vm1247, %v4250, 0
      %v4321 = vsel %vm1247, %v4251, 0
      %v4324 = vsel %vm1247, %v4252, 0
      %v4327 = vsel %vm1247, %v4253, 0
      %v4330 = vsel %vm1247, %v4254, 0
      %v4333 = vsel %vm1247, %v4255, 0
      %v4336 = vsel %vm1247, %v4256, 0
      %v4339 = vsel %vm1247, %v4257, 0
      %v4342 = vsel %vm1247, %v4258, 0
      %v4345 = vsel %vm1247, %v4259, 0
      %v4348 = vsel %vm1247, %v4260, 0
      %v4351 = vsel %vm1247, %v4261, 0
      %v4354 = vsel %vm1247, %v4262, 0
      %v4357 = vsel %vm1247, %v4263, 0
      %v4360 = vsel %vm1247, %v4264, 0
      %v4363 = vsel %vm1247, %v4265, 0
      %4365 = vmatprep.subr.mxu0 0.0
      %4366 = vmatpush1.msra.mxu0 0.0
      %4367 = vmatprep.subr.mxu0 0.0
      %4368 = vmatpush1.msra.mxu0 0.0
      %4369 = vmatprep.subr.mxu0 0.0
      %4370 = vmatpush1.msra.mxu0 0.0
      %4371 = vmatprep.subr.mxu0 0.0
      %4372 = vmatpush1.msra.mxu0 0.0
      %4373 = vmatprep.subr.mxu0 0.0
      %4374 = vmatpush1.msra.mxu0 0.0
      %4375 = vmatprep.subr.mxu0 0.0
      %4376 = vmatpush1.msra.mxu0 0.0
      %4377 = vmatprep.subr.mxu0 0.0
      %4378 = vmatpush1.msra.mxu0 0.0
      %4379 = vmatprep.subr.mxu0 0.0
      %4380 = vmatpush1.msra.mxu0 0.0
      %4381 = vmatprep.subr.mxu0 0.0
      %4382 = vmatpush1.msra.mxu0 0.0
      %4383 = vmatprep.subr.mxu0 0.0
      %4384 = vmatpush1.msra.mxu0 0.0
      %4385 = vmatprep.subr.mxu0 0.0
      %4386 = vmatpush1.msra.mxu0 0.0
      %4387 = vmatprep.subr.mxu0 0.0
      %4388 = vmatpush1.msra.mxu0 0.0
      %4389 = vmatprep.subr.mxu0 0.0
      %4390 = vmatpush1.msra.mxu0 0.0
      %4391 = vmatprep.subr.mxu0 0.0
      %4392 = vmatpush1.msra.mxu0 0.0
      %4393 = vmatprep.subr.mxu0 0.0
      %4394 = vmatpush1.msra.mxu0 %v4268
      %4395 = vmatprep.subr.mxu0 0.0
      %4396 = vmatpush1.msra.mxu0 %v4267
      %4397 = vmatprep.subr.mxu0 0.0
      %4398 = vmatpush2.msra.mxu0 0.0
      %4399 = vmatprep.subr.mxu0 0.0
      %4400 = vmatpush2.msra.mxu0 0.0
      %4401 = vmatprep.subr.mxu0 0.0
      %4402 = vmatpush2.msra.mxu0 0.0
      %4403 = vmatprep.subr.mxu0 0.0
      %4404 = vmatpush2.msra.mxu0 0.0
      %4405 = vmatprep.subr.mxu0 0.0
      %4406 = vmatpush2.msra.mxu0 0.0
      %4407 = vmatprep.subr.mxu0 0.0
      %4408 = vmatpush2.msra.mxu0 0.0
      %4409 = vmatprep.subr.mxu0 0.0
      %4410 = vmatpush2.msra.mxu0 0.0
      %4411 = vmatprep.subr.mxu0 0.0
      %4412 = vmatpush2.msra.mxu0 0.0
      %4413 = vmatprep.subr.mxu0 0.0
      %4414 = vmatpush2.msra.mxu0 0.0
      %4415 = vmatprep.subr.mxu0 0.0
      %4416 = vmatpush2.msra.mxu0 0.0
      %4417 = vmatprep.subr.mxu0 0.0
      %4418 = vmatpush2.msra.mxu0 0.0
      %4419 = vmatprep.subr.mxu0 0.0
      %4420 = vmatpush2.msra.mxu0 0.0
      %4421 = vmatprep.subr.mxu0 0.0
      %4422 = vmatpush2.msra.mxu0 0.0
      %4423 = vmatprep.subr.mxu0 0.0
      %4424 = vmatpush2.msra.mxu0 0.0
      %4425 = vmatprep.subr.mxu0 0.0
      %4426 = vmatpush2.msra.mxu0 0.0
      %4427 = vmatprep.subr.mxu0 0.0
      %4428 = vmatpush2.msra.mxu0 0.0
      %4429 = vmatprep.mubr.f32.mxu0 0.0
      %4430 = vmatmul.mubr.f32.gmra.mxu0 %v4270
      %v4431 = vpop.f32.mrf.mxu0
      %v4432 = vadd.f32 0.0, %v4431
      %v4433 = vpop.f32.mrf.mxu0
      %4434 = vmatprep.mubr.f32.mxu0 0.0
      %4435 = vmatmul.mubr.f32.gmra.mxu0 %v4273
      %v4436 = vpop.f32.mrf.mxu0
      %v4437 = vadd.f32 0.0, %v4436
      %v4438 = vpop.f32.mrf.mxu0
      %4439 = vmatprep.mubr.f32.mxu0 0.0
      %4440 = vmatmul.mubr.f32.gmra.mxu0 %v4276
      %v4441 = vpop.f32.mrf.mxu0
      %v4442 = vadd.f32 0.0, %v4441
      %v4443 = vpop.f32.mrf.mxu0
      %4444 = vmatprep.mubr.f32.mxu0 0.0
      %4445 = vmatmul.mubr.f32.gmra.mxu0 %v4279
      %v4446 = vpop.f32.mrf.mxu0
      %v4447 = vadd.f32 0.0, %v4446
      %v4448 = vpop.f32.mrf.mxu0
      %4449 = vmatprep.mubr.f32.mxu0 0.0
      %4450 = vmatmul.mubr.f32.gmra.mxu0 %v4282
      %v4451 = vpop.f32.mrf.mxu0
      %v4452 = vadd.f32 0.0, %v4451
      %v4453 = vpop.f32.mrf.mxu0
      %4454 = vmatprep.mubr.f32.mxu0 0.0
      %4455 = vmatmul.mubr.f32.gmra.mxu0 %v4285
      %v4456 = vpop.f32.mrf.mxu0
      %v4457 = vadd.f32 0.0, %v4456
      %v4458 = vpop.f32.mrf.mxu0
      %4459 = vmatprep.mubr.f32.mxu0 0.0
      %4460 = vmatmul.mubr.f32.gmra.mxu0 %v4288
      %v4461 = vpop.f32.mrf.mxu0
      %v4462 = vadd.f32 0.0, %v4461
      %v4463 = vpop.f32.mrf.mxu0
      %4464 = vmatprep.mubr.f32.mxu0 0.0
      %4465 = vmatmul.mubr.f32.gmra.mxu0 %v4291
      %v4466 = vpop.f32.mrf.mxu0
      %v4467 = vadd.f32 0.0, %v4466
      %v4468 = vpop.f32.mrf.mxu0
      %4469 = vmatprep.mubr.f32.mxu0 0.0
      %4470 = vmatmul.mubr.f32.gmra.mxu0 %v4294
      %v4471 = vpop.f32.mrf.mxu0
      %v4472 = vadd.f32 0.0, %v4471
      %v4473 = vpop.f32.mrf.mxu0
      %4474 = vmatprep.mubr.f32.mxu0 0.0
      %4475 = vmatmul.mubr.f32.gmra.mxu0 %v4297
      %v4476 = vpop.f32.mrf.mxu0
      %v4477 = vadd.f32 0.0, %v4476
      %v4478 = vpop.f32.mrf.mxu0
      %4479 = vmatprep.mubr.f32.mxu0 0.0
      %4480 = vmatmul.mubr.f32.gmra.mxu0 %v4300
      %v4481 = vpop.f32.mrf.mxu0
      %v4482 = vadd.f32 0.0, %v4481
      %v4483 = vpop.f32.mrf.mxu0
      %4484 = vmatprep.mubr.f32.mxu0 0.0
      %4485 = vmatmul.mubr.f32.gmra.mxu0 %v4303
      %v4486 = vpop.f32.mrf.mxu0
      %v4487 = vadd.f32 0.0, %v4486
      %v4488 = vpop.f32.mrf.mxu0
      %4489 = vmatprep.mubr.f32.mxu0 0.0
      %4490 = vmatmul.mubr.f32.gmra.mxu0 %v4306
      %v4491 = vpop.f32.mrf.mxu0
      %v4492 = vadd.f32 0.0, %v4491
      %v4493 = vpop.f32.mrf.mxu0
      %4494 = vmatprep.mubr.f32.mxu0 0.0
      %4495 = vmatmul.mubr.f32.gmra.mxu0 %v4309
      %v4496 = vpop.f32.mrf.mxu0
      %v4497 = vadd.f32 0.0, %v4496
      %v4498 = vpop.f32.mrf.mxu0
      %4499 = vmatprep.mubr.f32.mxu0 0.0
      %4500 = vmatmul.mubr.f32.gmra.mxu0 %v4312
      %v4501 = vpop.f32.mrf.mxu0
      %v4502 = vadd.f32 0.0, %v4501
      %v4503 = vpop.f32.mrf.mxu0
      %4504 = vmatprep.mubr.f32.mxu0 0.0
      %4505 = vmatmul.mubr.f32.gmra.mxu0 %v4315
      %v4506 = vpop.f32.mrf.mxu0
      %v4507 = vadd.f32 0.0, %v4506
      %v4508 = vpop.f32.mrf.mxu0
      %4509 = vmatprep.mubr.f32.mxu0 0.0
      %4510 = vmatmul.mubr.f32.gmra.mxu0 %v4318
      %v4511 = vpop.f32.mrf.mxu0
      %v4512 = vadd.f32 0.0, %v4511
      %v4513 = vpop.f32.mrf.mxu0
      %4514 = vmatprep.mubr.f32.mxu0 0.0
      %4515 = vmatmul.mubr.f32.gmra.mxu0 %v4321
      %v4516 = vpop.f32.mrf.mxu0
      %v4517 = vadd.f32 0.0, %v4516
      %v4518 = vpop.f32.mrf.mxu0
      %4519 = vmatprep.mubr.f32.mxu0 0.0
      %4520 = vmatmul.mubr.f32.gmra.mxu0 %v4324
      %v4521 = vpop.f32.mrf.mxu0
      %v4522 = vadd.f32 0.0, %v4521
      %v4523 = vpop.f32.mrf.mxu0
      %4524 = vmatprep.mubr.f32.mxu0 0.0
      %4525 = vmatmul.mubr.f32.gmra.mxu0 %v4327
      %v4526 = vpop.f32.mrf.mxu0
      %v4527 = vadd.f32 0.0, %v4526
      %v4528 = vpop.f32.mrf.mxu0
      %4529 = vmatprep.mubr.f32.mxu0 0.0
      %4530 = vmatmul.mubr.f32.gmra.mxu0 %v4330
      %v4531 = vpop.f32.mrf.mxu0
      %v4532 = vadd.f32 0.0, %v4531
      %v4533 = vpop.f32.mrf.mxu0
      %4534 = vmatprep.mubr.f32.mxu0 0.0
      %4535 = vmatmul.mubr.f32.gmra.mxu0 %v4333
      %v4536 = vpop.f32.mrf.mxu0
      %v4537 = vadd.f32 0.0, %v4536
      %v4538 = vpop.f32.mrf.mxu0
      %4539 = vmatprep.mubr.f32.mxu0 0.0
      %4540 = vmatmul.mubr.f32.gmra.mxu0 %v4336
      %v4541 = vpop.f32.mrf.mxu0
      %v4542 = vadd.f32 0.0, %v4541
      %v4543 = vpop.f32.mrf.mxu0
      %4544 = vmatprep.mubr.f32.mxu0 0.0
      %4545 = vmatmul.mubr.f32.gmra.mxu0 %v4339
      %v4546 = vpop.f32.mrf.mxu0
      %v4547 = vadd.f32 0.0, %v4546
      %v4548 = vpop.f32.mrf.mxu0
      %4549 = vmatprep.mubr.f32.mxu0 0.0
      %4550 = vmatmul.mubr.f32.gmra.mxu0 %v4342
      %v4551 = vpop.f32.mrf.mxu0
      %v4552 = vadd.f32 0.0, %v4551
      %v4553 = vpop.f32.mrf.mxu0
      %4554 = vmatprep.mubr.f32.mxu0 0.0
      %4555 = vmatmul.mubr.f32.gmra.mxu0 %v4345
      %v4556 = vpop.f32.mrf.mxu0
      %v4557 = vadd.f32 0.0, %v4556
      %v4558 = vpop.f32.mrf.mxu0
      %4559 = vmatprep.mubr.f32.mxu0 0.0
      %4560 = vmatmul.mubr.f32.gmra.mxu0 %v4348
      %v4561 = vpop.f32.mrf.mxu0
      %v4562 = vadd.f32 0.0, %v4561
      %v4563 = vpop.f32.mrf.mxu0
      %4564 = vmatprep.mubr.f32.mxu0 0.0
      %4565 = vmatmul.mubr.f32.gmra.mxu0 %v4351
      %v4566 = vpop.f32.mrf.mxu0
      %v4567 = vadd.f32 0.0, %v4566
      %v4568 = vpop.f32.mrf.mxu0
      %4569 = vmatprep.mubr.f32.mxu0 0.0
      %4570 = vmatmul.mubr.f32.gmra.mxu0 %v4354
      %v4571 = vpop.f32.mrf.mxu0
      %v4572 = vadd.f32 0.0, %v4571
      %v4573 = vpop.f32.mrf.mxu0
      %4574 = vmatprep.mubr.f32.mxu0 0.0
      %4575 = vmatmul.mubr.f32.gmra.mxu0 %v4357
      %v4576 = vpop.f32.mrf.mxu0
      %v4577 = vadd.f32 0.0, %v4576
      %v4578 = vpop.f32.mrf.mxu0
      %4579 = vmatprep.mubr.f32.mxu0 0.0
      %4580 = vmatmul.mubr.f32.gmra.mxu0 %v4360
      %v4581 = vpop.f32.mrf.mxu0
      %v4582 = vadd.f32 0.0, %v4581
      %v4583 = vpop.f32.mrf.mxu0
      %4584 = vmatprep.mubr.f32.mxu0 0.0
      %4585 = vmatmul.mubr.f32.gmra.mxu0 %v4363
      %v4586 = vpop.f32.mrf.mxu0
      %v4587 = vadd.f32 0.0, %v4586
      %v4588 = vpop.f32.mrf.mxu0
      %4589 = vdwg.mxu0
      %v4590 = vadd.f32 %v4170, %v4432
      %v4591 = vadd.f32 %v4171, %v4437
      %v4592 = vadd.f32 %v4172, %v4442
      %v4593 = vadd.f32 %v4173, %v4447
      %v4594 = vadd.f32 %v4174, %v4452
      %v4595 = vadd.f32 %v4175, %v4457
      %v4596 = vadd.f32 %v4176, %v4462
      %v4597 = vadd.f32 %v4177, %v4467
      %v4598 = vadd.f32 %v4178, %v4472
      %v4599 = vadd.f32 %v4179, %v4477
      %v4600 = vadd.f32 %v4180, %v4482
      %v4601 = vadd.f32 %v4181, %v4487
      %v4602 = vadd.f32 %v4182, %v4492
      %v4603 = vadd.f32 %v4183, %v4497
      %v4604 = vadd.f32 %v4184, %v4502
      %v4605 = vadd.f32 %v4185, %v4507
      %v4606 = vadd.f32 %v4186, %v4512
      %v4607 = vadd.f32 %v4187, %v4517
      %v4608 = vadd.f32 %v4188, %v4522
      %v4609 = vadd.f32 %v4189, %v4527
      %v4610 = vadd.f32 %v4190, %v4532
      %v4611 = vadd.f32 %v4191, %v4537
      %v4612 = vadd.f32 %v4192, %v4542
      %v4613 = vadd.f32 %v4193, %v4547
      %v4614 = vadd.f32 %v4194, %v4552
      %v4615 = vadd.f32 %v4195, %v4557
      %v4616 = vadd.f32 %v4196, %v4562
      %v4617 = vadd.f32 %v4197, %v4567
      %v4618 = vadd.f32 %v4198, %v4572
      %v4619 = vadd.f32 %v4199, %v4577
      %v4620 = vadd.f32 %v4200, %v4582
      %v4621 = vadd.f32 %v4201, %v4587
      %v4622 = vld [vmem:[#allocation2 + $0x27] sm:$0xff]
      %v4623 = vld [vmem:[#allocation2 + $0x2f] sm:$0xff]
      %v4624 = vld [vmem:[#allocation2 + $0x37] sm:$0xff]
      %v4625 = vld [vmem:[#allocation2 + $0x3f] sm:$0xff]
      %v4626 = vld [vmem:[#allocation2 + $0x47] sm:$0xff]
      %v4627 = vld [vmem:[#allocation2 + $0x4f] sm:$0xff]
      %v4628 = vld [vmem:[#allocation2 + $0x57] sm:$0xff]
      %v4629 = vld [vmem:[#allocation2 + $0x5f] sm:$0xff]
      %v4630 = vld [vmem:[#allocation2 + $0x67] sm:$0xff]
      %v4631 = vld [vmem:[#allocation2 + $0x6f] sm:$0xff]
      %v4632 = vld [vmem:[#allocation2 + $0x77] sm:$0xff]
      %v4633 = vld [vmem:[#allocation2 + $0x7f] sm:$0xff]
      %v4634 = vld [vmem:[#allocation2 + $0x87] sm:$0xff]
      %v4635 = vld [vmem:[#allocation2 + $0x8f] sm:$0xff]
      %v4636 = vld [vmem:[#allocation2 + $0x97] sm:$0xff]
      %v4637 = vld [vmem:[#allocation2 + $0x9f] sm:$0xff]
      %v4638 = vld [vmem:[#allocation2 + $0xa7] sm:$0xff]
      %v4639 = vld [vmem:[#allocation2 + $0xaf] sm:$0xff]
      %v4640 = vld [vmem:[#allocation2 + $0xb7] sm:$0xff]
      %v4641 = vld [vmem:[#allocation2 + $0xbf] sm:$0xff]
      %v4642 = vld [vmem:[#allocation2 + $0xc7] sm:$0xff]
      %v4643 = vld [vmem:[#allocation2 + $0xcf] sm:$0xff]
      %v4644 = vld [vmem:[#allocation2 + $0xd7] sm:$0xff]
      %v4645 = vld [vmem:[#allocation2 + $0xdf] sm:$0xff]
      %v4646 = vld [vmem:[#allocation2 + $0xe7] sm:$0xff]
      %v4647 = vld [vmem:[#allocation2 + $0xef] sm:$0xff]
      %v4648 = vld [vmem:[#allocation2 + $0xf7] sm:$0xff]
      %v4649 = vld [vmem:[#allocation2 + $0xff] sm:$0xff]
      %v4650 = vld [vmem:[#allocation2 + $0x107] sm:$0xff]
      %v4651 = vld [vmem:[#allocation2 + $0x10f] sm:$0xff]
      %v4652 = vld [vmem:[#allocation2 + $0x117] sm:$0xff]
      %v4653 = vld [vmem:[#allocation2 + $0x11f] sm:$0xff]
      %v4654 = vsel %vm2135, %v4622, 0.0
      %v4655 = vsel %vm2136, %v4623, 0.0
      %v4656 = vsel %vm2137, %v4624, 0.0
      %v4657 = vsel %vm2138, %v4625, 0.0
      %v4658 = vsel %vm2139, %v4626, 0.0
      %v4659 = vsel %vm2140, %v4627, 0.0
      %v4660 = vsel %vm2141, %v4628, 0.0
      %v4661 = vsel %vm2142, %v4629, 0.0
      %v4662 = vsel %vm2143, %v4630, 0.0
      %v4663 = vsel %vm2144, %v4631, 0.0
      %v4664 = vsel %vm2145, %v4632, 0.0
      %v4665 = vsel %vm2146, %v4633, 0.0
      %v4666 = vsel %vm2147, %v4634, 0.0
      %v4667 = vsel %vm2148, %v4635, 0.0
      %v4668 = vsel %vm2149, %v4636, 0.0
      %v4669 = vsel %vm2150, %v4637, 0.0
      %v4670 = vsel %vm2151, %v4638, 0.0
      %v4671 = vsel %vm2152, %v4639, 0.0
      %v4672 = vsel %vm2153, %v4640, 0.0
      %v4673 = vsel %vm2154, %v4641, 0.0
      %v4674 = vsel %vm2155, %v4642, 0.0
      %v4675 = vsel %vm2156, %v4643, 0.0
      %v4676 = vsel %vm2157, %v4644, 0.0
      %v4677 = vsel %vm2158, %v4645, 0.0
      %v4678 = vsel %vm2159, %v4646, 0.0
      %v4679 = vsel %vm2160, %v4647, 0.0
      %v4680 = vsel %vm2161, %v4648, 0.0
      %v4681 = vsel %vm2162, %v4649, 0.0
      %v4682 = vsel %vm2163, %v4650, 0.0
      %v4683 = vsel %vm2164, %v4651, 0.0
      %v4684 = vsel %vm2165, %v4652, 0.0
      %v4685 = vsel %vm2166, %v4653, 0.0
      %s4686 = scalar_lea.vmem %s10, 96
      %v4687 = vld [vmem:[%s4686] sm:$0xff]
      %v4688 = vld [vmem:[%s4686 + $0x8] sm:$0xff]
      %v4690 = vsel %vm1247, %v4654, 0
      %v4693 = vsel %vm1247, %v4655, 0
      %v4696 = vsel %vm1247, %v4656, 0
      %v4699 = vsel %vm1247, %v4657, 0
      %v4702 = vsel %vm1247, %v4658, 0
      %v4705 = vsel %vm1247, %v4659, 0
      %v4708 = vsel %vm1247, %v4660, 0
      %v4711 = vsel %vm1247, %v4661, 0
      %v4714 = vsel %vm1247, %v4662, 0
      %v4717 = vsel %vm1247, %v4663, 0
      %v4720 = vsel %vm1247, %v4664, 0
      %v4723 = vsel %vm1247, %v4665, 0
      %v4726 = vsel %vm1247, %v4666, 0
      %v4729 = vsel %vm1247, %v4667, 0
      %v4732 = vsel %vm1247, %v4668, 0
      %v4735 = vsel %vm1247, %v4669, 0
      %v4738 = vsel %vm1247, %v4670, 0
      %v4741 = vsel %vm1247, %v4671, 0
      %v4744 = vsel %vm1247, %v4672, 0
      %v4747 = vsel %vm1247, %v4673, 0
      %v4750 = vsel %vm1247, %v4674, 0
      %v4753 = vsel %vm1247, %v4675, 0
      %v4756 = vsel %vm1247, %v4676, 0
      %v4759 = vsel %vm1247, %v4677, 0
      %v4762 = vsel %vm1247, %v4678, 0
      %v4765 = vsel %vm1247, %v4679, 0
      %v4768 = vsel %vm1247, %v4680, 0
      %v4771 = vsel %vm1247, %v4681, 0
      %v4774 = vsel %vm1247, %v4682, 0
      %v4777 = vsel %vm1247, %v4683, 0
      %v4780 = vsel %vm1247, %v4684, 0
      %v4783 = vsel %vm1247, %v4685, 0
      %4785 = vmatprep.subr.mxu0 0.0
      %4786 = vmatpush1.msra.mxu0 0.0
      %4787 = vmatprep.subr.mxu0 0.0
      %4788 = vmatpush1.msra.mxu0 0.0
      %4789 = vmatprep.subr.mxu0 0.0
      %4790 = vmatpush1.msra.mxu0 0.0
      %4791 = vmatprep.subr.mxu0 0.0
      %4792 = vmatpush1.msra.mxu0 0.0
      %4793 = vmatprep.subr.mxu0 0.0
      %4794 = vmatpush1.msra.mxu0 0.0
      %4795 = vmatprep.subr.mxu0 0.0
      %4796 = vmatpush1.msra.mxu0 0.0
      %4797 = vmatprep.subr.mxu0 0.0
      %4798 = vmatpush1.msra.mxu0 0.0
      %4799 = vmatprep.subr.mxu0 0.0
      %4800 = vmatpush1.msra.mxu0 0.0
      %4801 = vmatprep.subr.mxu0 0.0
      %4802 = vmatpush1.msra.mxu0 0.0
      %4803 = vmatprep.subr.mxu0 0.0
      %4804 = vmatpush1.msra.mxu0 0.0
      %4805 = vmatprep.subr.mxu0 0.0
      %4806 = vmatpush1.msra.mxu0 0.0
      %4807 = vmatprep.subr.mxu0 0.0
      %4808 = vmatpush1.msra.mxu0 0.0
      %4809 = vmatprep.subr.mxu0 0.0
      %4810 = vmatpush1.msra.mxu0 0.0
      %4811 = vmatprep.subr.mxu0 0.0
      %4812 = vmatpush1.msra.mxu0 0.0
      %4813 = vmatprep.subr.mxu0 0.0
      %4814 = vmatpush1.msra.mxu0 %v4688
      %4815 = vmatprep.subr.mxu0 0.0
      %4816 = vmatpush1.msra.mxu0 %v4687
      %4817 = vmatprep.subr.mxu0 0.0
      %4818 = vmatpush2.msra.mxu0 0.0
      %4819 = vmatprep.subr.mxu0 0.0
      %4820 = vmatpush2.msra.mxu0 0.0
      %4821 = vmatprep.subr.mxu0 0.0
      %4822 = vmatpush2.msra.mxu0 0.0
      %4823 = vmatprep.subr.mxu0 0.0
      %4824 = vmatpush2.msra.mxu0 0.0
      %4825 = vmatprep.subr.mxu0 0.0
      %4826 = vmatpush2.msra.mxu0 0.0
      %4827 = vmatprep.subr.mxu0 0.0
      %4828 = vmatpush2.msra.mxu0 0.0
      %4829 = vmatprep.subr.mxu0 0.0
      %4830 = vmatpush2.msra.mxu0 0.0
      %4831 = vmatprep.subr.mxu0 0.0
      %4832 = vmatpush2.msra.mxu0 0.0
      %4833 = vmatprep.subr.mxu0 0.0
      %4834 = vmatpush2.msra.mxu0 0.0
      %4835 = vmatprep.subr.mxu0 0.0
      %4836 = vmatpush2.msra.mxu0 0.0
      %4837 = vmatprep.subr.mxu0 0.0
      %4838 = vmatpush2.msra.mxu0 0.0
      %4839 = vmatprep.subr.mxu0 0.0
      %4840 = vmatpush2.msra.mxu0 0.0
      %4841 = vmatprep.subr.mxu0 0.0
      %4842 = vmatpush2.msra.mxu0 0.0
      %4843 = vmatprep.subr.mxu0 0.0
      %4844 = vmatpush2.msra.mxu0 0.0
      %4845 = vmatprep.subr.mxu0 0.0
      %4846 = vmatpush2.msra.mxu0 0.0
      %4847 = vmatprep.subr.mxu0 0.0
      %4848 = vmatpush2.msra.mxu0 0.0
      %4849 = vmatprep.mubr.f32.mxu0 0.0
      %4850 = vmatmul.mubr.f32.gmra.mxu0 %v4690
      %v4851 = vpop.f32.mrf.mxu0
      %v4852 = vadd.f32 0.0, %v4851
      %v4853 = vpop.f32.mrf.mxu0
      %4854 = vmatprep.mubr.f32.mxu0 0.0
      %4855 = vmatmul.mubr.f32.gmra.mxu0 %v4693
      %v4856 = vpop.f32.mrf.mxu0
      %v4857 = vadd.f32 0.0, %v4856
      %v4858 = vpop.f32.mrf.mxu0
      %4859 = vmatprep.mubr.f32.mxu0 0.0
      %4860 = vmatmul.mubr.f32.gmra.mxu0 %v4696
      %v4861 = vpop.f32.mrf.mxu0
      %v4862 = vadd.f32 0.0, %v4861
      %v4863 = vpop.f32.mrf.mxu0
      %4864 = vmatprep.mubr.f32.mxu0 0.0
      %4865 = vmatmul.mubr.f32.gmra.mxu0 %v4699
      %v4866 = vpop.f32.mrf.mxu0
      %v4867 = vadd.f32 0.0, %v4866
      %v4868 = vpop.f32.mrf.mxu0
      %4869 = vmatprep.mubr.f32.mxu0 0.0
      %4870 = vmatmul.mubr.f32.gmra.mxu0 %v4702
      %v4871 = vpop.f32.mrf.mxu0
      %v4872 = vadd.f32 0.0, %v4871
      %v4873 = vpop.f32.mrf.mxu0
      %4874 = vmatprep.mubr.f32.mxu0 0.0
      %4875 = vmatmul.mubr.f32.gmra.mxu0 %v4705
      %v4876 = vpop.f32.mrf.mxu0
      %v4877 = vadd.f32 0.0, %v4876
      %v4878 = vpop.f32.mrf.mxu0
      %4879 = vmatprep.mubr.f32.mxu0 0.0
      %4880 = vmatmul.mubr.f32.gmra.mxu0 %v4708
      %v4881 = vpop.f32.mrf.mxu0
      %v4882 = vadd.f32 0.0, %v4881
      %v4883 = vpop.f32.mrf.mxu0
      %4884 = vmatprep.mubr.f32.mxu0 0.0
      %4885 = vmatmul.mubr.f32.gmra.mxu0 %v4711
      %v4886 = vpop.f32.mrf.mxu0
      %v4887 = vadd.f32 0.0, %v4886
      %v4888 = vpop.f32.mrf.mxu0
      %4889 = vmatprep.mubr.f32.mxu0 0.0
      %4890 = vmatmul.mubr.f32.gmra.mxu0 %v4714
      %v4891 = vpop.f32.mrf.mxu0
      %v4892 = vadd.f32 0.0, %v4891
      %v4893 = vpop.f32.mrf.mxu0
      %4894 = vmatprep.mubr.f32.mxu0 0.0
      %4895 = vmatmul.mubr.f32.gmra.mxu0 %v4717
      %v4896 = vpop.f32.mrf.mxu0
      %v4897 = vadd.f32 0.0, %v4896
      %v4898 = vpop.f32.mrf.mxu0
      %4899 = vmatprep.mubr.f32.mxu0 0.0
      %4900 = vmatmul.mubr.f32.gmra.mxu0 %v4720
      %v4901 = vpop.f32.mrf.mxu0
      %v4902 = vadd.f32 0.0, %v4901
      %v4903 = vpop.f32.mrf.mxu0
      %4904 = vmatprep.mubr.f32.mxu0 0.0
      %4905 = vmatmul.mubr.f32.gmra.mxu0 %v4723
      %v4906 = vpop.f32.mrf.mxu0
      %v4907 = vadd.f32 0.0, %v4906
      %v4908 = vpop.f32.mrf.mxu0
      %4909 = vmatprep.mubr.f32.mxu0 0.0
      %4910 = vmatmul.mubr.f32.gmra.mxu0 %v4726
      %v4911 = vpop.f32.mrf.mxu0
      %v4912 = vadd.f32 0.0, %v4911
      %v4913 = vpop.f32.mrf.mxu0
      %4914 = vmatprep.mubr.f32.mxu0 0.0
      %4915 = vmatmul.mubr.f32.gmra.mxu0 %v4729
      %v4916 = vpop.f32.mrf.mxu0
      %v4917 = vadd.f32 0.0, %v4916
      %v4918 = vpop.f32.mrf.mxu0
      %4919 = vmatprep.mubr.f32.mxu0 0.0
      %4920 = vmatmul.mubr.f32.gmra.mxu0 %v4732
      %v4921 = vpop.f32.mrf.mxu0
      %v4922 = vadd.f32 0.0, %v4921
      %v4923 = vpop.f32.mrf.mxu0
      %4924 = vmatprep.mubr.f32.mxu0 0.0
      %4925 = vmatmul.mubr.f32.gmra.mxu0 %v4735
      %v4926 = vpop.f32.mrf.mxu0
      %v4927 = vadd.f32 0.0, %v4926
      %v4928 = vpop.f32.mrf.mxu0
      %4929 = vmatprep.mubr.f32.mxu0 0.0
      %4930 = vmatmul.mubr.f32.gmra.mxu0 %v4738
      %v4931 = vpop.f32.mrf.mxu0
      %v4932 = vadd.f32 0.0, %v4931
      %v4933 = vpop.f32.mrf.mxu0
      %4934 = vmatprep.mubr.f32.mxu0 0.0
      %4935 = vmatmul.mubr.f32.gmra.mxu0 %v4741
      %v4936 = vpop.f32.mrf.mxu0
      %v4937 = vadd.f32 0.0, %v4936
      %v4938 = vpop.f32.mrf.mxu0
      %4939 = vmatprep.mubr.f32.mxu0 0.0
      %4940 = vmatmul.mubr.f32.gmra.mxu0 %v4744
      %v4941 = vpop.f32.mrf.mxu0
      %v4942 = vadd.f32 0.0, %v4941
      %v4943 = vpop.f32.mrf.mxu0
      %4944 = vmatprep.mubr.f32.mxu0 0.0
      %4945 = vmatmul.mubr.f32.gmra.mxu0 %v4747
      %v4946 = vpop.f32.mrf.mxu0
      %v4947 = vadd.f32 0.0, %v4946
      %v4948 = vpop.f32.mrf.mxu0
      %4949 = vmatprep.mubr.f32.mxu0 0.0
      %4950 = vmatmul.mubr.f32.gmra.mxu0 %v4750
      %v4951 = vpop.f32.mrf.mxu0
      %v4952 = vadd.f32 0.0, %v4951
      %v4953 = vpop.f32.mrf.mxu0
      %4954 = vmatprep.mubr.f32.mxu0 0.0
      %4955 = vmatmul.mubr.f32.gmra.mxu0 %v4753
      %v4956 = vpop.f32.mrf.mxu0
      %v4957 = vadd.f32 0.0, %v4956
      %v4958 = vpop.f32.mrf.mxu0
      %4959 = vmatprep.mubr.f32.mxu0 0.0
      %4960 = vmatmul.mubr.f32.gmra.mxu0 %v4756
      %v4961 = vpop.f32.mrf.mxu0
      %v4962 = vadd.f32 0.0, %v4961
      %v4963 = vpop.f32.mrf.mxu0
      %4964 = vmatprep.mubr.f32.mxu0 0.0
      %4965 = vmatmul.mubr.f32.gmra.mxu0 %v4759
      %v4966 = vpop.f32.mrf.mxu0
      %v4967 = vadd.f32 0.0, %v4966
      %v4968 = vpop.f32.mrf.mxu0
      %4969 = vmatprep.mubr.f32.mxu0 0.0
      %4970 = vmatmul.mubr.f32.gmra.mxu0 %v4762
      %v4971 = vpop.f32.mrf.mxu0
      %v4972 = vadd.f32 0.0, %v4971
      %v4973 = vpop.f32.mrf.mxu0
      %4974 = vmatprep.mubr.f32.mxu0 0.0
      %4975 = vmatmul.mubr.f32.gmra.mxu0 %v4765
      %v4976 = vpop.f32.mrf.mxu0
      %v4977 = vadd.f32 0.0, %v4976
      %v4978 = vpop.f32.mrf.mxu0
      %4979 = vmatprep.mubr.f32.mxu0 0.0
      %4980 = vmatmul.mubr.f32.gmra.mxu0 %v4768
      %v4981 = vpop.f32.mrf.mxu0
      %v4982 = vadd.f32 0.0, %v4981
      %v4983 = vpop.f32.mrf.mxu0
      %4984 = vmatprep.mubr.f32.mxu0 0.0
      %4985 = vmatmul.mubr.f32.gmra.mxu0 %v4771
      %v4986 = vpop.f32.mrf.mxu0
      %v4987 = vadd.f32 0.0, %v4986
      %v4988 = vpop.f32.mrf.mxu0
      %4989 = vmatprep.mubr.f32.mxu0 0.0
      %4990 = vmatmul.mubr.f32.gmra.mxu0 %v4774
      %v4991 = vpop.f32.mrf.mxu0
      %v4992 = vadd.f32 0.0, %v4991
      %v4993 = vpop.f32.mrf.mxu0
      %4994 = vmatprep.mubr.f32.mxu0 0.0
      %4995 = vmatmul.mubr.f32.gmra.mxu0 %v4777
      %v4996 = vpop.f32.mrf.mxu0
      %v4997 = vadd.f32 0.0, %v4996
      %v4998 = vpop.f32.mrf.mxu0
      %4999 = vmatprep.mubr.f32.mxu0 0.0
      %5000 = vmatmul.mubr.f32.gmra.mxu0 %v4780
      %v5001 = vpop.f32.mrf.mxu0
      %v5002 = vadd.f32 0.0, %v5001
      %v5003 = vpop.f32.mrf.mxu0
      %5004 = vmatprep.mubr.f32.mxu0 0.0
      %5005 = vmatmul.mubr.f32.gmra.mxu0 %v4783
      %v5006 = vpop.f32.mrf.mxu0
      %v5007 = vadd.f32 0.0, %v5006
      %v5008 = vpop.f32.mrf.mxu0
      %5009 = vdwg.mxu0
      %v5010 = vadd.f32 %v4590, %v4852
      %v5011 = vadd.f32 %v4591, %v4857
      %v5012 = vadd.f32 %v4592, %v4862
      %v5013 = vadd.f32 %v4593, %v4867
      %v5014 = vadd.f32 %v4594, %v4872
      %v5015 = vadd.f32 %v4595, %v4877
      %v5016 = vadd.f32 %v4596, %v4882
      %v5017 = vadd.f32 %v4597, %v4887
      %v5018 = vadd.f32 %v4598, %v4892
      %v5019 = vadd.f32 %v4599, %v4897
      %v5020 = vadd.f32 %v4600, %v4902
      %v5021 = vadd.f32 %v4601, %v4907
      %v5022 = vadd.f32 %v4602, %v4912
      %v5023 = vadd.f32 %v4603, %v4917
      %v5024 = vadd.f32 %v4604, %v4922
      %v5025 = vadd.f32 %v4605, %v4927
      %v5026 = vadd.f32 %v4606, %v4932
      %v5027 = vadd.f32 %v4607, %v4937
      %v5028 = vadd.f32 %v4608, %v4942
      %v5029 = vadd.f32 %v4609, %v4947
      %v5030 = vadd.f32 %v4610, %v4952
      %v5031 = vadd.f32 %v4611, %v4957
      %v5032 = vadd.f32 %v4612, %v4962
      %v5033 = vadd.f32 %v4613, %v4967
      %v5034 = vadd.f32 %v4614, %v4972
      %v5035 = vadd.f32 %v4615, %v4977
      %v5036 = vadd.f32 %v4616, %v4982
      %v5037 = vadd.f32 %v4617, %v4987
      %v5038 = vadd.f32 %v4618, %v4992
      %v5039 = vadd.f32 %v4619, %v4997
      %v5040 = vadd.f32 %v4620, %v5002
      %v5041 = vadd.f32 %v4621, %v5007
      %v5042 = vld [vmem:[#allocation2 + $0x28] sm:$0xff]
      %v5043 = vld [vmem:[#allocation2 + $0x30] sm:$0xff]
      %v5044 = vld [vmem:[#allocation2 + $0x38] sm:$0xff]
      %v5045 = vld [vmem:[#allocation2 + $0x40] sm:$0xff]
      %v5046 = vld [vmem:[#allocation2 + $0x48] sm:$0xff]
      %v5047 = vld [vmem:[#allocation2 + $0x50] sm:$0xff]
      %v5048 = vld [vmem:[#allocation2 + $0x58] sm:$0xff]
      %v5049 = vld [vmem:[#allocation2 + $0x60] sm:$0xff]
      %v5050 = vld [vmem:[#allocation2 + $0x68] sm:$0xff]
      %v5051 = vld [vmem:[#allocation2 + $0x70] sm:$0xff]
      %v5052 = vld [vmem:[#allocation2 + $0x78] sm:$0xff]
      %v5053 = vld [vmem:[#allocation2 + $0x80] sm:$0xff]
      %v5054 = vld [vmem:[#allocation2 + $0x88] sm:$0xff]
      %v5055 = vld [vmem:[#allocation2 + $0x90] sm:$0xff]
      %v5056 = vld [vmem:[#allocation2 + $0x98] sm:$0xff]
      %v5057 = vld [vmem:[#allocation2 + $0xa0] sm:$0xff]
      %v5058 = vld [vmem:[#allocation2 + $0xa8] sm:$0xff]
      %v5059 = vld [vmem:[#allocation2 + $0xb0] sm:$0xff]
      %v5060 = vld [vmem:[#allocation2 + $0xb8] sm:$0xff]
      %v5061 = vld [vmem:[#allocation2 + $0xc0] sm:$0xff]
      %v5062 = vld [vmem:[#allocation2 + $0xc8] sm:$0xff]
      %v5063 = vld [vmem:[#allocation2 + $0xd0] sm:$0xff]
      %v5064 = vld [vmem:[#allocation2 + $0xd8] sm:$0xff]
      %v5065 = vld [vmem:[#allocation2 + $0xe0] sm:$0xff]
      %v5066 = vld [vmem:[#allocation2 + $0xe8] sm:$0xff]
      %v5067 = vld [vmem:[#allocation2 + $0xf0] sm:$0xff]
      %v5068 = vld [vmem:[#allocation2 + $0xf8] sm:$0xff]
      %v5069 = vld [vmem:[#allocation2 + $0x100] sm:$0xff]
      %v5070 = vld [vmem:[#allocation2 + $0x108] sm:$0xff]
      %v5071 = vld [vmem:[#allocation2 + $0x110] sm:$0xff]
      %v5072 = vld [vmem:[#allocation2 + $0x118] sm:$0xff]
      %v5073 = vld [vmem:[#allocation2 + $0x120] sm:$0xff]
      %s5074 = scalar_lea.vmem %s10, 112
      %v5075 = vld [vmem:[%s5074] sm:$0xff]
      %v5076 = vld [vmem:[%s5074 + $0x8] sm:$0xff]
      %v5078 = vsel %vm1247, %v5042, 0
      %v5081 = vsel %vm1247, %v5043, 0
      %v5084 = vsel %vm1247, %v5044, 0
      %v5087 = vsel %vm1247, %v5045, 0
      %v5090 = vsel %vm1247, %v5046, 0
      %v5093 = vsel %vm1247, %v5047, 0
      %v5096 = vsel %vm1247, %v5048, 0
      %v5099 = vsel %vm1247, %v5049, 0
      %v5102 = vsel %vm1247, %v5050, 0
      %v5105 = vsel %vm1247, %v5051, 0
      %v5108 = vsel %vm1247, %v5052, 0
      %v5111 = vsel %vm1247, %v5053, 0
      %v5114 = vsel %vm1247, %v5054, 0
      %v5117 = vsel %vm1247, %v5055, 0
      %v5120 = vsel %vm1247, %v5056, 0
      %v5123 = vsel %vm1247, %v5057, 0
      %v5126 = vsel %vm1247, %v5058, 0
      %v5129 = vsel %vm1247, %v5059, 0
      %v5132 = vsel %vm1247, %v5060, 0
      %v5135 = vsel %vm1247, %v5061, 0
      %v5138 = vsel %vm1247, %v5062, 0
      %v5141 = vsel %vm1247, %v5063, 0
      %v5144 = vsel %vm1247, %v5064, 0
      %v5147 = vsel %vm1247, %v5065, 0
      %v5150 = vsel %vm1247, %v5066, 0
      %v5153 = vsel %vm1247, %v5067, 0
      %v5156 = vsel %vm1247, %v5068, 0
      %v5159 = vsel %vm1247, %v5069, 0
      %v5162 = vsel %vm1247, %v5070, 0
      %v5165 = vsel %vm1247, %v5071, 0
      %v5168 = vsel %vm1247, %v5072, 0
      %v5171 = vsel %vm1247, %v5073, 0
      %5173 = vmatprep.subr.mxu0 0.0
      %5174 = vmatpush1.msra.mxu0 0.0
      %5175 = vmatprep.subr.mxu0 0.0
      %5176 = vmatpush1.msra.mxu0 0.0
      %5177 = vmatprep.subr.mxu0 0.0
      %5178 = vmatpush1.msra.mxu0 0.0
      %5179 = vmatprep.subr.mxu0 0.0
      %5180 = vmatpush1.msra.mxu0 0.0
      %5181 = vmatprep.subr.mxu0 0.0
      %5182 = vmatpush1.msra.mxu0 0.0
      %5183 = vmatprep.subr.mxu0 0.0
      %5184 = vmatpush1.msra.mxu0 0.0
      %5185 = vmatprep.subr.mxu0 0.0
      %5186 = vmatpush1.msra.mxu0 0.0
      %5187 = vmatprep.subr.mxu0 0.0
      %5188 = vmatpush1.msra.mxu0 0.0
      %5189 = vmatprep.subr.mxu0 0.0
      %5190 = vmatpush1.msra.mxu0 0.0
      %5191 = vmatprep.subr.mxu0 0.0
      %5192 = vmatpush1.msra.mxu0 0.0
      %5193 = vmatprep.subr.mxu0 0.0
      %5194 = vmatpush1.msra.mxu0 0.0
      %5195 = vmatprep.subr.mxu0 0.0
      %5196 = vmatpush1.msra.mxu0 0.0
      %5197 = vmatprep.subr.mxu0 0.0
      %5198 = vmatpush1.msra.mxu0 0.0
      %5199 = vmatprep.subr.mxu0 0.0
      %5200 = vmatpush1.msra.mxu0 0.0
      %5201 = vmatprep.subr.mxu0 0.0
      %5202 = vmatpush1.msra.mxu0 %v5076
      %5203 = vmatprep.subr.mxu0 0.0
      %5204 = vmatpush1.msra.mxu0 %v5075
      %5205 = vmatprep.subr.mxu0 0.0
      %5206 = vmatpush2.msra.mxu0 0.0
      %5207 = vmatprep.subr.mxu0 0.0
      %5208 = vmatpush2.msra.mxu0 0.0
      %5209 = vmatprep.subr.mxu0 0.0
      %5210 = vmatpush2.msra.mxu0 0.0
      %5211 = vmatprep.subr.mxu0 0.0
      %5212 = vmatpush2.msra.mxu0 0.0
      %5213 = vmatprep.subr.mxu0 0.0
      %5214 = vmatpush2.msra.mxu0 0.0
      %5215 = vmatprep.subr.mxu0 0.0
      %5216 = vmatpush2.msra.mxu0 0.0
      %5217 = vmatprep.subr.mxu0 0.0
      %5218 = vmatpush2.msra.mxu0 0.0
      %5219 = vmatprep.subr.mxu0 0.0
      %5220 = vmatpush2.msra.mxu0 0.0
      %5221 = vmatprep.subr.mxu0 0.0
      %5222 = vmatpush2.msra.mxu0 0.0
      %5223 = vmatprep.subr.mxu0 0.0
      %5224 = vmatpush2.msra.mxu0 0.0
      %5225 = vmatprep.subr.mxu0 0.0
      %5226 = vmatpush2.msra.mxu0 0.0
      %5227 = vmatprep.subr.mxu0 0.0
      %5228 = vmatpush2.msra.mxu0 0.0
      %5229 = vmatprep.subr.mxu0 0.0
      %5230 = vmatpush2.msra.mxu0 0.0
      %5231 = vmatprep.subr.mxu0 0.0
      %5232 = vmatpush2.msra.mxu0 0.0
      %5233 = vmatprep.subr.mxu0 0.0
      %5234 = vmatpush2.msra.mxu0 0.0
      %5235 = vmatprep.subr.mxu0 0.0
      %5236 = vmatpush2.msra.mxu0 0.0
      %5237 = vmatprep.mubr.f32.mxu0 0.0
      %5238 = vmatmul.mubr.f32.gmra.mxu0 %v5078
      %v5239 = vpop.f32.mrf.mxu0
      %v5240 = vadd.f32 0.0, %v5239
      %v5241 = vpop.f32.mrf.mxu0
      %5242 = vmatprep.mubr.f32.mxu0 0.0
      %5243 = vmatmul.mubr.f32.gmra.mxu0 %v5081
      %v5244 = vpop.f32.mrf.mxu0
      %v5245 = vadd.f32 0.0, %v5244
      %v5246 = vpop.f32.mrf.mxu0
      %5247 = vmatprep.mubr.f32.mxu0 0.0
      %5248 = vmatmul.mubr.f32.gmra.mxu0 %v5084
      %v5249 = vpop.f32.mrf.mxu0
      %v5250 = vadd.f32 0.0, %v5249
      %v5251 = vpop.f32.mrf.mxu0
      %5252 = vmatprep.mubr.f32.mxu0 0.0
      %5253 = vmatmul.mubr.f32.gmra.mxu0 %v5087
      %v5254 = vpop.f32.mrf.mxu0
      %v5255 = vadd.f32 0.0, %v5254
      %v5256 = vpop.f32.mrf.mxu0
      %5257 = vmatprep.mubr.f32.mxu0 0.0
      %5258 = vmatmul.mubr.f32.gmra.mxu0 %v5090
      %v5259 = vpop.f32.mrf.mxu0
      %v5260 = vadd.f32 0.0, %v5259
      %v5261 = vpop.f32.mrf.mxu0
      %5262 = vmatprep.mubr.f32.mxu0 0.0
      %5263 = vmatmul.mubr.f32.gmra.mxu0 %v5093
      %v5264 = vpop.f32.mrf.mxu0
      %v5265 = vadd.f32 0.0, %v5264
      %v5266 = vpop.f32.mrf.mxu0
      %5267 = vmatprep.mubr.f32.mxu0 0.0
      %5268 = vmatmul.mubr.f32.gmra.mxu0 %v5096
      %v5269 = vpop.f32.mrf.mxu0
      %v5270 = vadd.f32 0.0, %v5269
      %v5271 = vpop.f32.mrf.mxu0
      %5272 = vmatprep.mubr.f32.mxu0 0.0
      %5273 = vmatmul.mubr.f32.gmra.mxu0 %v5099
      %v5274 = vpop.f32.mrf.mxu0
      %v5275 = vadd.f32 0.0, %v5274
      %v5276 = vpop.f32.mrf.mxu0
      %5277 = vmatprep.mubr.f32.mxu0 0.0
      %5278 = vmatmul.mubr.f32.gmra.mxu0 %v5102
      %v5279 = vpop.f32.mrf.mxu0
      %v5280 = vadd.f32 0.0, %v5279
      %v5281 = vpop.f32.mrf.mxu0
      %5282 = vmatprep.mubr.f32.mxu0 0.0
      %5283 = vmatmul.mubr.f32.gmra.mxu0 %v5105
      %v5284 = vpop.f32.mrf.mxu0
      %v5285 = vadd.f32 0.0, %v5284
      %v5286 = vpop.f32.mrf.mxu0
      %5287 = vmatprep.mubr.f32.mxu0 0.0
      %5288 = vmatmul.mubr.f32.gmra.mxu0 %v5108
      %v5289 = vpop.f32.mrf.mxu0
      %v5290 = vadd.f32 0.0, %v5289
      %v5291 = vpop.f32.mrf.mxu0
      %5292 = vmatprep.mubr.f32.mxu0 0.0
      %5293 = vmatmul.mubr.f32.gmra.mxu0 %v5111
      %v5294 = vpop.f32.mrf.mxu0
      %v5295 = vadd.f32 0.0, %v5294
      %v5296 = vpop.f32.mrf.mxu0
      %5297 = vmatprep.mubr.f32.mxu0 0.0
      %5298 = vmatmul.mubr.f32.gmra.mxu0 %v5114
      %v5299 = vpop.f32.mrf.mxu0
      %v5300 = vadd.f32 0.0, %v5299
      %v5301 = vpop.f32.mrf.mxu0
      %5302 = vmatprep.mubr.f32.mxu0 0.0
      %5303 = vmatmul.mubr.f32.gmra.mxu0 %v5117
      %v5304 = vpop.f32.mrf.mxu0
      %v5305 = vadd.f32 0.0, %v5304
      %v5306 = vpop.f32.mrf.mxu0
      %5307 = vmatprep.mubr.f32.mxu0 0.0
      %5308 = vmatmul.mubr.f32.gmra.mxu0 %v5120
      %v5309 = vpop.f32.mrf.mxu0
      %v5310 = vadd.f32 0.0, %v5309
      %v5311 = vpop.f32.mrf.mxu0
      %5312 = vmatprep.mubr.f32.mxu0 0.0
      %5313 = vmatmul.mubr.f32.gmra.mxu0 %v5123
      %v5314 = vpop.f32.mrf.mxu0
      %v5315 = vadd.f32 0.0, %v5314
      %v5316 = vpop.f32.mrf.mxu0
      %5317 = vmatprep.mubr.f32.mxu0 0.0
      %5318 = vmatmul.mubr.f32.gmra.mxu0 %v5126
      %v5319 = vpop.f32.mrf.mxu0
      %v5320 = vadd.f32 0.0, %v5319
      %v5321 = vpop.f32.mrf.mxu0
      %5322 = vmatprep.mubr.f32.mxu0 0.0
      %5323 = vmatmul.mubr.f32.gmra.mxu0 %v5129
      %v5324 = vpop.f32.mrf.mxu0
      %v5325 = vadd.f32 0.0, %v5324
      %v5326 = vpop.f32.mrf.mxu0
      %5327 = vmatprep.mubr.f32.mxu0 0.0
      %5328 = vmatmul.mubr.f32.gmra.mxu0 %v5132
      %v5329 = vpop.f32.mrf.mxu0
      %v5330 = vadd.f32 0.0, %v5329
      %v5331 = vpop.f32.mrf.mxu0
      %5332 = vmatprep.mubr.f32.mxu0 0.0
      %5333 = vmatmul.mubr.f32.gmra.mxu0 %v5135
      %v5334 = vpop.f32.mrf.mxu0
      %v5335 = vadd.f32 0.0, %v5334
      %v5336 = vpop.f32.mrf.mxu0
      %5337 = vmatprep.mubr.f32.mxu0 0.0
      %5338 = vmatmul.mubr.f32.gmra.mxu0 %v5138
      %v5339 = vpop.f32.mrf.mxu0
      %v5340 = vadd.f32 0.0, %v5339
      %v5341 = vpop.f32.mrf.mxu0
      %5342 = vmatprep.mubr.f32.mxu0 0.0
      %5343 = vmatmul.mubr.f32.gmra.mxu0 %v5141
      %v5344 = vpop.f32.mrf.mxu0
      %v5345 = vadd.f32 0.0, %v5344
      %v5346 = vpop.f32.mrf.mxu0
      %5347 = vmatprep.mubr.f32.mxu0 0.0
      %5348 = vmatmul.mubr.f32.gmra.mxu0 %v5144
      %v5349 = vpop.f32.mrf.mxu0
      %v5350 = vadd.f32 0.0, %v5349
      %v5351 = vpop.f32.mrf.mxu0
      %5352 = vmatprep.mubr.f32.mxu0 0.0
      %5353 = vmatmul.mubr.f32.gmra.mxu0 %v5147
      %v5354 = vpop.f32.mrf.mxu0
      %v5355 = vadd.f32 0.0, %v5354
      %v5356 = vpop.f32.mrf.mxu0
      %5357 = vmatprep.mubr.f32.mxu0 0.0
      %5358 = vmatmul.mubr.f32.gmra.mxu0 %v5150
      %v5359 = vpop.f32.mrf.mxu0
      %v5360 = vadd.f32 0.0, %v5359
      %v5361 = vpop.f32.mrf.mxu0
      %5362 = vmatprep.mubr.f32.mxu0 0.0
      %5363 = vmatmul.mubr.f32.gmra.mxu0 %v5153
      %v5364 = vpop.f32.mrf.mxu0
      %v5365 = vadd.f32 0.0, %v5364
      %v5366 = vpop.f32.mrf.mxu0
      %5367 = vmatprep.mubr.f32.mxu0 0.0
      %5368 = vmatmul.mubr.f32.gmra.mxu0 %v5156
      %v5369 = vpop.f32.mrf.mxu0
      %v5370 = vadd.f32 0.0, %v5369
      %v5371 = vpop.f32.mrf.mxu0
      %5372 = vmatprep.mubr.f32.mxu0 0.0
      %5373 = vmatmul.mubr.f32.gmra.mxu0 %v5159
      %v5374 = vpop.f32.mrf.mxu0
      %v5375 = vadd.f32 0.0, %v5374
      %v5376 = vpop.f32.mrf.mxu0
      %5377 = vmatprep.mubr.f32.mxu0 0.0
      %5378 = vmatmul.mubr.f32.gmra.mxu0 %v5162
      %v5379 = vpop.f32.mrf.mxu0
      %v5380 = vadd.f32 0.0, %v5379
      %v5381 = vpop.f32.mrf.mxu0
      %5382 = vmatprep.mubr.f32.mxu0 0.0
      %5383 = vmatmul.mubr.f32.gmra.mxu0 %v5165
      %v5384 = vpop.f32.mrf.mxu0
      %v5385 = vadd.f32 0.0, %v5384
      %v5386 = vpop.f32.mrf.mxu0
      %5387 = vmatprep.mubr.f32.mxu0 0.0
      %5388 = vmatmul.mubr.f32.gmra.mxu0 %v5168
      %v5389 = vpop.f32.mrf.mxu0
      %v5390 = vadd.f32 0.0, %v5389
      %v5391 = vpop.f32.mrf.mxu0
      %5392 = vmatprep.mubr.f32.mxu0 0.0
      %5393 = vmatmul.mubr.f32.gmra.mxu0 %v5171
      %v5394 = vpop.f32.mrf.mxu0
      %v5395 = vadd.f32 0.0, %v5394
      %v5396 = vpop.f32.mrf.mxu0
      %5397 = vdwg.mxu0
      %v5398 = vadd.f32 %v5010, %v5240
      %v5399 = vadd.f32 %v5011, %v5245
      %v5400 = vadd.f32 %v5012, %v5250
      %v5401 = vadd.f32 %v5013, %v5255
      %v5402 = vadd.f32 %v5014, %v5260
      %v5403 = vadd.f32 %v5015, %v5265
      %v5404 = vadd.f32 %v5016, %v5270
      %v5405 = vadd.f32 %v5017, %v5275
      %v5406 = vadd.f32 %v5018, %v5280
      %v5407 = vadd.f32 %v5019, %v5285
      %v5408 = vadd.f32 %v5020, %v5290
      %v5409 = vadd.f32 %v5021, %v5295
      %v5410 = vadd.f32 %v5022, %v5300
      %v5411 = vadd.f32 %v5023, %v5305
      %v5412 = vadd.f32 %v5024, %v5310
      %v5413 = vadd.f32 %v5025, %v5315
      %v5414 = vadd.f32 %v5026, %v5320
      %v5415 = vadd.f32 %v5027, %v5325
      %v5416 = vadd.f32 %v5028, %v5330
      %v5417 = vadd.f32 %v5029, %v5335
      %v5418 = vadd.f32 %v5030, %v5340
      %v5419 = vadd.f32 %v5031, %v5345
      %v5420 = vadd.f32 %v5032, %v5350
      %v5421 = vadd.f32 %v5033, %v5355
      %v5422 = vadd.f32 %v5034, %v5360
      %v5423 = vadd.f32 %v5035, %v5365
      %v5424 = vadd.f32 %v5036, %v5370
      %v5425 = vadd.f32 %v5037, %v5375
      %v5426 = vadd.f32 %v5038, %v5380
      %v5427 = vadd.f32 %v5039, %v5385
      %v5428 = vadd.f32 %v5040, %v5390
      %v5429 = vadd.f32 %v5041, %v5395
      %v5430 = vld [vmem:[#allocation2 + $0x29] sm:$0xff]
      %v5431 = vld [vmem:[#allocation2 + $0x31] sm:$0xff]
      %v5432 = vld [vmem:[#allocation2 + $0x39] sm:$0xff]
      %v5433 = vld [vmem:[#allocation2 + $0x41] sm:$0xff]
      %v5434 = vld [vmem:[#allocation2 + $0x49] sm:$0xff]
      %v5435 = vld [vmem:[#allocation2 + $0x51] sm:$0xff]
      %v5436 = vld [vmem:[#allocation2 + $0x59] sm:$0xff]
      %v5437 = vld [vmem:[#allocation2 + $0x61] sm:$0xff]
      %v5438 = vld [vmem:[#allocation2 + $0x69] sm:$0xff]
      %v5439 = vld [vmem:[#allocation2 + $0x71] sm:$0xff]
      %v5440 = vld [vmem:[#allocation2 + $0x79] sm:$0xff]
      %v5441 = vld [vmem:[#allocation2 + $0x81] sm:$0xff]
      %v5442 = vld [vmem:[#allocation2 + $0x89] sm:$0xff]
      %v5443 = vld [vmem:[#allocation2 + $0x91] sm:$0xff]
      %v5444 = vld [vmem:[#allocation2 + $0x99] sm:$0xff]
      %v5445 = vld [vmem:[#allocation2 + $0xa1] sm:$0xff]
      %v5446 = vld [vmem:[#allocation2 + $0xa9] sm:$0xff]
      %v5447 = vld [vmem:[#allocation2 + $0xb1] sm:$0xff]
      %v5448 = vld [vmem:[#allocation2 + $0xb9] sm:$0xff]
      %v5449 = vld [vmem:[#allocation2 + $0xc1] sm:$0xff]
      %v5450 = vld [vmem:[#allocation2 + $0xc9] sm:$0xff]
      %v5451 = vld [vmem:[#allocation2 + $0xd1] sm:$0xff]
      %v5452 = vld [vmem:[#allocation2 + $0xd9] sm:$0xff]
      %v5453 = vld [vmem:[#allocation2 + $0xe1] sm:$0xff]
      %v5454 = vld [vmem:[#allocation2 + $0xe9] sm:$0xff]
      %v5455 = vld [vmem:[#allocation2 + $0xf1] sm:$0xff]
      %v5456 = vld [vmem:[#allocation2 + $0xf9] sm:$0xff]
      %v5457 = vld [vmem:[#allocation2 + $0x101] sm:$0xff]
      %v5458 = vld [vmem:[#allocation2 + $0x109] sm:$0xff]
      %v5459 = vld [vmem:[#allocation2 + $0x111] sm:$0xff]
      %v5460 = vld [vmem:[#allocation2 + $0x119] sm:$0xff]
      %v5461 = vld [vmem:[#allocation2 + $0x121] sm:$0xff]
      %v5462 = vsel %vm2199, %v5430, 0.0
      %v5463 = vsel %vm2200, %v5431, 0.0
      %v5464 = vsel %vm2201, %v5432, 0.0
      %v5465 = vsel %vm2202, %v5433, 0.0
      %v5466 = vsel %vm2203, %v5434, 0.0
      %v5467 = vsel %vm2204, %v5435, 0.0
      %v5468 = vsel %vm2205, %v5436, 0.0
      %v5469 = vsel %vm2206, %v5437, 0.0
      %v5470 = vsel %vm2207, %v5438, 0.0
      %v5471 = vsel %vm2208, %v5439, 0.0
      %v5472 = vsel %vm2209, %v5440, 0.0
      %v5473 = vsel %vm2210, %v5441, 0.0
      %v5474 = vsel %vm2211, %v5442, 0.0
      %v5475 = vsel %vm2212, %v5443, 0.0
      %v5476 = vsel %vm2213, %v5444, 0.0
      %v5477 = vsel %vm2214, %v5445, 0.0
      %v5478 = vsel %vm2215, %v5446, 0.0
      %v5479 = vsel %vm2216, %v5447, 0.0
      %v5480 = vsel %vm2217, %v5448, 0.0
      %v5481 = vsel %vm2218, %v5449, 0.0
      %v5482 = vsel %vm2219, %v5450, 0.0
      %v5483 = vsel %vm2220, %v5451, 0.0
      %v5484 = vsel %vm2221, %v5452, 0.0
      %v5485 = vsel %vm2222, %v5453, 0.0
      %v5486 = vsel %vm2223, %v5454, 0.0
      %v5487 = vsel %vm2224, %v5455, 0.0
      %v5488 = vsel %vm2225, %v5456, 0.0
      %v5489 = vsel %vm2226, %v5457, 0.0
      %v5490 = vsel %vm2227, %v5458, 0.0
      %v5491 = vsel %vm2228, %v5459, 0.0
      %v5492 = vsel %vm2229, %v5460, 0.0
      %v5493 = vsel %vm2230, %v5461, 0.0
      %s5494 = scalar_lea.vmem %s10, 128
      %v5495 = vld [vmem:[%s5494] sm:$0xff]
      %v5496 = vld [vmem:[%s5494 + $0x8] sm:$0xff]
      %v5498 = vsel %vm1247, %v5462, 0
      %v5501 = vsel %vm1247, %v5463, 0
      %v5504 = vsel %vm1247, %v5464, 0
      %v5507 = vsel %vm1247, %v5465, 0
      %v5510 = vsel %vm1247, %v5466, 0
      %v5513 = vsel %vm1247, %v5467, 0
      %v5516 = vsel %vm1247, %v5468, 0
      %v5519 = vsel %vm1247, %v5469, 0
      %v5522 = vsel %vm1247, %v5470, 0
      %v5525 = vsel %vm1247, %v5471, 0
      %v5528 = vsel %vm1247, %v5472, 0
      %v5531 = vsel %vm1247, %v5473, 0
      %v5534 = vsel %vm1247, %v5474, 0
      %v5537 = vsel %vm1247, %v5475, 0
      %v5540 = vsel %vm1247, %v5476, 0
      %v5543 = vsel %vm1247, %v5477, 0
      %v5546 = vsel %vm1247, %v5478, 0
      %v5549 = vsel %vm1247, %v5479, 0
      %v5552 = vsel %vm1247, %v5480, 0
      %v5555 = vsel %vm1247, %v5481, 0
      %v5558 = vsel %vm1247, %v5482, 0
      %v5561 = vsel %vm1247, %v5483, 0
      %v5564 = vsel %vm1247, %v5484, 0
      %v5567 = vsel %vm1247, %v5485, 0
      %v5570 = vsel %vm1247, %v5486, 0
      %v5573 = vsel %vm1247, %v5487, 0
      %v5576 = vsel %vm1247, %v5488, 0
      %v5579 = vsel %vm1247, %v5489, 0
      %v5582 = vsel %vm1247, %v5490, 0
      %v5585 = vsel %vm1247, %v5491, 0
      %v5588 = vsel %vm1247, %v5492, 0
      %v5591 = vsel %vm1247, %v5493, 0
      %5593 = vmatprep.subr.mxu0 0.0
      %5594 = vmatpush1.msra.mxu0 0.0
      %5595 = vmatprep.subr.mxu0 0.0
      %5596 = vmatpush1.msra.mxu0 0.0
      %5597 = vmatprep.subr.mxu0 0.0
      %5598 = vmatpush1.msra.mxu0 0.0
      %5599 = vmatprep.subr.mxu0 0.0
      %5600 = vmatpush1.msra.mxu0 0.0
      %5601 = vmatprep.subr.mxu0 0.0
      %5602 = vmatpush1.msra.mxu0 0.0
      %5603 = vmatprep.subr.mxu0 0.0
      %5604 = vmatpush1.msra.mxu0 0.0
      %5605 = vmatprep.subr.mxu0 0.0
      %5606 = vmatpush1.msra.mxu0 0.0
      %5607 = vmatprep.subr.mxu0 0.0
      %5608 = vmatpush1.msra.mxu0 0.0
      %5609 = vmatprep.subr.mxu0 0.0
      %5610 = vmatpush1.msra.mxu0 0.0
      %5611 = vmatprep.subr.mxu0 0.0
      %5612 = vmatpush1.msra.mxu0 0.0
      %5613 = vmatprep.subr.mxu0 0.0
      %5614 = vmatpush1.msra.mxu0 0.0
      %5615 = vmatprep.subr.mxu0 0.0
      %5616 = vmatpush1.msra.mxu0 0.0
      %5617 = vmatprep.subr.mxu0 0.0
      %5618 = vmatpush1.msra.mxu0 0.0
      %5619 = vmatprep.subr.mxu0 0.0
      %5620 = vmatpush1.msra.mxu0 0.0
      %5621 = vmatprep.subr.mxu0 0.0
      %5622 = vmatpush1.msra.mxu0 %v5496
      %5623 = vmatprep.subr.mxu0 0.0
      %5624 = vmatpush1.msra.mxu0 %v5495
      %5625 = vmatprep.subr.mxu0 0.0
      %5626 = vmatpush2.msra.mxu0 0.0
      %5627 = vmatprep.subr.mxu0 0.0
      %5628 = vmatpush2.msra.mxu0 0.0
      %5629 = vmatprep.subr.mxu0 0.0
      %5630 = vmatpush2.msra.mxu0 0.0
      %5631 = vmatprep.subr.mxu0 0.0
      %5632 = vmatpush2.msra.mxu0 0.0
      %5633 = vmatprep.subr.mxu0 0.0
      %5634 = vmatpush2.msra.mxu0 0.0
      %5635 = vmatprep.subr.mxu0 0.0
      %5636 = vmatpush2.msra.mxu0 0.0
      %5637 = vmatprep.subr.mxu0 0.0
      %5638 = vmatpush2.msra.mxu0 0.0
      %5639 = vmatprep.subr.mxu0 0.0
      %5640 = vmatpush2.msra.mxu0 0.0
      %5641 = vmatprep.subr.mxu0 0.0
      %5642 = vmatpush2.msra.mxu0 0.0
      %5643 = vmatprep.subr.mxu0 0.0
      %5644 = vmatpush2.msra.mxu0 0.0
      %5645 = vmatprep.subr.mxu0 0.0
      %5646 = vmatpush2.msra.mxu0 0.0
      %5647 = vmatprep.subr.mxu0 0.0
      %5648 = vmatpush2.msra.mxu0 0.0
      %5649 = vmatprep.subr.mxu0 0.0
      %5650 = vmatpush2.msra.mxu0 0.0
      %5651 = vmatprep.subr.mxu0 0.0
      %5652 = vmatpush2.msra.mxu0 0.0
      %5653 = vmatprep.subr.mxu0 0.0
      %5654 = vmatpush2.msra.mxu0 0.0
      %5655 = vmatprep.subr.mxu0 0.0
      %5656 = vmatpush2.msra.mxu0 0.0
      %5657 = vmatprep.mubr.f32.mxu0 0.0
      %5658 = vmatmul.mubr.f32.gmra.mxu0 %v5498
      %v5659 = vpop.f32.mrf.mxu0
      %v5660 = vadd.f32 0.0, %v5659
      %v5661 = vpop.f32.mrf.mxu0
      %5662 = vmatprep.mubr.f32.mxu0 0.0
      %5663 = vmatmul.mubr.f32.gmra.mxu0 %v5501
      %v5664 = vpop.f32.mrf.mxu0
      %v5665 = vadd.f32 0.0, %v5664
      %v5666 = vpop.f32.mrf.mxu0
      %5667 = vmatprep.mubr.f32.mxu0 0.0
      %5668 = vmatmul.mubr.f32.gmra.mxu0 %v5504
      %v5669 = vpop.f32.mrf.mxu0
      %v5670 = vadd.f32 0.0, %v5669
      %v5671 = vpop.f32.mrf.mxu0
      %5672 = vmatprep.mubr.f32.mxu0 0.0
      %5673 = vmatmul.mubr.f32.gmra.mxu0 %v5507
      %v5674 = vpop.f32.mrf.mxu0
      %v5675 = vadd.f32 0.0, %v5674
      %v5676 = vpop.f32.mrf.mxu0
      %5677 = vmatprep.mubr.f32.mxu0 0.0
      %5678 = vmatmul.mubr.f32.gmra.mxu0 %v5510
      %v5679 = vpop.f32.mrf.mxu0
      %v5680 = vadd.f32 0.0, %v5679
      %v5681 = vpop.f32.mrf.mxu0
      %5682 = vmatprep.mubr.f32.mxu0 0.0
      %5683 = vmatmul.mubr.f32.gmra.mxu0 %v5513
      %v5684 = vpop.f32.mrf.mxu0
      %v5685 = vadd.f32 0.0, %v5684
      %v5686 = vpop.f32.mrf.mxu0
      %5687 = vmatprep.mubr.f32.mxu0 0.0
      %5688 = vmatmul.mubr.f32.gmra.mxu0 %v5516
      %v5689 = vpop.f32.mrf.mxu0
      %v5690 = vadd.f32 0.0, %v5689
      %v5691 = vpop.f32.mrf.mxu0
      %5692 = vmatprep.mubr.f32.mxu0 0.0
      %5693 = vmatmul.mubr.f32.gmra.mxu0 %v5519
      %v5694 = vpop.f32.mrf.mxu0
      %v5695 = vadd.f32 0.0, %v5694
      %v5696 = vpop.f32.mrf.mxu0
      %5697 = vmatprep.mubr.f32.mxu0 0.0
      %5698 = vmatmul.mubr.f32.gmra.mxu0 %v5522
      %v5699 = vpop.f32.mrf.mxu0
      %v5700 = vadd.f32 0.0, %v5699
      %v5701 = vpop.f32.mrf.mxu0
      %5702 = vmatprep.mubr.f32.mxu0 0.0
      %5703 = vmatmul.mubr.f32.gmra.mxu0 %v5525
      %v5704 = vpop.f32.mrf.mxu0
      %v5705 = vadd.f32 0.0, %v5704
      %v5706 = vpop.f32.mrf.mxu0
      %5707 = vmatprep.mubr.f32.mxu0 0.0
      %5708 = vmatmul.mubr.f32.gmra.mxu0 %v5528
      %v5709 = vpop.f32.mrf.mxu0
      %v5710 = vadd.f32 0.0, %v5709
      %v5711 = vpop.f32.mrf.mxu0
      %5712 = vmatprep.mubr.f32.mxu0 0.0
      %5713 = vmatmul.mubr.f32.gmra.mxu0 %v5531
      %v5714 = vpop.f32.mrf.mxu0
      %v5715 = vadd.f32 0.0, %v5714
      %v5716 = vpop.f32.mrf.mxu0
      %5717 = vmatprep.mubr.f32.mxu0 0.0
      %5718 = vmatmul.mubr.f32.gmra.mxu0 %v5534
      %v5719 = vpop.f32.mrf.mxu0
      %v5720 = vadd.f32 0.0, %v5719
      %v5721 = vpop.f32.mrf.mxu0
      %5722 = vmatprep.mubr.f32.mxu0 0.0
      %5723 = vmatmul.mubr.f32.gmra.mxu0 %v5537
      %v5724 = vpop.f32.mrf.mxu0
      %v5725 = vadd.f32 0.0, %v5724
      %v5726 = vpop.f32.mrf.mxu0
      %5727 = vmatprep.mubr.f32.mxu0 0.0
      %5728 = vmatmul.mubr.f32.gmra.mxu0 %v5540
      %v5729 = vpop.f32.mrf.mxu0
      %v5730 = vadd.f32 0.0, %v5729
      %v5731 = vpop.f32.mrf.mxu0
      %5732 = vmatprep.mubr.f32.mxu0 0.0
      %5733 = vmatmul.mubr.f32.gmra.mxu0 %v5543
      %v5734 = vpop.f32.mrf.mxu0
      %v5735 = vadd.f32 0.0, %v5734
      %v5736 = vpop.f32.mrf.mxu0
      %5737 = vmatprep.mubr.f32.mxu0 0.0
      %5738 = vmatmul.mubr.f32.gmra.mxu0 %v5546
      %v5739 = vpop.f32.mrf.mxu0
      %v5740 = vadd.f32 0.0, %v5739
      %v5741 = vpop.f32.mrf.mxu0
      %5742 = vmatprep.mubr.f32.mxu0 0.0
      %5743 = vmatmul.mubr.f32.gmra.mxu0 %v5549
      %v5744 = vpop.f32.mrf.mxu0
      %v5745 = vadd.f32 0.0, %v5744
      %v5746 = vpop.f32.mrf.mxu0
      %5747 = vmatprep.mubr.f32.mxu0 0.0
      %5748 = vmatmul.mubr.f32.gmra.mxu0 %v5552
      %v5749 = vpop.f32.mrf.mxu0
      %v5750 = vadd.f32 0.0, %v5749
      %v5751 = vpop.f32.mrf.mxu0
      %5752 = vmatprep.mubr.f32.mxu0 0.0
      %5753 = vmatmul.mubr.f32.gmra.mxu0 %v5555
      %v5754 = vpop.f32.mrf.mxu0
      %v5755 = vadd.f32 0.0, %v5754
      %v5756 = vpop.f32.mrf.mxu0
      %5757 = vmatprep.mubr.f32.mxu0 0.0
      %5758 = vmatmul.mubr.f32.gmra.mxu0 %v5558
      %v5759 = vpop.f32.mrf.mxu0
      %v5760 = vadd.f32 0.0, %v5759
      %v5761 = vpop.f32.mrf.mxu0
      %5762 = vmatprep.mubr.f32.mxu0 0.0
      %5763 = vmatmul.mubr.f32.gmra.mxu0 %v5561
      %v5764 = vpop.f32.mrf.mxu0
      %v5765 = vadd.f32 0.0, %v5764
      %v5766 = vpop.f32.mrf.mxu0
      %5767 = vmatprep.mubr.f32.mxu0 0.0
      %5768 = vmatmul.mubr.f32.gmra.mxu0 %v5564
      %v5769 = vpop.f32.mrf.mxu0
      %v5770 = vadd.f32 0.0, %v5769
      %v5771 = vpop.f32.mrf.mxu0
      %5772 = vmatprep.mubr.f32.mxu0 0.0
      %5773 = vmatmul.mubr.f32.gmra.mxu0 %v5567
      %v5774 = vpop.f32.mrf.mxu0
      %v5775 = vadd.f32 0.0, %v5774
      %v5776 = vpop.f32.mrf.mxu0
      %5777 = vmatprep.mubr.f32.mxu0 0.0
      %5778 = vmatmul.mubr.f32.gmra.mxu0 %v5570
      %v5779 = vpop.f32.mrf.mxu0
      %v5780 = vadd.f32 0.0, %v5779
      %v5781 = vpop.f32.mrf.mxu0
      %5782 = vmatprep.mubr.f32.mxu0 0.0
      %5783 = vmatmul.mubr.f32.gmra.mxu0 %v5573
      %v5784 = vpop.f32.mrf.mxu0
      %v5785 = vadd.f32 0.0, %v5784
      %v5786 = vpop.f32.mrf.mxu0
      %5787 = vmatprep.mubr.f32.mxu0 0.0
      %5788 = vmatmul.mubr.f32.gmra.mxu0 %v5576
      %v5789 = vpop.f32.mrf.mxu0
      %v5790 = vadd.f32 0.0, %v5789
      %v5791 = vpop.f32.mrf.mxu0
      %5792 = vmatprep.mubr.f32.mxu0 0.0
      %5793 = vmatmul.mubr.f32.gmra.mxu0 %v5579
      %v5794 = vpop.f32.mrf.mxu0
      %v5795 = vadd.f32 0.0, %v5794
      %v5796 = vpop.f32.mrf.mxu0
      %5797 = vmatprep.mubr.f32.mxu0 0.0
      %5798 = vmatmul.mubr.f32.gmra.mxu0 %v5582
      %v5799 = vpop.f32.mrf.mxu0
      %v5800 = vadd.f32 0.0, %v5799
      %v5801 = vpop.f32.mrf.mxu0
      %5802 = vmatprep.mubr.f32.mxu0 0.0
      %5803 = vmatmul.mubr.f32.gmra.mxu0 %v5585
      %v5804 = vpop.f32.mrf.mxu0
      %v5805 = vadd.f32 0.0, %v5804
      %v5806 = vpop.f32.mrf.mxu0
      %5807 = vmatprep.mubr.f32.mxu0 0.0
      %5808 = vmatmul.mubr.f32.gmra.mxu0 %v5588
      %v5809 = vpop.f32.mrf.mxu0
      %v5810 = vadd.f32 0.0, %v5809
      %v5811 = vpop.f32.mrf.mxu0
      %5812 = vmatprep.mubr.f32.mxu0 0.0
      %5813 = vmatmul.mubr.f32.gmra.mxu0 %v5591
      %v5814 = vpop.f32.mrf.mxu0
      %v5815 = vadd.f32 0.0, %v5814
      %v5816 = vpop.f32.mrf.mxu0
      %5817 = vdwg.mxu0
      %v5818 = vadd.f32 %v5398, %v5660
      %v5819 = vadd.f32 %v5399, %v5665
      %v5820 = vadd.f32 %v5400, %v5670
      %v5821 = vadd.f32 %v5401, %v5675
      %v5822 = vadd.f32 %v5402, %v5680
      %v5823 = vadd.f32 %v5403, %v5685
      %v5824 = vadd.f32 %v5404, %v5690
      %v5825 = vadd.f32 %v5405, %v5695
      %v5826 = vadd.f32 %v5406, %v5700
      %v5827 = vadd.f32 %v5407, %v5705
      %v5828 = vadd.f32 %v5408, %v5710
      %v5829 = vadd.f32 %v5409, %v5715
      %v5830 = vadd.f32 %v5410, %v5720
      %v5831 = vadd.f32 %v5411, %v5725
      %v5832 = vadd.f32 %v5412, %v5730
      %v5833 = vadd.f32 %v5413, %v5735
      %v5834 = vadd.f32 %v5414, %v5740
      %v5835 = vadd.f32 %v5415, %v5745
      %v5836 = vadd.f32 %v5416, %v5750
      %v5837 = vadd.f32 %v5417, %v5755
      %v5838 = vadd.f32 %v5418, %v5760
      %v5839 = vadd.f32 %v5419, %v5765
      %v5840 = vadd.f32 %v5420, %v5770
      %v5841 = vadd.f32 %v5421, %v5775
      %v5842 = vadd.f32 %v5422, %v5780
      %v5843 = vadd.f32 %v5423, %v5785
      %v5844 = vadd.f32 %v5424, %v5790
      %v5845 = vadd.f32 %v5425, %v5795
      %v5846 = vadd.f32 %v5426, %v5800
      %v5847 = vadd.f32 %v5427, %v5805
      %v5848 = vadd.f32 %v5428, %v5810
      %v5849 = vadd.f32 %v5429, %v5815
      %v5850 = vld [vmem:[%s11] sm:$0x1]
      %v5852 = vlaneseq
      %v5853 = vshrl.u32 %v5852, 7
      %v5854 = vsub.s32 0, %v5853
      %v5855 = vrot.slane %v5850, %v5854
      %v5857 = vadd.f32 %v5818, %v5855
      %v5858 = vadd.f32 %v5819, %v5855
      %v5859 = vadd.f32 %v5820, %v5855
      %v5860 = vadd.f32 %v5821, %v5855
      %v5861 = vadd.f32 %v5822, %v5855
      %v5862 = vadd.f32 %v5823, %v5855
      %v5863 = vadd.f32 %v5824, %v5855
      %v5864 = vadd.f32 %v5825, %v5855
      %v5865 = vadd.f32 %v5826, %v5855
      %v5866 = vadd.f32 %v5827, %v5855
      %v5867 = vadd.f32 %v5828, %v5855
      %v5868 = vadd.f32 %v5829, %v5855
      %v5869 = vadd.f32 %v5830, %v5855
      %v5870 = vadd.f32 %v5831, %v5855
      %v5871 = vadd.f32 %v5832, %v5855
      %v5872 = vadd.f32 %v5833, %v5855
      %v5873 = vadd.f32 %v5834, %v5855
      %v5874 = vadd.f32 %v5835, %v5855
      %v5875 = vadd.f32 %v5836, %v5855
      %v5876 = vadd.f32 %v5837, %v5855
      %v5877 = vadd.f32 %v5838, %v5855
      %v5878 = vadd.f32 %v5839, %v5855
      %v5879 = vadd.f32 %v5840, %v5855
      %v5880 = vadd.f32 %v5841, %v5855
      %v5881 = vadd.f32 %v5842, %v5855
      %v5882 = vadd.f32 %v5843, %v5855
      %v5883 = vadd.f32 %v5844, %v5855
      %v5884 = vadd.f32 %v5845, %v5855
      %v5885 = vadd.f32 %v5846, %v5855
      %v5886 = vadd.f32 %v5847, %v5855
      %v5887 = vadd.f32 %v5848, %v5855
      %v5888 = vadd.f32 %v5849, %v5855
      %v5889 = vsel %vm1247, %v5857, 0.0
      %v5890 = vsel %vm1247, %v5858, 0.0
      %v5891 = vadd.f32 %v5889, %v5890
      %v5892 = vsel %vm1247, %v5859, 0.0
      %v5893 = vadd.f32 %v5891, %v5892
      %v5894 = vsel %vm1247, %v5860, 0.0
      %v5895 = vadd.f32 %v5893, %v5894
      %v5896 = vsel %vm1247, %v5861, 0.0
      %v5897 = vadd.f32 %v5895, %v5896
      %v5898 = vsel %vm1247, %v5862, 0.0
      %v5899 = vadd.f32 %v5897, %v5898
      %v5900 = vsel %vm1247, %v5863, 0.0
      %v5901 = vadd.f32 %v5899, %v5900
      %v5902 = vsel %vm1247, %v5864, 0.0
      %v5903 = vadd.f32 %v5901, %v5902
      %v5904 = vsel %vm1247, %v5865, 0.0
      %v5905 = vadd.f32 %v5903, %v5904
      %v5906 = vsel %vm1247, %v5866, 0.0
      %v5907 = vadd.f32 %v5905, %v5906
      %v5908 = vsel %vm1247, %v5867, 0.0
      %v5909 = vadd.f32 %v5907, %v5908
      %v5910 = vsel %vm1247, %v5868, 0.0
      %v5911 = vadd.f32 %v5909, %v5910
      %v5912 = vsel %vm1247, %v5869, 0.0
      %v5913 = vadd.f32 %v5911, %v5912
      %v5914 = vsel %vm1247, %v5870, 0.0
      %v5915 = vadd.f32 %v5913, %v5914
      %v5916 = vsel %vm1247, %v5871, 0.0
      %v5917 = vadd.f32 %v5915, %v5916
      %v5918 = vsel %vm1247, %v5872, 0.0
      %v5919 = vadd.f32 %v5917, %v5918
      %v5920 = vsel %vm1247, %v5873, 0.0
      %v5921 = vadd.f32 %v5919, %v5920
      %v5922 = vsel %vm1247, %v5874, 0.0
      %v5923 = vadd.f32 %v5921, %v5922
      %v5924 = vsel %vm1247, %v5875, 0.0
      %v5925 = vadd.f32 %v5923, %v5924
      %v5926 = vsel %vm1247, %v5876, 0.0
      %v5927 = vadd.f32 %v5925, %v5926
      %v5928 = vsel %vm1247, %v5877, 0.0
      %v5929 = vadd.f32 %v5927, %v5928
      %v5930 = vsel %vm1247, %v5878, 0.0
      %v5931 = vadd.f32 %v5929, %v5930
      %v5932 = vsel %vm1247, %v5879, 0.0
      %v5933 = vadd.f32 %v5931, %v5932
      %v5934 = vsel %vm1247, %v5880, 0.0
      %v5935 = vadd.f32 %v5933, %v5934
      %v5936 = vsel %vm1247, %v5881, 0.0
      %v5937 = vadd.f32 %v5935, %v5936
      %v5938 = vsel %vm1247, %v5882, 0.0
      %v5939 = vadd.f32 %v5937, %v5938
      %v5940 = vsel %vm1247, %v5883, 0.0
      %v5941 = vadd.f32 %v5939, %v5940
      %v5942 = vsel %vm1247, %v5884, 0.0
      %v5943 = vadd.f32 %v5941, %v5942
      %v5944 = vsel %vm1247, %v5885, 0.0
      %v5945 = vadd.f32 %v5943, %v5944
      %v5946 = vsel %vm1247, %v5886, 0.0
      %v5947 = vadd.f32 %v5945, %v5946
      %v5948 = vsel %vm1247, %v5887, 0.0
      %v5949 = vadd.f32 %v5947, %v5948
      %v5950 = vsel %vm1247, %v5888, 0.0
      %v5951 = vadd.f32 %v5949, %v5950
      %v5952 = vrot.slane %v5951, 4
      %v5953 = vadd.f32 %v5951, %v5952
      %v5954 = vrot.slane %v5953, 2
      %v5955 = vadd.f32 %v5953, %v5954
      %v5956 = vrot.slane %v5955, 1
      %v5957 = vadd.f32 %v5955, %v5956
      %v5958 = vmul.f32 %v5857, %v5857
      %v5959 = vmul.f32 %v5858, %v5858
      %v5960 = vmul.f32 %v5859, %v5859
      %v5961 = vmul.f32 %v5860, %v5860
      %v5962 = vmul.f32 %v5861, %v5861
      %v5963 = vmul.f32 %v5862, %v5862
      %v5964 = vmul.f32 %v5863, %v5863
      %v5965 = vmul.f32 %v5864, %v5864
      %v5966 = vmul.f32 %v5865, %v5865
      %v5967 = vmul.f32 %v5866, %v5866
      %v5968 = vmul.f32 %v5867, %v5867
      %v5969 = vmul.f32 %v5868, %v5868
      %v5970 = vmul.f32 %v5869, %v5869
      %v5971 = vmul.f32 %v5870, %v5870
      %v5972 = vmul.f32 %v5871, %v5871
      %v5973 = vmul.f32 %v5872, %v5872
      %v5974 = vmul.f32 %v5873, %v5873
      %v5975 = vmul.f32 %v5874, %v5874
      %v5976 = vmul.f32 %v5875, %v5875
      %v5977 = vmul.f32 %v5876, %v5876
      %v5978 = vmul.f32 %v5877, %v5877
      %v5979 = vmul.f32 %v5878, %v5878
      %v5980 = vmul.f32 %v5879, %v5879
      %v5981 = vmul.f32 %v5880, %v5880
      %v5982 = vmul.f32 %v5881, %v5881
      %v5983 = vmul.f32 %v5882, %v5882
      %v5984 = vmul.f32 %v5883, %v5883
      %v5985 = vmul.f32 %v5884, %v5884
      %v5986 = vmul.f32 %v5885, %v5885
      %v5987 = vmul.f32 %v5886, %v5886
      %v5988 = vmul.f32 %v5887, %v5887
      %v5989 = vmul.f32 %v5888, %v5888
      %v5990 = vsel %vm1247, %v5958, 0.0
      %v5991 = vsel %vm1247, %v5959, 0.0
      %v5992 = vadd.f32 %v5990, %v5991
      %v5993 = vsel %vm1247, %v5960, 0.0
      %v5994 = vadd.f32 %v5992, %v5993
      %v5995 = vsel %vm1247, %v5961, 0.0
      %v5996 = vadd.f32 %v5994, %v5995
      %v5997 = vsel %vm1247, %v5962, 0.0
      %v5998 = vadd.f32 %v5996, %v5997
      %v5999 = vsel %vm1247, %v5963, 0.0
      %v6000 = vadd.f32 %v5998, %v5999
      %v6001 = vsel %vm1247, %v5964, 0.0
      %v6002 = vadd.f32 %v6000, %v6001
      %v6003 = vsel %vm1247, %v5965, 0.0
      %v6004 = vadd.f32 %v6002, %v6003
      %v6005 = vsel %vm1247, %v5966, 0.0
      %v6006 = vadd.f32 %v6004, %v6005
      %v6007 = vsel %vm1247, %v5967, 0.0
      %v6008 = vadd.f32 %v6006, %v6007
      %v6009 = vsel %vm1247, %v5968, 0.0
      %v6010 = vadd.f32 %v6008, %v6009
      %v6011 = vsel %vm1247, %v5969, 0.0
      %v6012 = vadd.f32 %v6010, %v6011
      %v6013 = vsel %vm1247, %v5970, 0.0
      %v6014 = vadd.f32 %v6012, %v6013
      %v6015 = vsel %vm1247, %v5971, 0.0
      %v6016 = vadd.f32 %v6014, %v6015
      %v6017 = vsel %vm1247, %v5972, 0.0
      %v6018 = vadd.f32 %v6016, %v6017
      %v6019 = vsel %vm1247, %v5973, 0.0
      %v6020 = vadd.f32 %v6018, %v6019
      %v6021 = vsel %vm1247, %v5974, 0.0
      %v6022 = vadd.f32 %v6020, %v6021
      %v6023 = vsel %vm1247, %v5975, 0.0
      %v6024 = vadd.f32 %v6022, %v6023
      %v6025 = vsel %vm1247, %v5976, 0.0
      %v6026 = vadd.f32 %v6024, %v6025
      %v6027 = vsel %vm1247, %v5977, 0.0
      %v6028 = vadd.f32 %v6026, %v6027
      %v6029 = vsel %vm1247, %v5978, 0.0
      %v6030 = vadd.f32 %v6028, %v6029
      %v6031 = vsel %vm1247, %v5979, 0.0
      %v6032 = vadd.f32 %v6030, %v6031
      %v6033 = vsel %vm1247, %v5980, 0.0
      %v6034 = vadd.f32 %v6032, %v6033
      %v6035 = vsel %vm1247, %v5981, 0.0
      %v6036 = vadd.f32 %v6034, %v6035
      %v6037 = vsel %vm1247, %v5982, 0.0
      %v6038 = vadd.f32 %v6036, %v6037
      %v6039 = vsel %vm1247, %v5983, 0.0
      %v6040 = vadd.f32 %v6038, %v6039
      %v6041 = vsel %vm1247, %v5984, 0.0
      %v6042 = vadd.f32 %v6040, %v6041
      %v6043 = vsel %vm1247, %v5985, 0.0
      %v6044 = vadd.f32 %v6042, %v6043
      %v6045 = vsel %vm1247, %v5986, 0.0
      %v6046 = vadd.f32 %v6044, %v6045
      %v6047 = vsel %vm1247, %v5987, 0.0
      %v6048 = vadd.f32 %v6046, %v6047
      %v6049 = vsel %vm1247, %v5988, 0.0
      %v6050 = vadd.f32 %v6048, %v6049
      %v6051 = vsel %vm1247, %v5989, 0.0
      %v6052 = vadd.f32 %v6050, %v6051
      %v6053 = vrot.slane %v6052, 4
      %v6054 = vadd.f32 %v6052, %v6053
      %v6055 = vrot.slane %v6054, 2
      %v6056 = vadd.f32 %v6054, %v6055
      %v6057 = vrot.slane %v6056, 1
      %v6058 = vadd.f32 %v6056, %v6057
      %v6059 = vld [vmem:[%s3] sm:$0xff]
      %v6060 = vld [vmem:[%s3 + $0x8] sm:$0xff]
      %v6062 = vsel %vm1247, %v5957, 0
      %6064 = vmatprep.subr.mxu0 0.0
      %6065 = vmatpush1.msra.mxu0 0.0
      %6066 = vmatprep.subr.mxu0 0.0
      %6067 = vmatpush1.msra.mxu0 0.0
      %6068 = vmatprep.subr.mxu0 0.0
      %6069 = vmatpush1.msra.mxu0 0.0
      %6070 = vmatprep.subr.mxu0 0.0
      %6071 = vmatpush1.msra.mxu0 0.0
      %6072 = vmatprep.subr.mxu0 0.0
      %6073 = vmatpush1.msra.mxu0 0.0
      %6074 = vmatprep.subr.mxu0 0.0
      %6075 = vmatpush1.msra.mxu0 0.0
      %6076 = vmatprep.subr.mxu0 0.0
      %6077 = vmatpush1.msra.mxu0 0.0
      %6078 = vmatprep.subr.mxu0 0.0
      %6079 = vmatpush1.msra.mxu0 0.0
      %6080 = vmatprep.subr.mxu0 0.0
      %6081 = vmatpush1.msra.mxu0 0.0
      %6082 = vmatprep.subr.mxu0 0.0
      %6083 = vmatpush1.msra.mxu0 0.0
      %6084 = vmatprep.subr.mxu0 0.0
      %6085 = vmatpush1.msra.mxu0 0.0
      %6086 = vmatprep.subr.mxu0 0.0
      %6087 = vmatpush1.msra.mxu0 0.0
      %6088 = vmatprep.subr.mxu0 0.0
      %6089 = vmatpush1.msra.mxu0 0.0
      %6090 = vmatprep.subr.mxu0 0.0
      %6091 = vmatpush1.msra.mxu0 0.0
      %6092 = vmatprep.subr.mxu0 0.0
      %6093 = vmatpush1.msra.mxu0 %v6060
      %6094 = vmatprep.subr.mxu0 0.0
      %6095 = vmatpush1.msra.mxu0 %v6059
      %6096 = vmatprep.subr.mxu0 0.0
      %6097 = vmatpush2.msra.mxu0 0.0
      %6098 = vmatprep.subr.mxu0 0.0
      %6099 = vmatpush2.msra.mxu0 0.0
      %6100 = vmatprep.subr.mxu0 0.0
      %6101 = vmatpush2.msra.mxu0 0.0
      %6102 = vmatprep.subr.mxu0 0.0
      %6103 = vmatpush2.msra.mxu0 0.0
      %6104 = vmatprep.subr.mxu0 0.0
      %6105 = vmatpush2.msra.mxu0 0.0
      %6106 = vmatprep.subr.mxu0 0.0
      %6107 = vmatpush2.msra.mxu0 0.0
      %6108 = vmatprep.subr.mxu0 0.0
      %6109 = vmatpush2.msra.mxu0 0.0
      %6110 = vmatprep.subr.mxu0 0.0
      %6111 = vmatpush2.msra.mxu0 0.0
      %6112 = vmatprep.subr.mxu0 0.0
      %6113 = vmatpush2.msra.mxu0 0.0
      %6114 = vmatprep.subr.mxu0 0.0
      %6115 = vmatpush2.msra.mxu0 0.0
      %6116 = vmatprep.subr.mxu0 0.0
      %6117 = vmatpush2.msra.mxu0 0.0
      %6118 = vmatprep.subr.mxu0 0.0
      %6119 = vmatpush2.msra.mxu0 0.0
      %6120 = vmatprep.subr.mxu0 0.0
      %6121 = vmatpush2.msra.mxu0 0.0
      %6122 = vmatprep.subr.mxu0 0.0
      %6123 = vmatpush2.msra.mxu0 0.0
      %6124 = vmatprep.subr.mxu0 0.0
      %6125 = vmatpush2.msra.mxu0 0.0
      %6126 = vmatprep.subr.mxu0 0.0
      %6127 = vmatpush2.msra.mxu0 0.0
      %6128 = vmatprep.mubr.f32.mxu0 0.0
      %6129 = vmatmul.mubr.f32.gmra.mxu0 %v6062
      %v6130 = vpop.f32.mrf.mxu0
      %v6131 = vadd.f32 0.0, %v6130
      %v6132 = vpop.f32.mrf.mxu0
      %6133 = vdwg.mxu0
      %v6135 = vsel %vm1247, %v6058, 0
      %6137 = vmatprep.subr.mxu0 0.0
      %6138 = vmatpush1.msra.mxu0 0.0
      %6139 = vmatprep.subr.mxu0 0.0
      %6140 = vmatpush1.msra.mxu0 0.0
      %6141 = vmatprep.subr.mxu0 0.0
      %6142 = vmatpush1.msra.mxu0 0.0
      %6143 = vmatprep.subr.mxu0 0.0
      %6144 = vmatpush1.msra.mxu0 0.0
      %6145 = vmatprep.subr.mxu0 0.0
      %6146 = vmatpush1.msra.mxu0 0.0
      %6147 = vmatprep.subr.mxu0 0.0
      %6148 = vmatpush1.msra.mxu0 0.0
      %6149 = vmatprep.subr.mxu0 0.0
      %6150 = vmatpush1.msra.mxu0 0.0
      %6151 = vmatprep.subr.mxu0 0.0
      %6152 = vmatpush1.msra.mxu0 0.0
      %6153 = vmatprep.subr.mxu0 0.0
      %6154 = vmatpush1.msra.mxu0 0.0
      %6155 = vmatprep.subr.mxu0 0.0
      %6156 = vmatpush1.msra.mxu0 0.0
      %6157 = vmatprep.subr.mxu0 0.0
      %6158 = vmatpush1.msra.mxu0 0.0
      %6159 = vmatprep.subr.mxu0 0.0
      %6160 = vmatpush1.msra.mxu0 0.0
      %6161 = vmatprep.subr.mxu0 0.0
      %6162 = vmatpush1.msra.mxu0 0.0
      %6163 = vmatprep.subr.mxu0 0.0
      %6164 = vmatpush1.msra.mxu0 0.0
      %6165 = vmatprep.subr.mxu0 0.0
      %6166 = vmatpush1.msra.mxu0 %v6060
      %6167 = vmatprep.subr.mxu0 0.0
      %6168 = vmatpush1.msra.mxu0 %v6059
      %6169 = vmatprep.subr.mxu0 0.0
      %6170 = vmatpush2.msra.mxu0 0.0
      %6171 = vmatprep.subr.mxu0 0.0
      %6172 = vmatpush2.msra.mxu0 0.0
      %6173 = vmatprep.subr.mxu0 0.0
      %6174 = vmatpush2.msra.mxu0 0.0
      %6175 = vmatprep.subr.mxu0 0.0
      %6176 = vmatpush2.msra.mxu0 0.0
      %6177 = vmatprep.subr.mxu0 0.0
      %6178 = vmatpush2.msra.mxu0 0.0
      %6179 = vmatprep.subr.mxu0 0.0
      %6180 = vmatpush2.msra.mxu0 0.0
      %6181 = vmatprep.subr.mxu0 0.0
      %6182 = vmatpush2.msra.mxu0 0.0
      %6183 = vmatprep.subr.mxu0 0.0
      %6184 = vmatpush2.msra.mxu0 0.0
      %6185 = vmatprep.subr.mxu0 0.0
      %6186 = vmatpush2.msra.mxu0 0.0
      %6187 = vmatprep.subr.mxu0 0.0
      %6188 = vmatpush2.msra.mxu0 0.0
      %6189 = vmatprep.subr.mxu0 0.0
      %6190 = vmatpush2.msra.mxu0 0.0
      %6191 = vmatprep.subr.mxu0 0.0
      %6192 = vmatpush2.msra.mxu0 0.0
      %6193 = vmatprep.subr.mxu0 0.0
      %6194 = vmatpush2.msra.mxu0 0.0
      %6195 = vmatprep.subr.mxu0 0.0
      %6196 = vmatpush2.msra.mxu0 0.0
      %6197 = vmatprep.subr.mxu0 0.0
      %6198 = vmatpush2.msra.mxu0 0.0
      %6199 = vmatprep.subr.mxu0 0.0
      %6200 = vmatpush2.msra.mxu0 0.0
      %6201 = vmatprep.mubr.f32.mxu0 0.0
      %6202 = vmatmul.mubr.f32.gmra.mxu0 %v6135
      %v6203 = vpop.f32.mrf.mxu0
      %v6204 = vadd.f32 0.0, %v6203
      %v6205 = vpop.f32.mrf.mxu0
      %6206 = vdwg.mxu0
      %v6207 = vmul.f32 %v6131, 0.001953125
      %v6208 = vmul.f32 %v6204, 0.001953125
      %v6209 = vmul.f32 %v6207, %v6207
      %v6210 = vsub.f32 %v6208, %v6209
      %v6211 = vmax.f32 %v6210, 0.0
      %v6212 = vadd.f32 %v6211, 1e-05
      %v6213 = vrsqrt.pop %v6212
      %v6214 = vld [vmem:[%s12] sm:$0x1]
      %v6215 = vmul.f32 %v6213, %v6214
      %v6216 = vld [vmem:[%s13] sm:$0x1]
      %v6217 = vmul.f32 %v6207, %v6215
      %v6218 = vsub.f32 %v6216, %v6217
      %v6219 = vlaneseq
      %v6220 = vshrl.u32 %v6219, 7
      %v6221 = vsub.s32 0, %v6220
      %v6222 = vrot.slane %v6215, %v6221
      %v6223 = vmul.f32 %v5857, %v6222
      %v6224 = vmul.f32 %v5858, %v6222
      %v6225 = vmul.f32 %v5859, %v6222
      %v6226 = vmul.f32 %v5860, %v6222
      %v6227 = vmul.f32 %v5861, %v6222
      %v6228 = vmul.f32 %v5862, %v6222
      %v6229 = vmul.f32 %v5863, %v6222
      %v6230 = vmul.f32 %v5864, %v6222
      %v6231 = vmul.f32 %v5865, %v6222
      %v6232 = vmul.f32 %v5866, %v6222
      %v6233 = vmul.f32 %v5867, %v6222
      %v6234 = vmul.f32 %v5868, %v6222
      %v6235 = vmul.f32 %v5869, %v6222
      %v6236 = vmul.f32 %v5870, %v6222
      %v6237 = vmul.f32 %v5871, %v6222
      %v6238 = vmul.f32 %v5872, %v6222
      %v6239 = vmul.f32 %v5873, %v6222
      %v6240 = vmul.f32 %v5874, %v6222
      %v6241 = vmul.f32 %v5875, %v6222
      %v6242 = vmul.f32 %v5876, %v6222
      %v6243 = vmul.f32 %v5877, %v6222
      %v6244 = vmul.f32 %v5878, %v6222
      %v6245 = vmul.f32 %v5879, %v6222
      %v6246 = vmul.f32 %v5880, %v6222
      %v6247 = vmul.f32 %v5881, %v6222
      %v6248 = vmul.f32 %v5882, %v6222
      %v6249 = vmul.f32 %v5883, %v6222
      %v6250 = vmul.f32 %v5884, %v6222
      %v6251 = vmul.f32 %v5885, %v6222
      %v6252 = vmul.f32 %v5886, %v6222
      %v6253 = vmul.f32 %v5887, %v6222
      %v6254 = vmul.f32 %v5888, %v6222
      %v6256 = vlaneseq
      %v6257 = vshrl.u32 %v6256, 7
      %v6258 = vsub.s32 0, %v6257
      %v6259 = vrot.slane %v6218, %v6258
      %v6261 = vadd.f32 %v6223, %v6259
      %v6262 = vadd.f32 %v6224, %v6259
      %v6263 = vadd.f32 %v6225, %v6259
      %v6264 = vadd.f32 %v6226, %v6259
      %v6265 = vadd.f32 %v6227, %v6259
      %v6266 = vadd.f32 %v6228, %v6259
      %v6267 = vadd.f32 %v6229, %v6259
      %v6268 = vadd.f32 %v6230, %v6259
      %v6269 = vadd.f32 %v6231, %v6259
      %v6270 = vadd.f32 %v6232, %v6259
      %v6271 = vadd.f32 %v6233, %v6259
      %v6272 = vadd.f32 %v6234, %v6259
      %v6273 = vadd.f32 %v6235, %v6259
      %v6274 = vadd.f32 %v6236, %v6259
      %v6275 = vadd.f32 %v6237, %v6259
      %v6276 = vadd.f32 %v6238, %v6259
      %v6277 = vadd.f32 %v6239, %v6259
      %v6278 = vadd.f32 %v6240, %v6259
      %v6279 = vadd.f32 %v6241, %v6259
      %v6280 = vadd.f32 %v6242, %v6259
      %v6281 = vadd.f32 %v6243, %v6259
      %v6282 = vadd.f32 %v6244, %v6259
      %v6283 = vadd.f32 %v6245, %v6259
      %v6284 = vadd.f32 %v6246, %v6259
      %v6285 = vadd.f32 %v6247, %v6259
      %v6286 = vadd.f32 %v6248, %v6259
      %v6287 = vadd.f32 %v6249, %v6259
      %v6288 = vadd.f32 %v6250, %v6259
      %v6289 = vadd.f32 %v6251, %v6259
      %v6290 = vadd.f32 %v6252, %v6259
      %v6291 = vadd.f32 %v6253, %v6259
      %v6292 = vadd.f32 %v6254, %v6259
      %v6293 = vmin.f32 %v6261, 20.0
      %v6294 = vmin.f32 %v6262, 20.0
      %v6295 = vmin.f32 %v6263, 20.0
      %v6296 = vmin.f32 %v6264, 20.0
      %v6297 = vmin.f32 %v6265, 20.0
      %v6298 = vmin.f32 %v6266, 20.0
      %v6299 = vmin.f32 %v6267, 20.0
      %v6300 = vmin.f32 %v6268, 20.0
      %v6301 = vmin.f32 %v6269, 20.0
      %v6302 = vmin.f32 %v6270, 20.0
      %v6303 = vmin.f32 %v6271, 20.0
      %v6304 = vmin.f32 %v6272, 20.0
      %v6305 = vmin.f32 %v6273, 20.0
      %v6306 = vmin.f32 %v6274, 20.0
      %v6307 = vmin.f32 %v6275, 20.0
      %v6308 = vmin.f32 %v6276, 20.0
      %v6309 = vmin.f32 %v6277, 20.0
      %v6310 = vmin.f32 %v6278, 20.0
      %v6311 = vmin.f32 %v6279, 20.0
      %v6312 = vmin.f32 %v6280, 20.0
      %v6313 = vmin.f32 %v6281, 20.0
      %v6314 = vmin.f32 %v6282, 20.0
      %v6315 = vmin.f32 %v6283, 20.0
      %v6316 = vmin.f32 %v6284, 20.0
      %v6317 = vmin.f32 %v6285, 20.0
      %v6318 = vmin.f32 %v6286, 20.0
      %v6319 = vmin.f32 %v6287, 20.0
      %v6320 = vmin.f32 %v6288, 20.0
      %v6321 = vmin.f32 %v6289, 20.0
      %v6322 = vmin.f32 %v6290, 20.0
      %v6323 = vmin.f32 %v6291, 20.0
      %v6324 = vmin.f32 %v6292, 20.0
      %v6325 = vmul.f32 %v6293, 1.442695
      %v6326 = vpow.pop %v6325
      %v6327 = vmul.f32 %v6294, 1.442695
      %v6328 = vpow.pop %v6327
      %v6329 = vmul.f32 %v6295, 1.442695
      %v6330 = vpow.pop %v6329
      %v6331 = vmul.f32 %v6296, 1.442695
      %v6332 = vpow.pop %v6331
      %v6333 = vmul.f32 %v6297, 1.442695
      %v6334 = vpow.pop %v6333
      %v6335 = vmul.f32 %v6298, 1.442695
      %v6336 = vpow.pop %v6335
      %v6337 = vmul.f32 %v6299, 1.442695
      %v6338 = vpow.pop %v6337
      %v6339 = vmul.f32 %v6300, 1.442695
      %v6340 = vpow.pop %v6339
      %v6341 = vmul.f32 %v6301, 1.442695
      %v6342 = vpow.pop %v6341
      %v6343 = vmul.f32 %v6302, 1.442695
      %v6344 = vpow.pop %v6343
      %v6345 = vmul.f32 %v6303, 1.442695
      %v6346 = vpow.pop %v6345
      %v6347 = vmul.f32 %v6304, 1.442695
      %v6348 = vpow.pop %v6347
      %v6349 = vmul.f32 %v6305, 1.442695
      %v6350 = vpow.pop %v6349
      %v6351 = vmul.f32 %v6306, 1.442695
      %v6352 = vpow.pop %v6351
      %v6353 = vmul.f32 %v6307, 1.442695
      %v6354 = vpow.pop %v6353
      %v6355 = vmul.f32 %v6308, 1.442695
      %v6356 = vpow.pop %v6355
      %v6357 = vmul.f32 %v6309, 1.442695
      %v6358 = vpow.pop %v6357
      %v6359 = vmul.f32 %v6310, 1.442695
      %v6360 = vpow.pop %v6359
      %v6361 = vmul.f32 %v6311, 1.442695
      %v6362 = vpow.pop %v6361
      %v6363 = vmul.f32 %v6312, 1.442695
      %v6364 = vpow.pop %v6363
      %v6365 = vmul.f32 %v6313, 1.442695
      %v6366 = vpow.pop %v6365
      %v6367 = vmul.f32 %v6314, 1.442695
      %v6368 = vpow.pop %v6367
      %v6369 = vmul.f32 %v6315, 1.442695
      %v6370 = vpow.pop %v6369
      %v6371 = vmul.f32 %v6316, 1.442695
      %v6372 = vpow.pop %v6371
      %v6373 = vmul.f32 %v6317, 1.442695
      %v6374 = vpow.pop %v6373
      %v6375 = vmul.f32 %v6318, 1.442695
      %v6376 = vpow.pop %v6375
      %v6377 = vmul.f32 %v6319, 1.442695
      %v6378 = vpow.pop %v6377
      %v6379 = vmul.f32 %v6320, 1.442695
      %v6380 = vpow.pop %v6379
      %v6381 = vmul.f32 %v6321, 1.442695
      %v6382 = vpow.pop %v6381
      %v6383 = vmul.f32 %v6322, 1.442695
      %v6384 = vpow.pop %v6383
      %v6385 = vmul.f32 %v6323, 1.442695
      %v6386 = vpow.pop %v6385
      %v6387 = vmul.f32 %v6324, 1.442695
      %v6388 = vpow.pop %v6387
      %v6389 = vadd.f32 %v6326, 2.0
      %v6390 = vadd.f32 %v6328, 2.0
      %v6391 = vadd.f32 %v6330, 2.0
      %v6392 = vadd.f32 %v6332, 2.0
      %v6393 = vadd.f32 %v6334, 2.0
      %v6394 = vadd.f32 %v6336, 2.0
      %v6395 = vadd.f32 %v6338, 2.0
      %v6396 = vadd.f32 %v6340, 2.0
      %v6397 = vadd.f32 %v6342, 2.0
      %v6398 = vadd.f32 %v6344, 2.0
      %v6399 = vadd.f32 %v6346, 2.0
      %v6400 = vadd.f32 %v6348, 2.0
      %v6401 = vadd.f32 %v6350, 2.0
      %v6402 = vadd.f32 %v6352, 2.0
      %v6403 = vadd.f32 %v6354, 2.0
      %v6404 = vadd.f32 %v6356, 2.0
      %v6405 = vadd.f32 %v6358, 2.0
      %v6406 = vadd.f32 %v6360, 2.0
      %v6407 = vadd.f32 %v6362, 2.0
      %v6408 = vadd.f32 %v6364, 2.0
      %v6409 = vadd.f32 %v6366, 2.0
      %v6410 = vadd.f32 %v6368, 2.0
      %v6411 = vadd.f32 %v6370, 2.0
      %v6412 = vadd.f32 %v6372, 2.0
      %v6413 = vadd.f32 %v6374, 2.0
      %v6414 = vadd.f32 %v6376, 2.0
      %v6415 = vadd.f32 %v6378, 2.0
      %v6416 = vadd.f32 %v6380, 2.0
      %v6417 = vadd.f32 %v6382, 2.0
      %v6418 = vadd.f32 %v6384, 2.0
      %v6419 = vadd.f32 %v6386, 2.0
      %v6420 = vadd.f32 %v6388, 2.0
      %v6421 = vmul.f32 %v6326, %v6389
      %v6422 = vmul.f32 %v6328, %v6390
      %v6423 = vmul.f32 %v6330, %v6391
      %v6424 = vmul.f32 %v6332, %v6392
      %v6425 = vmul.f32 %v6334, %v6393
      %v6426 = vmul.f32 %v6336, %v6394
      %v6427 = vmul.f32 %v6338, %v6395
      %v6428 = vmul.f32 %v6340, %v6396
      %v6429 = vmul.f32 %v6342, %v6397
      %v6430 = vmul.f32 %v6344, %v6398
      %v6431 = vmul.f32 %v6346, %v6399
      %v6432 = vmul.f32 %v6348, %v6400
      %v6433 = vmul.f32 %v6350, %v6401
      %v6434 = vmul.f32 %v6352, %v6402
      %v6435 = vmul.f32 %v6354, %v6403
      %v6436 = vmul.f32 %v6356, %v6404
      %v6437 = vmul.f32 %v6358, %v6405
      %v6438 = vmul.f32 %v6360, %v6406
      %v6439 = vmul.f32 %v6362, %v6407
      %v6440 = vmul.f32 %v6364, %v6408
      %v6441 = vmul.f32 %v6366, %v6409
      %v6442 = vmul.f32 %v6368, %v6410
      %v6443 = vmul.f32 %v6370, %v6411
      %v6444 = vmul.f32 %v6372, %v6412
      %v6445 = vmul.f32 %v6374, %v6413
      %v6446 = vmul.f32 %v6376, %v6414
      %v6447 = vmul.f32 %v6378, %v6415
      %v6448 = vmul.f32 %v6380, %v6416
      %v6449 = vmul.f32 %v6382, %v6417
      %v6450 = vmul.f32 %v6384, %v6418
      %v6451 = vmul.f32 %v6386, %v6419
      %v6452 = vmul.f32 %v6388, %v6420
      %v6453 = vmul.f32 %v6261, %v6421
      %v6454 = vmul.f32 %v6262, %v6422
      %v6455 = vmul.f32 %v6263, %v6423
      %v6456 = vmul.f32 %v6264, %v6424
      %v6457 = vmul.f32 %v6265, %v6425
      %v6458 = vmul.f32 %v6266, %v6426
      %v6459 = vmul.f32 %v6267, %v6427
      %v6460 = vmul.f32 %v6268, %v6428
      %v6461 = vmul.f32 %v6269, %v6429
      %v6462 = vmul.f32 %v6270, %v6430
      %v6463 = vmul.f32 %v6271, %v6431
      %v6464 = vmul.f32 %v6272, %v6432
      %v6465 = vmul.f32 %v6273, %v6433
      %v6466 = vmul.f32 %v6274, %v6434
      %v6467 = vmul.f32 %v6275, %v6435
      %v6468 = vmul.f32 %v6276, %v6436
      %v6469 = vmul.f32 %v6277, %v6437
      %v6470 = vmul.f32 %v6278, %v6438
      %v6471 = vmul.f32 %v6279, %v6439
      %v6472 = vmul.f32 %v6280, %v6440
      %v6473 = vmul.f32 %v6281, %v6441
      %v6474 = vmul.f32 %v6282, %v6442
      %v6475 = vmul.f32 %v6283, %v6443
      %v6476 = vmul.f32 %v6284, %v6444
      %v6477 = vmul.f32 %v6285, %v6445
      %v6478 = vmul.f32 %v6286, %v6446
      %v6479 = vmul.f32 %v6287, %v6447
      %v6480 = vmul.f32 %v6288, %v6448
      %v6481 = vmul.f32 %v6289, %v6449
      %v6482 = vmul.f32 %v6290, %v6450
      %v6483 = vmul.f32 %v6291, %v6451
      %v6484 = vmul.f32 %v6292, %v6452
      %v6485 = vadd.f32 %v6421, 2.0
      %v6486 = vadd.f32 %v6422, 2.0
      %v6487 = vadd.f32 %v6423, 2.0
      %v6488 = vadd.f32 %v6424, 2.0
      %v6489 = vadd.f32 %v6425, 2.0
      %v6490 = vadd.f32 %v6426, 2.0
      %v6491 = vadd.f32 %v6427, 2.0
      %v6492 = vadd.f32 %v6428, 2.0
      %v6493 = vadd.f32 %v6429, 2.0
      %v6494 = vadd.f32 %v6430, 2.0
      %v6495 = vadd.f32 %v6431, 2.0
      %v6496 = vadd.f32 %v6432, 2.0
      %v6497 = vadd.f32 %v6433, 2.0
      %v6498 = vadd.f32 %v6434, 2.0
      %v6499 = vadd.f32 %v6435, 2.0
      %v6500 = vadd.f32 %v6436, 2.0
      %v6501 = vadd.f32 %v6437, 2.0
      %v6502 = vadd.f32 %v6438, 2.0
      %v6503 = vadd.f32 %v6439, 2.0
      %v6504 = vadd.f32 %v6440, 2.0
      %v6505 = vadd.f32 %v6441, 2.0
      %v6506 = vadd.f32 %v6442, 2.0
      %v6507 = vadd.f32 %v6443, 2.0
      %v6508 = vadd.f32 %v6444, 2.0
      %v6509 = vadd.f32 %v6445, 2.0
      %v6510 = vadd.f32 %v6446, 2.0
      %v6511 = vadd.f32 %v6447, 2.0
      %v6512 = vadd.f32 %v6448, 2.0
      %v6513 = vadd.f32 %v6449, 2.0
      %v6514 = vadd.f32 %v6450, 2.0
      %v6515 = vadd.f32 %v6451, 2.0
      %v6516 = vadd.f32 %v6452, 2.0
      %v6517 = vrcp.pop %v6485
      %v6518 = vrcp.pop %v6486
      %v6519 = vrcp.pop %v6487
      %v6520 = vrcp.pop %v6488
      %v6521 = vrcp.pop %v6489
      %v6522 = vrcp.pop %v6490
      %v6523 = vrcp.pop %v6491
      %v6524 = vrcp.pop %v6492
      %v6525 = vrcp.pop %v6493
      %v6526 = vrcp.pop %v6494
      %v6527 = vrcp.pop %v6495
      %v6528 = vrcp.pop %v6496
      %v6529 = vrcp.pop %v6497
      %v6530 = vrcp.pop %v6498
      %v6531 = vrcp.pop %v6499
      %v6532 = vrcp.pop %v6500
      %v6533 = vrcp.pop %v6501
      %v6534 = vrcp.pop %v6502
      %v6535 = vrcp.pop %v6503
      %v6536 = vrcp.pop %v6504
      %v6537 = vrcp.pop %v6505
      %v6538 = vrcp.pop %v6506
      %v6539 = vrcp.pop %v6507
      %v6540 = vrcp.pop %v6508
      %v6541 = vrcp.pop %v6509
      %v6542 = vrcp.pop %v6510
      %v6543 = vrcp.pop %v6511
      %v6544 = vrcp.pop %v6512
      %v6545 = vrcp.pop %v6513
      %v6546 = vrcp.pop %v6514
      %v6547 = vrcp.pop %v6515
      %v6548 = vrcp.pop %v6516
      %v6549 = vmul.f32 %v6453, %v6517
      %v6550 = vmul.f32 %v6454, %v6518
      %v6551 = vmul.f32 %v6455, %v6519
      %v6552 = vmul.f32 %v6456, %v6520
      %v6553 = vmul.f32 %v6457, %v6521
      %v6554 = vmul.f32 %v6458, %v6522
      %v6555 = vmul.f32 %v6459, %v6523
      %v6556 = vmul.f32 %v6460, %v6524
      %v6557 = vmul.f32 %v6461, %v6525
      %v6558 = vmul.f32 %v6462, %v6526
      %v6559 = vmul.f32 %v6463, %v6527
      %v6560 = vmul.f32 %v6464, %v6528
      %v6561 = vmul.f32 %v6465, %v6529
      %v6562 = vmul.f32 %v6466, %v6530
      %v6563 = vmul.f32 %v6467, %v6531
      %v6564 = vmul.f32 %v6468, %v6532
      %v6565 = vmul.f32 %v6469, %v6533
      %v6566 = vmul.f32 %v6470, %v6534
      %v6567 = vmul.f32 %v6471, %v6535
      %v6568 = vmul.f32 %v6472, %v6536
      %v6569 = vmul.f32 %v6473, %v6537
      %v6570 = vmul.f32 %v6474, %v6538
      %v6571 = vmul.f32 %v6475, %v6539
      %v6572 = vmul.f32 %v6476, %v6540
      %v6573 = vmul.f32 %v6477, %v6541
      %v6574 = vmul.f32 %v6478, %v6542
      %v6575 = vmul.f32 %v6479, %v6543
      %v6576 = vmul.f32 %v6480, %v6544
      %v6577 = vmul.f32 %v6481, %v6545
      %v6578 = vmul.f32 %v6482, %v6546
      %v6579 = vmul.f32 %v6483, %v6547
      %v6580 = vmul.f32 %v6484, %v6548
      %v6581 = vld [vmem:[%s14] sm:$0xf]
      %v6582 = vld [vmem:[%s15] sm:$0x1]
      %v6584 = vlaneseq
      %v6585 = vshrl.u32 %v6584, 7
      %v6586 = vsub.s32 0, %v6585
      %v6587 = vrot.slane %v6582, %v6586
      %vm6589 = vcmask 31744
      %v6591 = vsel %vm6589, %v1215, 0
      %v6594 = vsel %vm6589, %v1216, 0
      %v6597 = vsel %vm6589, %v1217, 0
      %v6600 = vsel %vm6589, %v1218, 0
      %v6603 = vsel %vm6589, %v1219, 0
      %v6606 = vsel %vm6589, %v1220, 0
      %v6609 = vsel %vm6589, %v1221, 0
      %v6612 = vsel %vm6589, %v1222, 0
      %v6615 = vsel %vm6589, %v1223, 0
      %v6618 = vsel %vm6589, %v1224, 0
      %v6621 = vsel %vm6589, %v1225, 0
      %v6624 = vsel %vm6589, %v1226, 0
      %v6627 = vsel %vm6589, %v1227, 0
      %v6630 = vsel %vm6589, %v1228, 0
      %v6633 = vsel %vm6589, %v1229, 0
      %v6636 = vsel %vm6589, %v1230, 0
      %v6639 = vsel %vm6589, %v1231, 0
      %v6642 = vsel %vm6589, %v1232, 0
      %v6645 = vsel %vm6589, %v1233, 0
      %v6648 = vsel %vm6589, %v1234, 0
      %v6651 = vsel %vm6589, %v1235, 0
      %v6654 = vsel %vm6589, %v1236, 0
      %v6657 = vsel %vm6589, %v1237, 0
      %v6660 = vsel %vm6589, %v1238, 0
      %v6663 = vsel %vm6589, %v1239, 0
      %v6666 = vsel %vm6589, %v1240, 0
      %v6669 = vsel %vm6589, %v1241, 0
      %v6672 = vsel %vm6589, %v1242, 0
      %v6675 = vsel %vm6589, %v1243, 0
      %v6678 = vsel %vm6589, %v1244, 0
      %v6681 = vsel %vm6589, %v1245, 0
      %v6684 = vsel %vm6589, %v1246, 0
      %v6687 = vsel %vm986, %v6581, 0
      %6689 = vmatprep.subr.mxu0 0.0
      %6690 = vmatpush1.msra.mxu0 0.0
      %6691 = vmatprep.subr.mxu0 0.0
      %6692 = vmatpush1.msra.mxu0 0.0
      %6693 = vmatprep.subr.mxu0 0.0
      %6694 = vmatpush1.msra.mxu0 0.0
      %6695 = vmatprep.subr.mxu0 0.0
      %6696 = vmatpush1.msra.mxu0 0.0
      %6697 = vmatprep.subr.mxu0 0.0
      %6698 = vmatpush1.msra.mxu0 0.0
      %6699 = vmatprep.subr.mxu0 0.0
      %6700 = vmatpush1.msra.mxu0 0.0
      %6701 = vmatprep.subr.mxu0 0.0
      %6702 = vmatpush1.msra.mxu0 0.0
      %6703 = vmatprep.subr.mxu0 0.0
      %6704 = vmatpush1.msra.mxu0 0.0
      %6705 = vmatprep.subr.mxu0 0.0
      %6706 = vmatpush1.msra.mxu0 0.0
      %6707 = vmatprep.subr.mxu0 0.0
      %6708 = vmatpush1.msra.mxu0 0.0
      %6709 = vmatprep.subr.mxu0 0.0
      %6710 = vmatpush1.msra.mxu0 0.0
      %6711 = vmatprep.subr.mxu0 0.0
      %6712 = vmatpush1.msra.mxu0 0.0
      %6713 = vmatprep.subr.mxu0 0.0
      %6714 = vmatpush1.msra.mxu0 0.0
      %6715 = vmatprep.subr.mxu0 0.0
      %6716 = vmatpush1.msra.mxu0 0.0
      %6717 = vmatprep.subr.mxu0 0.0
      %6718 = vmatpush1.msra.mxu0 0.0
      %6719 = vmatprep.subr.mxu0 0.0
      %6720 = vmatpush1.msra.mxu0 %v6687
      %6721 = vmatprep.subr.mxu0 0.0
      %6722 = vmatpush2.msra.mxu0 0.0
      %6723 = vmatprep.subr.mxu0 0.0
      %6724 = vmatpush2.msra.mxu0 0.0
      %6725 = vmatprep.subr.mxu0 0.0
      %6726 = vmatpush2.msra.mxu0 0.0
      %6727 = vmatprep.subr.mxu0 0.0
      %6728 = vmatpush2.msra.mxu0 0.0
      %6729 = vmatprep.subr.mxu0 0.0
      %6730 = vmatpush2.msra.mxu0 0.0
      %6731 = vmatprep.subr.mxu0 0.0
      %6732 = vmatpush2.msra.mxu0 0.0
      %6733 = vmatprep.subr.mxu0 0.0
      %6734 = vmatpush2.msra.mxu0 0.0
      %6735 = vmatprep.subr.mxu0 0.0
      %6736 = vmatpush2.msra.mxu0 0.0
      %6737 = vmatprep.subr.mxu0 0.0
      %6738 = vmatpush2.msra.mxu0 0.0
      %6739 = vmatprep.subr.mxu0 0.0
      %6740 = vmatpush2.msra.mxu0 0.0
      %6741 = vmatprep.subr.mxu0 0.0
      %6742 = vmatpush2.msra.mxu0 0.0
      %6743 = vmatprep.subr.mxu0 0.0
      %6744 = vmatpush2.msra.mxu0 0.0
      %6745 = vmatprep.subr.mxu0 0.0
      %6746 = vmatpush2.msra.mxu0 0.0
      %6747 = vmatprep.subr.mxu0 0.0
      %6748 = vmatpush2.msra.mxu0 0.0
      %6749 = vmatprep.subr.mxu0 0.0
      %6750 = vmatpush2.msra.mxu0 0.0
      %6751 = vmatprep.subr.mxu0 0.0
      %6752 = vmatpush2.msra.mxu0 0.0
      %6753 = vmatprep.mubr.f32.mxu0 0.0
      %6754 = vmatmul.mubr.f32.gmra.mxu0 %v6591
      %v6755 = vpop.f32.mrf.mxu0
      %v6756 = vadd.f32 %v6587, %v6755
      %v6757 = vpop.f32.mrf.mxu0
      %6758 = vmatprep.mubr.f32.mxu0 0.0
      %6759 = vmatmul.mubr.f32.gmra.mxu0 %v6594
      %v6760 = vpop.f32.mrf.mxu0
      %v6761 = vadd.f32 %v6587, %v6760
      %v6762 = vpop.f32.mrf.mxu0
      %6763 = vmatprep.mubr.f32.mxu0 0.0
      %6764 = vmatmul.mubr.f32.gmra.mxu0 %v6597
      %v6765 = vpop.f32.mrf.mxu0
      %v6766 = vadd.f32 %v6587, %v6765
      %v6767 = vpop.f32.mrf.mxu0
      %6768 = vmatprep.mubr.f32.mxu0 0.0
      %6769 = vmatmul.mubr.f32.gmra.mxu0 %v6600
      %v6770 = vpop.f32.mrf.mxu0
      %v6771 = vadd.f32 %v6587, %v6770
      %v6772 = vpop.f32.mrf.mxu0
      %6773 = vmatprep.mubr.f32.mxu0 0.0
      %6774 = vmatmul.mubr.f32.gmra.mxu0 %v6603
      %v6775 = vpop.f32.mrf.mxu0
      %v6776 = vadd.f32 %v6587, %v6775
      %v6777 = vpop.f32.mrf.mxu0
      %6778 = vmatprep.mubr.f32.mxu0 0.0
      %6779 = vmatmul.mubr.f32.gmra.mxu0 %v6606
      %v6780 = vpop.f32.mrf.mxu0
      %v6781 = vadd.f32 %v6587, %v6780
      %v6782 = vpop.f32.mrf.mxu0
      %6783 = vmatprep.mubr.f32.mxu0 0.0
      %6784 = vmatmul.mubr.f32.gmra.mxu0 %v6609
      %v6785 = vpop.f32.mrf.mxu0
      %v6786 = vadd.f32 %v6587, %v6785
      %v6787 = vpop.f32.mrf.mxu0
      %6788 = vmatprep.mubr.f32.mxu0 0.0
      %6789 = vmatmul.mubr.f32.gmra.mxu0 %v6612
      %v6790 = vpop.f32.mrf.mxu0
      %v6791 = vadd.f32 %v6587, %v6790
      %v6792 = vpop.f32.mrf.mxu0
      %6793 = vmatprep.mubr.f32.mxu0 0.0
      %6794 = vmatmul.mubr.f32.gmra.mxu0 %v6615
      %v6795 = vpop.f32.mrf.mxu0
      %v6796 = vadd.f32 %v6587, %v6795
      %v6797 = vpop.f32.mrf.mxu0
      %6798 = vmatprep.mubr.f32.mxu0 0.0
      %6799 = vmatmul.mubr.f32.gmra.mxu0 %v6618
      %v6800 = vpop.f32.mrf.mxu0
      %v6801 = vadd.f32 %v6587, %v6800
      %v6802 = vpop.f32.mrf.mxu0
      %6803 = vmatprep.mubr.f32.mxu0 0.0
      %6804 = vmatmul.mubr.f32.gmra.mxu0 %v6621
      %v6805 = vpop.f32.mrf.mxu0
      %v6806 = vadd.f32 %v6587, %v6805
      %v6807 = vpop.f32.mrf.mxu0
      %6808 = vmatprep.mubr.f32.mxu0 0.0
      %6809 = vmatmul.mubr.f32.gmra.mxu0 %v6624
      %v6810 = vpop.f32.mrf.mxu0
      %v6811 = vadd.f32 %v6587, %v6810
      %v6812 = vpop.f32.mrf.mxu0
      %6813 = vmatprep.mubr.f32.mxu0 0.0
      %6814 = vmatmul.mubr.f32.gmra.mxu0 %v6627
      %v6815 = vpop.f32.mrf.mxu0
      %v6816 = vadd.f32 %v6587, %v6815
      %v6817 = vpop.f32.mrf.mxu0
      %6818 = vmatprep.mubr.f32.mxu0 0.0
      %6819 = vmatmul.mubr.f32.gmra.mxu0 %v6630
      %v6820 = vpop.f32.mrf.mxu0
      %v6821 = vadd.f32 %v6587, %v6820
      %v6822 = vpop.f32.mrf.mxu0
      %6823 = vmatprep.mubr.f32.mxu0 0.0
      %6824 = vmatmul.mubr.f32.gmra.mxu0 %v6633
      %v6825 = vpop.f32.mrf.mxu0
      %v6826 = vadd.f32 %v6587, %v6825
      %v6827 = vpop.f32.mrf.mxu0
      %6828 = vmatprep.mubr.f32.mxu0 0.0
      %6829 = vmatmul.mubr.f32.gmra.mxu0 %v6636
      %v6830 = vpop.f32.mrf.mxu0
      %v6831 = vadd.f32 %v6587, %v6830
      %v6832 = vpop.f32.mrf.mxu0
      %6833 = vmatprep.mubr.f32.mxu0 0.0
      %6834 = vmatmul.mubr.f32.gmra.mxu0 %v6639
      %v6835 = vpop.f32.mrf.mxu0
      %v6836 = vadd.f32 %v6587, %v6835
      %v6837 = vpop.f32.mrf.mxu0
      %6838 = vmatprep.mubr.f32.mxu0 0.0
      %6839 = vmatmul.mubr.f32.gmra.mxu0 %v6642
      %v6840 = vpop.f32.mrf.mxu0
      %v6841 = vadd.f32 %v6587, %v6840
      %v6842 = vpop.f32.mrf.mxu0
      %6843 = vmatprep.mubr.f32.mxu0 0.0
      %6844 = vmatmul.mubr.f32.gmra.mxu0 %v6645
      %v6845 = vpop.f32.mrf.mxu0
      %v6846 = vadd.f32 %v6587, %v6845
      %v6847 = vpop.f32.mrf.mxu0
      %6848 = vmatprep.mubr.f32.mxu0 0.0
      %6849 = vmatmul.mubr.f32.gmra.mxu0 %v6648
      %v6850 = vpop.f32.mrf.mxu0
      %v6851 = vadd.f32 %v6587, %v6850
      %v6852 = vpop.f32.mrf.mxu0
      %6853 = vmatprep.mubr.f32.mxu0 0.0
      %6854 = vmatmul.mubr.f32.gmra.mxu0 %v6651
      %v6855 = vpop.f32.mrf.mxu0
      %v6856 = vadd.f32 %v6587, %v6855
      %v6857 = vpop.f32.mrf.mxu0
      %6858 = vmatprep.mubr.f32.mxu0 0.0
      %6859 = vmatmul.mubr.f32.gmra.mxu0 %v6654
      %v6860 = vpop.f32.mrf.mxu0
      %v6861 = vadd.f32 %v6587, %v6860
      %v6862 = vpop.f32.mrf.mxu0
      %6863 = vmatprep.mubr.f32.mxu0 0.0
      %6864 = vmatmul.mubr.f32.gmra.mxu0 %v6657
      %v6865 = vpop.f32.mrf.mxu0
      %v6866 = vadd.f32 %v6587, %v6865
      %v6867 = vpop.f32.mrf.mxu0
      %6868 = vmatprep.mubr.f32.mxu0 0.0
      %6869 = vmatmul.mubr.f32.gmra.mxu0 %v6660
      %v6870 = vpop.f32.mrf.mxu0
      %v6871 = vadd.f32 %v6587, %v6870
      %v6872 = vpop.f32.mrf.mxu0
      %6873 = vmatprep.mubr.f32.mxu0 0.0
      %6874 = vmatmul.mubr.f32.gmra.mxu0 %v6663
      %v6875 = vpop.f32.mrf.mxu0
      %v6876 = vadd.f32 %v6587, %v6875
      %v6877 = vpop.f32.mrf.mxu0
      %6878 = vmatprep.mubr.f32.mxu0 0.0
      %6879 = vmatmul.mubr.f32.gmra.mxu0 %v6666
      %v6880 = vpop.f32.mrf.mxu0
      %v6881 = vadd.f32 %v6587, %v6880
      %v6882 = vpop.f32.mrf.mxu0
      %6883 = vmatprep.mubr.f32.mxu0 0.0
      %6884 = vmatmul.mubr.f32.gmra.mxu0 %v6669
      %v6885 = vpop.f32.mrf.mxu0
      %v6886 = vadd.f32 %v6587, %v6885
      %v6887 = vpop.f32.mrf.mxu0
      %6888 = vmatprep.mubr.f32.mxu0 0.0
      %6889 = vmatmul.mubr.f32.gmra.mxu0 %v6672
      %v6890 = vpop.f32.mrf.mxu0
      %v6891 = vadd.f32 %v6587, %v6890
      %v6892 = vpop.f32.mrf.mxu0
      %6893 = vmatprep.mubr.f32.mxu0 0.0
      %6894 = vmatmul.mubr.f32.gmra.mxu0 %v6675
      %v6895 = vpop.f32.mrf.mxu0
      %v6896 = vadd.f32 %v6587, %v6895
      %v6897 = vpop.f32.mrf.mxu0
      %6898 = vmatprep.mubr.f32.mxu0 0.0
      %6899 = vmatmul.mubr.f32.gmra.mxu0 %v6678
      %v6900 = vpop.f32.mrf.mxu0
      %v6901 = vadd.f32 %v6587, %v6900
      %v6902 = vpop.f32.mrf.mxu0
      %6903 = vmatprep.mubr.f32.mxu0 0.0
      %6904 = vmatmul.mubr.f32.gmra.mxu0 %v6681
      %v6905 = vpop.f32.mrf.mxu0
      %v6906 = vadd.f32 %v6587, %v6905
      %v6907 = vpop.f32.mrf.mxu0
      %6908 = vmatprep.mubr.f32.mxu0 0.0
      %6909 = vmatmul.mubr.f32.gmra.mxu0 %v6684
      %v6910 = vpop.f32.mrf.mxu0
      %v6911 = vadd.f32 %v6587, %v6910
      %v6912 = vpop.f32.mrf.mxu0
      %6913 = vdwg.mxu0
      %v6914 = vadd.f32 %v6549, %v6756
      %v6915 = vadd.f32 %v6550, %v6761
      %v6916 = vadd.f32 %v6551, %v6766
      %v6917 = vadd.f32 %v6552, %v6771
      %v6918 = vadd.f32 %v6553, %v6776
      %v6919 = vadd.f32 %v6554, %v6781
      %v6920 = vadd.f32 %v6555, %v6786
      %v6921 = vadd.f32 %v6556, %v6791
      %v6922 = vadd.f32 %v6557, %v6796
      %v6923 = vadd.f32 %v6558, %v6801
      %v6924 = vadd.f32 %v6559, %v6806
      %v6925 = vadd.f32 %v6560, %v6811
      %v6926 = vadd.f32 %v6561, %v6816
      %v6927 = vadd.f32 %v6562, %v6821
      %v6928 = vadd.f32 %v6563, %v6826
      %v6929 = vadd.f32 %v6564, %v6831
      %v6930 = vadd.f32 %v6565, %v6836
      %v6931 = vadd.f32 %v6566, %v6841
      %v6932 = vadd.f32 %v6567, %v6846
      %v6933 = vadd.f32 %v6568, %v6851
      %v6934 = vadd.f32 %v6569, %v6856
      %v6935 = vadd.f32 %v6570, %v6861
      %v6936 = vadd.f32 %v6571, %v6866
      %v6937 = vadd.f32 %v6572, %v6871
      %v6938 = vadd.f32 %v6573, %v6876
      %v6939 = vadd.f32 %v6574, %v6881
      %v6940 = vadd.f32 %v6575, %v6886
      %v6941 = vadd.f32 %v6576, %v6891
      %v6942 = vadd.f32 %v6577, %v6896
      %v6943 = vadd.f32 %v6578, %v6901
      %v6944 = vadd.f32 %v6579, %v6906
      %v6945 = vadd.f32 %v6580, %v6911
      %6946 = vst.msk [vmem:[%s555] sm:$0xff] %vm1247, %v6914
      %6947 = vst.msk [vmem:[%s555 + $0x8] sm:$0xff] %vm1247, %v6915
      %6948 = vst.msk [vmem:[%s555 + $0x10] sm:$0xff] %vm1247, %v6916
      %6949 = vst.msk [vmem:[%s555 + $0x18] sm:$0xff] %vm1247, %v6917
      %6950 = vst.msk [vmem:[%s555 + $0x20] sm:$0xff] %vm1247, %v6918
      %6951 = vst.msk [vmem:[%s555 + $0x28] sm:$0xff] %vm1247, %v6919
      %6952 = vst.msk [vmem:[%s555 + $0x30] sm:$0xff] %vm1247, %v6920
      %6953 = vst.msk [vmem:[%s555 + $0x38] sm:$0xff] %vm1247, %v6921
      %6954 = vst.msk [vmem:[%s555 + $0x40] sm:$0xff] %vm1247, %v6922
      %6955 = vst.msk [vmem:[%s555 + $0x48] sm:$0xff] %vm1247, %v6923
      %6956 = vst.msk [vmem:[%s555 + $0x50] sm:$0xff] %vm1247, %v6924
      %6957 = vst.msk [vmem:[%s555 + $0x58] sm:$0xff] %vm1247, %v6925
      %6958 = vst.msk [vmem:[%s555 + $0x60] sm:$0xff] %vm1247, %v6926
      %6959 = vst.msk [vmem:[%s555 + $0x68] sm:$0xff] %vm1247, %v6927
      %6960 = vst.msk [vmem:[%s555 + $0x70] sm:$0xff] %vm1247, %v6928
      %6961 = vst.msk [vmem:[%s555 + $0x78] sm:$0xff] %vm1247, %v6929
      %6962 = vst.msk [vmem:[%s555 + $0x80] sm:$0xff] %vm1247, %v6930
      %6963 = vst.msk [vmem:[%s555 + $0x88] sm:$0xff] %vm1247, %v6931
      %6964 = vst.msk [vmem:[%s555 + $0x90] sm:$0xff] %vm1247, %v6932
      %6965 = vst.msk [vmem:[%s555 + $0x98] sm:$0xff] %vm1247, %v6933
      %6966 = vst.msk [vmem:[%s555 + $0xa0] sm:$0xff] %vm1247, %v6934
      %6967 = vst.msk [vmem:[%s555 + $0xa8] sm:$0xff] %vm1247, %v6935
      %6968 = vst.msk [vmem:[%s555 + $0xb0] sm:$0xff] %vm1247, %v6936
      %6969 = vst.msk [vmem:[%s555 + $0xb8] sm:$0xff] %vm1247, %v6937
      %6970 = vst.msk [vmem:[%s555 + $0xc0] sm:$0xff] %vm1247, %v6938
      %6971 = vst.msk [vmem:[%s555 + $0xc8] sm:$0xff] %vm1247, %v6939
      %6972 = vst.msk [vmem:[%s555 + $0xd0] sm:$0xff] %vm1247, %v6940
      %6973 = vst.msk [vmem:[%s555 + $0xd8] sm:$0xff] %vm1247, %v6941
      %6974 = vst.msk [vmem:[%s555 + $0xe0] sm:$0xff] %vm1247, %v6942
      %6975 = vst.msk [vmem:[%s555 + $0xe8] sm:$0xff] %vm1247, %v6943
      %6976 = vst.msk [vmem:[%s555 + $0xf0] sm:$0xff] %vm1247, %v6944
      %6977 = vst.msk [vmem:[%s555 + $0xf8] sm:$0xff] %vm1247, %v6945
      %p6978 = scmp.lt.s32.totalorder %s27, 1
      %s6979 = scalar_select %p6978, %s27, 1
      %s6980 = smul.addr %s6979, 32
      %s6981 = smul.addr %s6980, 8
      %s6982 = scalar_lea.vmem %s16, %s6981
      // Predicated region
      $region85: #{tpu_custom_call.1} parent=83 // pred_check
        %p6983 = pneg %p396
      $region86: #{tpu_custom_call.1} parent=83 // pred_check_branch
        %6985 = sbr.rel (%p6983) target = $region88
      $region87: #{tpu_custom_call.1} parent=83 // pred_region
        _
      $region88: #{tpu_custom_call.1} parent=83 // pred_fallthru
        _
    $region84: #{tpu_custom_call.1} parent=5 // pred_fallthru
      _
    %p6986 = scmp.le.s32.totalorder 2, %s22
    // Predicated region
    $region89: #{tpu_custom_call.1} parent=5 // pred_check
      %p6987 = pneg %p6986
    $region90: #{tpu_custom_call.1} parent=5 // pred_check_branch
      %6989 = sbr.rel (%p6987) target = $region92
    $region91: #{tpu_custom_call.1} parent=5 // pred_region
      %s6990 = ssub.s32 %s22, 2
      // Predicated region
      $region93: #{tpu_custom_call.1} parent=91 // pred_check
        %p6991 = pneg %p402
      $region94: #{tpu_custom_call.1} parent=91 // pred_check_branch
        %6993 = sbr.rel (%p6991) target = $region96
      $region95: #{tpu_custom_call.1} parent=91 // pred_region
        %p6994 = scmp.lt.s32.totalorder %s28, 1
        %s6995 = scalar_select %p6994, %s28, 1
        %s6996 = smul.addr %s6995, 32
        %s6997 = smul.addr %s6996, 8
        %s6998 = scalar_lea.vmem %s16, %s6997
      $region96: #{tpu_custom_call.1} parent=91 // pred_fallthru
        _
    $region92: #{tpu_custom_call.1} parent=5 // pred_fallthru
      _
  $region6: #{tpu_custom_call.1} parent=0 // loop_footer
    %s26 = sadd.s32 1, %s22
  $region7: #{tpu_custom_call.1} parent=0 // loop_footer_branch
    %21 = sbr.rel target = $region3
  $region8: #{tpu_custom_call.1} parent=0 // loop_exit
    _

</llo_original>
